<compile_context>
chip_gen: v6e
topology: v6e:2x2x1
jax: 0.10.0
libtpu: 0.0.40
codegen_flags: <defaults>
</compile_context>

<pallas_src>
import functools

import jax
import jax.numpy as jnp
from jax.experimental import pallas as pl
from jax.experimental.pallas import tpu as pltpu


def _round_up(x, m):
    return ((x + m - 1) // m) * m


# ---------------------------------------------------------------------------
# Fused C2f kernel (one grid step == one batch image)
# ---------------------------------------------------------------------------
def _c2f_att_kernel(x_ref, w1a_ref, w1b_ref, b1a_ref, b1b_ref,
                    mw1_ref, mb1_ref, mw2_ref, mb2_ref,
                    w2_ref, b2_ref, o_ref, pad_ref,
                    *, H, W, c, n, shortcut, pad_off):
    N = H * W

    def silu(v):
        return v * jax.nn.sigmoid(v)

    # ---- cv1 (1x1 conv + folded BN + SiLU); weights pre-split into chunks ----
    xb = x_ref[...].astype(jnp.bfloat16)
    y0 = silu(jnp.dot(xb, w1a_ref[...], preferred_element_type=jnp.float32)
              + b1a_ref[...])
    y1 = silu(jnp.dot(xb, w1b_ref[...], preferred_element_type=jnp.float32)
              + b1b_ref[...])

    # Zero the halo once; rows [pad_off, pad_off+N) are overwritten per conv.
    pad_ref[...] = jnp.zeros_like(pad_ref)

    # Column-wrap masks (hoisted): flattened row shifts by dx-1 are only valid
    # when the source column stays inside [0, W).
    row = jax.lax.broadcasted_iota(jnp.int32, (N, 1), 0)
    col = row % W
    col_mask = {0: col > 0, 1: None, 2: col < (W - 1)}

    def conv3x3(inp, w_ref, base, bias):
        """3x3 'same' conv (+bias +SiLU) as 9 shifted MXU matmuls. inp: (N,c) f32."""
        pad_ref[pad_off:pad_off + N, :] = inp
        acc = jnp.zeros((N, c), jnp.float32)
        for dy in range(3):
            for dx in range(3):
                if dy == 1 and dx == 1:
                    win = inp                      # zero shift: reuse directly
                else:
                    start = pad_off + (dy - 1) * W + (dx - 1)
                    win = pad_ref[start:start + N, :]
                    if col_mask[dx] is not None:
                        win = jnp.where(col_mask[dx], win, 0.0)
                acc = acc + jnp.dot(win.astype(jnp.bfloat16),
                                    w_ref[base + dy * 3 + dx],
                                    preferred_element_type=jnp.float32)
        return silu(acc + bias)

    # ---- Bottleneck chain on the second chunk ----
    branches = [y0, y1]
    ycur = y1
    for j in range(n):
        t = conv3x3(ycur, mw1_ref, j * 9, mb1_ref[j])
        t = conv3x3(t, mw2_ref, j * 9, mb2_ref[j])
        ycur = (ycur + t) if shortcut else t
        branches.append(ycur)

    # ---- cv2 over the virtual concat: per-branch split-weight matmuls ----
    out = b2_ref[...] + jnp.dot(branches[0].astype(jnp.bfloat16), w2_ref[0],
                                preferred_element_type=jnp.float32)
    for i in range(1, 2 + n):
        out = out + jnp.dot(branches[i].astype(jnp.bfloat16), w2_ref[i],
                            preferred_element_type=jnp.float32)
    o_ref[...] = silu(out).astype(o_ref.dtype)


# ---------------------------------------------------------------------------
# Parameters (synthetic, BN folded into each conv's W / b)
# ---------------------------------------------------------------------------
def init_c2f_att_params(key, c1, c2, n=1, e=0.5):
    c = int(c2 * e)
    ks = jax.random.split(key, 8)

    def rnd(k, shape, s=0.05):
        return s * jax.random.normal(k, shape, jnp.float32)

    return {
        "cv1_w": rnd(ks[0], (c1, 2 * c)),        # 1x1: (Cin, Cout)
        "cv1_b": rnd(ks[1], (2 * c,)),
        "m1_w": rnd(ks[2], (n, 3, 3, c, c)),     # bottleneck cv1, HWIO taps
        "m1_b": rnd(ks[3], (n, c)),
        "m2_w": rnd(ks[4], (n, 3, 3, c, c)),     # bottleneck cv2, HWIO taps
        "m2_b": rnd(ks[5], (n, c)),
        "cv2_w": rnd(ks[6], ((2 + n) * c, c2)),  # 1x1 over the concat
        "cv2_b": rnd(ks[7], (c2,)),
    }


# ---------------------------------------------------------------------------
# Forward wrapper
# ---------------------------------------------------------------------------
def c2f_att_forward(x_nchw, params, *, n=1, shortcut=False):
    B, c1, H, W = x_nchw.shape
    c = params["cv1_w"].shape[1] // 2
    c2 = params["cv2_b"].shape[0]
    N = H * W
    pad_off = _round_up(W + 1, 8)          # sublane-aligned image offset
    pad_rows = pad_off + N + W + 8         # room for all 9 shifted windows

    # NCHW -> (B, H*W, C) channels-last (I/O layout conversion only).
    x = jnp.transpose(x_nchw, (0, 2, 3, 1)).reshape(B, N, c1)

    # Host-side weight re-layout (free): bf16 MXU operands, branch-split
    # cv1/cv2 weights, flattened 3x3 taps, f32 biases.
    w1 = params["cv1_w"].astype(jnp.bfloat16)
    w1a, w1b = w1[:, :c], w1[:, c:]
    b1 = params["cv1_b"].astype(jnp.float32)
    b1a, b1b = b1[:c].reshape(1, c), b1[c:].reshape(1, c)
    mw1 = params["m1_w"].reshape(n * 9, c, c).astype(jnp.bfloat16)
    mb1 = params["m1_b"].reshape(n, 1, c).astype(jnp.float32)
    mw2 = params["m2_w"].reshape(n * 9, c, c).astype(jnp.bfloat16)
    mb2 = params["m2_b"].reshape(n, 1, c).astype(jnp.float32)
    w2 = params["cv2_w"].reshape(2 + n, c, c2).astype(jnp.bfloat16)
    b2 = params["cv2_b"].reshape(1, c2).astype(jnp.float32)

    sq = pl.Squeezed()
    rep2 = lambda b: (0, 0)
    rep3 = lambda b: (0, 0, 0)
    kernel = functools.partial(_c2f_att_kernel, H=H, W=W, c=c, n=n,
                               shortcut=shortcut, pad_off=pad_off)
    # NOTE: for large detection resolutions, tile the spatial grid with a halo
    # instead of one full-image block per step; at these sizes one block/image
    # is well inside VMEM on v5e/v6e/v7x.
    out = pl.pallas_call(
        kernel,
        out_shape=jax.ShapeDtypeStruct((B, N, c2), x_nchw.dtype),
        grid=(B,),
        in_specs=[
            pl.BlockSpec((sq, N, c1), lambda b: (b, 0, 0)),   # x (per image)
            pl.BlockSpec((c1, c), rep2),                      # cv1 W chunk 0
            pl.BlockSpec((c1, c), rep2),                      # cv1 W chunk 1
            pl.BlockSpec((1, c), rep2),                       # cv1 b chunk 0
            pl.BlockSpec((1, c), rep2),                       # cv1 b chunk 1
            pl.BlockSpec((n * 9, c, c), rep3),                # bottleneck cv1 W
            pl.BlockSpec((n, 1, c), rep3),                    # bottleneck cv1 b
            pl.BlockSpec((n * 9, c, c), rep3),                # bottleneck cv2 W
            pl.BlockSpec((n, 1, c), rep3),                    # bottleneck cv2 b
            pl.BlockSpec((2 + n, c, c2), rep3),               # cv2 W per branch
            pl.BlockSpec((1, c2), rep2),                      # cv2 b
        ],
        out_specs=pl.BlockSpec((sq, N, c2), lambda b: (b, 0, 0)),
        scratch_shapes=[pltpu.VMEM((pad_rows, c), jnp.float32)],
        compiler_params=pltpu.CompilerParams(
            dimension_semantics=("parallel",)),
    )(x, w1a, w1b, b1a, b1b, mw1, mb1, mw2, mb2, w2, b2)

    return out.reshape(B, H, W, c2).transpose(0, 3, 1, 2)     # back to NCHW


# ---------------------------------------------------------------------------
# Pure-JAX f32 reference (matches the PyTorch forward semantics)
# ---------------------------------------------------------------------------
def c2f_att_reference(x_nchw, params, *, n=1, shortcut=False):
    c = params["cv1_w"].shape[1] // 2
    silu = lambda v: v * jax.nn.sigmoid(v)
    x = jnp.transpose(x_nchw, (0, 2, 3, 1)).astype(jnp.float32)  # NHWC
    y = silu(jnp.einsum("bhwi,io->bhwo", x, params["cv1_w"]) + params["cv1_b"])
    y0, y1 = y[..., :c], y[..., c:]

    def conv3x3(v, w, b):
        o = jax.lax.conv_general_dilated(
            v, w, window_strides=(1, 1), padding="SAME",
            dimension_numbers=("NHWC", "HWIO", "NHWC"))
        return silu(o + b)

    branches = [y0, y1]
    ycur = y1
    for j in range(n):
        t = conv3x3(ycur, params["m1_w"][j], params["m1_b"][j])
        t = conv3x3(t, params["m2_w"][j], params["m2_b"][j])
        ycur = (ycur + t) if shortcut else t
        branches.append(ycur)

    cat = jnp.concatenate(branches, axis=-1)
    out = silu(jnp.einsum("bhwi,io->bhwo", cat, params["cv2_w"])
               + params["cv2_b"])
    return jnp.transpose(out, (0, 3, 1, 2))


if __name__ == "__main__":
    key = jax.random.PRNGKey(0)
    kx, kp = jax.random.split(key)

    # C2f_Att(c1=128, c2=128, n=1, shortcut=False)  ->  c = 64
    B, C1, C2, H, W, n = 2, 128, 128, 16, 16, 1
    x = jax.random.normal(kx, (B, C1, H, W), jnp.float32)
    params = init_c2f_att_params(kp, C1, C2, n=n, e=0.5)

    fwd = jax.jit(functools.partial(c2f_att_forward, n=n, shortcut=False))
    out = jax.block_until_ready(fwd(x, params))
    assert out.shape == (B, C2, H, W)
    assert bool(jnp.all(jnp.isfinite(out)))

    # Validate against the pure-JAX f32 reference (kernel uses bf16 MXU ops).
    ref = c2f_att_reference(x, params, n=n, shortcut=False)
    max_err = float(jnp.max(jnp.abs(out - ref)))
    assert max_err < 8e-2, f"max abs err {max_err}"
    print("KERNEL_OK")
</pallas_src>

<mosaic_0001>
module attributes {stable_mosaic.version = 11 : i64} {
  func.func @_c2f_att_kernel(%arg0: i32, %arg1: memref<1x256x128xf32, #tpu.memory_space<vmem>>, %arg2: memref<128x64xbf16, #tpu.memory_space<vmem>>, %arg3: memref<128x64xbf16, #tpu.memory_space<vmem>>, %arg4: memref<1x64xf32, #tpu.memory_space<vmem>>, %arg5: memref<1x64xf32, #tpu.memory_space<vmem>>, %arg6: memref<9x64x64xbf16, #tpu.memory_space<vmem>>, %arg7: memref<1x1x64xf32, #tpu.memory_space<vmem>>, %arg8: memref<9x64x64xbf16, #tpu.memory_space<vmem>>, %arg9: memref<1x1x64xf32, #tpu.memory_space<vmem>>, %arg10: memref<3x64x128xbf16, #tpu.memory_space<vmem>>, %arg11: memref<1x128xf32, #tpu.memory_space<vmem>>, %arg12: memref<1x256x128xf32, #tpu.memory_space<vmem>>, %arg13: memref<304x64xf32, #tpu.memory_space<vmem>>) attributes {dimension_semantics = [#tpu.dimension_semantics<parallel>], iteration_bounds = array<i64: 2>, scalar_prefetch = 0 : i64, scratch_operands = 1 : i64, tpu.core_type = #tpu.core_type<tc>, window_params = [{transform_indices = @transform_0, window_bounds = array<i64: 1, 256, 128>}, {pipeline_mode = #tpu.pipeline_mode<synchronous>, transform_indices = @transform_1, window_bounds = array<i64: 128, 64>}, {pipeline_mode = #tpu.pipeline_mode<synchronous>, transform_indices = @transform_2, window_bounds = array<i64: 128, 64>}, {pipeline_mode = #tpu.pipeline_mode<synchronous>, transform_indices = @transform_3, window_bounds = array<i64: 1, 64>}, {pipeline_mode = #tpu.pipeline_mode<synchronous>, transform_indices = @transform_4, window_bounds = array<i64: 1, 64>}, {pipeline_mode = #tpu.pipeline_mode<synchronous>, transform_indices = @transform_5, window_bounds = array<i64: 9, 64, 64>}, {pipeline_mode = #tpu.pipeline_mode<synchronous>, transform_indices = @transform_6, window_bounds = array<i64: 1, 1, 64>}, {pipeline_mode = #tpu.pipeline_mode<synchronous>, transform_indices = @transform_7, window_bounds = array<i64: 9, 64, 64>}, {pipeline_mode = #tpu.pipeline_mode<synchronous>, transform_indices = @transform_8, window_bounds = array<i64: 1, 1, 64>}, {pipeline_mode = #tpu.pipeline_mode<synchronous>, transform_indices = @transform_9, window_bounds = array<i64: 3, 64, 128>}, {pipeline_mode = #tpu.pipeline_mode<synchronous>, transform_indices = @transform_10, window_bounds = array<i64: 1, 128>}, {transform_indices = @transform_11, window_bounds = array<i64: 1, 256, 128>}]} {
    %c0 = arith.constant 0 : index
    %c0_0 = arith.constant 0 : index
    %c0_1 = arith.constant 0 : index
    %0 = vector.load %arg1[%c0, %c0_0, %c0_1] : memref<1x256x128xf32, #tpu.memory_space<vmem>>, vector<1x256x128xf32>
    %1 = vector.shape_cast %0 : vector<1x256x128xf32> to vector<256x128xf32>
    %2 = arith.truncf %1 : vector<256x128xf32> to vector<256x128xbf16>
    %c0_2 = arith.constant 0 : index
    %c0_3 = arith.constant 0 : index
    %3 = vector.load %arg2[%c0_2, %c0_3] : memref<128x64xbf16, #tpu.memory_space<vmem>>, vector<128x64xbf16>
    %cst = arith.constant dense<0.000000e+00> : vector<256x64xf32>
    %4 = tpu.matmul %2, %3, %cst {dimension_numbers = #tpu.dot_dimension_numbers<[1], [0], [0], [1], [0, 0, 1, 1], [], []>} : vector<256x128xbf16>, vector<128x64xbf16>, vector<256x64xf32> -> vector<256x64xf32>
    %c0_4 = arith.constant 0 : index
    %c0_5 = arith.constant 0 : index
    %5 = vector.load %arg4[%c0_4, %c0_5] : memref<1x64xf32, #tpu.memory_space<vmem>>, vector<1x64xf32>
    %6 = vector.broadcast %5 : vector<1x64xf32> to vector<256x64xf32>
    %7 = arith.addf %4, %6 : vector<256x64xf32>
    %8 = arith.negf %7 : vector<256x64xf32>
    %9 = math.exp %8 : vector<256x64xf32>
    %cst_6 = arith.constant 1.000000e+00 : f32
    %10 = vector.broadcast %cst_6 : f32 to vector<256x64xf32>
    %11 = arith.addf %10, %9 : vector<256x64xf32>
    %12 = arith.divf %10, %11 : vector<256x64xf32>
    %13 = arith.mulf %7, %12 : vector<256x64xf32>
    %c0_7 = arith.constant 0 : index
    %c0_8 = arith.constant 0 : index
    %14 = vector.load %arg3[%c0_7, %c0_8] : memref<128x64xbf16, #tpu.memory_space<vmem>>, vector<128x64xbf16>
    %cst_9 = arith.constant dense<0.000000e+00> : vector<256x64xf32>
    %15 = tpu.matmul %2, %14, %cst_9 {dimension_numbers = #tpu.dot_dimension_numbers<[1], [0], [0], [1], [0, 0, 1, 1], [], []>} : vector<256x128xbf16>, vector<128x64xbf16>, vector<256x64xf32> -> vector<256x64xf32>
    %c0_10 = arith.constant 0 : index
    %c0_11 = arith.constant 0 : index
    %16 = vector.load %arg5[%c0_10, %c0_11] : memref<1x64xf32, #tpu.memory_space<vmem>>, vector<1x64xf32>
    %17 = vector.broadcast %16 : vector<1x64xf32> to vector<256x64xf32>
    %18 = arith.addf %15, %17 : vector<256x64xf32>
    %19 = arith.negf %18 : vector<256x64xf32>
    %20 = math.exp %19 : vector<256x64xf32>
    %cst_12 = arith.constant 1.000000e+00 : f32
    %21 = vector.broadcast %cst_12 : f32 to vector<256x64xf32>
    %22 = arith.addf %21, %20 : vector<256x64xf32>
    %23 = arith.divf %21, %22 : vector<256x64xf32>
    %24 = arith.mulf %18, %23 : vector<256x64xf32>
    %cst_13 = arith.constant 0.000000e+00 : f32
    %25 = vector.broadcast %cst_13 : f32 to vector<304x64xf32>
    %c0_14 = arith.constant 0 : index
    %c0_15 = arith.constant 0 : index
    %26 = vector.load %arg13[%c0_14, %c0_15] : memref<304x64xf32, #tpu.memory_space<vmem>>, vector<304x64xf32>
    tpu.vector_store %arg13[%c0_14, %c0_15], %25 {strides = array<i32>} : memref<304x64xf32, #tpu.memory_space<vmem>>, vector<304x64xf32>,
    %27 = tpu.iota {dimensions = array<i32: 0>} : vector<256x1xi32>
    %c16_i32 = arith.constant 16 : i32
    %c0_i32 = arith.constant 0 : i32
    %28 = arith.cmpi eq, %c16_i32, %c0_i32 : i32
    %c1_i32 = arith.constant 1 : i32
    %29 = arith.select %28, %c1_i32, %c16_i32 : i32
    %30 = vector.broadcast %29 : i32 to vector<256x1xi32>
    %31 = arith.remsi %27, %30 : vector<256x1xi32>
    %c0_i32_16 = arith.constant 0 : i32
    %32 = vector.broadcast %c0_i32_16 : i32 to vector<256x1xi32>
    %33 = arith.cmpi ne, %31, %32 : vector<256x1xi32>
    %c0_i32_17 = arith.constant 0 : i32
    %34 = vector.broadcast %c0_i32_17 : i32 to vector<256x1xi32>
    %35 = arith.cmpi slt, %31, %34 : vector<256x1xi32>
    %c0_i32_18 = arith.constant 0 : i32
    %36 = arith.cmpi slt, %29, %c0_i32_18 : i32
    %37 = vector.broadcast %36 : i1 to vector<256x1xi1>
    %38 = vector.broadcast %37 : vector<256x1xi1> to vector<256x1xi1>
    %39 = arith.xori %35, %38 : vector<256x1xi1>
    %40 = arith.andi %39, %33 : vector<256x1xi1>
    %41 = vector.broadcast %29 : i32 to vector<256x1xi32>
    %42 = arith.addi %31, %41 : vector<256x1xi32>
    %43 = arith.select %40, %42, %31 : vector<256x1xi1>, vector<256x1xi32>
    %c0_i32_19 = arith.constant 0 : i32
    %44 = vector.broadcast %c0_i32_19 : i32 to vector<256x1xi32>
    %45 = arith.cmpi sgt, %43, %44 : vector<256x1xi32>
    %c15_i32 = arith.constant 15 : i32
    %46 = vector.broadcast %c15_i32 : i32 to vector<256x1xi32>
    %47 = arith.cmpi slt, %43, %46 : vector<256x1xi32>
    %c0_20 = arith.constant 0 : index
    %c0_21 = arith.constant 0 : index
    %c0_22 = arith.constant 0 : index
    %48 = vector.load %arg7[%c0_20, %c0_21, %c0_22] : memref<1x1x64xf32, #tpu.memory_space<vmem>>, vector<1x1x64xf32>
    %49 = vector.shape_cast %48 : vector<1x1x64xf32> to vector<1x64xf32>
    %c24 = arith.constant 24 : index
    %c0_23 = arith.constant 0 : index
    %50 = vector.load %arg13[%c24, %c0_23] : memref<304x64xf32, #tpu.memory_space<vmem>>, vector<256x64xf32>
    tpu.vector_store %arg13[%c24, %c0_23], %24 {strides = array<i32>} : memref<304x64xf32, #tpu.memory_space<vmem>>, vector<256x64xf32>,
    %cst_24 = arith.constant 0.000000e+00 : f32
    %51 = vector.broadcast %cst_24 : f32 to vector<256x64xf32>
    %c7 = arith.constant 7 : index
    %c0_25 = arith.constant 0 : index
    %52 = vector.load %arg13[%c7, %c0_25] : memref<304x64xf32, #tpu.memory_space<vmem>>, vector<256x64xf32>
    %cst_26 = arith.constant 0.000000e+00 : f32
    %53 = vector.shape_cast %45 : vector<256x1xi1> to vector<256x1xi1>
    %54 = vector.broadcast %53 : vector<256x1xi1> to vector<256x64xi1>
    %55 = vector.broadcast %cst_26 : f32 to vector<256x64xf32>
    %56 = arith.select %54, %52, %55 : vector<256x64xi1>, vector<256x64xf32>
    %57 = arith.truncf %56 : vector<256x64xf32> to vector<256x64xbf16>
    %c0_27 = arith.constant 0 : index
    %c0_28 = arith.constant 0 : index
    %c0_29 = arith.constant 0 : index
    %58 = vector.load %arg6[%c0_27, %c0_28, %c0_29] : memref<9x64x64xbf16, #tpu.memory_space<vmem>>, vector<1x64x64xbf16>
    %59 = vector.shape_cast %58 : vector<1x64x64xbf16> to vector<64x64xbf16>
    %cst_30 = arith.constant dense<0.000000e+00> : vector<256x64xf32>
    %60 = tpu.matmul %57, %59, %cst_30 {dimension_numbers = #tpu.dot_dimension_numbers<[1], [0], [0], [1], [0, 0, 1, 1], [], []>} : vector<256x64xbf16>, vector<64x64xbf16>, vector<256x64xf32> -> vector<256x64xf32>
    %61 = arith.addf %51, %60 : vector<256x64xf32>
    %c8 = arith.constant 8 : index
    %c0_31 = arith.constant 0 : index
    %62 = vector.load %arg13[%c8, %c0_31] : memref<304x64xf32, #tpu.memory_space<vmem>>, vector<256x64xf32>
    %63 = arith.truncf %62 : vector<256x64xf32> to vector<256x64xbf16>
    %c1 = arith.constant 1 : index
    %c0_32 = arith.constant 0 : index
    %c0_33 = arith.constant 0 : index
    %64 = vector.load %arg6[%c1, %c0_32, %c0_33] : memref<9x64x64xbf16, #tpu.memory_space<vmem>>, vector<1x64x64xbf16>
    %65 = vector.shape_cast %64 : vector<1x64x64xbf16> to vector<64x64xbf16>
    %cst_34 = arith.constant dense<0.000000e+00> : vector<256x64xf32>
    %66 = tpu.matmul %63, %65, %cst_34 {dimension_numbers = #tpu.dot_dimension_numbers<[1], [0], [0], [1], [0, 0, 1, 1], [], []>} : vector<256x64xbf16>, vector<64x64xbf16>, vector<256x64xf32> -> vector<256x64xf32>
    %67 = arith.addf %61, %66 : vector<256x64xf32>
    %c9 = arith.constant 9 : index
    %c0_35 = arith.constant 0 : index
    %68 = vector.load %arg13[%c9, %c0_35] : memref<304x64xf32, #tpu.memory_space<vmem>>, vector<256x64xf32>
    %cst_36 = arith.constant 0.000000e+00 : f32
    %69 = vector.shape_cast %47 : vector<256x1xi1> to vector<256x1xi1>
    %70 = vector.broadcast %69 : vector<256x1xi1> to vector<256x64xi1>
    %71 = vector.broadcast %cst_36 : f32 to vector<256x64xf32>
    %72 = arith.select %70, %68, %71 : vector<256x64xi1>, vector<256x64xf32>
    %73 = arith.truncf %72 : vector<256x64xf32> to vector<256x64xbf16>
    %c2 = arith.constant 2 : index
    %c0_37 = arith.constant 0 : index
    %c0_38 = arith.constant 0 : index
    %74 = vector.load %arg6[%c2, %c0_37, %c0_38] : memref<9x64x64xbf16, #tpu.memory_space<vmem>>, vector<1x64x64xbf16>
    %75 = vector.shape_cast %74 : vector<1x64x64xbf16> to vector<64x64xbf16>
    %cst_39 = arith.constant dense<0.000000e+00> : vector<256x64xf32>
    %76 = tpu.matmul %73, %75, %cst_39 {dimension_numbers = #tpu.dot_dimension_numbers<[1], [0], [0], [1], [0, 0, 1, 1], [], []>} : vector<256x64xbf16>, vector<64x64xbf16>, vector<256x64xf32> -> vector<256x64xf32>
    %77 = arith.addf %67, %76 : vector<256x64xf32>
    %c23 = arith.constant 23 : index
    %c0_40 = arith.constant 0 : index
    %78 = vector.load %arg13[%c23, %c0_40] : memref<304x64xf32, #tpu.memory_space<vmem>>, vector<256x64xf32>
    %cst_41 = arith.constant 0.000000e+00 : f32
    %79 = vector.shape_cast %45 : vector<256x1xi1> to vector<256x1xi1>
    %80 = vector.broadcast %79 : vector<256x1xi1> to vector<256x64xi1>
    %81 = vector.broadcast %cst_41 : f32 to vector<256x64xf32>
    %82 = arith.select %80, %78, %81 : vector<256x64xi1>, vector<256x64xf32>
    %83 = arith.truncf %82 : vector<256x64xf32> to vector<256x64xbf16>
    %c3 = arith.constant 3 : index
    %c0_42 = arith.constant 0 : index
    %c0_43 = arith.constant 0 : index
    %84 = vector.load %arg6[%c3, %c0_42, %c0_43] : memref<9x64x64xbf16, #tpu.memory_space<vmem>>, vector<1x64x64xbf16>
    %85 = vector.shape_cast %84 : vector<1x64x64xbf16> to vector<64x64xbf16>
    %cst_44 = arith.constant dense<0.000000e+00> : vector<256x64xf32>
    %86 = tpu.matmul %83, %85, %cst_44 {dimension_numbers = #tpu.dot_dimension_numbers<[1], [0], [0], [1], [0, 0, 1, 1], [], []>} : vector<256x64xbf16>, vector<64x64xbf16>, vector<256x64xf32> -> vector<256x64xf32>
    %87 = arith.addf %77, %86 : vector<256x64xf32>
    %88 = arith.truncf %24 : vector<256x64xf32> to vector<256x64xbf16>
    %c4 = arith.constant 4 : index
    %c0_45 = arith.constant 0 : index
    %c0_46 = arith.constant 0 : index
    %89 = vector.load %arg6[%c4, %c0_45, %c0_46] : memref<9x64x64xbf16, #tpu.memory_space<vmem>>, vector<1x64x64xbf16>
    %90 = vector.shape_cast %89 : vector<1x64x64xbf16> to vector<64x64xbf16>
    %cst_47 = arith.constant dense<0.000000e+00> : vector<256x64xf32>
    %91 = tpu.matmul %88, %90, %cst_47 {dimension_numbers = #tpu.dot_dimension_numbers<[1], [0], [0], [1], [0, 0, 1, 1], [], []>} : vector<256x64xbf16>, vector<64x64xbf16>, vector<256x64xf32> -> vector<256x64xf32>
    %92 = arith.addf %87, %91 : vector<256x64xf32>
    %c25 = arith.constant 25 : index
    %c0_48 = arith.constant 0 : index
    %93 = vector.load %arg13[%c25, %c0_48] : memref<304x64xf32, #tpu.memory_space<vmem>>, vector<256x64xf32>
    %cst_49 = arith.constant 0.000000e+00 : f32
    %94 = vector.shape_cast %47 : vector<256x1xi1> to vector<256x1xi1>
    %95 = vector.broadcast %94 : vector<256x1xi1> to vector<256x64xi1>
    %96 = vector.broadcast %cst_49 : f32 to vector<256x64xf32>
    %97 = arith.select %95, %93, %96 : vector<256x64xi1>, vector<256x64xf32>
    %98 = arith.truncf %97 : vector<256x64xf32> to vector<256x64xbf16>
    %c5 = arith.constant 5 : index
    %c0_50 = arith.constant 0 : index
    %c0_51 = arith.constant 0 : index
    %99 = vector.load %arg6[%c5, %c0_50, %c0_51] : memref<9x64x64xbf16, #tpu.memory_space<vmem>>, vector<1x64x64xbf16>
    %100 = vector.shape_cast %99 : vector<1x64x64xbf16> to vector<64x64xbf16>
    %cst_52 = arith.constant dense<0.000000e+00> : vector<256x64xf32>
    %101 = tpu.matmul %98, %100, %cst_52 {dimension_numbers = #tpu.dot_dimension_numbers<[1], [0], [0], [1], [0, 0, 1, 1], [], []>} : vector<256x64xbf16>, vector<64x64xbf16>, vector<256x64xf32> -> vector<256x64xf32>
    %102 = arith.addf %92, %101 : vector<256x64xf32>
    %c39 = arith.constant 39 : index
    %c0_53 = arith.constant 0 : index
    %103 = vector.load %arg13[%c39, %c0_53] : memref<304x64xf32, #tpu.memory_space<vmem>>, vector<256x64xf32>
    %cst_54 = arith.constant 0.000000e+00 : f32
    %104 = vector.shape_cast %45 : vector<256x1xi1> to vector<256x1xi1>
    %105 = vector.broadcast %104 : vector<256x1xi1> to vector<256x64xi1>
    %106 = vector.broadcast %cst_54 : f32 to vector<256x64xf32>
    %107 = arith.select %105, %103, %106 : vector<256x64xi1>, vector<256x64xf32>
    %108 = arith.truncf %107 : vector<256x64xf32> to vector<256x64xbf16>
    %c6 = arith.constant 6 : index
    %c0_55 = arith.constant 0 : index
    %c0_56 = arith.constant 0 : index
    %109 = vector.load %arg6[%c6, %c0_55, %c0_56] : memref<9x64x64xbf16, #tpu.memory_space<vmem>>, vector<1x64x64xbf16>
    %110 = vector.shape_cast %109 : vector<1x64x64xbf16> to vector<64x64xbf16>
    %cst_57 = arith.constant dense<0.000000e+00> : vector<256x64xf32>
    %111 = tpu.matmul %108, %110, %cst_57 {dimension_numbers = #tpu.dot_dimension_numbers<[1], [0], [0], [1], [0, 0, 1, 1], [], []>} : vector<256x64xbf16>, vector<64x64xbf16>, vector<256x64xf32> -> vector<256x64xf32>
    %112 = arith.addf %102, %111 : vector<256x64xf32>
    %c40 = arith.constant 40 : index
    %c0_58 = arith.constant 0 : index
    %113 = vector.load %arg13[%c40, %c0_58] : memref<304x64xf32, #tpu.memory_space<vmem>>, vector<256x64xf32>
    %114 = arith.truncf %113 : vector<256x64xf32> to vector<256x64xbf16>
    %c7_59 = arith.constant 7 : index
    %c0_60 = arith.constant 0 : index
    %c0_61 = arith.constant 0 : index
    %115 = vector.load %arg6[%c7_59, %c0_60, %c0_61] : memref<9x64x64xbf16, #tpu.memory_space<vmem>>, vector<1x64x64xbf16>
    %116 = vector.shape_cast %115 : vector<1x64x64xbf16> to vector<64x64xbf16>
    %cst_62 = arith.constant dense<0.000000e+00> : vector<256x64xf32>
    %117 = tpu.matmul %114, %116, %cst_62 {dimension_numbers = #tpu.dot_dimension_numbers<[1], [0], [0], [1], [0, 0, 1, 1], [], []>} : vector<256x64xbf16>, vector<64x64xbf16>, vector<256x64xf32> -> vector<256x64xf32>
    %118 = arith.addf %112, %117 : vector<256x64xf32>
    %c41 = arith.constant 41 : index
    %c0_63 = arith.constant 0 : index
    %119 = vector.load %arg13[%c41, %c0_63] : memref<304x64xf32, #tpu.memory_space<vmem>>, vector<256x64xf32>
    %cst_64 = arith.constant 0.000000e+00 : f32
    %120 = vector.shape_cast %47 : vector<256x1xi1> to vector<256x1xi1>
    %121 = vector.broadcast %120 : vector<256x1xi1> to vector<256x64xi1>
    %122 = vector.broadcast %cst_64 : f32 to vector<256x64xf32>
    %123 = arith.select %121, %119, %122 : vector<256x64xi1>, vector<256x64xf32>
    %124 = arith.truncf %123 : vector<256x64xf32> to vector<256x64xbf16>
    %c8_65 = arith.constant 8 : index
    %c0_66 = arith.constant 0 : index
    %c0_67 = arith.constant 0 : index
    %125 = vector.load %arg6[%c8_65, %c0_66, %c0_67] : memref<9x64x64xbf16, #tpu.memory_space<vmem>>, vector<1x64x64xbf16>
    %126 = vector.shape_cast %125 : vector<1x64x64xbf16> to vector<64x64xbf16>
    %cst_68 = arith.constant dense<0.000000e+00> : vector<256x64xf32>
    %127 = tpu.matmul %124, %126, %cst_68 {dimension_numbers = #tpu.dot_dimension_numbers<[1], [0], [0], [1], [0, 0, 1, 1], [], []>} : vector<256x64xbf16>, vector<64x64xbf16>, vector<256x64xf32> -> vector<256x64xf32>
    %128 = arith.addf %118, %127 : vector<256x64xf32>
    %129 = vector.broadcast %49 : vector<1x64xf32> to vector<256x64xf32>
    %130 = arith.addf %128, %129 : vector<256x64xf32>
    %131 = arith.negf %130 : vector<256x64xf32>
    %132 = math.exp %131 : vector<256x64xf32>
    %cst_69 = arith.constant 1.000000e+00 : f32
    %133 = vector.broadcast %cst_69 : f32 to vector<256x64xf32>
    %134 = arith.addf %133, %132 : vector<256x64xf32>
    %135 = arith.divf %133, %134 : vector<256x64xf32>
    %136 = arith.mulf %130, %135 : vector<256x64xf32>
    %c0_70 = arith.constant 0 : index
    %c0_71 = arith.constant 0 : index
    %c0_72 = arith.constant 0 : index
    %137 = vector.load %arg9[%c0_70, %c0_71, %c0_72] : memref<1x1x64xf32, #tpu.memory_space<vmem>>, vector<1x1x64xf32>
    %138 = vector.shape_cast %137 : vector<1x1x64xf32> to vector<1x64xf32>
    %c24_73 = arith.constant 24 : index
    %c0_74 = arith.constant 0 : index
    %139 = vector.load %arg13[%c24_73, %c0_74] : memref<304x64xf32, #tpu.memory_space<vmem>>, vector<256x64xf32>
    tpu.vector_store %arg13[%c24_73, %c0_74], %136 {strides = array<i32>} : memref<304x64xf32, #tpu.memory_space<vmem>>, vector<256x64xf32>,
    %cst_75 = arith.constant 0.000000e+00 : f32
    %140 = vector.broadcast %cst_75 : f32 to vector<256x64xf32>
    %c7_76 = arith.constant 7 : index
    %c0_77 = arith.constant 0 : index
    %141 = vector.load %arg13[%c7_76, %c0_77] : memref<304x64xf32, #tpu.memory_space<vmem>>, vector<256x64xf32>
    %cst_78 = arith.constant 0.000000e+00 : f32
    %142 = vector.shape_cast %45 : vector<256x1xi1> to vector<256x1xi1>
    %143 = vector.broadcast %142 : vector<256x1xi1> to vector<256x64xi1>
    %144 = vector.broadcast %cst_78 : f32 to vector<256x64xf32>
    %145 = arith.select %143, %141, %144 : vector<256x64xi1>, vector<256x64xf32>
    %146 = arith.truncf %145 : vector<256x64xf32> to vector<256x64xbf16>
    %c0_79 = arith.constant 0 : index
    %c0_80 = arith.constant 0 : index
    %c0_81 = arith.constant 0 : index
    %147 = vector.load %arg8[%c0_79, %c0_80, %c0_81] : memref<9x64x64xbf16, #tpu.memory_space<vmem>>, vector<1x64x64xbf16>
    %148 = vector.shape_cast %147 : vector<1x64x64xbf16> to vector<64x64xbf16>
    %cst_82 = arith.constant dense<0.000000e+00> : vector<256x64xf32>
    %149 = tpu.matmul %146, %148, %cst_82 {dimension_numbers = #tpu.dot_dimension_numbers<[1], [0], [0], [1], [0, 0, 1, 1], [], []>} : vector<256x64xbf16>, vector<64x64xbf16>, vector<256x64xf32> -> vector<256x64xf32>
    %150 = arith.addf %140, %149 : vector<256x64xf32>
    %c8_83 = arith.constant 8 : index
    %c0_84 = arith.constant 0 : index
    %151 = vector.load %arg13[%c8_83, %c0_84] : memref<304x64xf32, #tpu.memory_space<vmem>>, vector<256x64xf32>
    %152 = arith.truncf %151 : vector<256x64xf32> to vector<256x64xbf16>
    %c1_85 = arith.constant 1 : index
    %c0_86 = arith.constant 0 : index
    %c0_87 = arith.constant 0 : index
    %153 = vector.load %arg8[%c1_85, %c0_86, %c0_87] : memref<9x64x64xbf16, #tpu.memory_space<vmem>>, vector<1x64x64xbf16>
    %154 = vector.shape_cast %153 : vector<1x64x64xbf16> to vector<64x64xbf16>
    %cst_88 = arith.constant dense<0.000000e+00> : vector<256x64xf32>
    %155 = tpu.matmul %152, %154, %cst_88 {dimension_numbers = #tpu.dot_dimension_numbers<[1], [0], [0], [1], [0, 0, 1, 1], [], []>} : vector<256x64xbf16>, vector<64x64xbf16>, vector<256x64xf32> -> vector<256x64xf32>
    %156 = arith.addf %150, %155 : vector<256x64xf32>
    %c9_89 = arith.constant 9 : index
    %c0_90 = arith.constant 0 : index
    %157 = vector.load %arg13[%c9_89, %c0_90] : memref<304x64xf32, #tpu.memory_space<vmem>>, vector<256x64xf32>
    %cst_91 = arith.constant 0.000000e+00 : f32
    %158 = vector.shape_cast %47 : vector<256x1xi1> to vector<256x1xi1>
    %159 = vector.broadcast %158 : vector<256x1xi1> to vector<256x64xi1>
    %160 = vector.broadcast %cst_91 : f32 to vector<256x64xf32>
    %161 = arith.select %159, %157, %160 : vector<256x64xi1>, vector<256x64xf32>
    %162 = arith.truncf %161 : vector<256x64xf32> to vector<256x64xbf16>
    %c2_92 = arith.constant 2 : index
    %c0_93 = arith.constant 0 : index
    %c0_94 = arith.constant 0 : index
    %163 = vector.load %arg8[%c2_92, %c0_93, %c0_94] : memref<9x64x64xbf16, #tpu.memory_space<vmem>>, vector<1x64x64xbf16>
    %164 = vector.shape_cast %163 : vector<1x64x64xbf16> to vector<64x64xbf16>
    %cst_95 = arith.constant dense<0.000000e+00> : vector<256x64xf32>
    %165 = tpu.matmul %162, %164, %cst_95 {dimension_numbers = #tpu.dot_dimension_numbers<[1], [0], [0], [1], [0, 0, 1, 1], [], []>} : vector<256x64xbf16>, vector<64x64xbf16>, vector<256x64xf32> -> vector<256x64xf32>
    %166 = arith.addf %156, %165 : vector<256x64xf32>
    %c23_96 = arith.constant 23 : index
    %c0_97 = arith.constant 0 : index
    %167 = vector.load %arg13[%c23_96, %c0_97] : memref<304x64xf32, #tpu.memory_space<vmem>>, vector<256x64xf32>
    %cst_98 = arith.constant 0.000000e+00 : f32
    %168 = vector.shape_cast %45 : vector<256x1xi1> to vector<256x1xi1>
    %169 = vector.broadcast %168 : vector<256x1xi1> to vector<256x64xi1>
    %170 = vector.broadcast %cst_98 : f32 to vector<256x64xf32>
    %171 = arith.select %169, %167, %170 : vector<256x64xi1>, vector<256x64xf32>
    %172 = arith.truncf %171 : vector<256x64xf32> to vector<256x64xbf16>
    %c3_99 = arith.constant 3 : index
    %c0_100 = arith.constant 0 : index
    %c0_101 = arith.constant 0 : index
    %173 = vector.load %arg8[%c3_99, %c0_100, %c0_101] : memref<9x64x64xbf16, #tpu.memory_space<vmem>>, vector<1x64x64xbf16>
    %174 = vector.shape_cast %173 : vector<1x64x64xbf16> to vector<64x64xbf16>
    %cst_102 = arith.constant dense<0.000000e+00> : vector<256x64xf32>
    %175 = tpu.matmul %172, %174, %cst_102 {dimension_numbers = #tpu.dot_dimension_numbers<[1], [0], [0], [1], [0, 0, 1, 1], [], []>} : vector<256x64xbf16>, vector<64x64xbf16>, vector<256x64xf32> -> vector<256x64xf32>
    %176 = arith.addf %166, %175 : vector<256x64xf32>
    %177 = arith.truncf %136 : vector<256x64xf32> to vector<256x64xbf16>
    %c4_103 = arith.constant 4 : index
    %c0_104 = arith.constant 0 : index
    %c0_105 = arith.constant 0 : index
    %178 = vector.load %arg8[%c4_103, %c0_104, %c0_105] : memref<9x64x64xbf16, #tpu.memory_space<vmem>>, vector<1x64x64xbf16>
    %179 = vector.shape_cast %178 : vector<1x64x64xbf16> to vector<64x64xbf16>
    %cst_106 = arith.constant dense<0.000000e+00> : vector<256x64xf32>
    %180 = tpu.matmul %177, %179, %cst_106 {dimension_numbers = #tpu.dot_dimension_numbers<[1], [0], [0], [1], [0, 0, 1, 1], [], []>} : vector<256x64xbf16>, vector<64x64xbf16>, vector<256x64xf32> -> vector<256x64xf32>
    %181 = arith.addf %176, %180 : vector<256x64xf32>
    %c25_107 = arith.constant 25 : index
    %c0_108 = arith.constant 0 : index
    %182 = vector.load %arg13[%c25_107, %c0_108] : memref<304x64xf32, #tpu.memory_space<vmem>>, vector<256x64xf32>
    %cst_109 = arith.constant 0.000000e+00 : f32
    %183 = vector.shape_cast %47 : vector<256x1xi1> to vector<256x1xi1>
    %184 = vector.broadcast %183 : vector<256x1xi1> to vector<256x64xi1>
    %185 = vector.broadcast %cst_109 : f32 to vector<256x64xf32>
    %186 = arith.select %184, %182, %185 : vector<256x64xi1>, vector<256x64xf32>
    %187 = arith.truncf %186 : vector<256x64xf32> to vector<256x64xbf16>
    %c5_110 = arith.constant 5 : index
    %c0_111 = arith.constant 0 : index
    %c0_112 = arith.constant 0 : index
    %188 = vector.load %arg8[%c5_110, %c0_111, %c0_112] : memref<9x64x64xbf16, #tpu.memory_space<vmem>>, vector<1x64x64xbf16>
    %189 = vector.shape_cast %188 : vector<1x64x64xbf16> to vector<64x64xbf16>
    %cst_113 = arith.constant dense<0.000000e+00> : vector<256x64xf32>
    %190 = tpu.matmul %187, %189, %cst_113 {dimension_numbers = #tpu.dot_dimension_numbers<[1], [0], [0], [1], [0, 0, 1, 1], [], []>} : vector<256x64xbf16>, vector<64x64xbf16>, vector<256x64xf32> -> vector<256x64xf32>
    %191 = arith.addf %181, %190 : vector<256x64xf32>
    %c39_114 = arith.constant 39 : index
    %c0_115 = arith.constant 0 : index
    %192 = vector.load %arg13[%c39_114, %c0_115] : memref<304x64xf32, #tpu.memory_space<vmem>>, vector<256x64xf32>
    %cst_116 = arith.constant 0.000000e+00 : f32
    %193 = vector.shape_cast %45 : vector<256x1xi1> to vector<256x1xi1>
    %194 = vector.broadcast %193 : vector<256x1xi1> to vector<256x64xi1>
    %195 = vector.broadcast %cst_116 : f32 to vector<256x64xf32>
    %196 = arith.select %194, %192, %195 : vector<256x64xi1>, vector<256x64xf32>
    %197 = arith.truncf %196 : vector<256x64xf32> to vector<256x64xbf16>
    %c6_117 = arith.constant 6 : index
    %c0_118 = arith.constant 0 : index
    %c0_119 = arith.constant 0 : index
    %198 = vector.load %arg8[%c6_117, %c0_118, %c0_119] : memref<9x64x64xbf16, #tpu.memory_space<vmem>>, vector<1x64x64xbf16>
    %199 = vector.shape_cast %198 : vector<1x64x64xbf16> to vector<64x64xbf16>
    %cst_120 = arith.constant dense<0.000000e+00> : vector<256x64xf32>
    %200 = tpu.matmul %197, %199, %cst_120 {dimension_numbers = #tpu.dot_dimension_numbers<[1], [0], [0], [1], [0, 0, 1, 1], [], []>} : vector<256x64xbf16>, vector<64x64xbf16>, vector<256x64xf32> -> vector<256x64xf32>
    %201 = arith.addf %191, %200 : vector<256x64xf32>
    %c40_121 = arith.constant 40 : index
    %c0_122 = arith.constant 0 : index
    %202 = vector.load %arg13[%c40_121, %c0_122] : memref<304x64xf32, #tpu.memory_space<vmem>>, vector<256x64xf32>
    %203 = arith.truncf %202 : vector<256x64xf32> to vector<256x64xbf16>
    %c7_123 = arith.constant 7 : index
    %c0_124 = arith.constant 0 : index
    %c0_125 = arith.constant 0 : index
    %204 = vector.load %arg8[%c7_123, %c0_124, %c0_125] : memref<9x64x64xbf16, #tpu.memory_space<vmem>>, vector<1x64x64xbf16>
    %205 = vector.shape_cast %204 : vector<1x64x64xbf16> to vector<64x64xbf16>
    %cst_126 = arith.constant dense<0.000000e+00> : vector<256x64xf32>
    %206 = tpu.matmul %203, %205, %cst_126 {dimension_numbers = #tpu.dot_dimension_numbers<[1], [0], [0], [1], [0, 0, 1, 1], [], []>} : vector<256x64xbf16>, vector<64x64xbf16>, vector<256x64xf32> -> vector<256x64xf32>
    %207 = arith.addf %201, %206 : vector<256x64xf32>
    %c41_127 = arith.constant 41 : index
    %c0_128 = arith.constant 0 : index
    %208 = vector.load %arg13[%c41_127, %c0_128] : memref<304x64xf32, #tpu.memory_space<vmem>>, vector<256x64xf32>
    %cst_129 = arith.constant 0.000000e+00 : f32
    %209 = vector.shape_cast %47 : vector<256x1xi1> to vector<256x1xi1>
    %210 = vector.broadcast %209 : vector<256x1xi1> to vector<256x64xi1>
    %211 = vector.broadcast %cst_129 : f32 to vector<256x64xf32>
    %212 = arith.select %210, %208, %211 : vector<256x64xi1>, vector<256x64xf32>
    %213 = arith.truncf %212 : vector<256x64xf32> to vector<256x64xbf16>
    %c8_130 = arith.constant 8 : index
    %c0_131 = arith.constant 0 : index
    %c0_132 = arith.constant 0 : index
    %214 = vector.load %arg8[%c8_130, %c0_131, %c0_132] : memref<9x64x64xbf16, #tpu.memory_space<vmem>>, vector<1x64x64xbf16>
    %215 = vector.shape_cast %214 : vector<1x64x64xbf16> to vector<64x64xbf16>
    %cst_133 = arith.constant dense<0.000000e+00> : vector<256x64xf32>
    %216 = tpu.matmul %213, %215, %cst_133 {dimension_numbers = #tpu.dot_dimension_numbers<[1], [0], [0], [1], [0, 0, 1, 1], [], []>} : vector<256x64xbf16>, vector<64x64xbf16>, vector<256x64xf32> -> vector<256x64xf32>
    %217 = arith.addf %207, %216 : vector<256x64xf32>
    %218 = vector.broadcast %138 : vector<1x64xf32> to vector<256x64xf32>
    %219 = arith.addf %217, %218 : vector<256x64xf32>
    %220 = arith.negf %219 : vector<256x64xf32>
    %221 = math.exp %220 : vector<256x64xf32>
    %cst_134 = arith.constant 1.000000e+00 : f32
    %222 = vector.broadcast %cst_134 : f32 to vector<256x64xf32>
    %223 = arith.addf %222, %221 : vector<256x64xf32>
    %224 = arith.divf %222, %223 : vector<256x64xf32>
    %225 = arith.mulf %219, %224 : vector<256x64xf32>
    %c0_135 = arith.constant 0 : index
    %c0_136 = arith.constant 0 : index
    %226 = vector.load %arg11[%c0_135, %c0_136] : memref<1x128xf32, #tpu.memory_space<vmem>>, vector<1x128xf32>
    %227 = arith.truncf %13 : vector<256x64xf32> to vector<256x64xbf16>
    %c0_137 = arith.constant 0 : index
    %c0_138 = arith.constant 0 : index
    %c0_139 = arith.constant 0 : index
    %228 = vector.load %arg10[%c0_137, %c0_138, %c0_139] : memref<3x64x128xbf16, #tpu.memory_space<vmem>>, vector<1x64x128xbf16>
    %229 = vector.shape_cast %228 : vector<1x64x128xbf16> to vector<64x128xbf16>
    %cst_140 = arith.constant dense<0.000000e+00> : vector<256x128xf32>
    %230 = tpu.matmul %227, %229, %cst_140 {dimension_numbers = #tpu.dot_dimension_numbers<[1], [0], [0], [1], [0, 0, 1, 1], [], []>} : vector<256x64xbf16>, vector<64x128xbf16>, vector<256x128xf32> -> vector<256x128xf32>
    %231 = vector.broadcast %226 : vector<1x128xf32> to vector<256x128xf32>
    %232 = arith.addf %231, %230 : vector<256x128xf32>
    %233 = arith.truncf %24 : vector<256x64xf32> to vector<256x64xbf16>
    %c1_141 = arith.constant 1 : index
    %c0_142 = arith.constant 0 : index
    %c0_143 = arith.constant 0 : index
    %234 = vector.load %arg10[%c1_141, %c0_142, %c0_143] : memref<3x64x128xbf16, #tpu.memory_space<vmem>>, vector<1x64x128xbf16>
    %235 = vector.shape_cast %234 : vector<1x64x128xbf16> to vector<64x128xbf16>
    %cst_144 = arith.constant dense<0.000000e+00> : vector<256x128xf32>
    %236 = tpu.matmul %233, %235, %cst_144 {dimension_numbers = #tpu.dot_dimension_numbers<[1], [0], [0], [1], [0, 0, 1, 1], [], []>} : vector<256x64xbf16>, vector<64x128xbf16>, vector<256x128xf32> -> vector<256x128xf32>
    %237 = arith.addf %232, %236 : vector<256x128xf32>
    %238 = arith.truncf %225 : vector<256x64xf32> to vector<256x64xbf16>
    %c2_145 = arith.constant 2 : index
    %c0_146 = arith.constant 0 : index
    %c0_147 = arith.constant 0 : index
    %239 = vector.load %arg10[%c2_145, %c0_146, %c0_147] : memref<3x64x128xbf16, #tpu.memory_space<vmem>>, vector<1x64x128xbf16>
    %240 = vector.shape_cast %239 : vector<1x64x128xbf16> to vector<64x128xbf16>
    %cst_148 = arith.constant dense<0.000000e+00> : vector<256x128xf32>
    %241 = tpu.matmul %238, %240, %cst_148 {dimension_numbers = #tpu.dot_dimension_numbers<[1], [0], [0], [1], [0, 0, 1, 1], [], []>} : vector<256x64xbf16>, vector<64x128xbf16>, vector<256x128xf32> -> vector<256x128xf32>
    %242 = arith.addf %237, %241 : vector<256x128xf32>
    %243 = arith.negf %242 : vector<256x128xf32>
    %244 = math.exp %243 : vector<256x128xf32>
    %cst_149 = arith.constant 1.000000e+00 : f32
    %245 = vector.broadcast %cst_149 : f32 to vector<256x128xf32>
    %246 = arith.addf %245, %244 : vector<256x128xf32>
    %247 = arith.divf %245, %246 : vector<256x128xf32>
    %248 = arith.mulf %242, %247 : vector<256x128xf32>
    %c0_150 = arith.constant 0 : index
    %c0_151 = arith.constant 0 : index
    %c0_152 = arith.constant 0 : index
    %249 = vector.load %arg12[%c0_150, %c0_151, %c0_152] : memref<1x256x128xf32, #tpu.memory_space<vmem>>, vector<1x256x128xf32>
    %250 = vector.shape_cast %249 : vector<1x256x128xf32> to vector<256x128xf32>
    %251 = vector.shape_cast %248 : vector<256x128xf32> to vector<1x256x128xf32>
    tpu.vector_store %arg12[%c0_150, %c0_151, %c0_152], %251 {strides = array<i32>} : memref<1x256x128xf32, #tpu.memory_space<vmem>>, vector<1x256x128xf32>,
    return
  }
  func.func @transform_0(%arg0: i32) -> (i32, i32, i32) {
    %c0_i32 = arith.constant 0 : i32
    %c0_i32_0 = arith.constant 0 : i32
    %c0_i32_1 = arith.constant 0 : i32
    return %arg0, %c0_i32, %c0_i32_0 : i32, i32, i32
  }
  func.func @transform_1(%arg0: i32) -> (i32, i32) {
    %c0_i32 = arith.constant 0 : i32
    %c0_i32_0 = arith.constant 0 : i32
    %c0_i32_1 = arith.constant 0 : i32
    return %c0_i32, %c0_i32_0 : i32, i32
  }
  func.func @transform_2(%arg0: i32) -> (i32, i32) {
    %c0_i32 = arith.constant 0 : i32
    %c0_i32_0 = arith.constant 0 : i32
    %c0_i32_1 = arith.constant 0 : i32
    return %c0_i32, %c0_i32_0 : i32, i32
  }
  func.func @transform_3(%arg0: i32) -> (i32, i32) {
    %c0_i32 = arith.constant 0 : i32
    %c0_i32_0 = arith.constant 0 : i32
    %c0_i32_1 = arith.constant 0 : i32
    return %c0_i32, %c0_i32_0 : i32, i32
  }
  func.func @transform_4(%arg0: i32) -> (i32, i32) {
    %c0_i32 = arith.constant 0 : i32
    %c0_i32_0 = arith.constant 0 : i32
    %c0_i32_1 = arith.constant 0 : i32
    return %c0_i32, %c0_i32_0 : i32, i32
  }
  func.func @transform_5(%arg0: i32) -> (i32, i32, i32) {
    %c0_i32 = arith.constant 0 : i32
    %c0_i32_0 = arith.constant 0 : i32
    %c0_i32_1 = arith.constant 0 : i32
    %c0_i32_2 = arith.constant 0 : i32
    return %c0_i32, %c0_i32_0, %c0_i32_1 : i32, i32, i32
  }
  func.func @transform_6(%arg0: i32) -> (i32, i32, i32) {
    %c0_i32 = arith.constant 0 : i32
    %c0_i32_0 = arith.constant 0 : i32
    %c0_i32_1 = arith.constant 0 : i32
    %c0_i32_2 = arith.constant 0 : i32
    return %c0_i32, %c0_i32_0, %c0_i32_1 : i32, i32, i32
  }
  func.func @transform_7(%arg0: i32) -> (i32, i32, i32) {
    %c0_i32 = arith.constant 0 : i32
    %c0_i32_0 = arith.constant 0 : i32
    %c0_i32_1 = arith.constant 0 : i32
    %c0_i32_2 = arith.constant 0 : i32
    return %c0_i32, %c0_i32_0, %c0_i32_1 : i32, i32, i32
  }
  func.func @transform_8(%arg0: i32) -> (i32, i32, i32) {
    %c0_i32 = arith.constant 0 : i32
    %c0_i32_0 = arith.constant 0 : i32
    %c0_i32_1 = arith.constant 0 : i32
    %c0_i32_2 = arith.constant 0 : i32
    return %c0_i32, %c0_i32_0, %c0_i32_1 : i32, i32, i32
  }
  func.func @transform_9(%arg0: i32) -> (i32, i32, i32) {
    %c0_i32 = arith.constant 0 : i32
    %c0_i32_0 = arith.constant 0 : i32
    %c0_i32_1 = arith.constant 0 : i32
    %c0_i32_2 = arith.constant 0 : i32
    return %c0_i32, %c0_i32_0, %c0_i32_1 : i32, i32, i32
  }
  func.func @transform_10(%arg0: i32) -> (i32, i32) {
    %c0_i32 = arith.constant 0 : i32
    %c0_i32_0 = arith.constant 0 : i32
    %c0_i32_1 = arith.constant 0 : i32
    return %c0_i32, %c0_i32_0 : i32, i32
  }
  func.func @transform_11(%arg0: i32) -> (i32, i32, i32) {
    %c0_i32 = arith.constant 0 : i32
    %c0_i32_0 = arith.constant 0 : i32
    %c0_i32_1 = arith.constant 0 : i32
    return %arg0, %c0_i32, %c0_i32_0 : i32, i32, i32
  }
}

</mosaic_0001>

<llo_original>
// kernel: c2f_att_forward.1
$region0: #{c2f_att_forward.1}
  #allocation0 [shape = 'u32[]', space=smem, size = 0x4, offset = 0x4, fixed_abs, tag = 'smem constant byte address 0x4 - core index']
  #allocation1 [shape = 'u32[144,128]{1,0:T(1,128)}', space=vmem, size = 0x12000, scoped, tag = 'internal scratch']
  #allocation2 [shape = 'f32[304,64]{1,0:T(8,128)}', space=vmem, size = 0x26000, scoped, tag = 'scratch operand']
  %s0 = inlined_call_operand.vmem [shape: f32[2,256,128], index: 0, kind: input, shape index: {}]
  %s1 = inlined_call_operand.vmem [shape: bf16[128,64], index: 1, kind: input, shape index: {}]
  %s2 = inlined_call_operand.vmem [shape: bf16[128,64], index: 2, kind: input, shape index: {}]
  %s3 = inlined_call_operand.vmem [shape: f32[1,64], index: 3, kind: input, shape index: {}]
  %s4 = inlined_call_operand.vmem [shape: f32[1,64], index: 4, kind: input, shape index: {}]
  %s5 = inlined_call_operand.vmem [shape: bf16[9,64,64], index: 5, kind: input, shape index: {}]
  %s6 = inlined_call_operand.vmem [shape: f32[1,1,64], index: 6, kind: input, shape index: {}]
  %s7 = inlined_call_operand.vmem [shape: bf16[9,64,64], index: 7, kind: input, shape index: {}]
  %s8 = inlined_call_operand.vmem [shape: f32[1,1,64], index: 8, kind: input, shape index: {}]
  %s9 = inlined_call_operand.vmem [shape: bf16[3,64,128], index: 9, kind: input, shape index: {}]
  %s10 = inlined_call_operand.vmem [shape: f32[1,128], index: 10, kind: input, shape index: {}]
  %s11 = inlined_call_operand.hbm [shape: f32[2,256,128], index: 11, kind: output, shape index: {}]
  %s12 = sld [smem:[#allocation0]]
  $region77: #{c2f_att_forward.1} parent=0
    _
  %s14 = ssub.s32 1, %s12
  %s15 = scalar_select 0, %s14, %s12
  $region1: #{c2f_att_forward.1} parent=0
    #allocation3 [shape = 'u8[262144]{0}', space=vmem, size = 0x40000, scoped, tag = 'output window, operand 0']
    #allocation4 [shape = 's32[2]{0}', space=sflag, size = 0x8, scoped, tag = 'scoped memory for c2f_att_forward.1']
    %16 = vsyncpa [#allocation4], 0
    %s17 = scalar_lea.sflag [#allocation4], 1
    %18 = vsyncpa %s17, 0
    loop: start=0, step=1, limit=4
    $region2: #{c2f_att_forward.1} parent=1 // loop_pre_header
      _
    $region3: #{c2f_att_forward.1} parent=1 // loop_header
      %s20 = sphi 0, %s24
      %p21 = scmp.ge.s32.totalorder %s20, 4
      %s30 = sphi 0, %s32
      %s33 = sphi 0, %s30
      %s34 = sphi 0, %s33
      %s50 = sphi 0, %s34
      %s54 = sphi 0, %s54
      %s56 = sphi 0, %s54
      %s57 = sphi 0, %s56
      %s71 = sphi 0, %s57
      %s75 = sphi 0, %s75
      %s77 = sphi 0, %s75
      %s78 = sphi 0, %s77
      %s92 = sphi 0, %s78
      %s96 = sphi 0, %s96
      %s98 = sphi 0, %s96
      %s99 = sphi 0, %s98
      %s113 = sphi 0, %s99
      %s117 = sphi 0, %s117
      %s119 = sphi 0, %s117
      %s120 = sphi 0, %s119
      %s134 = sphi 0, %s120
      %s138 = sphi 0, %s138
      %s140 = sphi 0, %s138
      %s141 = sphi 0, %s140
      %s155 = sphi 0, %s141
      %s159 = sphi 0, %s159
      %s161 = sphi 0, %s159
      %s162 = sphi 0, %s161
      %s176 = sphi 0, %s162
      %s180 = sphi 0, %s180
      %s182 = sphi 0, %s180
      %s183 = sphi 0, %s182
      %s197 = sphi 0, %s183
      %s201 = sphi 0, %s201
      %s203 = sphi 0, %s201
      %s204 = sphi 0, %s203
      %s218 = sphi 0, %s204
      %s222 = sphi 0, %s222
      %s224 = sphi 0, %s222
      %s225 = sphi 0, %s224
      %s239 = sphi 0, %s225
      %s243 = sphi 0, %s243
      %s245 = sphi 0, %s243
      %s246 = sphi 0, %s245
      %s260 = sphi 0, %s246
      %s266 = sphi 0, %s268
      %s269 = sphi 0, %s266
      %s270 = sphi 0, %s269
      %s286 = sphi 0, %s270
    $region4: #{c2f_att_forward.1} parent=1 // loop_header_branch
      %23 = sbr.rel (%p21) target = $region8
    $region5: #{c2f_att_forward.1} parent=1 // loop_body
      %s25 = ssub.s32 %s20, 1
      %s26 = ssub.s32 %s20, 2
      %s27 = sadd.s32 %s20, 1
      %s28 = ssub.s32 %s20, %s27
      %p29 = scmp.eq.s32.totalorder %s28, 0
      %s31 = sadd.s32 %s30, 1
      %s32 = scalar_select %p29, %s30, %s31
      %p35 = pneg %p29
      %p36 = scmp.eq.s32.totalorder %s20, 1
      %p37 = por %p35, %p36
      %p38 = scmp.ne.s32.totalorder %s30, %s33
      %p39 = scmp.eq.s32.totalorder %s20, 0
      %p40 = por %p38, %p39
      %p41 = scmp.ne.s32.totalorder %s30, %s33
      %p42 = scmp.eq.s32.totalorder %s25, 1
      %p43 = por %p41, %p42
      %p44 = scmp.ne.s32.totalorder %s33, %s34
      %p45 = scmp.eq.s32.totalorder %s25, 0
      %p46 = por %p44, %p45
      %p47 = scmp.ne.s32.totalorder %s33, %s34
      %p48 = scmp.eq.s32.totalorder %s26, 1
      %p49 = por %p47, %p48
      %p51 = scmp.ne.s32.totalorder %s34, %s50
      %p52 = scmp.eq.s32.totalorder %s26, 0
      %p53 = por %p51, %p52
      %s55 = sadd.s32 %s54, 1
      %p58 = scmp.eq.s32.totalorder %s20, 1
      %p59 = scmp.ne.s32.totalorder %s54, %s56
      %p60 = scmp.eq.s32.totalorder %s20, 0
      %p61 = por %p59, %p60
      %p62 = scmp.ne.s32.totalorder %s54, %s56
      %p63 = scmp.eq.s32.totalorder %s25, 1
      %p64 = por %p62, %p63
      %p65 = scmp.ne.s32.totalorder %s56, %s57
      %p66 = scmp.eq.s32.totalorder %s25, 0
      %p67 = por %p65, %p66
      %p68 = scmp.ne.s32.totalorder %s56, %s57
      %p69 = scmp.eq.s32.totalorder %s26, 1
      %p70 = por %p68, %p69
      %p72 = scmp.ne.s32.totalorder %s57, %s71
      %p73 = scmp.eq.s32.totalorder %s26, 0
      %p74 = por %p72, %p73
      %s76 = sadd.s32 %s75, 1
      %p79 = scmp.eq.s32.totalorder %s20, 1
      %p80 = scmp.ne.s32.totalorder %s75, %s77
      %p81 = scmp.eq.s32.totalorder %s20, 0
      %p82 = por %p80, %p81
      %p83 = scmp.ne.s32.totalorder %s75, %s77
      %p84 = scmp.eq.s32.totalorder %s25, 1
      %p85 = por %p83, %p84
      %p86 = scmp.ne.s32.totalorder %s77, %s78
      %p87 = scmp.eq.s32.totalorder %s25, 0
      %p88 = por %p86, %p87
      %p89 = scmp.ne.s32.totalorder %s77, %s78
      %p90 = scmp.eq.s32.totalorder %s26, 1
      %p91 = por %p89, %p90
      %p93 = scmp.ne.s32.totalorder %s78, %s92
      %p94 = scmp.eq.s32.totalorder %s26, 0
      %p95 = por %p93, %p94
      %s97 = sadd.s32 %s96, 1
      %p100 = scmp.eq.s32.totalorder %s20, 1
      %p101 = scmp.ne.s32.totalorder %s96, %s98
      %p102 = scmp.eq.s32.totalorder %s20, 0
      %p103 = por %p101, %p102
      %p104 = scmp.ne.s32.totalorder %s96, %s98
      %p105 = scmp.eq.s32.totalorder %s25, 1
      %p106 = por %p104, %p105
      %p107 = scmp.ne.s32.totalorder %s98, %s99
      %p108 = scmp.eq.s32.totalorder %s25, 0
      %p109 = por %p107, %p108
      %p110 = scmp.ne.s32.totalorder %s98, %s99
      %p111 = scmp.eq.s32.totalorder %s26, 1
      %p112 = por %p110, %p111
      %p114 = scmp.ne.s32.totalorder %s99, %s113
      %p115 = scmp.eq.s32.totalorder %s26, 0
      %p116 = por %p114, %p115
      %s118 = sadd.s32 %s117, 1
      %p121 = scmp.eq.s32.totalorder %s20, 1
      %p122 = scmp.ne.s32.totalorder %s117, %s119
      %p123 = scmp.eq.s32.totalorder %s20, 0
      %p124 = por %p122, %p123
      %p125 = scmp.ne.s32.totalorder %s117, %s119
      %p126 = scmp.eq.s32.totalorder %s25, 1
      %p127 = por %p125, %p126
      %p128 = scmp.ne.s32.totalorder %s119, %s120
      %p129 = scmp.eq.s32.totalorder %s25, 0
      %p130 = por %p128, %p129
      %p131 = scmp.ne.s32.totalorder %s119, %s120
      %p132 = scmp.eq.s32.totalorder %s26, 1
      %p133 = por %p131, %p132
      %p135 = scmp.ne.s32.totalorder %s120, %s134
      %p136 = scmp.eq.s32.totalorder %s26, 0
      %p137 = por %p135, %p136
      %s139 = sadd.s32 %s138, 1
      %p142 = scmp.eq.s32.totalorder %s20, 1
      %p143 = scmp.ne.s32.totalorder %s138, %s140
      %p144 = scmp.eq.s32.totalorder %s20, 0
      %p145 = por %p143, %p144
      %p146 = scmp.ne.s32.totalorder %s138, %s140
      %p147 = scmp.eq.s32.totalorder %s25, 1
      %p148 = por %p146, %p147
      %p149 = scmp.ne.s32.totalorder %s140, %s141
      %p150 = scmp.eq.s32.totalorder %s25, 0
      %p151 = por %p149, %p150
      %p152 = scmp.ne.s32.totalorder %s140, %s141
      %p153 = scmp.eq.s32.totalorder %s26, 1
      %p154 = por %p152, %p153
      %p156 = scmp.ne.s32.totalorder %s141, %s155
      %p157 = scmp.eq.s32.totalorder %s26, 0
      %p158 = por %p156, %p157
      %s160 = sadd.s32 %s159, 1
      %p163 = scmp.eq.s32.totalorder %s20, 1
      %p164 = scmp.ne.s32.totalorder %s159, %s161
      %p165 = scmp.eq.s32.totalorder %s20, 0
      %p166 = por %p164, %p165
      %p167 = scmp.ne.s32.totalorder %s159, %s161
      %p168 = scmp.eq.s32.totalorder %s25, 1
      %p169 = por %p167, %p168
      %p170 = scmp.ne.s32.totalorder %s161, %s162
      %p171 = scmp.eq.s32.totalorder %s25, 0
      %p172 = por %p170, %p171
      %p173 = scmp.ne.s32.totalorder %s161, %s162
      %p174 = scmp.eq.s32.totalorder %s26, 1
      %p175 = por %p173, %p174
      %p177 = scmp.ne.s32.totalorder %s162, %s176
      %p178 = scmp.eq.s32.totalorder %s26, 0
      %p179 = por %p177, %p178
      %s181 = sadd.s32 %s180, 1
      %p184 = scmp.eq.s32.totalorder %s20, 1
      %p185 = scmp.ne.s32.totalorder %s180, %s182
      %p186 = scmp.eq.s32.totalorder %s20, 0
      %p187 = por %p185, %p186
      %p188 = scmp.ne.s32.totalorder %s180, %s182
      %p189 = scmp.eq.s32.totalorder %s25, 1
      %p190 = por %p188, %p189
      %p191 = scmp.ne.s32.totalorder %s182, %s183
      %p192 = scmp.eq.s32.totalorder %s25, 0
      %p193 = por %p191, %p192
      %p194 = scmp.ne.s32.totalorder %s182, %s183
      %p195 = scmp.eq.s32.totalorder %s26, 1
      %p196 = por %p194, %p195
      %p198 = scmp.ne.s32.totalorder %s183, %s197
      %p199 = scmp.eq.s32.totalorder %s26, 0
      %p200 = por %p198, %p199
      %s202 = sadd.s32 %s201, 1
      %p205 = scmp.eq.s32.totalorder %s20, 1
      %p206 = scmp.ne.s32.totalorder %s201, %s203
      %p207 = scmp.eq.s32.totalorder %s20, 0
      %p208 = por %p206, %p207
      %p209 = scmp.ne.s32.totalorder %s201, %s203
      %p210 = scmp.eq.s32.totalorder %s25, 1
      %p211 = por %p209, %p210
      %p212 = scmp.ne.s32.totalorder %s203, %s204
      %p213 = scmp.eq.s32.totalorder %s25, 0
      %p214 = por %p212, %p213
      %p215 = scmp.ne.s32.totalorder %s203, %s204
      %p216 = scmp.eq.s32.totalorder %s26, 1
      %p217 = por %p215, %p216
      %p219 = scmp.ne.s32.totalorder %s204, %s218
      %p220 = scmp.eq.s32.totalorder %s26, 0
      %p221 = por %p219, %p220
      %s223 = sadd.s32 %s222, 1
      %p226 = scmp.eq.s32.totalorder %s20, 1
      %p227 = scmp.ne.s32.totalorder %s222, %s224
      %p228 = scmp.eq.s32.totalorder %s20, 0
      %p229 = por %p227, %p228
      %p230 = scmp.ne.s32.totalorder %s222, %s224
      %p231 = scmp.eq.s32.totalorder %s25, 1
      %p232 = por %p230, %p231
      %p233 = scmp.ne.s32.totalorder %s224, %s225
      %p234 = scmp.eq.s32.totalorder %s25, 0
      %p235 = por %p233, %p234
      %p236 = scmp.ne.s32.totalorder %s224, %s225
      %p237 = scmp.eq.s32.totalorder %s26, 1
      %p238 = por %p236, %p237
      %p240 = scmp.ne.s32.totalorder %s225, %s239
      %p241 = scmp.eq.s32.totalorder %s26, 0
      %p242 = por %p240, %p241
      %s244 = sadd.s32 %s243, 1
      %p247 = scmp.eq.s32.totalorder %s20, 1
      %p248 = scmp.ne.s32.totalorder %s243, %s245
      %p249 = scmp.eq.s32.totalorder %s20, 0
      %p250 = por %p248, %p249
      %p251 = scmp.ne.s32.totalorder %s243, %s245
      %p252 = scmp.eq.s32.totalorder %s25, 1
      %p253 = por %p251, %p252
      %p254 = scmp.ne.s32.totalorder %s245, %s246
      %p255 = scmp.eq.s32.totalorder %s25, 0
      %p256 = por %p254, %p255
      %p257 = scmp.ne.s32.totalorder %s245, %s246
      %p258 = scmp.eq.s32.totalorder %s26, 1
      %p259 = por %p257, %p258
      %p261 = scmp.ne.s32.totalorder %s246, %s260
      %p262 = scmp.eq.s32.totalorder %s26, 0
      %p263 = por %p261, %p262
      %s264 = ssub.s32 %s20, %s27
      %p265 = scmp.eq.s32.totalorder %s264, 0
      %s267 = sadd.s32 %s266, 1
      %s268 = scalar_select %p265, %s266, %s267
      %p271 = pneg %p265
      %p272 = scmp.eq.s32.totalorder %s20, 1
      %p273 = por %p271, %p272
      %p274 = scmp.ne.s32.totalorder %s266, %s269
      %p275 = scmp.eq.s32.totalorder %s20, 0
      %p276 = por %p274, %p275
      %p277 = scmp.ne.s32.totalorder %s266, %s269
      %p278 = scmp.eq.s32.totalorder %s25, 1
      %p279 = por %p277, %p278
      %p280 = scmp.ne.s32.totalorder %s269, %s270
      %p281 = scmp.eq.s32.totalorder %s25, 0
      %p282 = por %p280, %p281
      %p283 = scmp.ne.s32.totalorder %s269, %s270
      %p284 = scmp.eq.s32.totalorder %s26, 1
      %p285 = por %p283, %p284
      %p287 = scmp.ne.s32.totalorder %s270, %s286
      %p288 = scmp.eq.s32.totalorder %s26, 0
      %p289 = por %p287, %p288
      %p290 = scmp.le.s32.totalorder 1, %s20
      %p291 = scmp.lt.s32.totalorder %s20, 3
      %p292 = pnand %p290, %p291
      %p293 = pneg %p292
      // Predicated region
      $region9: #{c2f_att_forward.1} parent=5 // pred_check
        _
      $region10: #{c2f_att_forward.1} parent=5 // pred_check_branch
        %295 = sbr.rel (%p292) target = $region12
      $region11: #{c2f_att_forward.1} parent=5 // pred_region
        %s296 = ssub.s32 %s20, 1
        // Predicated region
        $region13: #{c2f_att_forward.1} parent=11 // pred_check
          %p297 = pneg %p67
        $region14: #{c2f_att_forward.1} parent=11 // pred_check_branch
          %299 = sbr.rel (%p297) target = $region16
        $region15: #{c2f_att_forward.1} parent=11 // pred_region
          _
        $region16: #{c2f_att_forward.1} parent=11 // pred_fallthru
          _
        // Predicated region
        $region17: #{c2f_att_forward.1} parent=11 // pred_check
          %p300 = pneg %p88
        $region18: #{c2f_att_forward.1} parent=11 // pred_check_branch
          %302 = sbr.rel (%p300) target = $region20
        $region19: #{c2f_att_forward.1} parent=11 // pred_region
          _
        $region20: #{c2f_att_forward.1} parent=11 // pred_fallthru
          _
        // Predicated region
        $region21: #{c2f_att_forward.1} parent=11 // pred_check
          %p303 = pneg %p109
        $region22: #{c2f_att_forward.1} parent=11 // pred_check_branch
          %305 = sbr.rel (%p303) target = $region24
        $region23: #{c2f_att_forward.1} parent=11 // pred_region
          _
        $region24: #{c2f_att_forward.1} parent=11 // pred_fallthru
          _
        // Predicated region
        $region25: #{c2f_att_forward.1} parent=11 // pred_check
          %p306 = pneg %p130
        $region26: #{c2f_att_forward.1} parent=11 // pred_check_branch
          %308 = sbr.rel (%p306) target = $region28
        $region27: #{c2f_att_forward.1} parent=11 // pred_region
          _
        $region28: #{c2f_att_forward.1} parent=11 // pred_fallthru
          _
        // Predicated region
        $region29: #{c2f_att_forward.1} parent=11 // pred_check
          %p309 = pneg %p151
        $region30: #{c2f_att_forward.1} parent=11 // pred_check_branch
          %311 = sbr.rel (%p309) target = $region32
        $region31: #{c2f_att_forward.1} parent=11 // pred_region
          _
        $region32: #{c2f_att_forward.1} parent=11 // pred_fallthru
          _
        // Predicated region
        $region33: #{c2f_att_forward.1} parent=11 // pred_check
          %p312 = pneg %p172
        $region34: #{c2f_att_forward.1} parent=11 // pred_check_branch
          %314 = sbr.rel (%p312) target = $region36
        $region35: #{c2f_att_forward.1} parent=11 // pred_region
          _
        $region36: #{c2f_att_forward.1} parent=11 // pred_fallthru
          _
        // Predicated region
        $region37: #{c2f_att_forward.1} parent=11 // pred_check
          %p315 = pneg %p193
        $region38: #{c2f_att_forward.1} parent=11 // pred_check_branch
          %317 = sbr.rel (%p315) target = $region40
        $region39: #{c2f_att_forward.1} parent=11 // pred_region
          _
        $region40: #{c2f_att_forward.1} parent=11 // pred_fallthru
          _
        // Predicated region
        $region41: #{c2f_att_forward.1} parent=11 // pred_check
          %p318 = pneg %p214
        $region42: #{c2f_att_forward.1} parent=11 // pred_check_branch
          %320 = sbr.rel (%p318) target = $region44
        $region43: #{c2f_att_forward.1} parent=11 // pred_region
          _
        $region44: #{c2f_att_forward.1} parent=11 // pred_fallthru
          _
        // Predicated region
        $region45: #{c2f_att_forward.1} parent=11 // pred_check
          %p321 = pneg %p235
        $region46: #{c2f_att_forward.1} parent=11 // pred_check_branch
          %323 = sbr.rel (%p321) target = $region48
        $region47: #{c2f_att_forward.1} parent=11 // pred_region
          _
        $region48: #{c2f_att_forward.1} parent=11 // pred_fallthru
          _
        // Predicated region
        $region49: #{c2f_att_forward.1} parent=11 // pred_check
          %p324 = pneg %p256
        $region50: #{c2f_att_forward.1} parent=11 // pred_check_branch
          %326 = sbr.rel (%p324) target = $region52
        $region51: #{c2f_att_forward.1} parent=11 // pred_region
          _
        $region52: #{c2f_att_forward.1} parent=11 // pred_fallthru
          _
      $region12: #{c2f_att_forward.1} parent=5 // pred_fallthru
        _
      %p327 = scmp.lt.s32.totalorder %s20, 2
      // Predicated region
      $region53: #{c2f_att_forward.1} parent=5 // pred_check
        %p328 = pneg %p327
      $region54: #{c2f_att_forward.1} parent=5 // pred_check_branch
        %330 = sbr.rel (%p328) target = $region56
      $region55: #{c2f_att_forward.1} parent=5 // pred_region
        // Predicated region
        $region57: #{c2f_att_forward.1} parent=55 // pred_check
          %p331 = pneg %p40
        $region58: #{c2f_att_forward.1} parent=55 // pred_check_branch
          %333 = sbr.rel (%p331) target = $region60
        $region59: #{c2f_att_forward.1} parent=55 // pred_region
          %p334 = scmp.lt.s32.totalorder %s20, 1
          %s335 = scalar_select %p334, %s20, 1
          %s336 = smul.addr %s335, 32
          %s337 = smul.addr %s336, 8
          %s338 = scalar_lea.vmem %s0, %s337
        $region60: #{c2f_att_forward.1} parent=55 // pred_fallthru
          _
      $region56: #{c2f_att_forward.1} parent=5 // pred_fallthru
        _
      %p339 = scmp.le.s32.totalorder 1, %s20
      %p340 = scmp.lt.s32.totalorder %s20, 3
      %p341 = pnand %p339, %p340
      %p342 = pneg %p341
      // Predicated region
      $region61: #{c2f_att_forward.1} parent=5 // pred_check
        _
      $region62: #{c2f_att_forward.1} parent=5 // pred_check_branch
        %344 = sbr.rel (%p341) target = $region64
      $region63: #{c2f_att_forward.1} parent=5 // pred_region
        %s345 = ssub.s32 %s20, 1
        %p346 = scmp.lt.s32.totalorder %s25, 1
        %s347 = scalar_select %p346, %s25, 1
        %s348 = smul.addr %s347, 32
        %s349 = smul.addr %s348, 8
        %s350 = scalar_lea.vmem %s0, %s349
        %p351 = pneg %p46
        %p352 = pneg %p43
        %p353 = pneg %p67
        %p354 = pneg %p64
        %p355 = pneg %p88
        %p356 = pneg %p85
        %p357 = pneg %p109
        %p358 = pneg %p106
        %p359 = pneg %p130
        %p360 = pneg %p127
        %p361 = pneg %p151
        %p362 = pneg %p148
        %p363 = pneg %p172
        %p364 = pneg %p169
        %p365 = pneg %p193
        %p366 = pneg %p190
        %p367 = pneg %p214
        %p368 = pneg %p211
        %p369 = pneg %p235
        %p370 = pneg %p232
        %p371 = pneg %p256
        %p372 = pneg %p253
        %p373 = pneg %p282
        %p374 = pneg %p279
        %s375 = sand.u32 %s269, 1
        %s376 = scalar_lea.sflag [#allocation4], %s375
        %s377 = sand.u32 %s269, 1
        %s378 = smul.addr %s377, 256
        %s379 = scalar_lea.vmem [#allocation3], %s378
        %p380 = scmp.lt.s32.totalorder %s25, 1
        %s381 = scalar_select %p380, %s25, 1
        %s382 = smul.addr %s381, 32
        %s383 = smul.addr %s382, 8
        %s384 = scalar_lea.vmem %s0, %s383
        %v386 = vld [vmem:[%s384] sm:$0xff]
        %v387 = vld [vmem:[%s384 + $0x8] sm:$0xff]
        %v388 = vld [vmem:[%s384 + $0x10] sm:$0xff]
        %v389 = vld [vmem:[%s384 + $0x18] sm:$0xff]
        %v390 = vld [vmem:[%s384 + $0x20] sm:$0xff]
        %v391 = vld [vmem:[%s384 + $0x28] sm:$0xff]
        %v392 = vld [vmem:[%s384 + $0x30] sm:$0xff]
        %v393 = vld [vmem:[%s384 + $0x38] sm:$0xff]
        %v394 = vld [vmem:[%s384 + $0x40] sm:$0xff]
        %v395 = vld [vmem:[%s384 + $0x48] sm:$0xff]
        %v396 = vld [vmem:[%s384 + $0x50] sm:$0xff]
        %v397 = vld [vmem:[%s384 + $0x58] sm:$0xff]
        %v398 = vld [vmem:[%s384 + $0x60] sm:$0xff]
        %v399 = vld [vmem:[%s384 + $0x68] sm:$0xff]
        %v400 = vld [vmem:[%s384 + $0x70] sm:$0xff]
        %v401 = vld [vmem:[%s384 + $0x78] sm:$0xff]
        %v402 = vld [vmem:[%s384 + $0x80] sm:$0xff]
        %v403 = vld [vmem:[%s384 + $0x88] sm:$0xff]
        %v404 = vld [vmem:[%s384 + $0x90] sm:$0xff]
        %v405 = vld [vmem:[%s384 + $0x98] sm:$0xff]
        %v406 = vld [vmem:[%s384 + $0xa0] sm:$0xff]
        %v407 = vld [vmem:[%s384 + $0xa8] sm:$0xff]
        %v408 = vld [vmem:[%s384 + $0xb0] sm:$0xff]
        %v409 = vld [vmem:[%s384 + $0xb8] sm:$0xff]
        %v410 = vld [vmem:[%s384 + $0xc0] sm:$0xff]
        %v411 = vld [vmem:[%s384 + $0xc8] sm:$0xff]
        %v412 = vld [vmem:[%s384 + $0xd0] sm:$0xff]
        %v413 = vld [vmem:[%s384 + $0xd8] sm:$0xff]
        %v414 = vld [vmem:[%s384 + $0xe0] sm:$0xff]
        %v415 = vld [vmem:[%s384 + $0xe8] sm:$0xff]
        %v416 = vld [vmem:[%s384 + $0xf0] sm:$0xff]
        %v417 = vld [vmem:[%s384 + $0xf8] sm:$0xff]
        %v418 = vpack.c.bf16 %v387, %v386
        %v419 = vpack.c.bf16 %v389, %v388
        %v420 = vpack.c.bf16 %v391, %v390
        %v421 = vpack.c.bf16 %v393, %v392
        %v422 = vpack.c.bf16 %v395, %v394
        %v423 = vpack.c.bf16 %v397, %v396
        %v424 = vpack.c.bf16 %v399, %v398
        %v425 = vpack.c.bf16 %v401, %v400
        %v426 = vpack.c.bf16 %v403, %v402
        %v427 = vpack.c.bf16 %v405, %v404
        %v428 = vpack.c.bf16 %v407, %v406
        %v429 = vpack.c.bf16 %v409, %v408
        %v430 = vpack.c.bf16 %v411, %v410
        %v431 = vpack.c.bf16 %v413, %v412
        %v432 = vpack.c.bf16 %v415, %v414
        %v433 = vpack.c.bf16 %v417, %v416
        %v434 = vld [vmem:[%s1] sm:$0xf]
        %v435 = vld [vmem:[%s1 + $0x4] sm:$0xf]
        %v436 = vld [vmem:[%s1 + $0x8] sm:$0xf]
        %v437 = vld [vmem:[%s1 + $0xc] sm:$0xf]
        %v438 = vld [vmem:[%s1 + $0x10] sm:$0xf]
        %v439 = vld [vmem:[%s1 + $0x14] sm:$0xf]
        %v440 = vld [vmem:[%s1 + $0x18] sm:$0xf]
        %v441 = vld [vmem:[%s1 + $0x1c] sm:$0xf]
        %v442 = vld [vmem:[%s1 + $0x20] sm:$0xf]
        %v443 = vld [vmem:[%s1 + $0x24] sm:$0xf]
        %v444 = vld [vmem:[%s1 + $0x28] sm:$0xf]
        %v445 = vld [vmem:[%s1 + $0x2c] sm:$0xf]
        %v446 = vld [vmem:[%s1 + $0x30] sm:$0xf]
        %v447 = vld [vmem:[%s1 + $0x34] sm:$0xf]
        %v448 = vld [vmem:[%s1 + $0x38] sm:$0xf]
        %v449 = vld [vmem:[%s1 + $0x3c] sm:$0xf]
        %v450 = vld [vmem:[%s3] sm:$0x1]
        %v452 = vlaneseq
        %v453 = vshrl.u32 %v452, 7
        %v454 = vsub.s32 0, %v453
        %v455 = vrot.slane %v450, %v454
        %v473 = vunpack.c.l.b16 %v434
        %v474 = vunpack.c.l.b16 %v435
        %v475 = vunpack.c.l.b16 %v436
        %v476 = vunpack.c.l.b16 %v437
        %v477 = vunpack.c.l.b16 %v438
        %v478 = vunpack.c.l.b16 %v439
        %v479 = vunpack.c.l.b16 %v440
        %v480 = vunpack.c.l.b16 %v441
        %v481 = vunpack.c.l.b16 %v442
        %v482 = vunpack.c.l.b16 %v443
        %v483 = vunpack.c.l.b16 %v444
        %v484 = vunpack.c.l.b16 %v445
        %v485 = vunpack.c.l.b16 %v446
        %v486 = vunpack.c.l.b16 %v447
        %v487 = vunpack.c.l.b16 %v448
        %v488 = vunpack.c.l.b16 %v449
        %v489 = vpack.c.b16 %v474, %v473
        %v490 = vpack.c.b16 %v476, %v475
        %v491 = vpack.c.b16 %v478, %v477
        %v492 = vpack.c.b16 %v480, %v479
        %v493 = vpack.c.b16 %v482, %v481
        %v494 = vpack.c.b16 %v484, %v483
        %v495 = vpack.c.b16 %v486, %v485
        %v496 = vpack.c.b16 %v488, %v487
        %505 = vmatprep.subr.bf16.mxu0 0
        %506 = vmatpush1.bf16.msra.mxu0 %v496
        %507 = vmatprep.subr.bf16.mxu0 0
        %508 = vmatpush1.bf16.msra.mxu0 %v495
        %509 = vmatprep.subr.bf16.mxu0 0
        %510 = vmatpush1.bf16.msra.mxu0 %v494
        %511 = vmatprep.subr.bf16.mxu0 0
        %512 = vmatpush1.bf16.msra.mxu0 %v493
        %513 = vmatprep.subr.bf16.mxu0 0
        %514 = vmatpush1.bf16.msra.mxu0 %v492
        %515 = vmatprep.subr.bf16.mxu0 0
        %516 = vmatpush1.bf16.msra.mxu0 %v491
        %517 = vmatprep.subr.bf16.mxu0 0
        %518 = vmatpush1.bf16.msra.mxu0 %v490
        %519 = vmatprep.subr.bf16.mxu0 0
        %520 = vmatpush1.bf16.msra.mxu0 %v489
        %521 = vmatprep.subr.bf16.mxu0 0
        %522 = vmatpush2.bf16.msra.mxu0 0
        %523 = vmatprep.subr.bf16.mxu0 0
        %524 = vmatpush2.bf16.msra.mxu0 0
        %525 = vmatprep.subr.bf16.mxu0 0
        %526 = vmatpush2.bf16.msra.mxu0 0
        %527 = vmatprep.subr.bf16.mxu0 0
        %528 = vmatpush2.bf16.msra.mxu0 0
        %529 = vmatprep.subr.bf16.mxu0 0
        %530 = vmatpush2.bf16.msra.mxu0 0
        %531 = vmatprep.subr.bf16.mxu0 0
        %532 = vmatpush2.bf16.msra.mxu0 0
        %533 = vmatprep.subr.bf16.mxu0 0
        %534 = vmatpush2.bf16.msra.mxu0 0
        %535 = vmatprep.subr.bf16.mxu0 0
        %536 = vmatpush2.bf16.msra.mxu0 0
        %537 = vmatprep.mubr.bf16.mxu0 0
        %538 = vmatmul.mubr.bf16.gmra.mxu0 %v418
        %v539 = vpop.f32.mrf.mxu0
        %v540 = vadd.f32 %v455, %v539
        %v541 = vpop.f32.mrf.mxu0
        %v542 = vpop.f32.mrf.mxu0
        %v543 = vadd.f32 %v455, %v542
        %v544 = vpop.f32.mrf.mxu0
        %545 = vmatprep.mubr.bf16.mxu0 0
        %546 = vmatmul.mubr.bf16.gmra.mxu0 %v419
        %v547 = vpop.f32.mrf.mxu0
        %v548 = vadd.f32 %v455, %v547
        %v549 = vpop.f32.mrf.mxu0
        %v550 = vpop.f32.mrf.mxu0
        %v551 = vadd.f32 %v455, %v550
        %v552 = vpop.f32.mrf.mxu0
        %553 = vmatprep.mubr.bf16.mxu0 0
        %554 = vmatmul.mubr.bf16.gmra.mxu0 %v420
        %v555 = vpop.f32.mrf.mxu0
        %v556 = vadd.f32 %v455, %v555
        %v557 = vpop.f32.mrf.mxu0
        %v558 = vpop.f32.mrf.mxu0
        %v559 = vadd.f32 %v455, %v558
        %v560 = vpop.f32.mrf.mxu0
        %561 = vmatprep.mubr.bf16.mxu0 0
        %562 = vmatmul.mubr.bf16.gmra.mxu0 %v421
        %v563 = vpop.f32.mrf.mxu0
        %v564 = vadd.f32 %v455, %v563
        %v565 = vpop.f32.mrf.mxu0
        %v566 = vpop.f32.mrf.mxu0
        %v567 = vadd.f32 %v455, %v566
        %v568 = vpop.f32.mrf.mxu0
        %569 = vmatprep.mubr.bf16.mxu0 0
        %570 = vmatmul.mubr.bf16.gmra.mxu0 %v422
        %v571 = vpop.f32.mrf.mxu0
        %v572 = vadd.f32 %v455, %v571
        %v573 = vpop.f32.mrf.mxu0
        %v574 = vpop.f32.mrf.mxu0
        %v575 = vadd.f32 %v455, %v574
        %v576 = vpop.f32.mrf.mxu0
        %577 = vmatprep.mubr.bf16.mxu0 0
        %578 = vmatmul.mubr.bf16.gmra.mxu0 %v423
        %v579 = vpop.f32.mrf.mxu0
        %v580 = vadd.f32 %v455, %v579
        %v581 = vpop.f32.mrf.mxu0
        %v582 = vpop.f32.mrf.mxu0
        %v583 = vadd.f32 %v455, %v582
        %v584 = vpop.f32.mrf.mxu0
        %585 = vmatprep.mubr.bf16.mxu0 0
        %586 = vmatmul.mubr.bf16.gmra.mxu0 %v424
        %v587 = vpop.f32.mrf.mxu0
        %v588 = vadd.f32 %v455, %v587
        %v589 = vpop.f32.mrf.mxu0
        %v590 = vpop.f32.mrf.mxu0
        %v591 = vadd.f32 %v455, %v590
        %v592 = vpop.f32.mrf.mxu0
        %593 = vmatprep.mubr.bf16.mxu0 0
        %594 = vmatmul.mubr.bf16.gmra.mxu0 %v425
        %v595 = vpop.f32.mrf.mxu0
        %v596 = vadd.f32 %v455, %v595
        %v597 = vpop.f32.mrf.mxu0
        %v598 = vpop.f32.mrf.mxu0
        %v599 = vadd.f32 %v455, %v598
        %v600 = vpop.f32.mrf.mxu0
        %601 = vmatprep.mubr.bf16.mxu0 0
        %602 = vmatmul.mubr.bf16.gmra.mxu0 %v426
        %v603 = vpop.f32.mrf.mxu0
        %v604 = vadd.f32 %v455, %v603
        %v605 = vpop.f32.mrf.mxu0
        %v606 = vpop.f32.mrf.mxu0
        %v607 = vadd.f32 %v455, %v606
        %v608 = vpop.f32.mrf.mxu0
        %609 = vmatprep.mubr.bf16.mxu0 0
        %610 = vmatmul.mubr.bf16.gmra.mxu0 %v427
        %v611 = vpop.f32.mrf.mxu0
        %v612 = vadd.f32 %v455, %v611
        %v613 = vpop.f32.mrf.mxu0
        %v614 = vpop.f32.mrf.mxu0
        %v615 = vadd.f32 %v455, %v614
        %v616 = vpop.f32.mrf.mxu0
        %617 = vmatprep.mubr.bf16.mxu0 0
        %618 = vmatmul.mubr.bf16.gmra.mxu0 %v428
        %v619 = vpop.f32.mrf.mxu0
        %v620 = vadd.f32 %v455, %v619
        %v621 = vpop.f32.mrf.mxu0
        %v622 = vpop.f32.mrf.mxu0
        %v623 = vadd.f32 %v455, %v622
        %v624 = vpop.f32.mrf.mxu0
        %625 = vmatprep.mubr.bf16.mxu0 0
        %626 = vmatmul.mubr.bf16.gmra.mxu0 %v429
        %v627 = vpop.f32.mrf.mxu0
        %v628 = vadd.f32 %v455, %v627
        %v629 = vpop.f32.mrf.mxu0
        %v630 = vpop.f32.mrf.mxu0
        %v631 = vadd.f32 %v455, %v630
        %v632 = vpop.f32.mrf.mxu0
        %633 = vmatprep.mubr.bf16.mxu0 0
        %634 = vmatmul.mubr.bf16.gmra.mxu0 %v430
        %v635 = vpop.f32.mrf.mxu0
        %v636 = vadd.f32 %v455, %v635
        %v637 = vpop.f32.mrf.mxu0
        %v638 = vpop.f32.mrf.mxu0
        %v639 = vadd.f32 %v455, %v638
        %v640 = vpop.f32.mrf.mxu0
        %641 = vmatprep.mubr.bf16.mxu0 0
        %642 = vmatmul.mubr.bf16.gmra.mxu0 %v431
        %v643 = vpop.f32.mrf.mxu0
        %v644 = vadd.f32 %v455, %v643
        %v645 = vpop.f32.mrf.mxu0
        %v646 = vpop.f32.mrf.mxu0
        %v647 = vadd.f32 %v455, %v646
        %v648 = vpop.f32.mrf.mxu0
        %649 = vmatprep.mubr.bf16.mxu0 0
        %650 = vmatmul.mubr.bf16.gmra.mxu0 %v432
        %v651 = vpop.f32.mrf.mxu0
        %v652 = vadd.f32 %v455, %v651
        %v653 = vpop.f32.mrf.mxu0
        %v654 = vpop.f32.mrf.mxu0
        %v655 = vadd.f32 %v455, %v654
        %v656 = vpop.f32.mrf.mxu0
        %657 = vmatprep.mubr.bf16.mxu0 0
        %658 = vmatmul.mubr.bf16.gmra.mxu0 %v433
        %v659 = vpop.f32.mrf.mxu0
        %v660 = vadd.f32 %v455, %v659
        %v661 = vpop.f32.mrf.mxu0
        %v662 = vpop.f32.mrf.mxu0
        %v663 = vadd.f32 %v455, %v662
        %v664 = vpop.f32.mrf.mxu0
        %665 = vdwg.mxu0
        %v666 = vxor.u32 %v540, 2147483648
        %v667 = vxor.u32 %v543, 2147483648
        %v668 = vxor.u32 %v548, 2147483648
        %v669 = vxor.u32 %v551, 2147483648
        %v670 = vxor.u32 %v556, 2147483648
        %v671 = vxor.u32 %v559, 2147483648
        %v672 = vxor.u32 %v564, 2147483648
        %v673 = vxor.u32 %v567, 2147483648
        %v674 = vxor.u32 %v572, 2147483648
        %v675 = vxor.u32 %v575, 2147483648
        %v676 = vxor.u32 %v580, 2147483648
        %v677 = vxor.u32 %v583, 2147483648
        %v678 = vxor.u32 %v588, 2147483648
        %v679 = vxor.u32 %v591, 2147483648
        %v680 = vxor.u32 %v596, 2147483648
        %v681 = vxor.u32 %v599, 2147483648
        %v682 = vxor.u32 %v604, 2147483648
        %v683 = vxor.u32 %v607, 2147483648
        %v684 = vxor.u32 %v612, 2147483648
        %v685 = vxor.u32 %v615, 2147483648
        %v686 = vxor.u32 %v620, 2147483648
        %v687 = vxor.u32 %v623, 2147483648
        %v688 = vxor.u32 %v628, 2147483648
        %v689 = vxor.u32 %v631, 2147483648
        %v690 = vxor.u32 %v636, 2147483648
        %v691 = vxor.u32 %v639, 2147483648
        %v692 = vxor.u32 %v644, 2147483648
        %v693 = vxor.u32 %v647, 2147483648
        %v694 = vxor.u32 %v652, 2147483648
        %v695 = vxor.u32 %v655, 2147483648
        %v696 = vxor.u32 %v660, 2147483648
        %v697 = vxor.u32 %v663, 2147483648
        %v698 = vmul.f32 %v666, 1.442695
        %v699 = vpow.pop %v698
        %v700 = vmul.f32 %v667, 1.442695
        %v701 = vpow.pop %v700
        %v702 = vmul.f32 %v668, 1.442695
        %v703 = vpow.pop %v702
        %v704 = vmul.f32 %v669, 1.442695
        %v705 = vpow.pop %v704
        %v706 = vmul.f32 %v670, 1.442695
        %v707 = vpow.pop %v706
        %v708 = vmul.f32 %v671, 1.442695
        %v709 = vpow.pop %v708
        %v710 = vmul.f32 %v672, 1.442695
        %v711 = vpow.pop %v710
        %v712 = vmul.f32 %v673, 1.442695
        %v713 = vpow.pop %v712
        %v714 = vmul.f32 %v674, 1.442695
        %v715 = vpow.pop %v714
        %v716 = vmul.f32 %v675, 1.442695
        %v717 = vpow.pop %v716
        %v718 = vmul.f32 %v676, 1.442695
        %v719 = vpow.pop %v718
        %v720 = vmul.f32 %v677, 1.442695
        %v721 = vpow.pop %v720
        %v722 = vmul.f32 %v678, 1.442695
        %v723 = vpow.pop %v722
        %v724 = vmul.f32 %v679, 1.442695
        %v725 = vpow.pop %v724
        %v726 = vmul.f32 %v680, 1.442695
        %v727 = vpow.pop %v726
        %v728 = vmul.f32 %v681, 1.442695
        %v729 = vpow.pop %v728
        %v730 = vmul.f32 %v682, 1.442695
        %v731 = vpow.pop %v730
        %v732 = vmul.f32 %v683, 1.442695
        %v733 = vpow.pop %v732
        %v734 = vmul.f32 %v684, 1.442695
        %v735 = vpow.pop %v734
        %v736 = vmul.f32 %v685, 1.442695
        %v737 = vpow.pop %v736
        %v738 = vmul.f32 %v686, 1.442695
        %v739 = vpow.pop %v738
        %v740 = vmul.f32 %v687, 1.442695
        %v741 = vpow.pop %v740
        %v742 = vmul.f32 %v688, 1.442695
        %v743 = vpow.pop %v742
        %v744 = vmul.f32 %v689, 1.442695
        %v745 = vpow.pop %v744
        %v746 = vmul.f32 %v690, 1.442695
        %v747 = vpow.pop %v746
        %v748 = vmul.f32 %v691, 1.442695
        %v749 = vpow.pop %v748
        %v750 = vmul.f32 %v692, 1.442695
        %v751 = vpow.pop %v750
        %v752 = vmul.f32 %v693, 1.442695
        %v753 = vpow.pop %v752
        %v754 = vmul.f32 %v694, 1.442695
        %v755 = vpow.pop %v754
        %v756 = vmul.f32 %v695, 1.442695
        %v757 = vpow.pop %v756
        %v758 = vmul.f32 %v696, 1.442695
        %v759 = vpow.pop %v758
        %v760 = vmul.f32 %v697, 1.442695
        %v761 = vpow.pop %v760
        %v762 = vadd.f32 %v699, 1.0
        %v763 = vadd.f32 %v701, 1.0
        %v764 = vadd.f32 %v703, 1.0
        %v765 = vadd.f32 %v705, 1.0
        %v766 = vadd.f32 %v707, 1.0
        %v767 = vadd.f32 %v709, 1.0
        %v768 = vadd.f32 %v711, 1.0
        %v769 = vadd.f32 %v713, 1.0
        %v770 = vadd.f32 %v715, 1.0
        %v771 = vadd.f32 %v717, 1.0
        %v772 = vadd.f32 %v719, 1.0
        %v773 = vadd.f32 %v721, 1.0
        %v774 = vadd.f32 %v723, 1.0
        %v775 = vadd.f32 %v725, 1.0
        %v776 = vadd.f32 %v727, 1.0
        %v777 = vadd.f32 %v729, 1.0
        %v778 = vadd.f32 %v731, 1.0
        %v779 = vadd.f32 %v733, 1.0
        %v780 = vadd.f32 %v735, 1.0
        %v781 = vadd.f32 %v737, 1.0
        %v782 = vadd.f32 %v739, 1.0
        %v783 = vadd.f32 %v741, 1.0
        %v784 = vadd.f32 %v743, 1.0
        %v785 = vadd.f32 %v745, 1.0
        %v786 = vadd.f32 %v747, 1.0
        %v787 = vadd.f32 %v749, 1.0
        %v788 = vadd.f32 %v751, 1.0
        %v789 = vadd.f32 %v753, 1.0
        %v790 = vadd.f32 %v755, 1.0
        %v791 = vadd.f32 %v757, 1.0
        %v792 = vadd.f32 %v759, 1.0
        %v793 = vadd.f32 %v761, 1.0
        %v794 = vrcp.pop %v762
        %v795 = vmul.f32 1.0, %v794
        %v796 = vrcp.pop %v763
        %v797 = vmul.f32 1.0, %v796
        %v798 = vrcp.pop %v764
        %v799 = vmul.f32 1.0, %v798
        %v800 = vrcp.pop %v765
        %v801 = vmul.f32 1.0, %v800
        %v802 = vrcp.pop %v766
        %v803 = vmul.f32 1.0, %v802
        %v804 = vrcp.pop %v767
        %v805 = vmul.f32 1.0, %v804
        %v806 = vrcp.pop %v768
        %v807 = vmul.f32 1.0, %v806
        %v808 = vrcp.pop %v769
        %v809 = vmul.f32 1.0, %v808
        %v810 = vrcp.pop %v770
        %v811 = vmul.f32 1.0, %v810
        %v812 = vrcp.pop %v771
        %v813 = vmul.f32 1.0, %v812
        %v814 = vrcp.pop %v772
        %v815 = vmul.f32 1.0, %v814
        %v816 = vrcp.pop %v773
        %v817 = vmul.f32 1.0, %v816
        %v818 = vrcp.pop %v774
        %v819 = vmul.f32 1.0, %v818
        %v820 = vrcp.pop %v775
        %v821 = vmul.f32 1.0, %v820
        %v822 = vrcp.pop %v776
        %v823 = vmul.f32 1.0, %v822
        %v824 = vrcp.pop %v777
        %v825 = vmul.f32 1.0, %v824
        %v826 = vrcp.pop %v778
        %v827 = vmul.f32 1.0, %v826
        %v828 = vrcp.pop %v779
        %v829 = vmul.f32 1.0, %v828
        %v830 = vrcp.pop %v780
        %v831 = vmul.f32 1.0, %v830
        %v832 = vrcp.pop %v781
        %v833 = vmul.f32 1.0, %v832
        %v834 = vrcp.pop %v782
        %v835 = vmul.f32 1.0, %v834
        %v836 = vrcp.pop %v783
        %v837 = vmul.f32 1.0, %v836
        %v838 = vrcp.pop %v784
        %v839 = vmul.f32 1.0, %v838
        %v840 = vrcp.pop %v785
        %v841 = vmul.f32 1.0, %v840
        %v842 = vrcp.pop %v786
        %v843 = vmul.f32 1.0, %v842
        %v844 = vrcp.pop %v787
        %v845 = vmul.f32 1.0, %v844
        %v846 = vrcp.pop %v788
        %v847 = vmul.f32 1.0, %v846
        %v848 = vrcp.pop %v789
        %v849 = vmul.f32 1.0, %v848
        %v850 = vrcp.pop %v790
        %v851 = vmul.f32 1.0, %v850
        %v852 = vrcp.pop %v791
        %v853 = vmul.f32 1.0, %v852
        %v854 = vrcp.pop %v792
        %v855 = vmul.f32 1.0, %v854
        %v856 = vrcp.pop %v793
        %v857 = vmul.f32 1.0, %v856
        %v858 = vmul.f32 %v540, %v795
        %v859 = vmul.f32 %v543, %v797
        %v860 = vmul.f32 %v548, %v799
        %v861 = vmul.f32 %v551, %v801
        %v862 = vmul.f32 %v556, %v803
        %v863 = vmul.f32 %v559, %v805
        %v864 = vmul.f32 %v564, %v807
        %v865 = vmul.f32 %v567, %v809
        %v866 = vmul.f32 %v572, %v811
        %v867 = vmul.f32 %v575, %v813
        %v868 = vmul.f32 %v580, %v815
        %v869 = vmul.f32 %v583, %v817
        %v870 = vmul.f32 %v588, %v819
        %v871 = vmul.f32 %v591, %v821
        %v872 = vmul.f32 %v596, %v823
        %v873 = vmul.f32 %v599, %v825
        %v874 = vmul.f32 %v604, %v827
        %v875 = vmul.f32 %v607, %v829
        %v876 = vmul.f32 %v612, %v831
        %v877 = vmul.f32 %v615, %v833
        %v878 = vmul.f32 %v620, %v835
        %v879 = vmul.f32 %v623, %v837
        %v880 = vmul.f32 %v628, %v839
        %v881 = vmul.f32 %v631, %v841
        %v882 = vmul.f32 %v636, %v843
        %v883 = vmul.f32 %v639, %v845
        %v884 = vmul.f32 %v644, %v847
        %v885 = vmul.f32 %v647, %v849
        %v886 = vmul.f32 %v652, %v851
        %v887 = vmul.f32 %v655, %v853
        %v888 = vmul.f32 %v660, %v855
        %v889 = vmul.f32 %v663, %v857
        %v890 = vld [vmem:[%s2] sm:$0xf]
        %v891 = vld [vmem:[%s2 + $0x4] sm:$0xf]
        %v892 = vld [vmem:[%s2 + $0x8] sm:$0xf]
        %v893 = vld [vmem:[%s2 + $0xc] sm:$0xf]
        %v894 = vld [vmem:[%s2 + $0x10] sm:$0xf]
        %v895 = vld [vmem:[%s2 + $0x14] sm:$0xf]
        %v896 = vld [vmem:[%s2 + $0x18] sm:$0xf]
        %v897 = vld [vmem:[%s2 + $0x1c] sm:$0xf]
        %v898 = vld [vmem:[%s2 + $0x20] sm:$0xf]
        %v899 = vld [vmem:[%s2 + $0x24] sm:$0xf]
        %v900 = vld [vmem:[%s2 + $0x28] sm:$0xf]
        %v901 = vld [vmem:[%s2 + $0x2c] sm:$0xf]
        %v902 = vld [vmem:[%s2 + $0x30] sm:$0xf]
        %v903 = vld [vmem:[%s2 + $0x34] sm:$0xf]
        %v904 = vld [vmem:[%s2 + $0x38] sm:$0xf]
        %v905 = vld [vmem:[%s2 + $0x3c] sm:$0xf]
        %v906 = vld [vmem:[%s4] sm:$0x1]
        %v908 = vlaneseq
        %v909 = vshrl.u32 %v908, 7
        %v910 = vsub.s32 0, %v909
        %v911 = vrot.slane %v906, %v910
        %v929 = vunpack.c.l.b16 %v890
        %v930 = vunpack.c.l.b16 %v891
        %v931 = vunpack.c.l.b16 %v892
        %v932 = vunpack.c.l.b16 %v893
        %v933 = vunpack.c.l.b16 %v894
        %v934 = vunpack.c.l.b16 %v895
        %v935 = vunpack.c.l.b16 %v896
        %v936 = vunpack.c.l.b16 %v897
        %v937 = vunpack.c.l.b16 %v898
        %v938 = vunpack.c.l.b16 %v899
        %v939 = vunpack.c.l.b16 %v900
        %v940 = vunpack.c.l.b16 %v901
        %v941 = vunpack.c.l.b16 %v902
        %v942 = vunpack.c.l.b16 %v903
        %v943 = vunpack.c.l.b16 %v904
        %v944 = vunpack.c.l.b16 %v905
        %v945 = vpack.c.b16 %v930, %v929
        %v946 = vpack.c.b16 %v932, %v931
        %v947 = vpack.c.b16 %v934, %v933
        %v948 = vpack.c.b16 %v936, %v935
        %v949 = vpack.c.b16 %v938, %v937
        %v950 = vpack.c.b16 %v940, %v939
        %v951 = vpack.c.b16 %v942, %v941
        %v952 = vpack.c.b16 %v944, %v943
        %961 = vmatprep.subr.bf16.mxu0 0
        %962 = vmatpush1.bf16.msra.mxu0 %v952
        %963 = vmatprep.subr.bf16.mxu0 0
        %964 = vmatpush1.bf16.msra.mxu0 %v951
        %965 = vmatprep.subr.bf16.mxu0 0
        %966 = vmatpush1.bf16.msra.mxu0 %v950
        %967 = vmatprep.subr.bf16.mxu0 0
        %968 = vmatpush1.bf16.msra.mxu0 %v949
        %969 = vmatprep.subr.bf16.mxu0 0
        %970 = vmatpush1.bf16.msra.mxu0 %v948
        %971 = vmatprep.subr.bf16.mxu0 0
        %972 = vmatpush1.bf16.msra.mxu0 %v947
        %973 = vmatprep.subr.bf16.mxu0 0
        %974 = vmatpush1.bf16.msra.mxu0 %v946
        %975 = vmatprep.subr.bf16.mxu0 0
        %976 = vmatpush1.bf16.msra.mxu0 %v945
        %977 = vmatprep.subr.bf16.mxu0 0
        %978 = vmatpush2.bf16.msra.mxu0 0
        %979 = vmatprep.subr.bf16.mxu0 0
        %980 = vmatpush2.bf16.msra.mxu0 0
        %981 = vmatprep.subr.bf16.mxu0 0
        %982 = vmatpush2.bf16.msra.mxu0 0
        %983 = vmatprep.subr.bf16.mxu0 0
        %984 = vmatpush2.bf16.msra.mxu0 0
        %985 = vmatprep.subr.bf16.mxu0 0
        %986 = vmatpush2.bf16.msra.mxu0 0
        %987 = vmatprep.subr.bf16.mxu0 0
        %988 = vmatpush2.bf16.msra.mxu0 0
        %989 = vmatprep.subr.bf16.mxu0 0
        %990 = vmatpush2.bf16.msra.mxu0 0
        %991 = vmatprep.subr.bf16.mxu0 0
        %992 = vmatpush2.bf16.msra.mxu0 0
        %993 = vmatprep.mubr.bf16.mxu0 0
        %994 = vmatmul.mubr.bf16.gmra.mxu0 %v418
        %v995 = vpop.f32.mrf.mxu0
        %v996 = vadd.f32 %v911, %v995
        %v997 = vpop.f32.mrf.mxu0
        %v998 = vpop.f32.mrf.mxu0
        %v999 = vadd.f32 %v911, %v998
        %v1000 = vpop.f32.mrf.mxu0
        %1001 = vmatprep.mubr.bf16.mxu0 0
        %1002 = vmatmul.mubr.bf16.gmra.mxu0 %v419
        %v1003 = vpop.f32.mrf.mxu0
        %v1004 = vadd.f32 %v911, %v1003
        %v1005 = vpop.f32.mrf.mxu0
        %v1006 = vpop.f32.mrf.mxu0
        %v1007 = vadd.f32 %v911, %v1006
        %v1008 = vpop.f32.mrf.mxu0
        %1009 = vmatprep.mubr.bf16.mxu0 0
        %1010 = vmatmul.mubr.bf16.gmra.mxu0 %v420
        %v1011 = vpop.f32.mrf.mxu0
        %v1012 = vadd.f32 %v911, %v1011
        %v1013 = vpop.f32.mrf.mxu0
        %v1014 = vpop.f32.mrf.mxu0
        %v1015 = vadd.f32 %v911, %v1014
        %v1016 = vpop.f32.mrf.mxu0
        %1017 = vmatprep.mubr.bf16.mxu0 0
        %1018 = vmatmul.mubr.bf16.gmra.mxu0 %v421
        %v1019 = vpop.f32.mrf.mxu0
        %v1020 = vadd.f32 %v911, %v1019
        %v1021 = vpop.f32.mrf.mxu0
        %v1022 = vpop.f32.mrf.mxu0
        %v1023 = vadd.f32 %v911, %v1022
        %v1024 = vpop.f32.mrf.mxu0
        %1025 = vmatprep.mubr.bf16.mxu0 0
        %1026 = vmatmul.mubr.bf16.gmra.mxu0 %v422
        %v1027 = vpop.f32.mrf.mxu0
        %v1028 = vadd.f32 %v911, %v1027
        %v1029 = vpop.f32.mrf.mxu0
        %v1030 = vpop.f32.mrf.mxu0
        %v1031 = vadd.f32 %v911, %v1030
        %v1032 = vpop.f32.mrf.mxu0
        %1033 = vmatprep.mubr.bf16.mxu0 0
        %1034 = vmatmul.mubr.bf16.gmra.mxu0 %v423
        %v1035 = vpop.f32.mrf.mxu0
        %v1036 = vadd.f32 %v911, %v1035
        %v1037 = vpop.f32.mrf.mxu0
        %v1038 = vpop.f32.mrf.mxu0
        %v1039 = vadd.f32 %v911, %v1038
        %v1040 = vpop.f32.mrf.mxu0
        %1041 = vmatprep.mubr.bf16.mxu0 0
        %1042 = vmatmul.mubr.bf16.gmra.mxu0 %v424
        %v1043 = vpop.f32.mrf.mxu0
        %v1044 = vadd.f32 %v911, %v1043
        %v1045 = vpop.f32.mrf.mxu0
        %v1046 = vpop.f32.mrf.mxu0
        %v1047 = vadd.f32 %v911, %v1046
        %v1048 = vpop.f32.mrf.mxu0
        %1049 = vmatprep.mubr.bf16.mxu0 0
        %1050 = vmatmul.mubr.bf16.gmra.mxu0 %v425
        %v1051 = vpop.f32.mrf.mxu0
        %v1052 = vadd.f32 %v911, %v1051
        %v1053 = vpop.f32.mrf.mxu0
        %v1054 = vpop.f32.mrf.mxu0
        %v1055 = vadd.f32 %v911, %v1054
        %v1056 = vpop.f32.mrf.mxu0
        %1057 = vmatprep.mubr.bf16.mxu0 0
        %1058 = vmatmul.mubr.bf16.gmra.mxu0 %v426
        %v1059 = vpop.f32.mrf.mxu0
        %v1060 = vadd.f32 %v911, %v1059
        %v1061 = vpop.f32.mrf.mxu0
        %v1062 = vpop.f32.mrf.mxu0
        %v1063 = vadd.f32 %v911, %v1062
        %v1064 = vpop.f32.mrf.mxu0
        %1065 = vmatprep.mubr.bf16.mxu0 0
        %1066 = vmatmul.mubr.bf16.gmra.mxu0 %v427
        %v1067 = vpop.f32.mrf.mxu0
        %v1068 = vadd.f32 %v911, %v1067
        %v1069 = vpop.f32.mrf.mxu0
        %v1070 = vpop.f32.mrf.mxu0
        %v1071 = vadd.f32 %v911, %v1070
        %v1072 = vpop.f32.mrf.mxu0
        %1073 = vmatprep.mubr.bf16.mxu0 0
        %1074 = vmatmul.mubr.bf16.gmra.mxu0 %v428
        %v1075 = vpop.f32.mrf.mxu0
        %v1076 = vadd.f32 %v911, %v1075
        %v1077 = vpop.f32.mrf.mxu0
        %v1078 = vpop.f32.mrf.mxu0
        %v1079 = vadd.f32 %v911, %v1078
        %v1080 = vpop.f32.mrf.mxu0
        %1081 = vmatprep.mubr.bf16.mxu0 0
        %1082 = vmatmul.mubr.bf16.gmra.mxu0 %v429
        %v1083 = vpop.f32.mrf.mxu0
        %v1084 = vadd.f32 %v911, %v1083
        %v1085 = vpop.f32.mrf.mxu0
        %v1086 = vpop.f32.mrf.mxu0
        %v1087 = vadd.f32 %v911, %v1086
        %v1088 = vpop.f32.mrf.mxu0
        %1089 = vmatprep.mubr.bf16.mxu0 0
        %1090 = vmatmul.mubr.bf16.gmra.mxu0 %v430
        %v1091 = vpop.f32.mrf.mxu0
        %v1092 = vadd.f32 %v911, %v1091
        %v1093 = vpop.f32.mrf.mxu0
        %v1094 = vpop.f32.mrf.mxu0
        %v1095 = vadd.f32 %v911, %v1094
        %v1096 = vpop.f32.mrf.mxu0
        %1097 = vmatprep.mubr.bf16.mxu0 0
        %1098 = vmatmul.mubr.bf16.gmra.mxu0 %v431
        %v1099 = vpop.f32.mrf.mxu0
        %v1100 = vadd.f32 %v911, %v1099
        %v1101 = vpop.f32.mrf.mxu0
        %v1102 = vpop.f32.mrf.mxu0
        %v1103 = vadd.f32 %v911, %v1102
        %v1104 = vpop.f32.mrf.mxu0
        %1105 = vmatprep.mubr.bf16.mxu0 0
        %1106 = vmatmul.mubr.bf16.gmra.mxu0 %v432
        %v1107 = vpop.f32.mrf.mxu0
        %v1108 = vadd.f32 %v911, %v1107
        %v1109 = vpop.f32.mrf.mxu0
        %v1110 = vpop.f32.mrf.mxu0
        %v1111 = vadd.f32 %v911, %v1110
        %v1112 = vpop.f32.mrf.mxu0
        %1113 = vmatprep.mubr.bf16.mxu0 0
        %1114 = vmatmul.mubr.bf16.gmra.mxu0 %v433
        %v1115 = vpop.f32.mrf.mxu0
        %v1116 = vadd.f32 %v911, %v1115
        %v1117 = vpop.f32.mrf.mxu0
        %v1118 = vpop.f32.mrf.mxu0
        %v1119 = vadd.f32 %v911, %v1118
        %v1120 = vpop.f32.mrf.mxu0
        %1121 = vdwg.mxu0
        %v1122 = vxor.u32 %v996, 2147483648
        %v1123 = vxor.u32 %v999, 2147483648
        %v1124 = vxor.u32 %v1004, 2147483648
        %v1125 = vxor.u32 %v1007, 2147483648
        %v1126 = vxor.u32 %v1012, 2147483648
        %v1127 = vxor.u32 %v1015, 2147483648
        %v1128 = vxor.u32 %v1020, 2147483648
        %v1129 = vxor.u32 %v1023, 2147483648
        %v1130 = vxor.u32 %v1028, 2147483648
        %v1131 = vxor.u32 %v1031, 2147483648
        %v1132 = vxor.u32 %v1036, 2147483648
        %v1133 = vxor.u32 %v1039, 2147483648
        %v1134 = vxor.u32 %v1044, 2147483648
        %v1135 = vxor.u32 %v1047, 2147483648
        %v1136 = vxor.u32 %v1052, 2147483648
        %v1137 = vxor.u32 %v1055, 2147483648
        %v1138 = vxor.u32 %v1060, 2147483648
        %v1139 = vxor.u32 %v1063, 2147483648
        %v1140 = vxor.u32 %v1068, 2147483648
        %v1141 = vxor.u32 %v1071, 2147483648
        %v1142 = vxor.u32 %v1076, 2147483648
        %v1143 = vxor.u32 %v1079, 2147483648
        %v1144 = vxor.u32 %v1084, 2147483648
        %v1145 = vxor.u32 %v1087, 2147483648
        %v1146 = vxor.u32 %v1092, 2147483648
        %v1147 = vxor.u32 %v1095, 2147483648
        %v1148 = vxor.u32 %v1100, 2147483648
        %v1149 = vxor.u32 %v1103, 2147483648
        %v1150 = vxor.u32 %v1108, 2147483648
        %v1151 = vxor.u32 %v1111, 2147483648
        %v1152 = vxor.u32 %v1116, 2147483648
        %v1153 = vxor.u32 %v1119, 2147483648
        %v1154 = vmul.f32 %v1122, 1.442695
        %v1155 = vpow.pop %v1154
        %v1156 = vmul.f32 %v1123, 1.442695
        %v1157 = vpow.pop %v1156
        %v1158 = vmul.f32 %v1124, 1.442695
        %v1159 = vpow.pop %v1158
        %v1160 = vmul.f32 %v1125, 1.442695
        %v1161 = vpow.pop %v1160
        %v1162 = vmul.f32 %v1126, 1.442695
        %v1163 = vpow.pop %v1162
        %v1164 = vmul.f32 %v1127, 1.442695
        %v1165 = vpow.pop %v1164
        %v1166 = vmul.f32 %v1128, 1.442695
        %v1167 = vpow.pop %v1166
        %v1168 = vmul.f32 %v1129, 1.442695
        %v1169 = vpow.pop %v1168
        %v1170 = vmul.f32 %v1130, 1.442695
        %v1171 = vpow.pop %v1170
        %v1172 = vmul.f32 %v1131, 1.442695
        %v1173 = vpow.pop %v1172
        %v1174 = vmul.f32 %v1132, 1.442695
        %v1175 = vpow.pop %v1174
        %v1176 = vmul.f32 %v1133, 1.442695
        %v1177 = vpow.pop %v1176
        %v1178 = vmul.f32 %v1134, 1.442695
        %v1179 = vpow.pop %v1178
        %v1180 = vmul.f32 %v1135, 1.442695
        %v1181 = vpow.pop %v1180
        %v1182 = vmul.f32 %v1136, 1.442695
        %v1183 = vpow.pop %v1182
        %v1184 = vmul.f32 %v1137, 1.442695
        %v1185 = vpow.pop %v1184
        %v1186 = vmul.f32 %v1138, 1.442695
        %v1187 = vpow.pop %v1186
        %v1188 = vmul.f32 %v1139, 1.442695
        %v1189 = vpow.pop %v1188
        %v1190 = vmul.f32 %v1140, 1.442695
        %v1191 = vpow.pop %v1190
        %v1192 = vmul.f32 %v1141, 1.442695
        %v1193 = vpow.pop %v1192
        %v1194 = vmul.f32 %v1142, 1.442695
        %v1195 = vpow.pop %v1194
        %v1196 = vmul.f32 %v1143, 1.442695
        %v1197 = vpow.pop %v1196
        %v1198 = vmul.f32 %v1144, 1.442695
        %v1199 = vpow.pop %v1198
        %v1200 = vmul.f32 %v1145, 1.442695
        %v1201 = vpow.pop %v1200
        %v1202 = vmul.f32 %v1146, 1.442695
        %v1203 = vpow.pop %v1202
        %v1204 = vmul.f32 %v1147, 1.442695
        %v1205 = vpow.pop %v1204
        %v1206 = vmul.f32 %v1148, 1.442695
        %v1207 = vpow.pop %v1206
        %v1208 = vmul.f32 %v1149, 1.442695
        %v1209 = vpow.pop %v1208
        %v1210 = vmul.f32 %v1150, 1.442695
        %v1211 = vpow.pop %v1210
        %v1212 = vmul.f32 %v1151, 1.442695
        %v1213 = vpow.pop %v1212
        %v1214 = vmul.f32 %v1152, 1.442695
        %v1215 = vpow.pop %v1214
        %v1216 = vmul.f32 %v1153, 1.442695
        %v1217 = vpow.pop %v1216
        %v1218 = vadd.f32 %v1155, 1.0
        %v1219 = vadd.f32 %v1157, 1.0
        %v1220 = vadd.f32 %v1159, 1.0
        %v1221 = vadd.f32 %v1161, 1.0
        %v1222 = vadd.f32 %v1163, 1.0
        %v1223 = vadd.f32 %v1165, 1.0
        %v1224 = vadd.f32 %v1167, 1.0
        %v1225 = vadd.f32 %v1169, 1.0
        %v1226 = vadd.f32 %v1171, 1.0
        %v1227 = vadd.f32 %v1173, 1.0
        %v1228 = vadd.f32 %v1175, 1.0
        %v1229 = vadd.f32 %v1177, 1.0
        %v1230 = vadd.f32 %v1179, 1.0
        %v1231 = vadd.f32 %v1181, 1.0
        %v1232 = vadd.f32 %v1183, 1.0
        %v1233 = vadd.f32 %v1185, 1.0
        %v1234 = vadd.f32 %v1187, 1.0
        %v1235 = vadd.f32 %v1189, 1.0
        %v1236 = vadd.f32 %v1191, 1.0
        %v1237 = vadd.f32 %v1193, 1.0
        %v1238 = vadd.f32 %v1195, 1.0
        %v1239 = vadd.f32 %v1197, 1.0
        %v1240 = vadd.f32 %v1199, 1.0
        %v1241 = vadd.f32 %v1201, 1.0
        %v1242 = vadd.f32 %v1203, 1.0
        %v1243 = vadd.f32 %v1205, 1.0
        %v1244 = vadd.f32 %v1207, 1.0
        %v1245 = vadd.f32 %v1209, 1.0
        %v1246 = vadd.f32 %v1211, 1.0
        %v1247 = vadd.f32 %v1213, 1.0
        %v1248 = vadd.f32 %v1215, 1.0
        %v1249 = vadd.f32 %v1217, 1.0
        %v1250 = vrcp.pop %v1218
        %v1251 = vmul.f32 1.0, %v1250
        %v1252 = vrcp.pop %v1219
        %v1253 = vmul.f32 1.0, %v1252
        %v1254 = vrcp.pop %v1220
        %v1255 = vmul.f32 1.0, %v1254
        %v1256 = vrcp.pop %v1221
        %v1257 = vmul.f32 1.0, %v1256
        %v1258 = vrcp.pop %v1222
        %v1259 = vmul.f32 1.0, %v1258
        %v1260 = vrcp.pop %v1223
        %v1261 = vmul.f32 1.0, %v1260
        %v1262 = vrcp.pop %v1224
        %v1263 = vmul.f32 1.0, %v1262
        %v1264 = vrcp.pop %v1225
        %v1265 = vmul.f32 1.0, %v1264
        %v1266 = vrcp.pop %v1226
        %v1267 = vmul.f32 1.0, %v1266
        %v1268 = vrcp.pop %v1227
        %v1269 = vmul.f32 1.0, %v1268
        %v1270 = vrcp.pop %v1228
        %v1271 = vmul.f32 1.0, %v1270
        %v1272 = vrcp.pop %v1229
        %v1273 = vmul.f32 1.0, %v1272
        %v1274 = vrcp.pop %v1230
        %v1275 = vmul.f32 1.0, %v1274
        %v1276 = vrcp.pop %v1231
        %v1277 = vmul.f32 1.0, %v1276
        %v1278 = vrcp.pop %v1232
        %v1279 = vmul.f32 1.0, %v1278
        %v1280 = vrcp.pop %v1233
        %v1281 = vmul.f32 1.0, %v1280
        %v1282 = vrcp.pop %v1234
        %v1283 = vmul.f32 1.0, %v1282
        %v1284 = vrcp.pop %v1235
        %v1285 = vmul.f32 1.0, %v1284
        %v1286 = vrcp.pop %v1236
        %v1287 = vmul.f32 1.0, %v1286
        %v1288 = vrcp.pop %v1237
        %v1289 = vmul.f32 1.0, %v1288
        %v1290 = vrcp.pop %v1238
        %v1291 = vmul.f32 1.0, %v1290
        %v1292 = vrcp.pop %v1239
        %v1293 = vmul.f32 1.0, %v1292
        %v1294 = vrcp.pop %v1240
        %v1295 = vmul.f32 1.0, %v1294
        %v1296 = vrcp.pop %v1241
        %v1297 = vmul.f32 1.0, %v1296
        %v1298 = vrcp.pop %v1242
        %v1299 = vmul.f32 1.0, %v1298
        %v1300 = vrcp.pop %v1243
        %v1301 = vmul.f32 1.0, %v1300
        %v1302 = vrcp.pop %v1244
        %v1303 = vmul.f32 1.0, %v1302
        %v1304 = vrcp.pop %v1245
        %v1305 = vmul.f32 1.0, %v1304
        %v1306 = vrcp.pop %v1246
        %v1307 = vmul.f32 1.0, %v1306
        %v1308 = vrcp.pop %v1247
        %v1309 = vmul.f32 1.0, %v1308
        %v1310 = vrcp.pop %v1248
        %v1311 = vmul.f32 1.0, %v1310
        %v1312 = vrcp.pop %v1249
        %v1313 = vmul.f32 1.0, %v1312
        %v1314 = vmul.f32 %v996, %v1251
        %v1315 = vmul.f32 %v999, %v1253
        %v1316 = vmul.f32 %v1004, %v1255
        %v1317 = vmul.f32 %v1007, %v1257
        %v1318 = vmul.f32 %v1012, %v1259
        %v1319 = vmul.f32 %v1015, %v1261
        %v1320 = vmul.f32 %v1020, %v1263
        %v1321 = vmul.f32 %v1023, %v1265
        %v1322 = vmul.f32 %v1028, %v1267
        %v1323 = vmul.f32 %v1031, %v1269
        %v1324 = vmul.f32 %v1036, %v1271
        %v1325 = vmul.f32 %v1039, %v1273
        %v1326 = vmul.f32 %v1044, %v1275
        %v1327 = vmul.f32 %v1047, %v1277
        %v1328 = vmul.f32 %v1052, %v1279
        %v1329 = vmul.f32 %v1055, %v1281
        %v1330 = vmul.f32 %v1060, %v1283
        %v1331 = vmul.f32 %v1063, %v1285
        %v1332 = vmul.f32 %v1068, %v1287
        %v1333 = vmul.f32 %v1071, %v1289
        %v1334 = vmul.f32 %v1076, %v1291
        %v1335 = vmul.f32 %v1079, %v1293
        %v1336 = vmul.f32 %v1084, %v1295
        %v1337 = vmul.f32 %v1087, %v1297
        %v1338 = vmul.f32 %v1092, %v1299
        %v1339 = vmul.f32 %v1095, %v1301
        %v1340 = vmul.f32 %v1100, %v1303
        %v1341 = vmul.f32 %v1103, %v1305
        %v1342 = vmul.f32 %v1108, %v1307
        %v1343 = vmul.f32 %v1111, %v1309
        %v1344 = vmul.f32 %v1116, %v1311
        %v1345 = vmul.f32 %v1119, %v1313
        %vm1346 = vcmask 523264
        %1347 = vst.msk [vmem:[#allocation2] sm:$0xff] %vm1346, 0.0
        %1348 = vst.msk [vmem:[#allocation2 + $0x8] sm:$0xff] %vm1346, 0.0
        %1349 = vst.msk [vmem:[#allocation2 + $0x10] sm:$0xff] %vm1346, 0.0
        %1350 = vst.msk [vmem:[#allocation2 + $0x18] sm:$0xff] %vm1346, 0.0
        %1351 = vst.msk [vmem:[#allocation2 + $0x20] sm:$0xff] %vm1346, 0.0
        %1352 = vst.msk [vmem:[#allocation2 + $0x28] sm:$0xff] %vm1346, 0.0
        %1353 = vst.msk [vmem:[#allocation2 + $0x30] sm:$0xff] %vm1346, 0.0
        %1354 = vst.msk [vmem:[#allocation2 + $0x38] sm:$0xff] %vm1346, 0.0
        %1355 = vst.msk [vmem:[#allocation2 + $0x40] sm:$0xff] %vm1346, 0.0
        %1356 = vst.msk [vmem:[#allocation2 + $0x48] sm:$0xff] %vm1346, 0.0
        %1357 = vst.msk [vmem:[#allocation2 + $0x50] sm:$0xff] %vm1346, 0.0
        %1358 = vst.msk [vmem:[#allocation2 + $0x58] sm:$0xff] %vm1346, 0.0
        %1359 = vst.msk [vmem:[#allocation2 + $0x60] sm:$0xff] %vm1346, 0.0
        %1360 = vst.msk [vmem:[#allocation2 + $0x68] sm:$0xff] %vm1346, 0.0
        %1361 = vst.msk [vmem:[#allocation2 + $0x70] sm:$0xff] %vm1346, 0.0
        %1362 = vst.msk [vmem:[#allocation2 + $0x78] sm:$0xff] %vm1346, 0.0
        %1363 = vst.msk [vmem:[#allocation2 + $0x80] sm:$0xff] %vm1346, 0.0
        %1364 = vst.msk [vmem:[#allocation2 + $0x88] sm:$0xff] %vm1346, 0.0
        %1365 = vst.msk [vmem:[#allocation2 + $0x90] sm:$0xff] %vm1346, 0.0
        %1366 = vst.msk [vmem:[#allocation2 + $0x98] sm:$0xff] %vm1346, 0.0
        %1367 = vst.msk [vmem:[#allocation2 + $0xa0] sm:$0xff] %vm1346, 0.0
        %1368 = vst.msk [vmem:[#allocation2 + $0xa8] sm:$0xff] %vm1346, 0.0
        %1369 = vst.msk [vmem:[#allocation2 + $0xb0] sm:$0xff] %vm1346, 0.0
        %1370 = vst.msk [vmem:[#allocation2 + $0xb8] sm:$0xff] %vm1346, 0.0
        %1371 = vst.msk [vmem:[#allocation2 + $0xc0] sm:$0xff] %vm1346, 0.0
        %1372 = vst.msk [vmem:[#allocation2 + $0xc8] sm:$0xff] %vm1346, 0.0
        %1373 = vst.msk [vmem:[#allocation2 + $0xd0] sm:$0xff] %vm1346, 0.0
        %1374 = vst.msk [vmem:[#allocation2 + $0xd8] sm:$0xff] %vm1346, 0.0
        %1375 = vst.msk [vmem:[#allocation2 + $0xe0] sm:$0xff] %vm1346, 0.0
        %1376 = vst.msk [vmem:[#allocation2 + $0xe8] sm:$0xff] %vm1346, 0.0
        %1377 = vst.msk [vmem:[#allocation2 + $0xf0] sm:$0xff] %vm1346, 0.0
        %1378 = vst.msk [vmem:[#allocation2 + $0xf8] sm:$0xff] %vm1346, 0.0
        %1379 = vst.msk [vmem:[#allocation2 + $0x100] sm:$0xff] %vm1346, 0.0
        %1380 = vst.msk [vmem:[#allocation2 + $0x108] sm:$0xff] %vm1346, 0.0
        %1381 = vst.msk [vmem:[#allocation2 + $0x110] sm:$0xff] %vm1346, 0.0
        %1382 = vst.msk [vmem:[#allocation2 + $0x118] sm:$0xff] %vm1346, 0.0
        %1383 = vst.msk [vmem:[#allocation2 + $0x120] sm:$0xff] %vm1346, 0.0
        %1384 = vst.msk [vmem:[#allocation2 + $0x128] sm:$0xff] %vm1346, 0.0
        %v1385 = vlaneseq
        %v1386 = vshrl.u32 %v1385, 7
        %v1387 = vadd.s32 %v1386, 8
        %v1388 = vadd.s32 %v1386, 16
        %v1389 = vadd.s32 %v1386, 24
        %v1390 = vadd.s32 %v1386, 32
        %v1391 = vadd.s32 %v1386, 40
        %v1392 = vadd.s32 %v1386, 48
        %v1393 = vadd.s32 %v1386, 56
        %v1394 = vadd.s32 %v1386, 64
        %v1395 = vadd.s32 %v1386, 72
        %v1396 = vadd.s32 %v1386, 80
        %v1397 = vadd.s32 %v1386, 88
        %v1398 = vadd.s32 %v1386, 96
        %v1399 = vadd.s32 %v1386, 104
        %v1400 = vadd.s32 %v1386, 112
        %v1401 = vadd.s32 %v1386, 120
        %v1402 = vadd.s32 %v1386, 128
        %v1403 = vadd.s32 %v1386, 136
        %v1404 = vadd.s32 %v1386, 144
        %v1405 = vadd.s32 %v1386, 152
        %v1406 = vadd.s32 %v1386, 160
        %v1407 = vadd.s32 %v1386, 168
        %v1408 = vadd.s32 %v1386, 176
        %v1409 = vadd.s32 %v1386, 184
        %v1410 = vadd.s32 %v1386, 192
        %v1411 = vadd.s32 %v1386, 200
        %v1412 = vadd.s32 %v1386, 208
        %v1413 = vadd.s32 %v1386, 216
        %v1414 = vadd.s32 %v1386, 224
        %v1415 = vadd.s32 %v1386, 232
        %v1416 = vadd.s32 %v1386, 240
        %v1417 = vadd.s32 %v1386, 248
        %vm1418 = vcmp.lt.s32.totalorder %v1386, 0
        %v1419 = vsub.s32 0, %v1386
        %v1420 = vsel %vm1418, %v1419, %v1386
        %v1421 = vshrl.u32 %v1420, 4
        %v1422 = vand.u32 %v1420, 15
        %v1423 = vsub.s32 0, %v1422
        %v1424 = vsel %vm1418, %v1423, %v1422
        %vm1425 = vcmp.lt.s32.totalorder %v1387, 0
        %v1426 = vsub.s32 0, %v1387
        %v1427 = vsel %vm1425, %v1426, %v1387
        %v1428 = vshrl.u32 %v1427, 4
        %v1429 = vand.u32 %v1427, 15
        %v1430 = vsub.s32 0, %v1429
        %v1431 = vsel %vm1425, %v1430, %v1429
        %vm1432 = vcmp.lt.s32.totalorder %v1388, 0
        %v1433 = vsub.s32 0, %v1388
        %v1434 = vsel %vm1432, %v1433, %v1388
        %v1435 = vshrl.u32 %v1434, 4
        %v1436 = vand.u32 %v1434, 15
        %v1437 = vsub.s32 0, %v1436
        %v1438 = vsel %vm1432, %v1437, %v1436
        %vm1439 = vcmp.lt.s32.totalorder %v1389, 0
        %v1440 = vsub.s32 0, %v1389
        %v1441 = vsel %vm1439, %v1440, %v1389
        %v1442 = vshrl.u32 %v1441, 4
        %v1443 = vand.u32 %v1441, 15
        %v1444 = vsub.s32 0, %v1443
        %v1445 = vsel %vm1439, %v1444, %v1443
        %vm1446 = vcmp.lt.s32.totalorder %v1390, 0
        %v1447 = vsub.s32 0, %v1390
        %v1448 = vsel %vm1446, %v1447, %v1390
        %v1449 = vshrl.u32 %v1448, 4
        %v1450 = vand.u32 %v1448, 15
        %v1451 = vsub.s32 0, %v1450
        %v1452 = vsel %vm1446, %v1451, %v1450
        %vm1453 = vcmp.lt.s32.totalorder %v1391, 0
        %v1454 = vsub.s32 0, %v1391
        %v1455 = vsel %vm1453, %v1454, %v1391
        %v1456 = vshrl.u32 %v1455, 4
        %v1457 = vand.u32 %v1455, 15
        %v1458 = vsub.s32 0, %v1457
        %v1459 = vsel %vm1453, %v1458, %v1457
        %vm1460 = vcmp.lt.s32.totalorder %v1392, 0
        %v1461 = vsub.s32 0, %v1392
        %v1462 = vsel %vm1460, %v1461, %v1392
        %v1463 = vshrl.u32 %v1462, 4
        %v1464 = vand.u32 %v1462, 15
        %v1465 = vsub.s32 0, %v1464
        %v1466 = vsel %vm1460, %v1465, %v1464
        %vm1467 = vcmp.lt.s32.totalorder %v1393, 0
        %v1468 = vsub.s32 0, %v1393
        %v1469 = vsel %vm1467, %v1468, %v1393
        %v1470 = vshrl.u32 %v1469, 4
        %v1471 = vand.u32 %v1469, 15
        %v1472 = vsub.s32 0, %v1471
        %v1473 = vsel %vm1467, %v1472, %v1471
        %vm1474 = vcmp.lt.s32.totalorder %v1394, 0
        %v1475 = vsub.s32 0, %v1394
        %v1476 = vsel %vm1474, %v1475, %v1394
        %v1477 = vshrl.u32 %v1476, 4
        %v1478 = vand.u32 %v1476, 15
        %v1479 = vsub.s32 0, %v1478
        %v1480 = vsel %vm1474, %v1479, %v1478
        %vm1481 = vcmp.lt.s32.totalorder %v1395, 0
        %v1482 = vsub.s32 0, %v1395
        %v1483 = vsel %vm1481, %v1482, %v1395
        %v1484 = vshrl.u32 %v1483, 4
        %v1485 = vand.u32 %v1483, 15
        %v1486 = vsub.s32 0, %v1485
        %v1487 = vsel %vm1481, %v1486, %v1485
        %vm1488 = vcmp.lt.s32.totalorder %v1396, 0
        %v1489 = vsub.s32 0, %v1396
        %v1490 = vsel %vm1488, %v1489, %v1396
        %v1491 = vshrl.u32 %v1490, 4
        %v1492 = vand.u32 %v1490, 15
        %v1493 = vsub.s32 0, %v1492
        %v1494 = vsel %vm1488, %v1493, %v1492
        %vm1495 = vcmp.lt.s32.totalorder %v1397, 0
        %v1496 = vsub.s32 0, %v1397
        %v1497 = vsel %vm1495, %v1496, %v1397
        %v1498 = vshrl.u32 %v1497, 4
        %v1499 = vand.u32 %v1497, 15
        %v1500 = vsub.s32 0, %v1499
        %v1501 = vsel %vm1495, %v1500, %v1499
        %vm1502 = vcmp.lt.s32.totalorder %v1398, 0
        %v1503 = vsub.s32 0, %v1398
        %v1504 = vsel %vm1502, %v1503, %v1398
        %v1505 = vshrl.u32 %v1504, 4
        %v1506 = vand.u32 %v1504, 15
        %v1507 = vsub.s32 0, %v1506
        %v1508 = vsel %vm1502, %v1507, %v1506
        %vm1509 = vcmp.lt.s32.totalorder %v1399, 0
        %v1510 = vsub.s32 0, %v1399
        %v1511 = vsel %vm1509, %v1510, %v1399
        %v1512 = vshrl.u32 %v1511, 4
        %v1513 = vand.u32 %v1511, 15
        %v1514 = vsub.s32 0, %v1513
        %v1515 = vsel %vm1509, %v1514, %v1513
        %vm1516 = vcmp.lt.s32.totalorder %v1400, 0
        %v1517 = vsub.s32 0, %v1400
        %v1518 = vsel %vm1516, %v1517, %v1400
        %v1519 = vshrl.u32 %v1518, 4
        %v1520 = vand.u32 %v1518, 15
        %v1521 = vsub.s32 0, %v1520
        %v1522 = vsel %vm1516, %v1521, %v1520
        %vm1523 = vcmp.lt.s32.totalorder %v1401, 0
        %v1524 = vsub.s32 0, %v1401
        %v1525 = vsel %vm1523, %v1524, %v1401
        %v1526 = vshrl.u32 %v1525, 4
        %v1527 = vand.u32 %v1525, 15
        %v1528 = vsub.s32 0, %v1527
        %v1529 = vsel %vm1523, %v1528, %v1527
        %vm1530 = vcmp.lt.s32.totalorder %v1402, 0
        %v1531 = vsub.s32 0, %v1402
        %v1532 = vsel %vm1530, %v1531, %v1402
        %v1533 = vshrl.u32 %v1532, 4
        %v1534 = vand.u32 %v1532, 15
        %v1535 = vsub.s32 0, %v1534
        %v1536 = vsel %vm1530, %v1535, %v1534
        %vm1537 = vcmp.lt.s32.totalorder %v1403, 0
        %v1538 = vsub.s32 0, %v1403
        %v1539 = vsel %vm1537, %v1538, %v1403
        %v1540 = vshrl.u32 %v1539, 4
        %v1541 = vand.u32 %v1539, 15
        %v1542 = vsub.s32 0, %v1541
        %v1543 = vsel %vm1537, %v1542, %v1541
        %vm1544 = vcmp.lt.s32.totalorder %v1404, 0
        %v1545 = vsub.s32 0, %v1404
        %v1546 = vsel %vm1544, %v1545, %v1404
        %v1547 = vshrl.u32 %v1546, 4
        %v1548 = vand.u32 %v1546, 15
        %v1549 = vsub.s32 0, %v1548
        %v1550 = vsel %vm1544, %v1549, %v1548
        %vm1551 = vcmp.lt.s32.totalorder %v1405, 0
        %v1552 = vsub.s32 0, %v1405
        %v1553 = vsel %vm1551, %v1552, %v1405
        %v1554 = vshrl.u32 %v1553, 4
        %v1555 = vand.u32 %v1553, 15
        %v1556 = vsub.s32 0, %v1555
        %v1557 = vsel %vm1551, %v1556, %v1555
        %vm1558 = vcmp.lt.s32.totalorder %v1406, 0
        %v1559 = vsub.s32 0, %v1406
        %v1560 = vsel %vm1558, %v1559, %v1406
        %v1561 = vshrl.u32 %v1560, 4
        %v1562 = vand.u32 %v1560, 15
        %v1563 = vsub.s32 0, %v1562
        %v1564 = vsel %vm1558, %v1563, %v1562
        %vm1565 = vcmp.lt.s32.totalorder %v1407, 0
        %v1566 = vsub.s32 0, %v1407
        %v1567 = vsel %vm1565, %v1566, %v1407
        %v1568 = vshrl.u32 %v1567, 4
        %v1569 = vand.u32 %v1567, 15
        %v1570 = vsub.s32 0, %v1569
        %v1571 = vsel %vm1565, %v1570, %v1569
        %vm1572 = vcmp.lt.s32.totalorder %v1408, 0
        %v1573 = vsub.s32 0, %v1408
        %v1574 = vsel %vm1572, %v1573, %v1408
        %v1575 = vshrl.u32 %v1574, 4
        %v1576 = vand.u32 %v1574, 15
        %v1577 = vsub.s32 0, %v1576
        %v1578 = vsel %vm1572, %v1577, %v1576
        %vm1579 = vcmp.lt.s32.totalorder %v1409, 0
        %v1580 = vsub.s32 0, %v1409
        %v1581 = vsel %vm1579, %v1580, %v1409
        %v1582 = vshrl.u32 %v1581, 4
        %v1583 = vand.u32 %v1581, 15
        %v1584 = vsub.s32 0, %v1583
        %v1585 = vsel %vm1579, %v1584, %v1583
        %vm1586 = vcmp.lt.s32.totalorder %v1410, 0
        %v1587 = vsub.s32 0, %v1410
        %v1588 = vsel %vm1586, %v1587, %v1410
        %v1589 = vshrl.u32 %v1588, 4
        %v1590 = vand.u32 %v1588, 15
        %v1591 = vsub.s32 0, %v1590
        %v1592 = vsel %vm1586, %v1591, %v1590
        %vm1593 = vcmp.lt.s32.totalorder %v1411, 0
        %v1594 = vsub.s32 0, %v1411
        %v1595 = vsel %vm1593, %v1594, %v1411
        %v1596 = vshrl.u32 %v1595, 4
        %v1597 = vand.u32 %v1595, 15
        %v1598 = vsub.s32 0, %v1597
        %v1599 = vsel %vm1593, %v1598, %v1597
        %vm1600 = vcmp.lt.s32.totalorder %v1412, 0
        %v1601 = vsub.s32 0, %v1412
        %v1602 = vsel %vm1600, %v1601, %v1412
        %v1603 = vshrl.u32 %v1602, 4
        %v1604 = vand.u32 %v1602, 15
        %v1605 = vsub.s32 0, %v1604
        %v1606 = vsel %vm1600, %v1605, %v1604
        %vm1607 = vcmp.lt.s32.totalorder %v1413, 0
        %v1608 = vsub.s32 0, %v1413
        %v1609 = vsel %vm1607, %v1608, %v1413
        %v1610 = vshrl.u32 %v1609, 4
        %v1611 = vand.u32 %v1609, 15
        %v1612 = vsub.s32 0, %v1611
        %v1613 = vsel %vm1607, %v1612, %v1611
        %vm1614 = vcmp.lt.s32.totalorder %v1414, 0
        %v1615 = vsub.s32 0, %v1414
        %v1616 = vsel %vm1614, %v1615, %v1414
        %v1617 = vshrl.u32 %v1616, 4
        %v1618 = vand.u32 %v1616, 15
        %v1619 = vsub.s32 0, %v1618
        %v1620 = vsel %vm1614, %v1619, %v1618
        %vm1621 = vcmp.lt.s32.totalorder %v1415, 0
        %v1622 = vsub.s32 0, %v1415
        %v1623 = vsel %vm1621, %v1622, %v1415
        %v1624 = vshrl.u32 %v1623, 4
        %v1625 = vand.u32 %v1623, 15
        %v1626 = vsub.s32 0, %v1625
        %v1627 = vsel %vm1621, %v1626, %v1625
        %vm1628 = vcmp.lt.s32.totalorder %v1416, 0
        %v1629 = vsub.s32 0, %v1416
        %v1630 = vsel %vm1628, %v1629, %v1416
        %v1631 = vshrl.u32 %v1630, 4
        %v1632 = vand.u32 %v1630, 15
        %v1633 = vsub.s32 0, %v1632
        %v1634 = vsel %vm1628, %v1633, %v1632
        %vm1635 = vcmp.lt.s32.totalorder %v1417, 0
        %v1636 = vsub.s32 0, %v1417
        %v1637 = vsel %vm1635, %v1636, %v1417
        %v1638 = vshrl.u32 %v1637, 4
        %v1639 = vand.u32 %v1637, 15
        %v1640 = vsub.s32 0, %v1639
        %v1641 = vsel %vm1635, %v1640, %v1639
        %vm1642 = vcmp.ne.s32.totalorder %v1424, 0
        %vm1643 = vcmp.ne.s32.totalorder %v1431, 0
        %vm1644 = vcmp.ne.s32.totalorder %v1438, 0
        %vm1645 = vcmp.ne.s32.totalorder %v1445, 0
        %vm1646 = vcmp.ne.s32.totalorder %v1452, 0
        %vm1647 = vcmp.ne.s32.totalorder %v1459, 0
        %vm1648 = vcmp.ne.s32.totalorder %v1466, 0
        %vm1649 = vcmp.ne.s32.totalorder %v1473, 0
        %vm1650 = vcmp.ne.s32.totalorder %v1480, 0
        %vm1651 = vcmp.ne.s32.totalorder %v1487, 0
        %vm1652 = vcmp.ne.s32.totalorder %v1494, 0
        %vm1653 = vcmp.ne.s32.totalorder %v1501, 0
        %vm1654 = vcmp.ne.s32.totalorder %v1508, 0
        %vm1655 = vcmp.ne.s32.totalorder %v1515, 0
        %vm1656 = vcmp.ne.s32.totalorder %v1522, 0
        %vm1657 = vcmp.ne.s32.totalorder %v1529, 0
        %vm1658 = vcmp.ne.s32.totalorder %v1536, 0
        %vm1659 = vcmp.ne.s32.totalorder %v1543, 0
        %vm1660 = vcmp.ne.s32.totalorder %v1550, 0
        %vm1661 = vcmp.ne.s32.totalorder %v1557, 0
        %vm1662 = vcmp.ne.s32.totalorder %v1564, 0
        %vm1663 = vcmp.ne.s32.totalorder %v1571, 0
        %vm1664 = vcmp.ne.s32.totalorder %v1578, 0
        %vm1665 = vcmp.ne.s32.totalorder %v1585, 0
        %vm1666 = vcmp.ne.s32.totalorder %v1592, 0
        %vm1667 = vcmp.ne.s32.totalorder %v1599, 0
        %vm1668 = vcmp.ne.s32.totalorder %v1606, 0
        %vm1669 = vcmp.ne.s32.totalorder %v1613, 0
        %vm1670 = vcmp.ne.s32.totalorder %v1620, 0
        %vm1671 = vcmp.ne.s32.totalorder %v1627, 0
        %vm1672 = vcmp.ne.s32.totalorder %v1634, 0
        %vm1673 = vcmp.ne.s32.totalorder %v1641, 0
        %vm1674 = vcmp.lt.s32.totalorder %v1424, 0
        %vm1675 = vcmp.lt.s32.totalorder %v1431, 0
        %vm1676 = vcmp.lt.s32.totalorder %v1438, 0
        %vm1677 = vcmp.lt.s32.totalorder %v1445, 0
        %vm1678 = vcmp.lt.s32.totalorder %v1452, 0
        %vm1679 = vcmp.lt.s32.totalorder %v1459, 0
        %vm1680 = vcmp.lt.s32.totalorder %v1466, 0
        %vm1681 = vcmp.lt.s32.totalorder %v1473, 0
        %vm1682 = vcmp.lt.s32.totalorder %v1480, 0
        %vm1683 = vcmp.lt.s32.totalorder %v1487, 0
        %vm1684 = vcmp.lt.s32.totalorder %v1494, 0
        %vm1685 = vcmp.lt.s32.totalorder %v1501, 0
        %vm1686 = vcmp.lt.s32.totalorder %v1508, 0
        %vm1687 = vcmp.lt.s32.totalorder %v1515, 0
        %vm1688 = vcmp.lt.s32.totalorder %v1522, 0
        %vm1689 = vcmp.lt.s32.totalorder %v1529, 0
        %vm1690 = vcmp.lt.s32.totalorder %v1536, 0
        %vm1691 = vcmp.lt.s32.totalorder %v1543, 0
        %vm1692 = vcmp.lt.s32.totalorder %v1550, 0
        %vm1693 = vcmp.lt.s32.totalorder %v1557, 0
        %vm1694 = vcmp.lt.s32.totalorder %v1564, 0
        %vm1695 = vcmp.lt.s32.totalorder %v1571, 0
        %vm1696 = vcmp.lt.s32.totalorder %v1578, 0
        %vm1697 = vcmp.lt.s32.totalorder %v1585, 0
        %vm1698 = vcmp.lt.s32.totalorder %v1592, 0
        %vm1699 = vcmp.lt.s32.totalorder %v1599, 0
        %vm1700 = vcmp.lt.s32.totalorder %v1606, 0
        %vm1701 = vcmp.lt.s32.totalorder %v1613, 0
        %vm1702 = vcmp.lt.s32.totalorder %v1620, 0
        %vm1703 = vcmp.lt.s32.totalorder %v1627, 0
        %vm1704 = vcmp.lt.s32.totalorder %v1634, 0
        %vm1705 = vcmp.lt.s32.totalorder %v1641, 0
        %vm1706 = vmand %vm1674, %vm1642
        %vm1707 = vmand %vm1675, %vm1643
        %vm1708 = vmand %vm1676, %vm1644
        %vm1709 = vmand %vm1677, %vm1645
        %vm1710 = vmand %vm1678, %vm1646
        %vm1711 = vmand %vm1679, %vm1647
        %vm1712 = vmand %vm1680, %vm1648
        %vm1713 = vmand %vm1681, %vm1649
        %vm1714 = vmand %vm1682, %vm1650
        %vm1715 = vmand %vm1683, %vm1651
        %vm1716 = vmand %vm1684, %vm1652
        %vm1717 = vmand %vm1685, %vm1653
        %vm1718 = vmand %vm1686, %vm1654
        %vm1719 = vmand %vm1687, %vm1655
        %vm1720 = vmand %vm1688, %vm1656
        %vm1721 = vmand %vm1689, %vm1657
        %vm1722 = vmand %vm1690, %vm1658
        %vm1723 = vmand %vm1691, %vm1659
        %vm1724 = vmand %vm1692, %vm1660
        %vm1725 = vmand %vm1693, %vm1661
        %vm1726 = vmand %vm1694, %vm1662
        %vm1727 = vmand %vm1695, %vm1663
        %vm1728 = vmand %vm1696, %vm1664
        %vm1729 = vmand %vm1697, %vm1665
        %vm1730 = vmand %vm1698, %vm1666
        %vm1731 = vmand %vm1699, %vm1667
        %vm1732 = vmand %vm1700, %vm1668
        %vm1733 = vmand %vm1701, %vm1669
        %vm1734 = vmand %vm1702, %vm1670
        %vm1735 = vmand %vm1703, %vm1671
        %vm1736 = vmand %vm1704, %vm1672
        %vm1737 = vmand %vm1705, %vm1673
        %v1738 = vadd.s32 %v1424, 16
        %v1739 = vadd.s32 %v1431, 16
        %v1740 = vadd.s32 %v1438, 16
        %v1741 = vadd.s32 %v1445, 16
        %v1742 = vadd.s32 %v1452, 16
        %v1743 = vadd.s32 %v1459, 16
        %v1744 = vadd.s32 %v1466, 16
        %v1745 = vadd.s32 %v1473, 16
        %v1746 = vadd.s32 %v1480, 16
        %v1747 = vadd.s32 %v1487, 16
        %v1748 = vadd.s32 %v1494, 16
        %v1749 = vadd.s32 %v1501, 16
        %v1750 = vadd.s32 %v1508, 16
        %v1751 = vadd.s32 %v1515, 16
        %v1752 = vadd.s32 %v1522, 16
        %v1753 = vadd.s32 %v1529, 16
        %v1754 = vadd.s32 %v1536, 16
        %v1755 = vadd.s32 %v1543, 16
        %v1756 = vadd.s32 %v1550, 16
        %v1757 = vadd.s32 %v1557, 16
        %v1758 = vadd.s32 %v1564, 16
        %v1759 = vadd.s32 %v1571, 16
        %v1760 = vadd.s32 %v1578, 16
        %v1761 = vadd.s32 %v1585, 16
        %v1762 = vadd.s32 %v1592, 16
        %v1763 = vadd.s32 %v1599, 16
        %v1764 = vadd.s32 %v1606, 16
        %v1765 = vadd.s32 %v1613, 16
        %v1766 = vadd.s32 %v1620, 16
        %v1767 = vadd.s32 %v1627, 16
        %v1768 = vadd.s32 %v1634, 16
        %v1769 = vadd.s32 %v1641, 16
        %v1770 = vsel %vm1706, %v1738, %v1424
        %v1771 = vsel %vm1707, %v1739, %v1431
        %v1772 = vsel %vm1708, %v1740, %v1438
        %v1773 = vsel %vm1709, %v1741, %v1445
        %v1774 = vsel %vm1710, %v1742, %v1452
        %v1775 = vsel %vm1711, %v1743, %v1459
        %v1776 = vsel %vm1712, %v1744, %v1466
        %v1777 = vsel %vm1713, %v1745, %v1473
        %v1778 = vsel %vm1714, %v1746, %v1480
        %v1779 = vsel %vm1715, %v1747, %v1487
        %v1780 = vsel %vm1716, %v1748, %v1494
        %v1781 = vsel %vm1717, %v1749, %v1501
        %v1782 = vsel %vm1718, %v1750, %v1508
        %v1783 = vsel %vm1719, %v1751, %v1515
        %v1784 = vsel %vm1720, %v1752, %v1522
        %v1785 = vsel %vm1721, %v1753, %v1529
        %v1786 = vsel %vm1722, %v1754, %v1536
        %v1787 = vsel %vm1723, %v1755, %v1543
        %v1788 = vsel %vm1724, %v1756, %v1550
        %v1789 = vsel %vm1725, %v1757, %v1557
        %v1790 = vsel %vm1726, %v1758, %v1564
        %v1791 = vsel %vm1727, %v1759, %v1571
        %v1792 = vsel %vm1728, %v1760, %v1578
        %v1793 = vsel %vm1729, %v1761, %v1585
        %v1794 = vsel %vm1730, %v1762, %v1592
        %v1795 = vsel %vm1731, %v1763, %v1599
        %v1796 = vsel %vm1732, %v1764, %v1606
        %v1797 = vsel %vm1733, %v1765, %v1613
        %v1798 = vsel %vm1734, %v1766, %v1620
        %v1799 = vsel %vm1735, %v1767, %v1627
        %v1800 = vsel %vm1736, %v1768, %v1634
        %v1801 = vsel %vm1737, %v1769, %v1641
        %vm1802 = vcmp.gt.s32.totalorder %v1770, 0
        %vm1803 = vcmp.gt.s32.totalorder %v1771, 0
        %vm1804 = vcmp.gt.s32.totalorder %v1772, 0
        %vm1805 = vcmp.gt.s32.totalorder %v1773, 0
        %vm1806 = vcmp.gt.s32.totalorder %v1774, 0
        %vm1807 = vcmp.gt.s32.totalorder %v1775, 0
        %vm1808 = vcmp.gt.s32.totalorder %v1776, 0
        %vm1809 = vcmp.gt.s32.totalorder %v1777, 0
        %vm1810 = vcmp.gt.s32.totalorder %v1778, 0
        %vm1811 = vcmp.gt.s32.totalorder %v1779, 0
        %vm1812 = vcmp.gt.s32.totalorder %v1780, 0
        %vm1813 = vcmp.gt.s32.totalorder %v1781, 0
        %vm1814 = vcmp.gt.s32.totalorder %v1782, 0
        %vm1815 = vcmp.gt.s32.totalorder %v1783, 0
        %vm1816 = vcmp.gt.s32.totalorder %v1784, 0
        %vm1817 = vcmp.gt.s32.totalorder %v1785, 0
        %vm1818 = vcmp.gt.s32.totalorder %v1786, 0
        %vm1819 = vcmp.gt.s32.totalorder %v1787, 0
        %vm1820 = vcmp.gt.s32.totalorder %v1788, 0
        %vm1821 = vcmp.gt.s32.totalorder %v1789, 0
        %vm1822 = vcmp.gt.s32.totalorder %v1790, 0
        %vm1823 = vcmp.gt.s32.totalorder %v1791, 0
        %vm1824 = vcmp.gt.s32.totalorder %v1792, 0
        %vm1825 = vcmp.gt.s32.totalorder %v1793, 0
        %vm1826 = vcmp.gt.s32.totalorder %v1794, 0
        %vm1827 = vcmp.gt.s32.totalorder %v1795, 0
        %vm1828 = vcmp.gt.s32.totalorder %v1796, 0
        %vm1829 = vcmp.gt.s32.totalorder %v1797, 0
        %vm1830 = vcmp.gt.s32.totalorder %v1798, 0
        %vm1831 = vcmp.gt.s32.totalorder %v1799, 0
        %vm1832 = vcmp.gt.s32.totalorder %v1800, 0
        %vm1833 = vcmp.gt.s32.totalorder %v1801, 0
        %vm1834 = vcmp.lt.s32.totalorder %v1770, 15
        %vm1835 = vcmp.lt.s32.totalorder %v1771, 15
        %vm1836 = vcmp.lt.s32.totalorder %v1772, 15
        %vm1837 = vcmp.lt.s32.totalorder %v1773, 15
        %vm1838 = vcmp.lt.s32.totalorder %v1774, 15
        %vm1839 = vcmp.lt.s32.totalorder %v1775, 15
        %vm1840 = vcmp.lt.s32.totalorder %v1776, 15
        %vm1841 = vcmp.lt.s32.totalorder %v1777, 15
        %vm1842 = vcmp.lt.s32.totalorder %v1778, 15
        %vm1843 = vcmp.lt.s32.totalorder %v1779, 15
        %vm1844 = vcmp.lt.s32.totalorder %v1780, 15
        %vm1845 = vcmp.lt.s32.totalorder %v1781, 15
        %vm1846 = vcmp.lt.s32.totalorder %v1782, 15
        %vm1847 = vcmp.lt.s32.totalorder %v1783, 15
        %vm1848 = vcmp.lt.s32.totalorder %v1784, 15
        %vm1849 = vcmp.lt.s32.totalorder %v1785, 15
        %vm1850 = vcmp.lt.s32.totalorder %v1786, 15
        %vm1851 = vcmp.lt.s32.totalorder %v1787, 15
        %vm1852 = vcmp.lt.s32.totalorder %v1788, 15
        %vm1853 = vcmp.lt.s32.totalorder %v1789, 15
        %vm1854 = vcmp.lt.s32.totalorder %v1790, 15
        %vm1855 = vcmp.lt.s32.totalorder %v1791, 15
        %vm1856 = vcmp.lt.s32.totalorder %v1792, 15
        %vm1857 = vcmp.lt.s32.totalorder %v1793, 15
        %vm1858 = vcmp.lt.s32.totalorder %v1794, 15
        %vm1859 = vcmp.lt.s32.totalorder %v1795, 15
        %vm1860 = vcmp.lt.s32.totalorder %v1796, 15
        %vm1861 = vcmp.lt.s32.totalorder %v1797, 15
        %vm1862 = vcmp.lt.s32.totalorder %v1798, 15
        %vm1863 = vcmp.lt.s32.totalorder %v1799, 15
        %vm1864 = vcmp.lt.s32.totalorder %v1800, 15
        %vm1865 = vcmp.lt.s32.totalorder %v1801, 15
        %v1866 = vld [vmem:[%s6] sm:$0x1]
        %1867 = vst.msk [vmem:[#allocation2 + $0x18] sm:$0xff] %vm1346, %v1314
        %1868 = vst.msk [vmem:[#allocation2 + $0x20] sm:$0xff] %vm1346, %v1315
        %1869 = vst.msk [vmem:[#allocation2 + $0x28] sm:$0xff] %vm1346, %v1316
        %1870 = vst.msk [vmem:[#allocation2 + $0x30] sm:$0xff] %vm1346, %v1317
        %1871 = vst.msk [vmem:[#allocation2 + $0x38] sm:$0xff] %vm1346, %v1318
        %1872 = vst.msk [vmem:[#allocation2 + $0x40] sm:$0xff] %vm1346, %v1319
        %1873 = vst.msk [vmem:[#allocation2 + $0x48] sm:$0xff] %vm1346, %v1320
        %1874 = vst.msk [vmem:[#allocation2 + $0x50] sm:$0xff] %vm1346, %v1321
        %1875 = vst.msk [vmem:[#allocation2 + $0x58] sm:$0xff] %vm1346, %v1322
        %1876 = vst.msk [vmem:[#allocation2 + $0x60] sm:$0xff] %vm1346, %v1323
        %1877 = vst.msk [vmem:[#allocation2 + $0x68] sm:$0xff] %vm1346, %v1324
        %1878 = vst.msk [vmem:[#allocation2 + $0x70] sm:$0xff] %vm1346, %v1325
        %1879 = vst.msk [vmem:[#allocation2 + $0x78] sm:$0xff] %vm1346, %v1326
        %1880 = vst.msk [vmem:[#allocation2 + $0x80] sm:$0xff] %vm1346, %v1327
        %1881 = vst.msk [vmem:[#allocation2 + $0x88] sm:$0xff] %vm1346, %v1328
        %1882 = vst.msk [vmem:[#allocation2 + $0x90] sm:$0xff] %vm1346, %v1329
        %1883 = vst.msk [vmem:[#allocation2 + $0x98] sm:$0xff] %vm1346, %v1330
        %1884 = vst.msk [vmem:[#allocation2 + $0xa0] sm:$0xff] %vm1346, %v1331
        %1885 = vst.msk [vmem:[#allocation2 + $0xa8] sm:$0xff] %vm1346, %v1332
        %1886 = vst.msk [vmem:[#allocation2 + $0xb0] sm:$0xff] %vm1346, %v1333
        %1887 = vst.msk [vmem:[#allocation2 + $0xb8] sm:$0xff] %vm1346, %v1334
        %1888 = vst.msk [vmem:[#allocation2 + $0xc0] sm:$0xff] %vm1346, %v1335
        %1889 = vst.msk [vmem:[#allocation2 + $0xc8] sm:$0xff] %vm1346, %v1336
        %1890 = vst.msk [vmem:[#allocation2 + $0xd0] sm:$0xff] %vm1346, %v1337
        %1891 = vst.msk [vmem:[#allocation2 + $0xd8] sm:$0xff] %vm1346, %v1338
        %1892 = vst.msk [vmem:[#allocation2 + $0xe0] sm:$0xff] %vm1346, %v1339
        %1893 = vst.msk [vmem:[#allocation2 + $0xe8] sm:$0xff] %vm1346, %v1340
        %1894 = vst.msk [vmem:[#allocation2 + $0xf0] sm:$0xff] %vm1346, %v1341
        %1895 = vst.msk [vmem:[#allocation2 + $0xf8] sm:$0xff] %vm1346, %v1342
        %1896 = vst.msk [vmem:[#allocation2 + $0x100] sm:$0xff] %vm1346, %v1343
        %1897 = vst.msk [vmem:[#allocation2 + $0x108] sm:$0xff] %vm1346, %v1344
        %1898 = vst.msk [vmem:[#allocation2 + $0x110] sm:$0xff] %vm1346, %v1345
        %v1899 = vld [vmem:[#allocation2 + $0x7] sm:$0xff]
        %v1900 = vld [vmem:[#allocation2 + $0xf] sm:$0xff]
        %v1901 = vld [vmem:[#allocation2 + $0x17] sm:$0xff]
        %v1902 = vld [vmem:[#allocation2 + $0x1f] sm:$0xff]
        %v1903 = vld [vmem:[#allocation2 + $0x27] sm:$0xff]
        %v1904 = vld [vmem:[#allocation2 + $0x2f] sm:$0xff]
        %v1905 = vld [vmem:[#allocation2 + $0x37] sm:$0xff]
        %v1906 = vld [vmem:[#allocation2 + $0x3f] sm:$0xff]
        %v1907 = vld [vmem:[#allocation2 + $0x47] sm:$0xff]
        %v1908 = vld [vmem:[#allocation2 + $0x4f] sm:$0xff]
        %v1909 = vld [vmem:[#allocation2 + $0x57] sm:$0xff]
        %v1910 = vld [vmem:[#allocation2 + $0x5f] sm:$0xff]
        %v1911 = vld [vmem:[#allocation2 + $0x67] sm:$0xff]
        %v1912 = vld [vmem:[#allocation2 + $0x6f] sm:$0xff]
        %v1913 = vld [vmem:[#allocation2 + $0x77] sm:$0xff]
        %v1914 = vld [vmem:[#allocation2 + $0x7f] sm:$0xff]
        %v1915 = vld [vmem:[#allocation2 + $0x87] sm:$0xff]
        %v1916 = vld [vmem:[#allocation2 + $0x8f] sm:$0xff]
        %v1917 = vld [vmem:[#allocation2 + $0x97] sm:$0xff]
        %v1918 = vld [vmem:[#allocation2 + $0x9f] sm:$0xff]
        %v1919 = vld [vmem:[#allocation2 + $0xa7] sm:$0xff]
        %v1920 = vld [vmem:[#allocation2 + $0xaf] sm:$0xff]
        %v1921 = vld [vmem:[#allocation2 + $0xb7] sm:$0xff]
        %v1922 = vld [vmem:[#allocation2 + $0xbf] sm:$0xff]
        %v1923 = vld [vmem:[#allocation2 + $0xc7] sm:$0xff]
        %v1924 = vld [vmem:[#allocation2 + $0xcf] sm:$0xff]
        %v1925 = vld [vmem:[#allocation2 + $0xd7] sm:$0xff]
        %v1926 = vld [vmem:[#allocation2 + $0xdf] sm:$0xff]
        %v1927 = vld [vmem:[#allocation2 + $0xe7] sm:$0xff]
        %v1928 = vld [vmem:[#allocation2 + $0xef] sm:$0xff]
        %v1929 = vld [vmem:[#allocation2 + $0xf7] sm:$0xff]
        %v1930 = vld [vmem:[#allocation2 + $0xff] sm:$0xff]
        %v1931 = vsel %vm1802, 1, 0
        %v1932 = vsel %vm1803, 1, 0
        %v1933 = vsel %vm1804, 1, 0
        %v1934 = vsel %vm1805, 1, 0
        %v1935 = vsel %vm1806, 1, 0
        %v1936 = vsel %vm1807, 1, 0
        %v1937 = vsel %vm1808, 1, 0
        %v1938 = vsel %vm1809, 1, 0
        %v1939 = vsel %vm1810, 1, 0
        %v1940 = vsel %vm1811, 1, 0
        %v1941 = vsel %vm1812, 1, 0
        %v1942 = vsel %vm1813, 1, 0
        %v1943 = vsel %vm1814, 1, 0
        %v1944 = vsel %vm1815, 1, 0
        %v1945 = vsel %vm1816, 1, 0
        %v1946 = vsel %vm1817, 1, 0
        %v1947 = vsel %vm1818, 1, 0
        %v1948 = vsel %vm1819, 1, 0
        %v1949 = vsel %vm1820, 1, 0
        %v1950 = vsel %vm1821, 1, 0
        %v1951 = vsel %vm1822, 1, 0
        %v1952 = vsel %vm1823, 1, 0
        %v1953 = vsel %vm1824, 1, 0
        %v1954 = vsel %vm1825, 1, 0
        %v1955 = vsel %vm1826, 1, 0
        %v1956 = vsel %vm1827, 1, 0
        %v1957 = vsel %vm1828, 1, 0
        %v1958 = vsel %vm1829, 1, 0
        %v1959 = vsel %vm1830, 1, 0
        %v1960 = vsel %vm1831, 1, 0
        %v1961 = vsel %vm1832, 1, 0
        %v1962 = vsel %vm1833, 1, 0
        %vm1963 = vcmp.eq.s32.totalorder %v1931, 1
        %vm1964 = vcmp.eq.s32.totalorder %v1932, 1
        %vm1965 = vcmp.eq.s32.totalorder %v1933, 1
        %vm1966 = vcmp.eq.s32.totalorder %v1934, 1
        %vm1967 = vcmp.eq.s32.totalorder %v1935, 1
        %vm1968 = vcmp.eq.s32.totalorder %v1936, 1
        %vm1969 = vcmp.eq.s32.totalorder %v1937, 1
        %vm1970 = vcmp.eq.s32.totalorder %v1938, 1
        %vm1971 = vcmp.eq.s32.totalorder %v1939, 1
        %vm1972 = vcmp.eq.s32.totalorder %v1940, 1
        %vm1973 = vcmp.eq.s32.totalorder %v1941, 1
        %vm1974 = vcmp.eq.s32.totalorder %v1942, 1
        %vm1975 = vcmp.eq.s32.totalorder %v1943, 1
        %vm1976 = vcmp.eq.s32.totalorder %v1944, 1
        %vm1977 = vcmp.eq.s32.totalorder %v1945, 1
        %vm1978 = vcmp.eq.s32.totalorder %v1946, 1
        %vm1979 = vcmp.eq.s32.totalorder %v1947, 1
        %vm1980 = vcmp.eq.s32.totalorder %v1948, 1
        %vm1981 = vcmp.eq.s32.totalorder %v1949, 1
        %vm1982 = vcmp.eq.s32.totalorder %v1950, 1
        %vm1983 = vcmp.eq.s32.totalorder %v1951, 1
        %vm1984 = vcmp.eq.s32.totalorder %v1952, 1
        %vm1985 = vcmp.eq.s32.totalorder %v1953, 1
        %vm1986 = vcmp.eq.s32.totalorder %v1954, 1
        %vm1987 = vcmp.eq.s32.totalorder %v1955, 1
        %vm1988 = vcmp.eq.s32.totalorder %v1956, 1
        %vm1989 = vcmp.eq.s32.totalorder %v1957, 1
        %vm1990 = vcmp.eq.s32.totalorder %v1958, 1
        %vm1991 = vcmp.eq.s32.totalorder %v1959, 1
        %vm1992 = vcmp.eq.s32.totalorder %v1960, 1
        %vm1993 = vcmp.eq.s32.totalorder %v1961, 1
        %vm1994 = vcmp.eq.s32.totalorder %v1962, 1
        %v1995 = vsel %vm1963, %v1899, 0.0
        %v1996 = vsel %vm1964, %v1900, 0.0
        %v1997 = vsel %vm1965, %v1901, 0.0
        %v1998 = vsel %vm1966, %v1902, 0.0
        %v1999 = vsel %vm1967, %v1903, 0.0
        %v2000 = vsel %vm1968, %v1904, 0.0
        %v2001 = vsel %vm1969, %v1905, 0.0
        %v2002 = vsel %vm1970, %v1906, 0.0
        %v2003 = vsel %vm1971, %v1907, 0.0
        %v2004 = vsel %vm1972, %v1908, 0.0
        %v2005 = vsel %vm1973, %v1909, 0.0
        %v2006 = vsel %vm1974, %v1910, 0.0
        %v2007 = vsel %vm1975, %v1911, 0.0
        %v2008 = vsel %vm1976, %v1912, 0.0
        %v2009 = vsel %vm1977, %v1913, 0.0
        %v2010 = vsel %vm1978, %v1914, 0.0
        %v2011 = vsel %vm1979, %v1915, 0.0
        %v2012 = vsel %vm1980, %v1916, 0.0
        %v2013 = vsel %vm1981, %v1917, 0.0
        %v2014 = vsel %vm1982, %v1918, 0.0
        %v2015 = vsel %vm1983, %v1919, 0.0
        %v2016 = vsel %vm1984, %v1920, 0.0
        %v2017 = vsel %vm1985, %v1921, 0.0
        %v2018 = vsel %vm1986, %v1922, 0.0
        %v2019 = vsel %vm1987, %v1923, 0.0
        %v2020 = vsel %vm1988, %v1924, 0.0
        %v2021 = vsel %vm1989, %v1925, 0.0
        %v2022 = vsel %vm1990, %v1926, 0.0
        %v2023 = vsel %vm1991, %v1927, 0.0
        %v2024 = vsel %vm1992, %v1928, 0.0
        %v2025 = vsel %vm1993, %v1929, 0.0
        %v2026 = vsel %vm1994, %v1930, 0.0
        %v2027 = vpack.c.bf16 %v1996, %v1995
        %v2028 = vpack.c.bf16 %v1998, %v1997
        %v2029 = vpack.c.bf16 %v2000, %v1999
        %v2030 = vpack.c.bf16 %v2002, %v2001
        %v2031 = vpack.c.bf16 %v2004, %v2003
        %v2032 = vpack.c.bf16 %v2006, %v2005
        %v2033 = vpack.c.bf16 %v2008, %v2007
        %v2034 = vpack.c.bf16 %v2010, %v2009
        %v2035 = vpack.c.bf16 %v2012, %v2011
        %v2036 = vpack.c.bf16 %v2014, %v2013
        %v2037 = vpack.c.bf16 %v2016, %v2015
        %v2038 = vpack.c.bf16 %v2018, %v2017
        %v2039 = vpack.c.bf16 %v2020, %v2019
        %v2040 = vpack.c.bf16 %v2022, %v2021
        %v2041 = vpack.c.bf16 %v2024, %v2023
        %v2042 = vpack.c.bf16 %v2026, %v2025
        %v2043 = vld [vmem:[%s5] sm:$0xf]
        %v2044 = vld [vmem:[%s5 + $0x4] sm:$0xf]
        %v2045 = vld [vmem:[%s5 + $0x8] sm:$0xf]
        %v2046 = vld [vmem:[%s5 + $0xc] sm:$0xf]
        %v2047 = vld [vmem:[%s5 + $0x10] sm:$0xf]
        %v2048 = vld [vmem:[%s5 + $0x14] sm:$0xf]
        %v2049 = vld [vmem:[%s5 + $0x18] sm:$0xf]
        %v2050 = vld [vmem:[%s5 + $0x1c] sm:$0xf]
        %v2051 = vld [vmem:[#allocation2 + $0x8] sm:$0xff]
        %v2052 = vld [vmem:[#allocation2 + $0x10] sm:$0xff]
        %v2053 = vld [vmem:[#allocation2 + $0x18] sm:$0xff]
        %v2054 = vld [vmem:[#allocation2 + $0x20] sm:$0xff]
        %v2055 = vld [vmem:[#allocation2 + $0x28] sm:$0xff]
        %v2056 = vld [vmem:[#allocation2 + $0x30] sm:$0xff]
        %v2057 = vld [vmem:[#allocation2 + $0x38] sm:$0xff]
        %v2058 = vld [vmem:[#allocation2 + $0x40] sm:$0xff]
        %v2059 = vld [vmem:[#allocation2 + $0x48] sm:$0xff]
        %v2060 = vld [vmem:[#allocation2 + $0x50] sm:$0xff]
        %v2061 = vld [vmem:[#allocation2 + $0x58] sm:$0xff]
        %v2062 = vld [vmem:[#allocation2 + $0x60] sm:$0xff]
        %v2063 = vld [vmem:[#allocation2 + $0x68] sm:$0xff]
        %v2064 = vld [vmem:[#allocation2 + $0x70] sm:$0xff]
        %v2065 = vld [vmem:[#allocation2 + $0x78] sm:$0xff]
        %v2066 = vld [vmem:[#allocation2 + $0x80] sm:$0xff]
        %v2067 = vld [vmem:[#allocation2 + $0x88] sm:$0xff]
        %v2068 = vld [vmem:[#allocation2 + $0x90] sm:$0xff]
        %v2069 = vld [vmem:[#allocation2 + $0x98] sm:$0xff]
        %v2070 = vld [vmem:[#allocation2 + $0xa0] sm:$0xff]
        %v2071 = vld [vmem:[#allocation2 + $0xa8] sm:$0xff]
        %v2072 = vld [vmem:[#allocation2 + $0xb0] sm:$0xff]
        %v2073 = vld [vmem:[#allocation2 + $0xb8] sm:$0xff]
        %v2074 = vld [vmem:[#allocation2 + $0xc0] sm:$0xff]
        %v2075 = vld [vmem:[#allocation2 + $0xc8] sm:$0xff]
        %v2076 = vld [vmem:[#allocation2 + $0xd0] sm:$0xff]
        %v2077 = vld [vmem:[#allocation2 + $0xd8] sm:$0xff]
        %v2078 = vld [vmem:[#allocation2 + $0xe0] sm:$0xff]
        %v2079 = vld [vmem:[#allocation2 + $0xe8] sm:$0xff]
        %v2080 = vld [vmem:[#allocation2 + $0xf0] sm:$0xff]
        %v2081 = vld [vmem:[#allocation2 + $0xf8] sm:$0xff]
        %v2082 = vld [vmem:[#allocation2 + $0x100] sm:$0xff]
        %v2083 = vpack.c.bf16 %v2052, %v2051
        %v2084 = vpack.c.bf16 %v2054, %v2053
        %v2085 = vpack.c.bf16 %v2056, %v2055
        %v2086 = vpack.c.bf16 %v2058, %v2057
        %v2087 = vpack.c.bf16 %v2060, %v2059
        %v2088 = vpack.c.bf16 %v2062, %v2061
        %v2089 = vpack.c.bf16 %v2064, %v2063
        %v2090 = vpack.c.bf16 %v2066, %v2065
        %v2091 = vpack.c.bf16 %v2068, %v2067
        %v2092 = vpack.c.bf16 %v2070, %v2069
        %v2093 = vpack.c.bf16 %v2072, %v2071
        %v2094 = vpack.c.bf16 %v2074, %v2073
        %v2095 = vpack.c.bf16 %v2076, %v2075
        %v2096 = vpack.c.bf16 %v2078, %v2077
        %v2097 = vpack.c.bf16 %v2080, %v2079
        %v2098 = vpack.c.bf16 %v2082, %v2081
        %s2099 = scalar_lea.vmem %s5, 32
        %v2100 = vld [vmem:[%s2099] sm:$0xf]
        %v2101 = vld [vmem:[%s2099 + $0x4] sm:$0xf]
        %v2102 = vld [vmem:[%s2099 + $0x8] sm:$0xf]
        %v2103 = vld [vmem:[%s2099 + $0xc] sm:$0xf]
        %v2104 = vld [vmem:[%s2099 + $0x10] sm:$0xf]
        %v2105 = vld [vmem:[%s2099 + $0x14] sm:$0xf]
        %v2106 = vld [vmem:[%s2099 + $0x18] sm:$0xf]
        %v2107 = vld [vmem:[%s2099 + $0x1c] sm:$0xf]
        %v2116 = vunpack.c.l.b16 %v2100
        %v2117 = vunpack.c.l.b16 %v2101
        %v2118 = vunpack.c.l.b16 %v2102
        %v2119 = vunpack.c.l.b16 %v2103
        %v2120 = vunpack.c.l.b16 %v2104
        %v2121 = vunpack.c.l.b16 %v2105
        %v2122 = vunpack.c.l.b16 %v2106
        %v2123 = vunpack.c.l.b16 %v2107
        %v2124 = vpack.c.b16 %v2117, %v2116
        %v2125 = vpack.c.b16 %v2119, %v2118
        %v2126 = vpack.c.b16 %v2121, %v2120
        %v2127 = vpack.c.b16 %v2123, %v2122
        %v2133 = vsel %vm1346, %v2083, 0
        %v2136 = vsel %vm1346, %v2084, 0
        %v2139 = vsel %vm1346, %v2085, 0
        %v2142 = vsel %vm1346, %v2086, 0
        %v2145 = vsel %vm1346, %v2087, 0
        %v2148 = vsel %vm1346, %v2088, 0
        %v2151 = vsel %vm1346, %v2089, 0
        %v2154 = vsel %vm1346, %v2090, 0
        %v2157 = vsel %vm1346, %v2091, 0
        %v2160 = vsel %vm1346, %v2092, 0
        %v2163 = vsel %vm1346, %v2093, 0
        %v2166 = vsel %vm1346, %v2094, 0
        %v2169 = vsel %vm1346, %v2095, 0
        %v2172 = vsel %vm1346, %v2096, 0
        %v2175 = vsel %vm1346, %v2097, 0
        %v2178 = vsel %vm1346, %v2098, 0
        %2180 = vmatprep.subr.bf16.mxu0 0
        %2181 = vmatpush1.bf16.msra.mxu0 0
        %2182 = vmatprep.subr.bf16.mxu0 0
        %2183 = vmatpush1.bf16.msra.mxu0 0
        %2184 = vmatprep.subr.bf16.mxu0 0
        %2185 = vmatpush1.bf16.msra.mxu0 0
        %2186 = vmatprep.subr.bf16.mxu0 0
        %2187 = vmatpush1.bf16.msra.mxu0 0
        %2188 = vmatprep.subr.bf16.mxu0 0
        %2189 = vmatpush1.bf16.msra.mxu0 %v2127
        %2190 = vmatprep.subr.bf16.mxu0 0
        %2191 = vmatpush1.bf16.msra.mxu0 %v2126
        %2192 = vmatprep.subr.bf16.mxu0 0
        %2193 = vmatpush1.bf16.msra.mxu0 %v2125
        %2194 = vmatprep.subr.bf16.mxu0 0
        %2195 = vmatpush1.bf16.msra.mxu0 %v2124
        %2196 = vmatprep.subr.bf16.mxu0 0
        %2197 = vmatpush2.bf16.msra.mxu0 0
        %2198 = vmatprep.subr.bf16.mxu0 0
        %2199 = vmatpush2.bf16.msra.mxu0 0
        %2200 = vmatprep.subr.bf16.mxu0 0
        %2201 = vmatpush2.bf16.msra.mxu0 0
        %2202 = vmatprep.subr.bf16.mxu0 0
        %2203 = vmatpush2.bf16.msra.mxu0 0
        %2204 = vmatprep.subr.bf16.mxu0 0
        %2205 = vmatpush2.bf16.msra.mxu0 0
        %2206 = vmatprep.subr.bf16.mxu0 0
        %2207 = vmatpush2.bf16.msra.mxu0 0
        %2208 = vmatprep.subr.bf16.mxu0 0
        %2209 = vmatpush2.bf16.msra.mxu0 0
        %2210 = vmatprep.subr.bf16.mxu0 0
        %2211 = vmatpush2.bf16.msra.mxu0 0
        %2212 = vmatprep.mubr.bf16.mxu0 0
        %2213 = vmatmul.mubr.bf16.gmra.mxu0 %v2133
        %v2214 = vpop.f32.mrf.mxu0
        %v2215 = vadd.f32 0.0, %v2214
        %v2216 = vpop.f32.mrf.mxu0
        %v2217 = vpop.f32.mrf.mxu0
        %v2218 = vadd.f32 0.0, %v2217
        %v2219 = vpop.f32.mrf.mxu0
        %2220 = vmatprep.mubr.bf16.mxu0 0
        %2221 = vmatmul.mubr.bf16.gmra.mxu0 %v2136
        %v2222 = vpop.f32.mrf.mxu0
        %v2223 = vadd.f32 0.0, %v2222
        %v2224 = vpop.f32.mrf.mxu0
        %v2225 = vpop.f32.mrf.mxu0
        %v2226 = vadd.f32 0.0, %v2225
        %v2227 = vpop.f32.mrf.mxu0
        %2228 = vmatprep.mubr.bf16.mxu0 0
        %2229 = vmatmul.mubr.bf16.gmra.mxu0 %v2139
        %v2230 = vpop.f32.mrf.mxu0
        %v2231 = vadd.f32 0.0, %v2230
        %v2232 = vpop.f32.mrf.mxu0
        %v2233 = vpop.f32.mrf.mxu0
        %v2234 = vadd.f32 0.0, %v2233
        %v2235 = vpop.f32.mrf.mxu0
        %2236 = vmatprep.mubr.bf16.mxu0 0
        %2237 = vmatmul.mubr.bf16.gmra.mxu0 %v2142
        %v2238 = vpop.f32.mrf.mxu0
        %v2239 = vadd.f32 0.0, %v2238
        %v2240 = vpop.f32.mrf.mxu0
        %v2241 = vpop.f32.mrf.mxu0
        %v2242 = vadd.f32 0.0, %v2241
        %v2243 = vpop.f32.mrf.mxu0
        %2244 = vmatprep.mubr.bf16.mxu0 0
        %2245 = vmatmul.mubr.bf16.gmra.mxu0 %v2145
        %v2246 = vpop.f32.mrf.mxu0
        %v2247 = vadd.f32 0.0, %v2246
        %v2248 = vpop.f32.mrf.mxu0
        %v2249 = vpop.f32.mrf.mxu0
        %v2250 = vadd.f32 0.0, %v2249
        %v2251 = vpop.f32.mrf.mxu0
        %2252 = vmatprep.mubr.bf16.mxu0 0
        %2253 = vmatmul.mubr.bf16.gmra.mxu0 %v2148
        %v2254 = vpop.f32.mrf.mxu0
        %v2255 = vadd.f32 0.0, %v2254
        %v2256 = vpop.f32.mrf.mxu0
        %v2257 = vpop.f32.mrf.mxu0
        %v2258 = vadd.f32 0.0, %v2257
        %v2259 = vpop.f32.mrf.mxu0
        %2260 = vmatprep.mubr.bf16.mxu0 0
        %2261 = vmatmul.mubr.bf16.gmra.mxu0 %v2151
        %v2262 = vpop.f32.mrf.mxu0
        %v2263 = vadd.f32 0.0, %v2262
        %v2264 = vpop.f32.mrf.mxu0
        %v2265 = vpop.f32.mrf.mxu0
        %v2266 = vadd.f32 0.0, %v2265
        %v2267 = vpop.f32.mrf.mxu0
        %2268 = vmatprep.mubr.bf16.mxu0 0
        %2269 = vmatmul.mubr.bf16.gmra.mxu0 %v2154
        %v2270 = vpop.f32.mrf.mxu0
        %v2271 = vadd.f32 0.0, %v2270
        %v2272 = vpop.f32.mrf.mxu0
        %v2273 = vpop.f32.mrf.mxu0
        %v2274 = vadd.f32 0.0, %v2273
        %v2275 = vpop.f32.mrf.mxu0
        %2276 = vmatprep.mubr.bf16.mxu0 0
        %2277 = vmatmul.mubr.bf16.gmra.mxu0 %v2157
        %v2278 = vpop.f32.mrf.mxu0
        %v2279 = vadd.f32 0.0, %v2278
        %v2280 = vpop.f32.mrf.mxu0
        %v2281 = vpop.f32.mrf.mxu0
        %v2282 = vadd.f32 0.0, %v2281
        %v2283 = vpop.f32.mrf.mxu0
        %2284 = vmatprep.mubr.bf16.mxu0 0
        %2285 = vmatmul.mubr.bf16.gmra.mxu0 %v2160
        %v2286 = vpop.f32.mrf.mxu0
        %v2287 = vadd.f32 0.0, %v2286
        %v2288 = vpop.f32.mrf.mxu0
        %v2289 = vpop.f32.mrf.mxu0
        %v2290 = vadd.f32 0.0, %v2289
        %v2291 = vpop.f32.mrf.mxu0
        %2292 = vmatprep.mubr.bf16.mxu0 0
        %2293 = vmatmul.mubr.bf16.gmra.mxu0 %v2163
        %v2294 = vpop.f32.mrf.mxu0
        %v2295 = vadd.f32 0.0, %v2294
        %v2296 = vpop.f32.mrf.mxu0
        %v2297 = vpop.f32.mrf.mxu0
        %v2298 = vadd.f32 0.0, %v2297
        %v2299 = vpop.f32.mrf.mxu0
        %2300 = vmatprep.mubr.bf16.mxu0 0
        %2301 = vmatmul.mubr.bf16.gmra.mxu0 %v2166
        %v2302 = vpop.f32.mrf.mxu0
        %v2303 = vadd.f32 0.0, %v2302
        %v2304 = vpop.f32.mrf.mxu0
        %v2305 = vpop.f32.mrf.mxu0
        %v2306 = vadd.f32 0.0, %v2305
        %v2307 = vpop.f32.mrf.mxu0
        %2308 = vmatprep.mubr.bf16.mxu0 0
        %2309 = vmatmul.mubr.bf16.gmra.mxu0 %v2169
        %v2310 = vpop.f32.mrf.mxu0
        %v2311 = vadd.f32 0.0, %v2310
        %v2312 = vpop.f32.mrf.mxu0
        %v2313 = vpop.f32.mrf.mxu0
        %v2314 = vadd.f32 0.0, %v2313
        %v2315 = vpop.f32.mrf.mxu0
        %2316 = vmatprep.mubr.bf16.mxu0 0
        %2317 = vmatmul.mubr.bf16.gmra.mxu0 %v2172
        %v2318 = vpop.f32.mrf.mxu0
        %v2319 = vadd.f32 0.0, %v2318
        %v2320 = vpop.f32.mrf.mxu0
        %v2321 = vpop.f32.mrf.mxu0
        %v2322 = vadd.f32 0.0, %v2321
        %v2323 = vpop.f32.mrf.mxu0
        %2324 = vmatprep.mubr.bf16.mxu0 0
        %2325 = vmatmul.mubr.bf16.gmra.mxu0 %v2175
        %v2326 = vpop.f32.mrf.mxu0
        %v2327 = vadd.f32 0.0, %v2326
        %v2328 = vpop.f32.mrf.mxu0
        %v2329 = vpop.f32.mrf.mxu0
        %v2330 = vadd.f32 0.0, %v2329
        %v2331 = vpop.f32.mrf.mxu0
        %2332 = vmatprep.mubr.bf16.mxu0 0
        %2333 = vmatmul.mubr.bf16.gmra.mxu0 %v2178
        %v2334 = vpop.f32.mrf.mxu0
        %v2335 = vadd.f32 0.0, %v2334
        %v2336 = vpop.f32.mrf.mxu0
        %v2337 = vpop.f32.mrf.mxu0
        %v2338 = vadd.f32 0.0, %v2337
        %v2339 = vpop.f32.mrf.mxu0
        %2340 = vdwg.mxu0
        %v2349 = vunpack.c.l.b16 %v2043
        %v2350 = vunpack.c.l.b16 %v2044
        %v2351 = vunpack.c.l.b16 %v2045
        %v2352 = vunpack.c.l.b16 %v2046
        %v2353 = vunpack.c.l.b16 %v2047
        %v2354 = vunpack.c.l.b16 %v2048
        %v2355 = vunpack.c.l.b16 %v2049
        %v2356 = vunpack.c.l.b16 %v2050
        %v2357 = vpack.c.b16 %v2350, %v2349
        %v2358 = vpack.c.b16 %v2352, %v2351
        %v2359 = vpack.c.b16 %v2354, %v2353
        %v2360 = vpack.c.b16 %v2356, %v2355
        %v2366 = vsel %vm1346, %v2027, 0
        %v2369 = vsel %vm1346, %v2028, 0
        %v2372 = vsel %vm1346, %v2029, 0
        %v2375 = vsel %vm1346, %v2030, 0
        %v2378 = vsel %vm1346, %v2031, 0
        %v2381 = vsel %vm1346, %v2032, 0
        %v2384 = vsel %vm1346, %v2033, 0
        %v2387 = vsel %vm1346, %v2034, 0
        %v2390 = vsel %vm1346, %v2035, 0
        %v2393 = vsel %vm1346, %v2036, 0
        %v2396 = vsel %vm1346, %v2037, 0
        %v2399 = vsel %vm1346, %v2038, 0
        %v2402 = vsel %vm1346, %v2039, 0
        %v2405 = vsel %vm1346, %v2040, 0
        %v2408 = vsel %vm1346, %v2041, 0
        %v2411 = vsel %vm1346, %v2042, 0
        %2413 = vmatprep.subr.bf16.mxu0 0
        %2414 = vmatpush1.bf16.msra.mxu0 0
        %2415 = vmatprep.subr.bf16.mxu0 0
        %2416 = vmatpush1.bf16.msra.mxu0 0
        %2417 = vmatprep.subr.bf16.mxu0 0
        %2418 = vmatpush1.bf16.msra.mxu0 0
        %2419 = vmatprep.subr.bf16.mxu0 0
        %2420 = vmatpush1.bf16.msra.mxu0 0
        %2421 = vmatprep.subr.bf16.mxu0 0
        %2422 = vmatpush1.bf16.msra.mxu0 %v2360
        %2423 = vmatprep.subr.bf16.mxu0 0
        %2424 = vmatpush1.bf16.msra.mxu0 %v2359
        %2425 = vmatprep.subr.bf16.mxu0 0
        %2426 = vmatpush1.bf16.msra.mxu0 %v2358
        %2427 = vmatprep.subr.bf16.mxu0 0
        %2428 = vmatpush1.bf16.msra.mxu0 %v2357
        %2429 = vmatprep.subr.bf16.mxu0 0
        %2430 = vmatpush2.bf16.msra.mxu0 0
        %2431 = vmatprep.subr.bf16.mxu0 0
        %2432 = vmatpush2.bf16.msra.mxu0 0
        %2433 = vmatprep.subr.bf16.mxu0 0
        %2434 = vmatpush2.bf16.msra.mxu0 0
        %2435 = vmatprep.subr.bf16.mxu0 0
        %2436 = vmatpush2.bf16.msra.mxu0 0
        %2437 = vmatprep.subr.bf16.mxu0 0
        %2438 = vmatpush2.bf16.msra.mxu0 0
        %2439 = vmatprep.subr.bf16.mxu0 0
        %2440 = vmatpush2.bf16.msra.mxu0 0
        %2441 = vmatprep.subr.bf16.mxu0 0
        %2442 = vmatpush2.bf16.msra.mxu0 0
        %2443 = vmatprep.subr.bf16.mxu0 0
        %2444 = vmatpush2.bf16.msra.mxu0 0
        %2445 = vmatprep.mubr.bf16.mxu0 0
        %2446 = vmatmul.mubr.bf16.gmra.mxu0 %v2366
        %v2447 = vpop.f32.mrf.mxu0
        %v2448 = vadd.f32 %v2215, %v2447
        %v2449 = vpop.f32.mrf.mxu0
        %v2450 = vpop.f32.mrf.mxu0
        %v2451 = vadd.f32 %v2218, %v2450
        %v2452 = vpop.f32.mrf.mxu0
        %2453 = vmatprep.mubr.bf16.mxu0 0
        %2454 = vmatmul.mubr.bf16.gmra.mxu0 %v2369
        %v2455 = vpop.f32.mrf.mxu0
        %v2456 = vadd.f32 %v2223, %v2455
        %v2457 = vpop.f32.mrf.mxu0
        %v2458 = vpop.f32.mrf.mxu0
        %v2459 = vadd.f32 %v2226, %v2458
        %v2460 = vpop.f32.mrf.mxu0
        %2461 = vmatprep.mubr.bf16.mxu0 0
        %2462 = vmatmul.mubr.bf16.gmra.mxu0 %v2372
        %v2463 = vpop.f32.mrf.mxu0
        %v2464 = vadd.f32 %v2231, %v2463
        %v2465 = vpop.f32.mrf.mxu0
        %v2466 = vpop.f32.mrf.mxu0
        %v2467 = vadd.f32 %v2234, %v2466
        %v2468 = vpop.f32.mrf.mxu0
        %2469 = vmatprep.mubr.bf16.mxu0 0
        %2470 = vmatmul.mubr.bf16.gmra.mxu0 %v2375
        %v2471 = vpop.f32.mrf.mxu0
        %v2472 = vadd.f32 %v2239, %v2471
        %v2473 = vpop.f32.mrf.mxu0
        %v2474 = vpop.f32.mrf.mxu0
        %v2475 = vadd.f32 %v2242, %v2474
        %v2476 = vpop.f32.mrf.mxu0
        %2477 = vmatprep.mubr.bf16.mxu0 0
        %2478 = vmatmul.mubr.bf16.gmra.mxu0 %v2378
        %v2479 = vpop.f32.mrf.mxu0
        %v2480 = vadd.f32 %v2247, %v2479
        %v2481 = vpop.f32.mrf.mxu0
        %v2482 = vpop.f32.mrf.mxu0
        %v2483 = vadd.f32 %v2250, %v2482
        %v2484 = vpop.f32.mrf.mxu0
        %2485 = vmatprep.mubr.bf16.mxu0 0
        %2486 = vmatmul.mubr.bf16.gmra.mxu0 %v2381
        %v2487 = vpop.f32.mrf.mxu0
        %v2488 = vadd.f32 %v2255, %v2487
        %v2489 = vpop.f32.mrf.mxu0
        %v2490 = vpop.f32.mrf.mxu0
        %v2491 = vadd.f32 %v2258, %v2490
        %v2492 = vpop.f32.mrf.mxu0
        %2493 = vmatprep.mubr.bf16.mxu0 0
        %2494 = vmatmul.mubr.bf16.gmra.mxu0 %v2384
        %v2495 = vpop.f32.mrf.mxu0
        %v2496 = vadd.f32 %v2263, %v2495
        %v2497 = vpop.f32.mrf.mxu0
        %v2498 = vpop.f32.mrf.mxu0
        %v2499 = vadd.f32 %v2266, %v2498
        %v2500 = vpop.f32.mrf.mxu0
        %2501 = vmatprep.mubr.bf16.mxu0 0
        %2502 = vmatmul.mubr.bf16.gmra.mxu0 %v2387
        %v2503 = vpop.f32.mrf.mxu0
        %v2504 = vadd.f32 %v2271, %v2503
        %v2505 = vpop.f32.mrf.mxu0
        %v2506 = vpop.f32.mrf.mxu0
        %v2507 = vadd.f32 %v2274, %v2506
        %v2508 = vpop.f32.mrf.mxu0
        %2509 = vmatprep.mubr.bf16.mxu0 0
        %2510 = vmatmul.mubr.bf16.gmra.mxu0 %v2390
        %v2511 = vpop.f32.mrf.mxu0
        %v2512 = vadd.f32 %v2279, %v2511
        %v2513 = vpop.f32.mrf.mxu0
        %v2514 = vpop.f32.mrf.mxu0
        %v2515 = vadd.f32 %v2282, %v2514
        %v2516 = vpop.f32.mrf.mxu0
        %2517 = vmatprep.mubr.bf16.mxu0 0
        %2518 = vmatmul.mubr.bf16.gmra.mxu0 %v2393
        %v2519 = vpop.f32.mrf.mxu0
        %v2520 = vadd.f32 %v2287, %v2519
        %v2521 = vpop.f32.mrf.mxu0
        %v2522 = vpop.f32.mrf.mxu0
        %v2523 = vadd.f32 %v2290, %v2522
        %v2524 = vpop.f32.mrf.mxu0
        %2525 = vmatprep.mubr.bf16.mxu0 0
        %2526 = vmatmul.mubr.bf16.gmra.mxu0 %v2396
        %v2527 = vpop.f32.mrf.mxu0
        %v2528 = vadd.f32 %v2295, %v2527
        %v2529 = vpop.f32.mrf.mxu0
        %v2530 = vpop.f32.mrf.mxu0
        %v2531 = vadd.f32 %v2298, %v2530
        %v2532 = vpop.f32.mrf.mxu0
        %2533 = vmatprep.mubr.bf16.mxu0 0
        %2534 = vmatmul.mubr.bf16.gmra.mxu0 %v2399
        %v2535 = vpop.f32.mrf.mxu0
        %v2536 = vadd.f32 %v2303, %v2535
        %v2537 = vpop.f32.mrf.mxu0
        %v2538 = vpop.f32.mrf.mxu0
        %v2539 = vadd.f32 %v2306, %v2538
        %v2540 = vpop.f32.mrf.mxu0
        %2541 = vmatprep.mubr.bf16.mxu0 0
        %2542 = vmatmul.mubr.bf16.gmra.mxu0 %v2402
        %v2543 = vpop.f32.mrf.mxu0
        %v2544 = vadd.f32 %v2311, %v2543
        %v2545 = vpop.f32.mrf.mxu0
        %v2546 = vpop.f32.mrf.mxu0
        %v2547 = vadd.f32 %v2314, %v2546
        %v2548 = vpop.f32.mrf.mxu0
        %2549 = vmatprep.mubr.bf16.mxu0 0
        %2550 = vmatmul.mubr.bf16.gmra.mxu0 %v2405
        %v2551 = vpop.f32.mrf.mxu0
        %v2552 = vadd.f32 %v2319, %v2551
        %v2553 = vpop.f32.mrf.mxu0
        %v2554 = vpop.f32.mrf.mxu0
        %v2555 = vadd.f32 %v2322, %v2554
        %v2556 = vpop.f32.mrf.mxu0
        %2557 = vmatprep.mubr.bf16.mxu0 0
        %2558 = vmatmul.mubr.bf16.gmra.mxu0 %v2408
        %v2559 = vpop.f32.mrf.mxu0
        %v2560 = vadd.f32 %v2327, %v2559
        %v2561 = vpop.f32.mrf.mxu0
        %v2562 = vpop.f32.mrf.mxu0
        %v2563 = vadd.f32 %v2330, %v2562
        %v2564 = vpop.f32.mrf.mxu0
        %2565 = vmatprep.mubr.bf16.mxu0 0
        %2566 = vmatmul.mubr.bf16.gmra.mxu0 %v2411
        %v2567 = vpop.f32.mrf.mxu0
        %v2568 = vadd.f32 %v2335, %v2567
        %v2569 = vpop.f32.mrf.mxu0
        %v2570 = vpop.f32.mrf.mxu0
        %v2571 = vadd.f32 %v2338, %v2570
        %v2572 = vpop.f32.mrf.mxu0
        %2573 = vdwg.mxu0
        %v2574 = vld [vmem:[#allocation2 + $0x9] sm:$0xff]
        %v2575 = vld [vmem:[#allocation2 + $0x11] sm:$0xff]
        %v2576 = vld [vmem:[#allocation2 + $0x19] sm:$0xff]
        %v2577 = vld [vmem:[#allocation2 + $0x21] sm:$0xff]
        %v2578 = vld [vmem:[#allocation2 + $0x29] sm:$0xff]
        %v2579 = vld [vmem:[#allocation2 + $0x31] sm:$0xff]
        %v2580 = vld [vmem:[#allocation2 + $0x39] sm:$0xff]
        %v2581 = vld [vmem:[#allocation2 + $0x41] sm:$0xff]
        %v2582 = vld [vmem:[#allocation2 + $0x49] sm:$0xff]
        %v2583 = vld [vmem:[#allocation2 + $0x51] sm:$0xff]
        %v2584 = vld [vmem:[#allocation2 + $0x59] sm:$0xff]
        %v2585 = vld [vmem:[#allocation2 + $0x61] sm:$0xff]
        %v2586 = vld [vmem:[#allocation2 + $0x69] sm:$0xff]
        %v2587 = vld [vmem:[#allocation2 + $0x71] sm:$0xff]
        %v2588 = vld [vmem:[#allocation2 + $0x79] sm:$0xff]
        %v2589 = vld [vmem:[#allocation2 + $0x81] sm:$0xff]
        %v2590 = vld [vmem:[#allocation2 + $0x89] sm:$0xff]
        %v2591 = vld [vmem:[#allocation2 + $0x91] sm:$0xff]
        %v2592 = vld [vmem:[#allocation2 + $0x99] sm:$0xff]
        %v2593 = vld [vmem:[#allocation2 + $0xa1] sm:$0xff]
        %v2594 = vld [vmem:[#allocation2 + $0xa9] sm:$0xff]
        %v2595 = vld [vmem:[#allocation2 + $0xb1] sm:$0xff]
        %v2596 = vld [vmem:[#allocation2 + $0xb9] sm:$0xff]
        %v2597 = vld [vmem:[#allocation2 + $0xc1] sm:$0xff]
        %v2598 = vld [vmem:[#allocation2 + $0xc9] sm:$0xff]
        %v2599 = vld [vmem:[#allocation2 + $0xd1] sm:$0xff]
        %v2600 = vld [vmem:[#allocation2 + $0xd9] sm:$0xff]
        %v2601 = vld [vmem:[#allocation2 + $0xe1] sm:$0xff]
        %v2602 = vld [vmem:[#allocation2 + $0xe9] sm:$0xff]
        %v2603 = vld [vmem:[#allocation2 + $0xf1] sm:$0xff]
        %v2604 = vld [vmem:[#allocation2 + $0xf9] sm:$0xff]
        %v2605 = vld [vmem:[#allocation2 + $0x101] sm:$0xff]
        %v2606 = vsel %vm1834, 1, 0
        %v2607 = vsel %vm1835, 1, 0
        %v2608 = vsel %vm1836, 1, 0
        %v2609 = vsel %vm1837, 1, 0
        %v2610 = vsel %vm1838, 1, 0
        %v2611 = vsel %vm1839, 1, 0
        %v2612 = vsel %vm1840, 1, 0
        %v2613 = vsel %vm1841, 1, 0
        %v2614 = vsel %vm1842, 1, 0
        %v2615 = vsel %vm1843, 1, 0
        %v2616 = vsel %vm1844, 1, 0
        %v2617 = vsel %vm1845, 1, 0
        %v2618 = vsel %vm1846, 1, 0
        %v2619 = vsel %vm1847, 1, 0
        %v2620 = vsel %vm1848, 1, 0
        %v2621 = vsel %vm1849, 1, 0
        %v2622 = vsel %vm1850, 1, 0
        %v2623 = vsel %vm1851, 1, 0
        %v2624 = vsel %vm1852, 1, 0
        %v2625 = vsel %vm1853, 1, 0
        %v2626 = vsel %vm1854, 1, 0
        %v2627 = vsel %vm1855, 1, 0
        %v2628 = vsel %vm1856, 1, 0
        %v2629 = vsel %vm1857, 1, 0
        %v2630 = vsel %vm1858, 1, 0
        %v2631 = vsel %vm1859, 1, 0
        %v2632 = vsel %vm1860, 1, 0
        %v2633 = vsel %vm1861, 1, 0
        %v2634 = vsel %vm1862, 1, 0
        %v2635 = vsel %vm1863, 1, 0
        %v2636 = vsel %vm1864, 1, 0
        %v2637 = vsel %vm1865, 1, 0
        %vm2638 = vcmp.eq.s32.totalorder %v2606, 1
        %vm2639 = vcmp.eq.s32.totalorder %v2607, 1
        %vm2640 = vcmp.eq.s32.totalorder %v2608, 1
        %vm2641 = vcmp.eq.s32.totalorder %v2609, 1
        %vm2642 = vcmp.eq.s32.totalorder %v2610, 1
        %vm2643 = vcmp.eq.s32.totalorder %v2611, 1
        %vm2644 = vcmp.eq.s32.totalorder %v2612, 1
        %vm2645 = vcmp.eq.s32.totalorder %v2613, 1
        %vm2646 = vcmp.eq.s32.totalorder %v2614, 1
        %vm2647 = vcmp.eq.s32.totalorder %v2615, 1
        %vm2648 = vcmp.eq.s32.totalorder %v2616, 1
        %vm2649 = vcmp.eq.s32.totalorder %v2617, 1
        %vm2650 = vcmp.eq.s32.totalorder %v2618, 1
        %vm2651 = vcmp.eq.s32.totalorder %v2619, 1
        %vm2652 = vcmp.eq.s32.totalorder %v2620, 1
        %vm2653 = vcmp.eq.s32.totalorder %v2621, 1
        %vm2654 = vcmp.eq.s32.totalorder %v2622, 1
        %vm2655 = vcmp.eq.s32.totalorder %v2623, 1
        %vm2656 = vcmp.eq.s32.totalorder %v2624, 1
        %vm2657 = vcmp.eq.s32.totalorder %v2625, 1
        %vm2658 = vcmp.eq.s32.totalorder %v2626, 1
        %vm2659 = vcmp.eq.s32.totalorder %v2627, 1
        %vm2660 = vcmp.eq.s32.totalorder %v2628, 1
        %vm2661 = vcmp.eq.s32.totalorder %v2629, 1
        %vm2662 = vcmp.eq.s32.totalorder %v2630, 1
        %vm2663 = vcmp.eq.s32.totalorder %v2631, 1
        %vm2664 = vcmp.eq.s32.totalorder %v2632, 1
        %vm2665 = vcmp.eq.s32.totalorder %v2633, 1
        %vm2666 = vcmp.eq.s32.totalorder %v2634, 1
        %vm2667 = vcmp.eq.s32.totalorder %v2635, 1
        %vm2668 = vcmp.eq.s32.totalorder %v2636, 1
        %vm2669 = vcmp.eq.s32.totalorder %v2637, 1
        %v2670 = vsel %vm2638, %v2574, 0.0
        %v2671 = vsel %vm2639, %v2575, 0.0
        %v2672 = vsel %vm2640, %v2576, 0.0
        %v2673 = vsel %vm2641, %v2577, 0.0
        %v2674 = vsel %vm2642, %v2578, 0.0
        %v2675 = vsel %vm2643, %v2579, 0.0
        %v2676 = vsel %vm2644, %v2580, 0.0
        %v2677 = vsel %vm2645, %v2581, 0.0
        %v2678 = vsel %vm2646, %v2582, 0.0
        %v2679 = vsel %vm2647, %v2583, 0.0
        %v2680 = vsel %vm2648, %v2584, 0.0
        %v2681 = vsel %vm2649, %v2585, 0.0
        %v2682 = vsel %vm2650, %v2586, 0.0
        %v2683 = vsel %vm2651, %v2587, 0.0
        %v2684 = vsel %vm2652, %v2588, 0.0
        %v2685 = vsel %vm2653, %v2589, 0.0
        %v2686 = vsel %vm2654, %v2590, 0.0
        %v2687 = vsel %vm2655, %v2591, 0.0
        %v2688 = vsel %vm2656, %v2592, 0.0
        %v2689 = vsel %vm2657, %v2593, 0.0
        %v2690 = vsel %vm2658, %v2594, 0.0
        %v2691 = vsel %vm2659, %v2595, 0.0
        %v2692 = vsel %vm2660, %v2596, 0.0
        %v2693 = vsel %vm2661, %v2597, 0.0
        %v2694 = vsel %vm2662, %v2598, 0.0
        %v2695 = vsel %vm2663, %v2599, 0.0
        %v2696 = vsel %vm2664, %v2600, 0.0
        %v2697 = vsel %vm2665, %v2601, 0.0
        %v2698 = vsel %vm2666, %v2602, 0.0
        %v2699 = vsel %vm2667, %v2603, 0.0
        %v2700 = vsel %vm2668, %v2604, 0.0
        %v2701 = vsel %vm2669, %v2605, 0.0
        %v2702 = vpack.c.bf16 %v2671, %v2670
        %v2703 = vpack.c.bf16 %v2673, %v2672
        %v2704 = vpack.c.bf16 %v2675, %v2674
        %v2705 = vpack.c.bf16 %v2677, %v2676
        %v2706 = vpack.c.bf16 %v2679, %v2678
        %v2707 = vpack.c.bf16 %v2681, %v2680
        %v2708 = vpack.c.bf16 %v2683, %v2682
        %v2709 = vpack.c.bf16 %v2685, %v2684
        %v2710 = vpack.c.bf16 %v2687, %v2686
        %v2711 = vpack.c.bf16 %v2689, %v2688
        %v2712 = vpack.c.bf16 %v2691, %v2690
        %v2713 = vpack.c.bf16 %v2693, %v2692
        %v2714 = vpack.c.bf16 %v2695, %v2694
        %v2715 = vpack.c.bf16 %v2697, %v2696
        %v2716 = vpack.c.bf16 %v2699, %v2698
        %v2717 = vpack.c.bf16 %v2701, %v2700
        %s2718 = scalar_lea.vmem %s5, 64
        %v2719 = vld [vmem:[%s2718] sm:$0xf]
        %v2720 = vld [vmem:[%s2718 + $0x4] sm:$0xf]
        %v2721 = vld [vmem:[%s2718 + $0x8] sm:$0xf]
        %v2722 = vld [vmem:[%s2718 + $0xc] sm:$0xf]
        %v2723 = vld [vmem:[%s2718 + $0x10] sm:$0xf]
        %v2724 = vld [vmem:[%s2718 + $0x14] sm:$0xf]
        %v2725 = vld [vmem:[%s2718 + $0x18] sm:$0xf]
        %v2726 = vld [vmem:[%s2718 + $0x1c] sm:$0xf]
        %v2735 = vunpack.c.l.b16 %v2719
        %v2736 = vunpack.c.l.b16 %v2720
        %v2737 = vunpack.c.l.b16 %v2721
        %v2738 = vunpack.c.l.b16 %v2722
        %v2739 = vunpack.c.l.b16 %v2723
        %v2740 = vunpack.c.l.b16 %v2724
        %v2741 = vunpack.c.l.b16 %v2725
        %v2742 = vunpack.c.l.b16 %v2726
        %v2743 = vpack.c.b16 %v2736, %v2735
        %v2744 = vpack.c.b16 %v2738, %v2737
        %v2745 = vpack.c.b16 %v2740, %v2739
        %v2746 = vpack.c.b16 %v2742, %v2741
        %v2752 = vsel %vm1346, %v2702, 0
        %v2755 = vsel %vm1346, %v2703, 0
        %v2758 = vsel %vm1346, %v2704, 0
        %v2761 = vsel %vm1346, %v2705, 0
        %v2764 = vsel %vm1346, %v2706, 0
        %v2767 = vsel %vm1346, %v2707, 0
        %v2770 = vsel %vm1346, %v2708, 0
        %v2773 = vsel %vm1346, %v2709, 0
        %v2776 = vsel %vm1346, %v2710, 0
        %v2779 = vsel %vm1346, %v2711, 0
        %v2782 = vsel %vm1346, %v2712, 0
        %v2785 = vsel %vm1346, %v2713, 0
        %v2788 = vsel %vm1346, %v2714, 0
        %v2791 = vsel %vm1346, %v2715, 0
        %v2794 = vsel %vm1346, %v2716, 0
        %v2797 = vsel %vm1346, %v2717, 0
        %2799 = vmatprep.subr.bf16.mxu0 0
        %2800 = vmatpush1.bf16.msra.mxu0 0
        %2801 = vmatprep.subr.bf16.mxu0 0
        %2802 = vmatpush1.bf16.msra.mxu0 0
        %2803 = vmatprep.subr.bf16.mxu0 0
        %2804 = vmatpush1.bf16.msra.mxu0 0
        %2805 = vmatprep.subr.bf16.mxu0 0
        %2806 = vmatpush1.bf16.msra.mxu0 0
        %2807 = vmatprep.subr.bf16.mxu0 0
        %2808 = vmatpush1.bf16.msra.mxu0 %v2746
        %2809 = vmatprep.subr.bf16.mxu0 0
        %2810 = vmatpush1.bf16.msra.mxu0 %v2745
        %2811 = vmatprep.subr.bf16.mxu0 0
        %2812 = vmatpush1.bf16.msra.mxu0 %v2744
        %2813 = vmatprep.subr.bf16.mxu0 0
        %2814 = vmatpush1.bf16.msra.mxu0 %v2743
        %2815 = vmatprep.subr.bf16.mxu0 0
        %2816 = vmatpush2.bf16.msra.mxu0 0
        %2817 = vmatprep.subr.bf16.mxu0 0
        %2818 = vmatpush2.bf16.msra.mxu0 0
        %2819 = vmatprep.subr.bf16.mxu0 0
        %2820 = vmatpush2.bf16.msra.mxu0 0
        %2821 = vmatprep.subr.bf16.mxu0 0
        %2822 = vmatpush2.bf16.msra.mxu0 0
        %2823 = vmatprep.subr.bf16.mxu0 0
        %2824 = vmatpush2.bf16.msra.mxu0 0
        %2825 = vmatprep.subr.bf16.mxu0 0
        %2826 = vmatpush2.bf16.msra.mxu0 0
        %2827 = vmatprep.subr.bf16.mxu0 0
        %2828 = vmatpush2.bf16.msra.mxu0 0
        %2829 = vmatprep.subr.bf16.mxu0 0
        %2830 = vmatpush2.bf16.msra.mxu0 0
        %2831 = vmatprep.mubr.bf16.mxu0 0
        %2832 = vmatmul.mubr.bf16.gmra.mxu0 %v2752
        %v2833 = vpop.f32.mrf.mxu0
        %v2834 = vadd.f32 0.0, %v2833
        %v2835 = vpop.f32.mrf.mxu0
        %v2836 = vpop.f32.mrf.mxu0
        %v2837 = vadd.f32 0.0, %v2836
        %v2838 = vpop.f32.mrf.mxu0
        %2839 = vmatprep.mubr.bf16.mxu0 0
        %2840 = vmatmul.mubr.bf16.gmra.mxu0 %v2755
        %v2841 = vpop.f32.mrf.mxu0
        %v2842 = vadd.f32 0.0, %v2841
        %v2843 = vpop.f32.mrf.mxu0
        %v2844 = vpop.f32.mrf.mxu0
        %v2845 = vadd.f32 0.0, %v2844
        %v2846 = vpop.f32.mrf.mxu0
        %2847 = vmatprep.mubr.bf16.mxu0 0
        %2848 = vmatmul.mubr.bf16.gmra.mxu0 %v2758
        %v2849 = vpop.f32.mrf.mxu0
        %v2850 = vadd.f32 0.0, %v2849
        %v2851 = vpop.f32.mrf.mxu0
        %v2852 = vpop.f32.mrf.mxu0
        %v2853 = vadd.f32 0.0, %v2852
        %v2854 = vpop.f32.mrf.mxu0
        %2855 = vmatprep.mubr.bf16.mxu0 0
        %2856 = vmatmul.mubr.bf16.gmra.mxu0 %v2761
        %v2857 = vpop.f32.mrf.mxu0
        %v2858 = vadd.f32 0.0, %v2857
        %v2859 = vpop.f32.mrf.mxu0
        %v2860 = vpop.f32.mrf.mxu0
        %v2861 = vadd.f32 0.0, %v2860
        %v2862 = vpop.f32.mrf.mxu0
        %2863 = vmatprep.mubr.bf16.mxu0 0
        %2864 = vmatmul.mubr.bf16.gmra.mxu0 %v2764
        %v2865 = vpop.f32.mrf.mxu0
        %v2866 = vadd.f32 0.0, %v2865
        %v2867 = vpop.f32.mrf.mxu0
        %v2868 = vpop.f32.mrf.mxu0
        %v2869 = vadd.f32 0.0, %v2868
        %v2870 = vpop.f32.mrf.mxu0
        %2871 = vmatprep.mubr.bf16.mxu0 0
        %2872 = vmatmul.mubr.bf16.gmra.mxu0 %v2767
        %v2873 = vpop.f32.mrf.mxu0
        %v2874 = vadd.f32 0.0, %v2873
        %v2875 = vpop.f32.mrf.mxu0
        %v2876 = vpop.f32.mrf.mxu0
        %v2877 = vadd.f32 0.0, %v2876
        %v2878 = vpop.f32.mrf.mxu0
        %2879 = vmatprep.mubr.bf16.mxu0 0
        %2880 = vmatmul.mubr.bf16.gmra.mxu0 %v2770
        %v2881 = vpop.f32.mrf.mxu0
        %v2882 = vadd.f32 0.0, %v2881
        %v2883 = vpop.f32.mrf.mxu0
        %v2884 = vpop.f32.mrf.mxu0
        %v2885 = vadd.f32 0.0, %v2884
        %v2886 = vpop.f32.mrf.mxu0
        %2887 = vmatprep.mubr.bf16.mxu0 0
        %2888 = vmatmul.mubr.bf16.gmra.mxu0 %v2773
        %v2889 = vpop.f32.mrf.mxu0
        %v2890 = vadd.f32 0.0, %v2889
        %v2891 = vpop.f32.mrf.mxu0
        %v2892 = vpop.f32.mrf.mxu0
        %v2893 = vadd.f32 0.0, %v2892
        %v2894 = vpop.f32.mrf.mxu0
        %2895 = vmatprep.mubr.bf16.mxu0 0
        %2896 = vmatmul.mubr.bf16.gmra.mxu0 %v2776
        %v2897 = vpop.f32.mrf.mxu0
        %v2898 = vadd.f32 0.0, %v2897
        %v2899 = vpop.f32.mrf.mxu0
        %v2900 = vpop.f32.mrf.mxu0
        %v2901 = vadd.f32 0.0, %v2900
        %v2902 = vpop.f32.mrf.mxu0
        %2903 = vmatprep.mubr.bf16.mxu0 0
        %2904 = vmatmul.mubr.bf16.gmra.mxu0 %v2779
        %v2905 = vpop.f32.mrf.mxu0
        %v2906 = vadd.f32 0.0, %v2905
        %v2907 = vpop.f32.mrf.mxu0
        %v2908 = vpop.f32.mrf.mxu0
        %v2909 = vadd.f32 0.0, %v2908
        %v2910 = vpop.f32.mrf.mxu0
        %2911 = vmatprep.mubr.bf16.mxu0 0
        %2912 = vmatmul.mubr.bf16.gmra.mxu0 %v2782
        %v2913 = vpop.f32.mrf.mxu0
        %v2914 = vadd.f32 0.0, %v2913
        %v2915 = vpop.f32.mrf.mxu0
        %v2916 = vpop.f32.mrf.mxu0
        %v2917 = vadd.f32 0.0, %v2916
        %v2918 = vpop.f32.mrf.mxu0
        %2919 = vmatprep.mubr.bf16.mxu0 0
        %2920 = vmatmul.mubr.bf16.gmra.mxu0 %v2785
        %v2921 = vpop.f32.mrf.mxu0
        %v2922 = vadd.f32 0.0, %v2921
        %v2923 = vpop.f32.mrf.mxu0
        %v2924 = vpop.f32.mrf.mxu0
        %v2925 = vadd.f32 0.0, %v2924
        %v2926 = vpop.f32.mrf.mxu0
        %2927 = vmatprep.mubr.bf16.mxu0 0
        %2928 = vmatmul.mubr.bf16.gmra.mxu0 %v2788
        %v2929 = vpop.f32.mrf.mxu0
        %v2930 = vadd.f32 0.0, %v2929
        %v2931 = vpop.f32.mrf.mxu0
        %v2932 = vpop.f32.mrf.mxu0
        %v2933 = vadd.f32 0.0, %v2932
        %v2934 = vpop.f32.mrf.mxu0
        %2935 = vmatprep.mubr.bf16.mxu0 0
        %2936 = vmatmul.mubr.bf16.gmra.mxu0 %v2791
        %v2937 = vpop.f32.mrf.mxu0
        %v2938 = vadd.f32 0.0, %v2937
        %v2939 = vpop.f32.mrf.mxu0
        %v2940 = vpop.f32.mrf.mxu0
        %v2941 = vadd.f32 0.0, %v2940
        %v2942 = vpop.f32.mrf.mxu0
        %2943 = vmatprep.mubr.bf16.mxu0 0
        %2944 = vmatmul.mubr.bf16.gmra.mxu0 %v2794
        %v2945 = vpop.f32.mrf.mxu0
        %v2946 = vadd.f32 0.0, %v2945
        %v2947 = vpop.f32.mrf.mxu0
        %v2948 = vpop.f32.mrf.mxu0
        %v2949 = vadd.f32 0.0, %v2948
        %v2950 = vpop.f32.mrf.mxu0
        %2951 = vmatprep.mubr.bf16.mxu0 0
        %2952 = vmatmul.mubr.bf16.gmra.mxu0 %v2797
        %v2953 = vpop.f32.mrf.mxu0
        %v2954 = vadd.f32 0.0, %v2953
        %v2955 = vpop.f32.mrf.mxu0
        %v2956 = vpop.f32.mrf.mxu0
        %v2957 = vadd.f32 0.0, %v2956
        %v2958 = vpop.f32.mrf.mxu0
        %2959 = vdwg.mxu0
        %v2960 = vadd.f32 %v2448, %v2834
        %v2961 = vadd.f32 %v2451, %v2837
        %v2962 = vadd.f32 %v2456, %v2842
        %v2963 = vadd.f32 %v2459, %v2845
        %v2964 = vadd.f32 %v2464, %v2850
        %v2965 = vadd.f32 %v2467, %v2853
        %v2966 = vadd.f32 %v2472, %v2858
        %v2967 = vadd.f32 %v2475, %v2861
        %v2968 = vadd.f32 %v2480, %v2866
        %v2969 = vadd.f32 %v2483, %v2869
        %v2970 = vadd.f32 %v2488, %v2874
        %v2971 = vadd.f32 %v2491, %v2877
        %v2972 = vadd.f32 %v2496, %v2882
        %v2973 = vadd.f32 %v2499, %v2885
        %v2974 = vadd.f32 %v2504, %v2890
        %v2975 = vadd.f32 %v2507, %v2893
        %v2976 = vadd.f32 %v2512, %v2898
        %v2977 = vadd.f32 %v2515, %v2901
        %v2978 = vadd.f32 %v2520, %v2906
        %v2979 = vadd.f32 %v2523, %v2909
        %v2980 = vadd.f32 %v2528, %v2914
        %v2981 = vadd.f32 %v2531, %v2917
        %v2982 = vadd.f32 %v2536, %v2922
        %v2983 = vadd.f32 %v2539, %v2925
        %v2984 = vadd.f32 %v2544, %v2930
        %v2985 = vadd.f32 %v2547, %v2933
        %v2986 = vadd.f32 %v2552, %v2938
        %v2987 = vadd.f32 %v2555, %v2941
        %v2988 = vadd.f32 %v2560, %v2946
        %v2989 = vadd.f32 %v2563, %v2949
        %v2990 = vadd.f32 %v2568, %v2954
        %v2991 = vadd.f32 %v2571, %v2957
        %v2992 = vld [vmem:[#allocation2 + $0x17] sm:$0xff]
        %v2993 = vld [vmem:[#allocation2 + $0x1f] sm:$0xff]
        %v2994 = vld [vmem:[#allocation2 + $0x27] sm:$0xff]
        %v2995 = vld [vmem:[#allocation2 + $0x2f] sm:$0xff]
        %v2996 = vld [vmem:[#allocation2 + $0x37] sm:$0xff]
        %v2997 = vld [vmem:[#allocation2 + $0x3f] sm:$0xff]
        %v2998 = vld [vmem:[#allocation2 + $0x47] sm:$0xff]
        %v2999 = vld [vmem:[#allocation2 + $0x4f] sm:$0xff]
        %v3000 = vld [vmem:[#allocation2 + $0x57] sm:$0xff]
        %v3001 = vld [vmem:[#allocation2 + $0x5f] sm:$0xff]
        %v3002 = vld [vmem:[#allocation2 + $0x67] sm:$0xff]
        %v3003 = vld [vmem:[#allocation2 + $0x6f] sm:$0xff]
        %v3004 = vld [vmem:[#allocation2 + $0x77] sm:$0xff]
        %v3005 = vld [vmem:[#allocation2 + $0x7f] sm:$0xff]
        %v3006 = vld [vmem:[#allocation2 + $0x87] sm:$0xff]
        %v3007 = vld [vmem:[#allocation2 + $0x8f] sm:$0xff]
        %v3008 = vld [vmem:[#allocation2 + $0x97] sm:$0xff]
        %v3009 = vld [vmem:[#allocation2 + $0x9f] sm:$0xff]
        %v3010 = vld [vmem:[#allocation2 + $0xa7] sm:$0xff]
        %v3011 = vld [vmem:[#allocation2 + $0xaf] sm:$0xff]
        %v3012 = vld [vmem:[#allocation2 + $0xb7] sm:$0xff]
        %v3013 = vld [vmem:[#allocation2 + $0xbf] sm:$0xff]
        %v3014 = vld [vmem:[#allocation2 + $0xc7] sm:$0xff]
        %v3015 = vld [vmem:[#allocation2 + $0xcf] sm:$0xff]
        %v3016 = vld [vmem:[#allocation2 + $0xd7] sm:$0xff]
        %v3017 = vld [vmem:[#allocation2 + $0xdf] sm:$0xff]
        %v3018 = vld [vmem:[#allocation2 + $0xe7] sm:$0xff]
        %v3019 = vld [vmem:[#allocation2 + $0xef] sm:$0xff]
        %v3020 = vld [vmem:[#allocation2 + $0xf7] sm:$0xff]
        %v3021 = vld [vmem:[#allocation2 + $0xff] sm:$0xff]
        %v3022 = vld [vmem:[#allocation2 + $0x107] sm:$0xff]
        %v3023 = vld [vmem:[#allocation2 + $0x10f] sm:$0xff]
        %v3024 = vsel %vm1963, %v2992, 0.0
        %v3025 = vsel %vm1964, %v2993, 0.0
        %v3026 = vsel %vm1965, %v2994, 0.0
        %v3027 = vsel %vm1966, %v2995, 0.0
        %v3028 = vsel %vm1967, %v2996, 0.0
        %v3029 = vsel %vm1968, %v2997, 0.0
        %v3030 = vsel %vm1969, %v2998, 0.0
        %v3031 = vsel %vm1970, %v2999, 0.0
        %v3032 = vsel %vm1971, %v3000, 0.0
        %v3033 = vsel %vm1972, %v3001, 0.0
        %v3034 = vsel %vm1973, %v3002, 0.0
        %v3035 = vsel %vm1974, %v3003, 0.0
        %v3036 = vsel %vm1975, %v3004, 0.0
        %v3037 = vsel %vm1976, %v3005, 0.0
        %v3038 = vsel %vm1977, %v3006, 0.0
        %v3039 = vsel %vm1978, %v3007, 0.0
        %v3040 = vsel %vm1979, %v3008, 0.0
        %v3041 = vsel %vm1980, %v3009, 0.0
        %v3042 = vsel %vm1981, %v3010, 0.0
        %v3043 = vsel %vm1982, %v3011, 0.0
        %v3044 = vsel %vm1983, %v3012, 0.0
        %v3045 = vsel %vm1984, %v3013, 0.0
        %v3046 = vsel %vm1985, %v3014, 0.0
        %v3047 = vsel %vm1986, %v3015, 0.0
        %v3048 = vsel %vm1987, %v3016, 0.0
        %v3049 = vsel %vm1988, %v3017, 0.0
        %v3050 = vsel %vm1989, %v3018, 0.0
        %v3051 = vsel %vm1990, %v3019, 0.0
        %v3052 = vsel %vm1991, %v3020, 0.0
        %v3053 = vsel %vm1992, %v3021, 0.0
        %v3054 = vsel %vm1993, %v3022, 0.0
        %v3055 = vsel %vm1994, %v3023, 0.0
        %v3056 = vpack.c.bf16 %v3025, %v3024
        %v3057 = vpack.c.bf16 %v3027, %v3026
        %v3058 = vpack.c.bf16 %v3029, %v3028
        %v3059 = vpack.c.bf16 %v3031, %v3030
        %v3060 = vpack.c.bf16 %v3033, %v3032
        %v3061 = vpack.c.bf16 %v3035, %v3034
        %v3062 = vpack.c.bf16 %v3037, %v3036
        %v3063 = vpack.c.bf16 %v3039, %v3038
        %v3064 = vpack.c.bf16 %v3041, %v3040
        %v3065 = vpack.c.bf16 %v3043, %v3042
        %v3066 = vpack.c.bf16 %v3045, %v3044
        %v3067 = vpack.c.bf16 %v3047, %v3046
        %v3068 = vpack.c.bf16 %v3049, %v3048
        %v3069 = vpack.c.bf16 %v3051, %v3050
        %v3070 = vpack.c.bf16 %v3053, %v3052
        %v3071 = vpack.c.bf16 %v3055, %v3054
        %s3072 = scalar_lea.vmem %s5, 96
        %v3073 = vld [vmem:[%s3072] sm:$0xf]
        %v3074 = vld [vmem:[%s3072 + $0x4] sm:$0xf]
        %v3075 = vld [vmem:[%s3072 + $0x8] sm:$0xf]
        %v3076 = vld [vmem:[%s3072 + $0xc] sm:$0xf]
        %v3077 = vld [vmem:[%s3072 + $0x10] sm:$0xf]
        %v3078 = vld [vmem:[%s3072 + $0x14] sm:$0xf]
        %v3079 = vld [vmem:[%s3072 + $0x18] sm:$0xf]
        %v3080 = vld [vmem:[%s3072 + $0x1c] sm:$0xf]
        %v3089 = vunpack.c.l.b16 %v3073
        %v3090 = vunpack.c.l.b16 %v3074
        %v3091 = vunpack.c.l.b16 %v3075
        %v3092 = vunpack.c.l.b16 %v3076
        %v3093 = vunpack.c.l.b16 %v3077
        %v3094 = vunpack.c.l.b16 %v3078
        %v3095 = vunpack.c.l.b16 %v3079
        %v3096 = vunpack.c.l.b16 %v3080
        %v3097 = vpack.c.b16 %v3090, %v3089
        %v3098 = vpack.c.b16 %v3092, %v3091
        %v3099 = vpack.c.b16 %v3094, %v3093
        %v3100 = vpack.c.b16 %v3096, %v3095
        %v3106 = vsel %vm1346, %v3056, 0
        %v3109 = vsel %vm1346, %v3057, 0
        %v3112 = vsel %vm1346, %v3058, 0
        %v3115 = vsel %vm1346, %v3059, 0
        %v3118 = vsel %vm1346, %v3060, 0
        %v3121 = vsel %vm1346, %v3061, 0
        %v3124 = vsel %vm1346, %v3062, 0
        %v3127 = vsel %vm1346, %v3063, 0
        %v3130 = vsel %vm1346, %v3064, 0
        %v3133 = vsel %vm1346, %v3065, 0
        %v3136 = vsel %vm1346, %v3066, 0
        %v3139 = vsel %vm1346, %v3067, 0
        %v3142 = vsel %vm1346, %v3068, 0
        %v3145 = vsel %vm1346, %v3069, 0
        %v3148 = vsel %vm1346, %v3070, 0
        %v3151 = vsel %vm1346, %v3071, 0
        %3153 = vmatprep.subr.bf16.mxu0 0
        %3154 = vmatpush1.bf16.msra.mxu0 0
        %3155 = vmatprep.subr.bf16.mxu0 0
        %3156 = vmatpush1.bf16.msra.mxu0 0
        %3157 = vmatprep.subr.bf16.mxu0 0
        %3158 = vmatpush1.bf16.msra.mxu0 0
        %3159 = vmatprep.subr.bf16.mxu0 0
        %3160 = vmatpush1.bf16.msra.mxu0 0
        %3161 = vmatprep.subr.bf16.mxu0 0
        %3162 = vmatpush1.bf16.msra.mxu0 %v3100
        %3163 = vmatprep.subr.bf16.mxu0 0
        %3164 = vmatpush1.bf16.msra.mxu0 %v3099
        %3165 = vmatprep.subr.bf16.mxu0 0
        %3166 = vmatpush1.bf16.msra.mxu0 %v3098
        %3167 = vmatprep.subr.bf16.mxu0 0
        %3168 = vmatpush1.bf16.msra.mxu0 %v3097
        %3169 = vmatprep.subr.bf16.mxu0 0
        %3170 = vmatpush2.bf16.msra.mxu0 0
        %3171 = vmatprep.subr.bf16.mxu0 0
        %3172 = vmatpush2.bf16.msra.mxu0 0
        %3173 = vmatprep.subr.bf16.mxu0 0
        %3174 = vmatpush2.bf16.msra.mxu0 0
        %3175 = vmatprep.subr.bf16.mxu0 0
        %3176 = vmatpush2.bf16.msra.mxu0 0
        %3177 = vmatprep.subr.bf16.mxu0 0
        %3178 = vmatpush2.bf16.msra.mxu0 0
        %3179 = vmatprep.subr.bf16.mxu0 0
        %3180 = vmatpush2.bf16.msra.mxu0 0
        %3181 = vmatprep.subr.bf16.mxu0 0
        %3182 = vmatpush2.bf16.msra.mxu0 0
        %3183 = vmatprep.subr.bf16.mxu0 0
        %3184 = vmatpush2.bf16.msra.mxu0 0
        %3185 = vmatprep.mubr.bf16.mxu0 0
        %3186 = vmatmul.mubr.bf16.gmra.mxu0 %v3106
        %v3187 = vpop.f32.mrf.mxu0
        %v3188 = vadd.f32 0.0, %v3187
        %v3189 = vpop.f32.mrf.mxu0
        %v3190 = vpop.f32.mrf.mxu0
        %v3191 = vadd.f32 0.0, %v3190
        %v3192 = vpop.f32.mrf.mxu0
        %3193 = vmatprep.mubr.bf16.mxu0 0
        %3194 = vmatmul.mubr.bf16.gmra.mxu0 %v3109
        %v3195 = vpop.f32.mrf.mxu0
        %v3196 = vadd.f32 0.0, %v3195
        %v3197 = vpop.f32.mrf.mxu0
        %v3198 = vpop.f32.mrf.mxu0
        %v3199 = vadd.f32 0.0, %v3198
        %v3200 = vpop.f32.mrf.mxu0
        %3201 = vmatprep.mubr.bf16.mxu0 0
        %3202 = vmatmul.mubr.bf16.gmra.mxu0 %v3112
        %v3203 = vpop.f32.mrf.mxu0
        %v3204 = vadd.f32 0.0, %v3203
        %v3205 = vpop.f32.mrf.mxu0
        %v3206 = vpop.f32.mrf.mxu0
        %v3207 = vadd.f32 0.0, %v3206
        %v3208 = vpop.f32.mrf.mxu0
        %3209 = vmatprep.mubr.bf16.mxu0 0
        %3210 = vmatmul.mubr.bf16.gmra.mxu0 %v3115
        %v3211 = vpop.f32.mrf.mxu0
        %v3212 = vadd.f32 0.0, %v3211
        %v3213 = vpop.f32.mrf.mxu0
        %v3214 = vpop.f32.mrf.mxu0
        %v3215 = vadd.f32 0.0, %v3214
        %v3216 = vpop.f32.mrf.mxu0
        %3217 = vmatprep.mubr.bf16.mxu0 0
        %3218 = vmatmul.mubr.bf16.gmra.mxu0 %v3118
        %v3219 = vpop.f32.mrf.mxu0
        %v3220 = vadd.f32 0.0, %v3219
        %v3221 = vpop.f32.mrf.mxu0
        %v3222 = vpop.f32.mrf.mxu0
        %v3223 = vadd.f32 0.0, %v3222
        %v3224 = vpop.f32.mrf.mxu0
        %3225 = vmatprep.mubr.bf16.mxu0 0
        %3226 = vmatmul.mubr.bf16.gmra.mxu0 %v3121
        %v3227 = vpop.f32.mrf.mxu0
        %v3228 = vadd.f32 0.0, %v3227
        %v3229 = vpop.f32.mrf.mxu0
        %v3230 = vpop.f32.mrf.mxu0
        %v3231 = vadd.f32 0.0, %v3230
        %v3232 = vpop.f32.mrf.mxu0
        %3233 = vmatprep.mubr.bf16.mxu0 0
        %3234 = vmatmul.mubr.bf16.gmra.mxu0 %v3124
        %v3235 = vpop.f32.mrf.mxu0
        %v3236 = vadd.f32 0.0, %v3235
        %v3237 = vpop.f32.mrf.mxu0
        %v3238 = vpop.f32.mrf.mxu0
        %v3239 = vadd.f32 0.0, %v3238
        %v3240 = vpop.f32.mrf.mxu0
        %3241 = vmatprep.mubr.bf16.mxu0 0
        %3242 = vmatmul.mubr.bf16.gmra.mxu0 %v3127
        %v3243 = vpop.f32.mrf.mxu0
        %v3244 = vadd.f32 0.0, %v3243
        %v3245 = vpop.f32.mrf.mxu0
        %v3246 = vpop.f32.mrf.mxu0
        %v3247 = vadd.f32 0.0, %v3246
        %v3248 = vpop.f32.mrf.mxu0
        %3249 = vmatprep.mubr.bf16.mxu0 0
        %3250 = vmatmul.mubr.bf16.gmra.mxu0 %v3130
        %v3251 = vpop.f32.mrf.mxu0
        %v3252 = vadd.f32 0.0, %v3251
        %v3253 = vpop.f32.mrf.mxu0
        %v3254 = vpop.f32.mrf.mxu0
        %v3255 = vadd.f32 0.0, %v3254
        %v3256 = vpop.f32.mrf.mxu0
        %3257 = vmatprep.mubr.bf16.mxu0 0
        %3258 = vmatmul.mubr.bf16.gmra.mxu0 %v3133
        %v3259 = vpop.f32.mrf.mxu0
        %v3260 = vadd.f32 0.0, %v3259
        %v3261 = vpop.f32.mrf.mxu0
        %v3262 = vpop.f32.mrf.mxu0
        %v3263 = vadd.f32 0.0, %v3262
        %v3264 = vpop.f32.mrf.mxu0
        %3265 = vmatprep.mubr.bf16.mxu0 0
        %3266 = vmatmul.mubr.bf16.gmra.mxu0 %v3136
        %v3267 = vpop.f32.mrf.mxu0
        %v3268 = vadd.f32 0.0, %v3267
        %v3269 = vpop.f32.mrf.mxu0
        %v3270 = vpop.f32.mrf.mxu0
        %v3271 = vadd.f32 0.0, %v3270
        %v3272 = vpop.f32.mrf.mxu0
        %3273 = vmatprep.mubr.bf16.mxu0 0
        %3274 = vmatmul.mubr.bf16.gmra.mxu0 %v3139
        %v3275 = vpop.f32.mrf.mxu0
        %v3276 = vadd.f32 0.0, %v3275
        %v3277 = vpop.f32.mrf.mxu0
        %v3278 = vpop.f32.mrf.mxu0
        %v3279 = vadd.f32 0.0, %v3278
        %v3280 = vpop.f32.mrf.mxu0
        %3281 = vmatprep.mubr.bf16.mxu0 0
        %3282 = vmatmul.mubr.bf16.gmra.mxu0 %v3142
        %v3283 = vpop.f32.mrf.mxu0
        %v3284 = vadd.f32 0.0, %v3283
        %v3285 = vpop.f32.mrf.mxu0
        %v3286 = vpop.f32.mrf.mxu0
        %v3287 = vadd.f32 0.0, %v3286
        %v3288 = vpop.f32.mrf.mxu0
        %3289 = vmatprep.mubr.bf16.mxu0 0
        %3290 = vmatmul.mubr.bf16.gmra.mxu0 %v3145
        %v3291 = vpop.f32.mrf.mxu0
        %v3292 = vadd.f32 0.0, %v3291
        %v3293 = vpop.f32.mrf.mxu0
        %v3294 = vpop.f32.mrf.mxu0
        %v3295 = vadd.f32 0.0, %v3294
        %v3296 = vpop.f32.mrf.mxu0
        %3297 = vmatprep.mubr.bf16.mxu0 0
        %3298 = vmatmul.mubr.bf16.gmra.mxu0 %v3148
        %v3299 = vpop.f32.mrf.mxu0
        %v3300 = vadd.f32 0.0, %v3299
        %v3301 = vpop.f32.mrf.mxu0
        %v3302 = vpop.f32.mrf.mxu0
        %v3303 = vadd.f32 0.0, %v3302
        %v3304 = vpop.f32.mrf.mxu0
        %3305 = vmatprep.mubr.bf16.mxu0 0
        %3306 = vmatmul.mubr.bf16.gmra.mxu0 %v3151
        %v3307 = vpop.f32.mrf.mxu0
        %v3308 = vadd.f32 0.0, %v3307
        %v3309 = vpop.f32.mrf.mxu0
        %v3310 = vpop.f32.mrf.mxu0
        %v3311 = vadd.f32 0.0, %v3310
        %v3312 = vpop.f32.mrf.mxu0
        %3313 = vdwg.mxu0
        %v3314 = vadd.f32 %v2960, %v3188
        %v3315 = vadd.f32 %v2961, %v3191
        %v3316 = vadd.f32 %v2962, %v3196
        %v3317 = vadd.f32 %v2963, %v3199
        %v3318 = vadd.f32 %v2964, %v3204
        %v3319 = vadd.f32 %v2965, %v3207
        %v3320 = vadd.f32 %v2966, %v3212
        %v3321 = vadd.f32 %v2967, %v3215
        %v3322 = vadd.f32 %v2968, %v3220
        %v3323 = vadd.f32 %v2969, %v3223
        %v3324 = vadd.f32 %v2970, %v3228
        %v3325 = vadd.f32 %v2971, %v3231
        %v3326 = vadd.f32 %v2972, %v3236
        %v3327 = vadd.f32 %v2973, %v3239
        %v3328 = vadd.f32 %v2974, %v3244
        %v3329 = vadd.f32 %v2975, %v3247
        %v3330 = vadd.f32 %v2976, %v3252
        %v3331 = vadd.f32 %v2977, %v3255
        %v3332 = vadd.f32 %v2978, %v3260
        %v3333 = vadd.f32 %v2979, %v3263
        %v3334 = vadd.f32 %v2980, %v3268
        %v3335 = vadd.f32 %v2981, %v3271
        %v3336 = vadd.f32 %v2982, %v3276
        %v3337 = vadd.f32 %v2983, %v3279
        %v3338 = vadd.f32 %v2984, %v3284
        %v3339 = vadd.f32 %v2985, %v3287
        %v3340 = vadd.f32 %v2986, %v3292
        %v3341 = vadd.f32 %v2987, %v3295
        %v3342 = vadd.f32 %v2988, %v3300
        %v3343 = vadd.f32 %v2989, %v3303
        %v3344 = vadd.f32 %v2990, %v3308
        %v3345 = vadd.f32 %v2991, %v3311
        %v3346 = vpack.c.bf16 %v1315, %v1314
        %v3347 = vpack.c.bf16 %v1317, %v1316
        %v3348 = vpack.c.bf16 %v1319, %v1318
        %v3349 = vpack.c.bf16 %v1321, %v1320
        %v3350 = vpack.c.bf16 %v1323, %v1322
        %v3351 = vpack.c.bf16 %v1325, %v1324
        %v3352 = vpack.c.bf16 %v1327, %v1326
        %v3353 = vpack.c.bf16 %v1329, %v1328
        %v3354 = vpack.c.bf16 %v1331, %v1330
        %v3355 = vpack.c.bf16 %v1333, %v1332
        %v3356 = vpack.c.bf16 %v1335, %v1334
        %v3357 = vpack.c.bf16 %v1337, %v1336
        %v3358 = vpack.c.bf16 %v1339, %v1338
        %v3359 = vpack.c.bf16 %v1341, %v1340
        %v3360 = vpack.c.bf16 %v1343, %v1342
        %v3361 = vpack.c.bf16 %v1345, %v1344
        %s3362 = scalar_lea.vmem %s5, 128
        %v3363 = vld [vmem:[%s3362] sm:$0xf]
        %v3364 = vld [vmem:[%s3362 + $0x4] sm:$0xf]
        %v3365 = vld [vmem:[%s3362 + $0x8] sm:$0xf]
        %v3366 = vld [vmem:[%s3362 + $0xc] sm:$0xf]
        %v3367 = vld [vmem:[%s3362 + $0x10] sm:$0xf]
        %v3368 = vld [vmem:[%s3362 + $0x14] sm:$0xf]
        %v3369 = vld [vmem:[%s3362 + $0x18] sm:$0xf]
        %v3370 = vld [vmem:[%s3362 + $0x1c] sm:$0xf]
        %v3379 = vunpack.c.l.b16 %v3363
        %v3380 = vunpack.c.l.b16 %v3364
        %v3381 = vunpack.c.l.b16 %v3365
        %v3382 = vunpack.c.l.b16 %v3366
        %v3383 = vunpack.c.l.b16 %v3367
        %v3384 = vunpack.c.l.b16 %v3368
        %v3385 = vunpack.c.l.b16 %v3369
        %v3386 = vunpack.c.l.b16 %v3370
        %v3387 = vpack.c.b16 %v3380, %v3379
        %v3388 = vpack.c.b16 %v3382, %v3381
        %v3389 = vpack.c.b16 %v3384, %v3383
        %v3390 = vpack.c.b16 %v3386, %v3385
        %v3396 = vsel %vm1346, %v3346, 0
        %v3399 = vsel %vm1346, %v3347, 0
        %v3402 = vsel %vm1346, %v3348, 0
        %v3405 = vsel %vm1346, %v3349, 0
        %v3408 = vsel %vm1346, %v3350, 0
        %v3411 = vsel %vm1346, %v3351, 0
        %v3414 = vsel %vm1346, %v3352, 0
        %v3417 = vsel %vm1346, %v3353, 0
        %v3420 = vsel %vm1346, %v3354, 0
        %v3423 = vsel %vm1346, %v3355, 0
        %v3426 = vsel %vm1346, %v3356, 0
        %v3429 = vsel %vm1346, %v3357, 0
        %v3432 = vsel %vm1346, %v3358, 0
        %v3435 = vsel %vm1346, %v3359, 0
        %v3438 = vsel %vm1346, %v3360, 0
        %v3441 = vsel %vm1346, %v3361, 0
        %3443 = vmatprep.subr.bf16.mxu0 0
        %3444 = vmatpush1.bf16.msra.mxu0 0
        %3445 = vmatprep.subr.bf16.mxu0 0
        %3446 = vmatpush1.bf16.msra.mxu0 0
        %3447 = vmatprep.subr.bf16.mxu0 0
        %3448 = vmatpush1.bf16.msra.mxu0 0
        %3449 = vmatprep.subr.bf16.mxu0 0
        %3450 = vmatpush1.bf16.msra.mxu0 0
        %3451 = vmatprep.subr.bf16.mxu0 0
        %3452 = vmatpush1.bf16.msra.mxu0 %v3390
        %3453 = vmatprep.subr.bf16.mxu0 0
        %3454 = vmatpush1.bf16.msra.mxu0 %v3389
        %3455 = vmatprep.subr.bf16.mxu0 0
        %3456 = vmatpush1.bf16.msra.mxu0 %v3388
        %3457 = vmatprep.subr.bf16.mxu0 0
        %3458 = vmatpush1.bf16.msra.mxu0 %v3387
        %3459 = vmatprep.subr.bf16.mxu0 0
        %3460 = vmatpush2.bf16.msra.mxu0 0
        %3461 = vmatprep.subr.bf16.mxu0 0
        %3462 = vmatpush2.bf16.msra.mxu0 0
        %3463 = vmatprep.subr.bf16.mxu0 0
        %3464 = vmatpush2.bf16.msra.mxu0 0
        %3465 = vmatprep.subr.bf16.mxu0 0
        %3466 = vmatpush2.bf16.msra.mxu0 0
        %3467 = vmatprep.subr.bf16.mxu0 0
        %3468 = vmatpush2.bf16.msra.mxu0 0
        %3469 = vmatprep.subr.bf16.mxu0 0
        %3470 = vmatpush2.bf16.msra.mxu0 0
        %3471 = vmatprep.subr.bf16.mxu0 0
        %3472 = vmatpush2.bf16.msra.mxu0 0
        %3473 = vmatprep.subr.bf16.mxu0 0
        %3474 = vmatpush2.bf16.msra.mxu0 0
        %3475 = vmatprep.mubr.bf16.mxu0 0
        %3476 = vmatmul.mubr.bf16.gmra.mxu0 %v3396
        %v3477 = vpop.f32.mrf.mxu0
        %v3478 = vadd.f32 0.0, %v3477
        %v3479 = vpop.f32.mrf.mxu0
        %v3480 = vpop.f32.mrf.mxu0
        %v3481 = vadd.f32 0.0, %v3480
        %v3482 = vpop.f32.mrf.mxu0
        %3483 = vmatprep.mubr.bf16.mxu0 0
        %3484 = vmatmul.mubr.bf16.gmra.mxu0 %v3399
        %v3485 = vpop.f32.mrf.mxu0
        %v3486 = vadd.f32 0.0, %v3485
        %v3487 = vpop.f32.mrf.mxu0
        %v3488 = vpop.f32.mrf.mxu0
        %v3489 = vadd.f32 0.0, %v3488
        %v3490 = vpop.f32.mrf.mxu0
        %3491 = vmatprep.mubr.bf16.mxu0 0
        %3492 = vmatmul.mubr.bf16.gmra.mxu0 %v3402
        %v3493 = vpop.f32.mrf.mxu0
        %v3494 = vadd.f32 0.0, %v3493
        %v3495 = vpop.f32.mrf.mxu0
        %v3496 = vpop.f32.mrf.mxu0
        %v3497 = vadd.f32 0.0, %v3496
        %v3498 = vpop.f32.mrf.mxu0
        %3499 = vmatprep.mubr.bf16.mxu0 0
        %3500 = vmatmul.mubr.bf16.gmra.mxu0 %v3405
        %v3501 = vpop.f32.mrf.mxu0
        %v3502 = vadd.f32 0.0, %v3501
        %v3503 = vpop.f32.mrf.mxu0
        %v3504 = vpop.f32.mrf.mxu0
        %v3505 = vadd.f32 0.0, %v3504
        %v3506 = vpop.f32.mrf.mxu0
        %3507 = vmatprep.mubr.bf16.mxu0 0
        %3508 = vmatmul.mubr.bf16.gmra.mxu0 %v3408
        %v3509 = vpop.f32.mrf.mxu0
        %v3510 = vadd.f32 0.0, %v3509
        %v3511 = vpop.f32.mrf.mxu0
        %v3512 = vpop.f32.mrf.mxu0
        %v3513 = vadd.f32 0.0, %v3512
        %v3514 = vpop.f32.mrf.mxu0
        %3515 = vmatprep.mubr.bf16.mxu0 0
        %3516 = vmatmul.mubr.bf16.gmra.mxu0 %v3411
        %v3517 = vpop.f32.mrf.mxu0
        %v3518 = vadd.f32 0.0, %v3517
        %v3519 = vpop.f32.mrf.mxu0
        %v3520 = vpop.f32.mrf.mxu0
        %v3521 = vadd.f32 0.0, %v3520
        %v3522 = vpop.f32.mrf.mxu0
        %3523 = vmatprep.mubr.bf16.mxu0 0
        %3524 = vmatmul.mubr.bf16.gmra.mxu0 %v3414
        %v3525 = vpop.f32.mrf.mxu0
        %v3526 = vadd.f32 0.0, %v3525
        %v3527 = vpop.f32.mrf.mxu0
        %v3528 = vpop.f32.mrf.mxu0
        %v3529 = vadd.f32 0.0, %v3528
        %v3530 = vpop.f32.mrf.mxu0
        %3531 = vmatprep.mubr.bf16.mxu0 0
        %3532 = vmatmul.mubr.bf16.gmra.mxu0 %v3417
        %v3533 = vpop.f32.mrf.mxu0
        %v3534 = vadd.f32 0.0, %v3533
        %v3535 = vpop.f32.mrf.mxu0
        %v3536 = vpop.f32.mrf.mxu0
        %v3537 = vadd.f32 0.0, %v3536
        %v3538 = vpop.f32.mrf.mxu0
        %3539 = vmatprep.mubr.bf16.mxu0 0
        %3540 = vmatmul.mubr.bf16.gmra.mxu0 %v3420
        %v3541 = vpop.f32.mrf.mxu0
        %v3542 = vadd.f32 0.0, %v3541
        %v3543 = vpop.f32.mrf.mxu0
        %v3544 = vpop.f32.mrf.mxu0
        %v3545 = vadd.f32 0.0, %v3544
        %v3546 = vpop.f32.mrf.mxu0
        %3547 = vmatprep.mubr.bf16.mxu0 0
        %3548 = vmatmul.mubr.bf16.gmra.mxu0 %v3423
        %v3549 = vpop.f32.mrf.mxu0
        %v3550 = vadd.f32 0.0, %v3549
        %v3551 = vpop.f32.mrf.mxu0
        %v3552 = vpop.f32.mrf.mxu0
        %v3553 = vadd.f32 0.0, %v3552
        %v3554 = vpop.f32.mrf.mxu0
        %3555 = vmatprep.mubr.bf16.mxu0 0
        %3556 = vmatmul.mubr.bf16.gmra.mxu0 %v3426
        %v3557 = vpop.f32.mrf.mxu0
        %v3558 = vadd.f32 0.0, %v3557
        %v3559 = vpop.f32.mrf.mxu0
        %v3560 = vpop.f32.mrf.mxu0
        %v3561 = vadd.f32 0.0, %v3560
        %v3562 = vpop.f32.mrf.mxu0
        %3563 = vmatprep.mubr.bf16.mxu0 0
        %3564 = vmatmul.mubr.bf16.gmra.mxu0 %v3429
        %v3565 = vpop.f32.mrf.mxu0
        %v3566 = vadd.f32 0.0, %v3565
        %v3567 = vpop.f32.mrf.mxu0
        %v3568 = vpop.f32.mrf.mxu0
        %v3569 = vadd.f32 0.0, %v3568
        %v3570 = vpop.f32.mrf.mxu0
        %3571 = vmatprep.mubr.bf16.mxu0 0
        %3572 = vmatmul.mubr.bf16.gmra.mxu0 %v3432
        %v3573 = vpop.f32.mrf.mxu0
        %v3574 = vadd.f32 0.0, %v3573
        %v3575 = vpop.f32.mrf.mxu0
        %v3576 = vpop.f32.mrf.mxu0
        %v3577 = vadd.f32 0.0, %v3576
        %v3578 = vpop.f32.mrf.mxu0
        %3579 = vmatprep.mubr.bf16.mxu0 0
        %3580 = vmatmul.mubr.bf16.gmra.mxu0 %v3435
        %v3581 = vpop.f32.mrf.mxu0
        %v3582 = vadd.f32 0.0, %v3581
        %v3583 = vpop.f32.mrf.mxu0
        %v3584 = vpop.f32.mrf.mxu0
        %v3585 = vadd.f32 0.0, %v3584
        %v3586 = vpop.f32.mrf.mxu0
        %3587 = vmatprep.mubr.bf16.mxu0 0
        %3588 = vmatmul.mubr.bf16.gmra.mxu0 %v3438
        %v3589 = vpop.f32.mrf.mxu0
        %v3590 = vadd.f32 0.0, %v3589
        %v3591 = vpop.f32.mrf.mxu0
        %v3592 = vpop.f32.mrf.mxu0
        %v3593 = vadd.f32 0.0, %v3592
        %v3594 = vpop.f32.mrf.mxu0
        %3595 = vmatprep.mubr.bf16.mxu0 0
        %3596 = vmatmul.mubr.bf16.gmra.mxu0 %v3441
        %v3597 = vpop.f32.mrf.mxu0
        %v3598 = vadd.f32 0.0, %v3597
        %v3599 = vpop.f32.mrf.mxu0
        %v3600 = vpop.f32.mrf.mxu0
        %v3601 = vadd.f32 0.0, %v3600
        %v3602 = vpop.f32.mrf.mxu0
        %3603 = vdwg.mxu0
        %v3604 = vadd.f32 %v3314, %v3478
        %v3605 = vadd.f32 %v3315, %v3481
        %v3606 = vadd.f32 %v3316, %v3486
        %v3607 = vadd.f32 %v3317, %v3489
        %v3608 = vadd.f32 %v3318, %v3494
        %v3609 = vadd.f32 %v3319, %v3497
        %v3610 = vadd.f32 %v3320, %v3502
        %v3611 = vadd.f32 %v3321, %v3505
        %v3612 = vadd.f32 %v3322, %v3510
        %v3613 = vadd.f32 %v3323, %v3513
        %v3614 = vadd.f32 %v3324, %v3518
        %v3615 = vadd.f32 %v3325, %v3521
        %v3616 = vadd.f32 %v3326, %v3526
        %v3617 = vadd.f32 %v3327, %v3529
        %v3618 = vadd.f32 %v3328, %v3534
        %v3619 = vadd.f32 %v3329, %v3537
        %v3620 = vadd.f32 %v3330, %v3542
        %v3621 = vadd.f32 %v3331, %v3545
        %v3622 = vadd.f32 %v3332, %v3550
        %v3623 = vadd.f32 %v3333, %v3553
        %v3624 = vadd.f32 %v3334, %v3558
        %v3625 = vadd.f32 %v3335, %v3561
        %v3626 = vadd.f32 %v3336, %v3566
        %v3627 = vadd.f32 %v3337, %v3569
        %v3628 = vadd.f32 %v3338, %v3574
        %v3629 = vadd.f32 %v3339, %v3577
        %v3630 = vadd.f32 %v3340, %v3582
        %v3631 = vadd.f32 %v3341, %v3585
        %v3632 = vadd.f32 %v3342, %v3590
        %v3633 = vadd.f32 %v3343, %v3593
        %v3634 = vadd.f32 %v3344, %v3598
        %v3635 = vadd.f32 %v3345, %v3601
        %v3636 = vld [vmem:[#allocation2 + $0x19] sm:$0xff]
        %v3637 = vld [vmem:[#allocation2 + $0x21] sm:$0xff]
        %v3638 = vld [vmem:[#allocation2 + $0x29] sm:$0xff]
        %v3639 = vld [vmem:[#allocation2 + $0x31] sm:$0xff]
        %v3640 = vld [vmem:[#allocation2 + $0x39] sm:$0xff]
        %v3641 = vld [vmem:[#allocation2 + $0x41] sm:$0xff]
        %v3642 = vld [vmem:[#allocation2 + $0x49] sm:$0xff]
        %v3643 = vld [vmem:[#allocation2 + $0x51] sm:$0xff]
        %v3644 = vld [vmem:[#allocation2 + $0x59] sm:$0xff]
        %v3645 = vld [vmem:[#allocation2 + $0x61] sm:$0xff]
        %v3646 = vld [vmem:[#allocation2 + $0x69] sm:$0xff]
        %v3647 = vld [vmem:[#allocation2 + $0x71] sm:$0xff]
        %v3648 = vld [vmem:[#allocation2 + $0x79] sm:$0xff]
        %v3649 = vld [vmem:[#allocation2 + $0x81] sm:$0xff]
        %v3650 = vld [vmem:[#allocation2 + $0x89] sm:$0xff]
        %v3651 = vld [vmem:[#allocation2 + $0x91] sm:$0xff]
        %v3652 = vld [vmem:[#allocation2 + $0x99] sm:$0xff]
        %v3653 = vld [vmem:[#allocation2 + $0xa1] sm:$0xff]
        %v3654 = vld [vmem:[#allocation2 + $0xa9] sm:$0xff]
        %v3655 = vld [vmem:[#allocation2 + $0xb1] sm:$0xff]
        %v3656 = vld [vmem:[#allocation2 + $0xb9] sm:$0xff]
        %v3657 = vld [vmem:[#allocation2 + $0xc1] sm:$0xff]
        %v3658 = vld [vmem:[#allocation2 + $0xc9] sm:$0xff]
        %v3659 = vld [vmem:[#allocation2 + $0xd1] sm:$0xff]
        %v3660 = vld [vmem:[#allocation2 + $0xd9] sm:$0xff]
        %v3661 = vld [vmem:[#allocation2 + $0xe1] sm:$0xff]
        %v3662 = vld [vmem:[#allocation2 + $0xe9] sm:$0xff]
        %v3663 = vld [vmem:[#allocation2 + $0xf1] sm:$0xff]
        %v3664 = vld [vmem:[#allocation2 + $0xf9] sm:$0xff]
        %v3665 = vld [vmem:[#allocation2 + $0x101] sm:$0xff]
        %v3666 = vld [vmem:[#allocation2 + $0x109] sm:$0xff]
        %v3667 = vld [vmem:[#allocation2 + $0x111] sm:$0xff]
        %v3668 = vsel %vm2638, %v3636, 0.0
        %v3669 = vsel %vm2639, %v3637, 0.0
        %v3670 = vsel %vm2640, %v3638, 0.0
        %v3671 = vsel %vm2641, %v3639, 0.0
        %v3672 = vsel %vm2642, %v3640, 0.0
        %v3673 = vsel %vm2643, %v3641, 0.0
        %v3674 = vsel %vm2644, %v3642, 0.0
        %v3675 = vsel %vm2645, %v3643, 0.0
        %v3676 = vsel %vm2646, %v3644, 0.0
        %v3677 = vsel %vm2647, %v3645, 0.0
        %v3678 = vsel %vm2648, %v3646, 0.0
        %v3679 = vsel %vm2649, %v3647, 0.0
        %v3680 = vsel %vm2650, %v3648, 0.0
        %v3681 = vsel %vm2651, %v3649, 0.0
        %v3682 = vsel %vm2652, %v3650, 0.0
        %v3683 = vsel %vm2653, %v3651, 0.0
        %v3684 = vsel %vm2654, %v3652, 0.0
        %v3685 = vsel %vm2655, %v3653, 0.0
        %v3686 = vsel %vm2656, %v3654, 0.0
        %v3687 = vsel %vm2657, %v3655, 0.0
        %v3688 = vsel %vm2658, %v3656, 0.0
        %v3689 = vsel %vm2659, %v3657, 0.0
        %v3690 = vsel %vm2660, %v3658, 0.0
        %v3691 = vsel %vm2661, %v3659, 0.0
        %v3692 = vsel %vm2662, %v3660, 0.0
        %v3693 = vsel %vm2663, %v3661, 0.0
        %v3694 = vsel %vm2664, %v3662, 0.0
        %v3695 = vsel %vm2665, %v3663, 0.0
        %v3696 = vsel %vm2666, %v3664, 0.0
        %v3697 = vsel %vm2667, %v3665, 0.0
        %v3698 = vsel %vm2668, %v3666, 0.0
        %v3699 = vsel %vm2669, %v3667, 0.0
        %v3700 = vpack.c.bf16 %v3669, %v3668
        %v3701 = vpack.c.bf16 %v3671, %v3670
        %v3702 = vpack.c.bf16 %v3673, %v3672
        %v3703 = vpack.c.bf16 %v3675, %v3674
        %v3704 = vpack.c.bf16 %v3677, %v3676
        %v3705 = vpack.c.bf16 %v3679, %v3678
        %v3706 = vpack.c.bf16 %v3681, %v3680
        %v3707 = vpack.c.bf16 %v3683, %v3682
        %v3708 = vpack.c.bf16 %v3685, %v3684
        %v3709 = vpack.c.bf16 %v3687, %v3686
        %v3710 = vpack.c.bf16 %v3689, %v3688
        %v3711 = vpack.c.bf16 %v3691, %v3690
        %v3712 = vpack.c.bf16 %v3693, %v3692
        %v3713 = vpack.c.bf16 %v3695, %v3694
        %v3714 = vpack.c.bf16 %v3697, %v3696
        %v3715 = vpack.c.bf16 %v3699, %v3698
        %s3716 = scalar_lea.vmem %s5, 160
        %v3717 = vld [vmem:[%s3716] sm:$0xf]
        %v3718 = vld [vmem:[%s3716 + $0x4] sm:$0xf]
        %v3719 = vld [vmem:[%s3716 + $0x8] sm:$0xf]
        %v3720 = vld [vmem:[%s3716 + $0xc] sm:$0xf]
        %v3721 = vld [vmem:[%s3716 + $0x10] sm:$0xf]
        %v3722 = vld [vmem:[%s3716 + $0x14] sm:$0xf]
        %v3723 = vld [vmem:[%s3716 + $0x18] sm:$0xf]
        %v3724 = vld [vmem:[%s3716 + $0x1c] sm:$0xf]
        %v3733 = vunpack.c.l.b16 %v3717
        %v3734 = vunpack.c.l.b16 %v3718
        %v3735 = vunpack.c.l.b16 %v3719
        %v3736 = vunpack.c.l.b16 %v3720
        %v3737 = vunpack.c.l.b16 %v3721
        %v3738 = vunpack.c.l.b16 %v3722
        %v3739 = vunpack.c.l.b16 %v3723
        %v3740 = vunpack.c.l.b16 %v3724
        %v3741 = vpack.c.b16 %v3734, %v3733
        %v3742 = vpack.c.b16 %v3736, %v3735
        %v3743 = vpack.c.b16 %v3738, %v3737
        %v3744 = vpack.c.b16 %v3740, %v3739
        %v3750 = vsel %vm1346, %v3700, 0
        %v3753 = vsel %vm1346, %v3701, 0
        %v3756 = vsel %vm1346, %v3702, 0
        %v3759 = vsel %vm1346, %v3703, 0
        %v3762 = vsel %vm1346, %v3704, 0
        %v3765 = vsel %vm1346, %v3705, 0
        %v3768 = vsel %vm1346, %v3706, 0
        %v3771 = vsel %vm1346, %v3707, 0
        %v3774 = vsel %vm1346, %v3708, 0
        %v3777 = vsel %vm1346, %v3709, 0
        %v3780 = vsel %vm1346, %v3710, 0
        %v3783 = vsel %vm1346, %v3711, 0
        %v3786 = vsel %vm1346, %v3712, 0
        %v3789 = vsel %vm1346, %v3713, 0
        %v3792 = vsel %vm1346, %v3714, 0
        %v3795 = vsel %vm1346, %v3715, 0
        %3797 = vmatprep.subr.bf16.mxu0 0
        %3798 = vmatpush1.bf16.msra.mxu0 0
        %3799 = vmatprep.subr.bf16.mxu0 0
        %3800 = vmatpush1.bf16.msra.mxu0 0
        %3801 = vmatprep.subr.bf16.mxu0 0
        %3802 = vmatpush1.bf16.msra.mxu0 0
        %3803 = vmatprep.subr.bf16.mxu0 0
        %3804 = vmatpush1.bf16.msra.mxu0 0
        %3805 = vmatprep.subr.bf16.mxu0 0
        %3806 = vmatpush1.bf16.msra.mxu0 %v3744
        %3807 = vmatprep.subr.bf16.mxu0 0
        %3808 = vmatpush1.bf16.msra.mxu0 %v3743
        %3809 = vmatprep.subr.bf16.mxu0 0
        %3810 = vmatpush1.bf16.msra.mxu0 %v3742
        %3811 = vmatprep.subr.bf16.mxu0 0
        %3812 = vmatpush1.bf16.msra.mxu0 %v3741
        %3813 = vmatprep.subr.bf16.mxu0 0
        %3814 = vmatpush2.bf16.msra.mxu0 0
        %3815 = vmatprep.subr.bf16.mxu0 0
        %3816 = vmatpush2.bf16.msra.mxu0 0
        %3817 = vmatprep.subr.bf16.mxu0 0
        %3818 = vmatpush2.bf16.msra.mxu0 0
        %3819 = vmatprep.subr.bf16.mxu0 0
        %3820 = vmatpush2.bf16.msra.mxu0 0
        %3821 = vmatprep.subr.bf16.mxu0 0
        %3822 = vmatpush2.bf16.msra.mxu0 0
        %3823 = vmatprep.subr.bf16.mxu0 0
        %3824 = vmatpush2.bf16.msra.mxu0 0
        %3825 = vmatprep.subr.bf16.mxu0 0
        %3826 = vmatpush2.bf16.msra.mxu0 0
        %3827 = vmatprep.subr.bf16.mxu0 0
        %3828 = vmatpush2.bf16.msra.mxu0 0
        %3829 = vmatprep.mubr.bf16.mxu0 0
        %3830 = vmatmul.mubr.bf16.gmra.mxu0 %v3750
        %v3831 = vpop.f32.mrf.mxu0
        %v3832 = vadd.f32 0.0, %v3831
        %v3833 = vpop.f32.mrf.mxu0
        %v3834 = vpop.f32.mrf.mxu0
        %v3835 = vadd.f32 0.0, %v3834
        %v3836 = vpop.f32.mrf.mxu0
        %3837 = vmatprep.mubr.bf16.mxu0 0
        %3838 = vmatmul.mubr.bf16.gmra.mxu0 %v3753
        %v3839 = vpop.f32.mrf.mxu0
        %v3840 = vadd.f32 0.0, %v3839
        %v3841 = vpop.f32.mrf.mxu0
        %v3842 = vpop.f32.mrf.mxu0
        %v3843 = vadd.f32 0.0, %v3842
        %v3844 = vpop.f32.mrf.mxu0
        %3845 = vmatprep.mubr.bf16.mxu0 0
        %3846 = vmatmul.mubr.bf16.gmra.mxu0 %v3756
        %v3847 = vpop.f32.mrf.mxu0
        %v3848 = vadd.f32 0.0, %v3847
        %v3849 = vpop.f32.mrf.mxu0
        %v3850 = vpop.f32.mrf.mxu0
        %v3851 = vadd.f32 0.0, %v3850
        %v3852 = vpop.f32.mrf.mxu0
        %3853 = vmatprep.mubr.bf16.mxu0 0
        %3854 = vmatmul.mubr.bf16.gmra.mxu0 %v3759
        %v3855 = vpop.f32.mrf.mxu0
        %v3856 = vadd.f32 0.0, %v3855
        %v3857 = vpop.f32.mrf.mxu0
        %v3858 = vpop.f32.mrf.mxu0
        %v3859 = vadd.f32 0.0, %v3858
        %v3860 = vpop.f32.mrf.mxu0
        %3861 = vmatprep.mubr.bf16.mxu0 0
        %3862 = vmatmul.mubr.bf16.gmra.mxu0 %v3762
        %v3863 = vpop.f32.mrf.mxu0
        %v3864 = vadd.f32 0.0, %v3863
        %v3865 = vpop.f32.mrf.mxu0
        %v3866 = vpop.f32.mrf.mxu0
        %v3867 = vadd.f32 0.0, %v3866
        %v3868 = vpop.f32.mrf.mxu0
        %3869 = vmatprep.mubr.bf16.mxu0 0
        %3870 = vmatmul.mubr.bf16.gmra.mxu0 %v3765
        %v3871 = vpop.f32.mrf.mxu0
        %v3872 = vadd.f32 0.0, %v3871
        %v3873 = vpop.f32.mrf.mxu0
        %v3874 = vpop.f32.mrf.mxu0
        %v3875 = vadd.f32 0.0, %v3874
        %v3876 = vpop.f32.mrf.mxu0
        %3877 = vmatprep.mubr.bf16.mxu0 0
        %3878 = vmatmul.mubr.bf16.gmra.mxu0 %v3768
        %v3879 = vpop.f32.mrf.mxu0
        %v3880 = vadd.f32 0.0, %v3879
        %v3881 = vpop.f32.mrf.mxu0
        %v3882 = vpop.f32.mrf.mxu0
        %v3883 = vadd.f32 0.0, %v3882
        %v3884 = vpop.f32.mrf.mxu0
        %3885 = vmatprep.mubr.bf16.mxu0 0
        %3886 = vmatmul.mubr.bf16.gmra.mxu0 %v3771
        %v3887 = vpop.f32.mrf.mxu0
        %v3888 = vadd.f32 0.0, %v3887
        %v3889 = vpop.f32.mrf.mxu0
        %v3890 = vpop.f32.mrf.mxu0
        %v3891 = vadd.f32 0.0, %v3890
        %v3892 = vpop.f32.mrf.mxu0
        %3893 = vmatprep.mubr.bf16.mxu0 0
        %3894 = vmatmul.mubr.bf16.gmra.mxu0 %v3774
        %v3895 = vpop.f32.mrf.mxu0
        %v3896 = vadd.f32 0.0, %v3895
        %v3897 = vpop.f32.mrf.mxu0
        %v3898 = vpop.f32.mrf.mxu0
        %v3899 = vadd.f32 0.0, %v3898
        %v3900 = vpop.f32.mrf.mxu0
        %3901 = vmatprep.mubr.bf16.mxu0 0
        %3902 = vmatmul.mubr.bf16.gmra.mxu0 %v3777
        %v3903 = vpop.f32.mrf.mxu0
        %v3904 = vadd.f32 0.0, %v3903
        %v3905 = vpop.f32.mrf.mxu0
        %v3906 = vpop.f32.mrf.mxu0
        %v3907 = vadd.f32 0.0, %v3906
        %v3908 = vpop.f32.mrf.mxu0
        %3909 = vmatprep.mubr.bf16.mxu0 0
        %3910 = vmatmul.mubr.bf16.gmra.mxu0 %v3780
        %v3911 = vpop.f32.mrf.mxu0
        %v3912 = vadd.f32 0.0, %v3911
        %v3913 = vpop.f32.mrf.mxu0
        %v3914 = vpop.f32.mrf.mxu0
        %v3915 = vadd.f32 0.0, %v3914
        %v3916 = vpop.f32.mrf.mxu0
        %3917 = vmatprep.mubr.bf16.mxu0 0
        %3918 = vmatmul.mubr.bf16.gmra.mxu0 %v3783
        %v3919 = vpop.f32.mrf.mxu0
        %v3920 = vadd.f32 0.0, %v3919
        %v3921 = vpop.f32.mrf.mxu0
        %v3922 = vpop.f32.mrf.mxu0
        %v3923 = vadd.f32 0.0, %v3922
        %v3924 = vpop.f32.mrf.mxu0
        %3925 = vmatprep.mubr.bf16.mxu0 0
        %3926 = vmatmul.mubr.bf16.gmra.mxu0 %v3786
        %v3927 = vpop.f32.mrf.mxu0
        %v3928 = vadd.f32 0.0, %v3927
        %v3929 = vpop.f32.mrf.mxu0
        %v3930 = vpop.f32.mrf.mxu0
        %v3931 = vadd.f32 0.0, %v3930
        %v3932 = vpop.f32.mrf.mxu0
        %3933 = vmatprep.mubr.bf16.mxu0 0
        %3934 = vmatmul.mubr.bf16.gmra.mxu0 %v3789
        %v3935 = vpop.f32.mrf.mxu0
        %v3936 = vadd.f32 0.0, %v3935
        %v3937 = vpop.f32.mrf.mxu0
        %v3938 = vpop.f32.mrf.mxu0
        %v3939 = vadd.f32 0.0, %v3938
        %v3940 = vpop.f32.mrf.mxu0
        %3941 = vmatprep.mubr.bf16.mxu0 0
        %3942 = vmatmul.mubr.bf16.gmra.mxu0 %v3792
        %v3943 = vpop.f32.mrf.mxu0
        %v3944 = vadd.f32 0.0, %v3943
        %v3945 = vpop.f32.mrf.mxu0
        %v3946 = vpop.f32.mrf.mxu0
        %v3947 = vadd.f32 0.0, %v3946
        %v3948 = vpop.f32.mrf.mxu0
        %3949 = vmatprep.mubr.bf16.mxu0 0
        %3950 = vmatmul.mubr.bf16.gmra.mxu0 %v3795
        %v3951 = vpop.f32.mrf.mxu0
        %v3952 = vadd.f32 0.0, %v3951
        %v3953 = vpop.f32.mrf.mxu0
        %v3954 = vpop.f32.mrf.mxu0
        %v3955 = vadd.f32 0.0, %v3954
        %v3956 = vpop.f32.mrf.mxu0
        %3957 = vdwg.mxu0
        %v3958 = vadd.f32 %v3604, %v3832
        %v3959 = vadd.f32 %v3605, %v3835
        %v3960 = vadd.f32 %v3606, %v3840
        %v3961 = vadd.f32 %v3607, %v3843
        %v3962 = vadd.f32 %v3608, %v3848
        %v3963 = vadd.f32 %v3609, %v3851
        %v3964 = vadd.f32 %v3610, %v3856
        %v3965 = vadd.f32 %v3611, %v3859
        %v3966 = vadd.f32 %v3612, %v3864
        %v3967 = vadd.f32 %v3613, %v3867
        %v3968 = vadd.f32 %v3614, %v3872
        %v3969 = vadd.f32 %v3615, %v3875
        %v3970 = vadd.f32 %v3616, %v3880
        %v3971 = vadd.f32 %v3617, %v3883
        %v3972 = vadd.f32 %v3618, %v3888
        %v3973 = vadd.f32 %v3619, %v3891
        %v3974 = vadd.f32 %v3620, %v3896
        %v3975 = vadd.f32 %v3621, %v3899
        %v3976 = vadd.f32 %v3622, %v3904
        %v3977 = vadd.f32 %v3623, %v3907
        %v3978 = vadd.f32 %v3624, %v3912
        %v3979 = vadd.f32 %v3625, %v3915
        %v3980 = vadd.f32 %v3626, %v3920
        %v3981 = vadd.f32 %v3627, %v3923
        %v3982 = vadd.f32 %v3628, %v3928
        %v3983 = vadd.f32 %v3629, %v3931
        %v3984 = vadd.f32 %v3630, %v3936
        %v3985 = vadd.f32 %v3631, %v3939
        %v3986 = vadd.f32 %v3632, %v3944
        %v3987 = vadd.f32 %v3633, %v3947
        %v3988 = vadd.f32 %v3634, %v3952
        %v3989 = vadd.f32 %v3635, %v3955
        %v3990 = vld [vmem:[#allocation2 + $0x27] sm:$0xff]
        %v3991 = vld [vmem:[#allocation2 + $0x2f] sm:$0xff]
        %v3992 = vld [vmem:[#allocation2 + $0x37] sm:$0xff]
        %v3993 = vld [vmem:[#allocation2 + $0x3f] sm:$0xff]
        %v3994 = vld [vmem:[#allocation2 + $0x47] sm:$0xff]
        %v3995 = vld [vmem:[#allocation2 + $0x4f] sm:$0xff]
        %v3996 = vld [vmem:[#allocation2 + $0x57] sm:$0xff]
        %v3997 = vld [vmem:[#allocation2 + $0x5f] sm:$0xff]
        %v3998 = vld [vmem:[#allocation2 + $0x67] sm:$0xff]
        %v3999 = vld [vmem:[#allocation2 + $0x6f] sm:$0xff]
        %v4000 = vld [vmem:[#allocation2 + $0x77] sm:$0xff]
        %v4001 = vld [vmem:[#allocation2 + $0x7f] sm:$0xff]
        %v4002 = vld [vmem:[#allocation2 + $0x87] sm:$0xff]
        %v4003 = vld [vmem:[#allocation2 + $0x8f] sm:$0xff]
        %v4004 = vld [vmem:[#allocation2 + $0x97] sm:$0xff]
        %v4005 = vld [vmem:[#allocation2 + $0x9f] sm:$0xff]
        %v4006 = vld [vmem:[#allocation2 + $0xa7] sm:$0xff]
        %v4007 = vld [vmem:[#allocation2 + $0xaf] sm:$0xff]
        %v4008 = vld [vmem:[#allocation2 + $0xb7] sm:$0xff]
        %v4009 = vld [vmem:[#allocation2 + $0xbf] sm:$0xff]
        %v4010 = vld [vmem:[#allocation2 + $0xc7] sm:$0xff]
        %v4011 = vld [vmem:[#allocation2 + $0xcf] sm:$0xff]
        %v4012 = vld [vmem:[#allocation2 + $0xd7] sm:$0xff]
        %v4013 = vld [vmem:[#allocation2 + $0xdf] sm:$0xff]
        %v4014 = vld [vmem:[#allocation2 + $0xe7] sm:$0xff]
        %v4015 = vld [vmem:[#allocation2 + $0xef] sm:$0xff]
        %v4016 = vld [vmem:[#allocation2 + $0xf7] sm:$0xff]
        %v4017 = vld [vmem:[#allocation2 + $0xff] sm:$0xff]
        %v4018 = vld [vmem:[#allocation2 + $0x107] sm:$0xff]
        %v4019 = vld [vmem:[#allocation2 + $0x10f] sm:$0xff]
        %v4020 = vld [vmem:[#allocation2 + $0x117] sm:$0xff]
        %v4021 = vld [vmem:[#allocation2 + $0x11f] sm:$0xff]
        %v4022 = vsel %vm1963, %v3990, 0.0
        %v4023 = vsel %vm1964, %v3991, 0.0
        %v4024 = vsel %vm1965, %v3992, 0.0
        %v4025 = vsel %vm1966, %v3993, 0.0
        %v4026 = vsel %vm1967, %v3994, 0.0
        %v4027 = vsel %vm1968, %v3995, 0.0
        %v4028 = vsel %vm1969, %v3996, 0.0
        %v4029 = vsel %vm1970, %v3997, 0.0
        %v4030 = vsel %vm1971, %v3998, 0.0
        %v4031 = vsel %vm1972, %v3999, 0.0
        %v4032 = vsel %vm1973, %v4000, 0.0
        %v4033 = vsel %vm1974, %v4001, 0.0
        %v4034 = vsel %vm1975, %v4002, 0.0
        %v4035 = vsel %vm1976, %v4003, 0.0
        %v4036 = vsel %vm1977, %v4004, 0.0
        %v4037 = vsel %vm1978, %v4005, 0.0
        %v4038 = vsel %vm1979, %v4006, 0.0
        %v4039 = vsel %vm1980, %v4007, 0.0
        %v4040 = vsel %vm1981, %v4008, 0.0
        %v4041 = vsel %vm1982, %v4009, 0.0
        %v4042 = vsel %vm1983, %v4010, 0.0
        %v4043 = vsel %vm1984, %v4011, 0.0
        %v4044 = vsel %vm1985, %v4012, 0.0
        %v4045 = vsel %vm1986, %v4013, 0.0
        %v4046 = vsel %vm1987, %v4014, 0.0
        %v4047 = vsel %vm1988, %v4015, 0.0
        %v4048 = vsel %vm1989, %v4016, 0.0
        %v4049 = vsel %vm1990, %v4017, 0.0
        %v4050 = vsel %vm1991, %v4018, 0.0
        %v4051 = vsel %vm1992, %v4019, 0.0
        %v4052 = vsel %vm1993, %v4020, 0.0
        %v4053 = vsel %vm1994, %v4021, 0.0
        %v4054 = vpack.c.bf16 %v4023, %v4022
        %v4055 = vpack.c.bf16 %v4025, %v4024
        %v4056 = vpack.c.bf16 %v4027, %v4026
        %v4057 = vpack.c.bf16 %v4029, %v4028
        %v4058 = vpack.c.bf16 %v4031, %v4030
        %v4059 = vpack.c.bf16 %v4033, %v4032
        %v4060 = vpack.c.bf16 %v4035, %v4034
        %v4061 = vpack.c.bf16 %v4037, %v4036
        %v4062 = vpack.c.bf16 %v4039, %v4038
        %v4063 = vpack.c.bf16 %v4041, %v4040
        %v4064 = vpack.c.bf16 %v4043, %v4042
        %v4065 = vpack.c.bf16 %v4045, %v4044
        %v4066 = vpack.c.bf16 %v4047, %v4046
        %v4067 = vpack.c.bf16 %v4049, %v4048
        %v4068 = vpack.c.bf16 %v4051, %v4050
        %v4069 = vpack.c.bf16 %v4053, %v4052
        %s4070 = scalar_lea.vmem %s5, 192
        %v4071 = vld [vmem:[%s4070] sm:$0xf]
        %v4072 = vld [vmem:[%s4070 + $0x4] sm:$0xf]
        %v4073 = vld [vmem:[%s4070 + $0x8] sm:$0xf]
        %v4074 = vld [vmem:[%s4070 + $0xc] sm:$0xf]
        %v4075 = vld [vmem:[%s4070 + $0x10] sm:$0xf]
        %v4076 = vld [vmem:[%s4070 + $0x14] sm:$0xf]
        %v4077 = vld [vmem:[%s4070 + $0x18] sm:$0xf]
        %v4078 = vld [vmem:[%s4070 + $0x1c] sm:$0xf]
        %v4087 = vunpack.c.l.b16 %v4071
        %v4088 = vunpack.c.l.b16 %v4072
        %v4089 = vunpack.c.l.b16 %v4073
        %v4090 = vunpack.c.l.b16 %v4074
        %v4091 = vunpack.c.l.b16 %v4075
        %v4092 = vunpack.c.l.b16 %v4076
        %v4093 = vunpack.c.l.b16 %v4077
        %v4094 = vunpack.c.l.b16 %v4078
        %v4095 = vpack.c.b16 %v4088, %v4087
        %v4096 = vpack.c.b16 %v4090, %v4089
        %v4097 = vpack.c.b16 %v4092, %v4091
        %v4098 = vpack.c.b16 %v4094, %v4093
        %v4104 = vsel %vm1346, %v4054, 0
        %v4107 = vsel %vm1346, %v4055, 0
        %v4110 = vsel %vm1346, %v4056, 0
        %v4113 = vsel %vm1346, %v4057, 0
        %v4116 = vsel %vm1346, %v4058, 0
        %v4119 = vsel %vm1346, %v4059, 0
        %v4122 = vsel %vm1346, %v4060, 0
        %v4125 = vsel %vm1346, %v4061, 0
        %v4128 = vsel %vm1346, %v4062, 0
        %v4131 = vsel %vm1346, %v4063, 0
        %v4134 = vsel %vm1346, %v4064, 0
        %v4137 = vsel %vm1346, %v4065, 0
        %v4140 = vsel %vm1346, %v4066, 0
        %v4143 = vsel %vm1346, %v4067, 0
        %v4146 = vsel %vm1346, %v4068, 0
        %v4149 = vsel %vm1346, %v4069, 0
        %4151 = vmatprep.subr.bf16.mxu0 0
        %4152 = vmatpush1.bf16.msra.mxu0 0
        %4153 = vmatprep.subr.bf16.mxu0 0
        %4154 = vmatpush1.bf16.msra.mxu0 0
        %4155 = vmatprep.subr.bf16.mxu0 0
        %4156 = vmatpush1.bf16.msra.mxu0 0
        %4157 = vmatprep.subr.bf16.mxu0 0
        %4158 = vmatpush1.bf16.msra.mxu0 0
        %4159 = vmatprep.subr.bf16.mxu0 0
        %4160 = vmatpush1.bf16.msra.mxu0 %v4098
        %4161 = vmatprep.subr.bf16.mxu0 0
        %4162 = vmatpush1.bf16.msra.mxu0 %v4097
        %4163 = vmatprep.subr.bf16.mxu0 0
        %4164 = vmatpush1.bf16.msra.mxu0 %v4096
        %4165 = vmatprep.subr.bf16.mxu0 0
        %4166 = vmatpush1.bf16.msra.mxu0 %v4095
        %4167 = vmatprep.subr.bf16.mxu0 0
        %4168 = vmatpush2.bf16.msra.mxu0 0
        %4169 = vmatprep.subr.bf16.mxu0 0
        %4170 = vmatpush2.bf16.msra.mxu0 0
        %4171 = vmatprep.subr.bf16.mxu0 0
        %4172 = vmatpush2.bf16.msra.mxu0 0
        %4173 = vmatprep.subr.bf16.mxu0 0
        %4174 = vmatpush2.bf16.msra.mxu0 0
        %4175 = vmatprep.subr.bf16.mxu0 0
        %4176 = vmatpush2.bf16.msra.mxu0 0
        %4177 = vmatprep.subr.bf16.mxu0 0
        %4178 = vmatpush2.bf16.msra.mxu0 0
        %4179 = vmatprep.subr.bf16.mxu0 0
        %4180 = vmatpush2.bf16.msra.mxu0 0
        %4181 = vmatprep.subr.bf16.mxu0 0
        %4182 = vmatpush2.bf16.msra.mxu0 0
        %4183 = vmatprep.mubr.bf16.mxu0 0
        %4184 = vmatmul.mubr.bf16.gmra.mxu0 %v4104
        %v4185 = vpop.f32.mrf.mxu0
        %v4186 = vadd.f32 0.0, %v4185
        %v4187 = vpop.f32.mrf.mxu0
        %v4188 = vpop.f32.mrf.mxu0
        %v4189 = vadd.f32 0.0, %v4188
        %v4190 = vpop.f32.mrf.mxu0
        %4191 = vmatprep.mubr.bf16.mxu0 0
        %4192 = vmatmul.mubr.bf16.gmra.mxu0 %v4107
        %v4193 = vpop.f32.mrf.mxu0
        %v4194 = vadd.f32 0.0, %v4193
        %v4195 = vpop.f32.mrf.mxu0
        %v4196 = vpop.f32.mrf.mxu0
        %v4197 = vadd.f32 0.0, %v4196
        %v4198 = vpop.f32.mrf.mxu0
        %4199 = vmatprep.mubr.bf16.mxu0 0
        %4200 = vmatmul.mubr.bf16.gmra.mxu0 %v4110
        %v4201 = vpop.f32.mrf.mxu0
        %v4202 = vadd.f32 0.0, %v4201
        %v4203 = vpop.f32.mrf.mxu0
        %v4204 = vpop.f32.mrf.mxu0
        %v4205 = vadd.f32 0.0, %v4204
        %v4206 = vpop.f32.mrf.mxu0
        %4207 = vmatprep.mubr.bf16.mxu0 0
        %4208 = vmatmul.mubr.bf16.gmra.mxu0 %v4113
        %v4209 = vpop.f32.mrf.mxu0
        %v4210 = vadd.f32 0.0, %v4209
        %v4211 = vpop.f32.mrf.mxu0
        %v4212 = vpop.f32.mrf.mxu0
        %v4213 = vadd.f32 0.0, %v4212
        %v4214 = vpop.f32.mrf.mxu0
        %4215 = vmatprep.mubr.bf16.mxu0 0
        %4216 = vmatmul.mubr.bf16.gmra.mxu0 %v4116
        %v4217 = vpop.f32.mrf.mxu0
        %v4218 = vadd.f32 0.0, %v4217
        %v4219 = vpop.f32.mrf.mxu0
        %v4220 = vpop.f32.mrf.mxu0
        %v4221 = vadd.f32 0.0, %v4220
        %v4222 = vpop.f32.mrf.mxu0
        %4223 = vmatprep.mubr.bf16.mxu0 0
        %4224 = vmatmul.mubr.bf16.gmra.mxu0 %v4119
        %v4225 = vpop.f32.mrf.mxu0
        %v4226 = vadd.f32 0.0, %v4225
        %v4227 = vpop.f32.mrf.mxu0
        %v4228 = vpop.f32.mrf.mxu0
        %v4229 = vadd.f32 0.0, %v4228
        %v4230 = vpop.f32.mrf.mxu0
        %4231 = vmatprep.mubr.bf16.mxu0 0
        %4232 = vmatmul.mubr.bf16.gmra.mxu0 %v4122
        %v4233 = vpop.f32.mrf.mxu0
        %v4234 = vadd.f32 0.0, %v4233
        %v4235 = vpop.f32.mrf.mxu0
        %v4236 = vpop.f32.mrf.mxu0
        %v4237 = vadd.f32 0.0, %v4236
        %v4238 = vpop.f32.mrf.mxu0
        %4239 = vmatprep.mubr.bf16.mxu0 0
        %4240 = vmatmul.mubr.bf16.gmra.mxu0 %v4125
        %v4241 = vpop.f32.mrf.mxu0
        %v4242 = vadd.f32 0.0, %v4241
        %v4243 = vpop.f32.mrf.mxu0
        %v4244 = vpop.f32.mrf.mxu0
        %v4245 = vadd.f32 0.0, %v4244
        %v4246 = vpop.f32.mrf.mxu0
        %4247 = vmatprep.mubr.bf16.mxu0 0
        %4248 = vmatmul.mubr.bf16.gmra.mxu0 %v4128
        %v4249 = vpop.f32.mrf.mxu0
        %v4250 = vadd.f32 0.0, %v4249
        %v4251 = vpop.f32.mrf.mxu0
        %v4252 = vpop.f32.mrf.mxu0
        %v4253 = vadd.f32 0.0, %v4252
        %v4254 = vpop.f32.mrf.mxu0
        %4255 = vmatprep.mubr.bf16.mxu0 0
        %4256 = vmatmul.mubr.bf16.gmra.mxu0 %v4131
        %v4257 = vpop.f32.mrf.mxu0
        %v4258 = vadd.f32 0.0, %v4257
        %v4259 = vpop.f32.mrf.mxu0
        %v4260 = vpop.f32.mrf.mxu0
        %v4261 = vadd.f32 0.0, %v4260
        %v4262 = vpop.f32.mrf.mxu0
        %4263 = vmatprep.mubr.bf16.mxu0 0
        %4264 = vmatmul.mubr.bf16.gmra.mxu0 %v4134
        %v4265 = vpop.f32.mrf.mxu0
        %v4266 = vadd.f32 0.0, %v4265
        %v4267 = vpop.f32.mrf.mxu0
        %v4268 = vpop.f32.mrf.mxu0
        %v4269 = vadd.f32 0.0, %v4268
        %v4270 = vpop.f32.mrf.mxu0
        %4271 = vmatprep.mubr.bf16.mxu0 0
        %4272 = vmatmul.mubr.bf16.gmra.mxu0 %v4137
        %v4273 = vpop.f32.mrf.mxu0
        %v4274 = vadd.f32 0.0, %v4273
        %v4275 = vpop.f32.mrf.mxu0
        %v4276 = vpop.f32.mrf.mxu0
        %v4277 = vadd.f32 0.0, %v4276
        %v4278 = vpop.f32.mrf.mxu0
        %4279 = vmatprep.mubr.bf16.mxu0 0
        %4280 = vmatmul.mubr.bf16.gmra.mxu0 %v4140
        %v4281 = vpop.f32.mrf.mxu0
        %v4282 = vadd.f32 0.0, %v4281
        %v4283 = vpop.f32.mrf.mxu0
        %v4284 = vpop.f32.mrf.mxu0
        %v4285 = vadd.f32 0.0, %v4284
        %v4286 = vpop.f32.mrf.mxu0
        %4287 = vmatprep.mubr.bf16.mxu0 0
        %4288 = vmatmul.mubr.bf16.gmra.mxu0 %v4143
        %v4289 = vpop.f32.mrf.mxu0
        %v4290 = vadd.f32 0.0, %v4289
        %v4291 = vpop.f32.mrf.mxu0
        %v4292 = vpop.f32.mrf.mxu0
        %v4293 = vadd.f32 0.0, %v4292
        %v4294 = vpop.f32.mrf.mxu0
        %4295 = vmatprep.mubr.bf16.mxu0 0
        %4296 = vmatmul.mubr.bf16.gmra.mxu0 %v4146
        %v4297 = vpop.f32.mrf.mxu0
        %v4298 = vadd.f32 0.0, %v4297
        %v4299 = vpop.f32.mrf.mxu0
        %v4300 = vpop.f32.mrf.mxu0
        %v4301 = vadd.f32 0.0, %v4300
        %v4302 = vpop.f32.mrf.mxu0
        %4303 = vmatprep.mubr.bf16.mxu0 0
        %4304 = vmatmul.mubr.bf16.gmra.mxu0 %v4149
        %v4305 = vpop.f32.mrf.mxu0
        %v4306 = vadd.f32 0.0, %v4305
        %v4307 = vpop.f32.mrf.mxu0
        %v4308 = vpop.f32.mrf.mxu0
        %v4309 = vadd.f32 0.0, %v4308
        %v4310 = vpop.f32.mrf.mxu0
        %4311 = vdwg.mxu0
        %v4312 = vadd.f32 %v3958, %v4186
        %v4313 = vadd.f32 %v3959, %v4189
        %v4314 = vadd.f32 %v3960, %v4194
        %v4315 = vadd.f32 %v3961, %v4197
        %v4316 = vadd.f32 %v3962, %v4202
        %v4317 = vadd.f32 %v3963, %v4205
        %v4318 = vadd.f32 %v3964, %v4210
        %v4319 = vadd.f32 %v3965, %v4213
        %v4320 = vadd.f32 %v3966, %v4218
        %v4321 = vadd.f32 %v3967, %v4221
        %v4322 = vadd.f32 %v3968, %v4226
        %v4323 = vadd.f32 %v3969, %v4229
        %v4324 = vadd.f32 %v3970, %v4234
        %v4325 = vadd.f32 %v3971, %v4237
        %v4326 = vadd.f32 %v3972, %v4242
        %v4327 = vadd.f32 %v3973, %v4245
        %v4328 = vadd.f32 %v3974, %v4250
        %v4329 = vadd.f32 %v3975, %v4253
        %v4330 = vadd.f32 %v3976, %v4258
        %v4331 = vadd.f32 %v3977, %v4261
        %v4332 = vadd.f32 %v3978, %v4266
        %v4333 = vadd.f32 %v3979, %v4269
        %v4334 = vadd.f32 %v3980, %v4274
        %v4335 = vadd.f32 %v3981, %v4277
        %v4336 = vadd.f32 %v3982, %v4282
        %v4337 = vadd.f32 %v3983, %v4285
        %v4338 = vadd.f32 %v3984, %v4290
        %v4339 = vadd.f32 %v3985, %v4293
        %v4340 = vadd.f32 %v3986, %v4298
        %v4341 = vadd.f32 %v3987, %v4301
        %v4342 = vadd.f32 %v3988, %v4306
        %v4343 = vadd.f32 %v3989, %v4309
        %v4344 = vld [vmem:[#allocation2 + $0x28] sm:$0xff]
        %v4345 = vld [vmem:[#allocation2 + $0x30] sm:$0xff]
        %v4346 = vld [vmem:[#allocation2 + $0x38] sm:$0xff]
        %v4347 = vld [vmem:[#allocation2 + $0x40] sm:$0xff]
        %v4348 = vld [vmem:[#allocation2 + $0x48] sm:$0xff]
        %v4349 = vld [vmem:[#allocation2 + $0x50] sm:$0xff]
        %v4350 = vld [vmem:[#allocation2 + $0x58] sm:$0xff]
        %v4351 = vld [vmem:[#allocation2 + $0x60] sm:$0xff]
        %v4352 = vld [vmem:[#allocation2 + $0x68] sm:$0xff]
        %v4353 = vld [vmem:[#allocation2 + $0x70] sm:$0xff]
        %v4354 = vld [vmem:[#allocation2 + $0x78] sm:$0xff]
        %v4355 = vld [vmem:[#allocation2 + $0x80] sm:$0xff]
        %v4356 = vld [vmem:[#allocation2 + $0x88] sm:$0xff]
        %v4357 = vld [vmem:[#allocation2 + $0x90] sm:$0xff]
        %v4358 = vld [vmem:[#allocation2 + $0x98] sm:$0xff]
        %v4359 = vld [vmem:[#allocation2 + $0xa0] sm:$0xff]
        %v4360 = vld [vmem:[#allocation2 + $0xa8] sm:$0xff]
        %v4361 = vld [vmem:[#allocation2 + $0xb0] sm:$0xff]
        %v4362 = vld [vmem:[#allocation2 + $0xb8] sm:$0xff]
        %v4363 = vld [vmem:[#allocation2 + $0xc0] sm:$0xff]
        %v4364 = vld [vmem:[#allocation2 + $0xc8] sm:$0xff]
        %v4365 = vld [vmem:[#allocation2 + $0xd0] sm:$0xff]
        %v4366 = vld [vmem:[#allocation2 + $0xd8] sm:$0xff]
        %v4367 = vld [vmem:[#allocation2 + $0xe0] sm:$0xff]
        %v4368 = vld [vmem:[#allocation2 + $0xe8] sm:$0xff]
        %v4369 = vld [vmem:[#allocation2 + $0xf0] sm:$0xff]
        %v4370 = vld [vmem:[#allocation2 + $0xf8] sm:$0xff]
        %v4371 = vld [vmem:[#allocation2 + $0x100] sm:$0xff]
        %v4372 = vld [vmem:[#allocation2 + $0x108] sm:$0xff]
        %v4373 = vld [vmem:[#allocation2 + $0x110] sm:$0xff]
        %v4374 = vld [vmem:[#allocation2 + $0x118] sm:$0xff]
        %v4375 = vld [vmem:[#allocation2 + $0x120] sm:$0xff]
        %v4376 = vpack.c.bf16 %v4345, %v4344
        %v4377 = vpack.c.bf16 %v4347, %v4346
        %v4378 = vpack.c.bf16 %v4349, %v4348
        %v4379 = vpack.c.bf16 %v4351, %v4350
        %v4380 = vpack.c.bf16 %v4353, %v4352
        %v4381 = vpack.c.bf16 %v4355, %v4354
        %v4382 = vpack.c.bf16 %v4357, %v4356
        %v4383 = vpack.c.bf16 %v4359, %v4358
        %v4384 = vpack.c.bf16 %v4361, %v4360
        %v4385 = vpack.c.bf16 %v4363, %v4362
        %v4386 = vpack.c.bf16 %v4365, %v4364
        %v4387 = vpack.c.bf16 %v4367, %v4366
        %v4388 = vpack.c.bf16 %v4369, %v4368
        %v4389 = vpack.c.bf16 %v4371, %v4370
        %v4390 = vpack.c.bf16 %v4373, %v4372
        %v4391 = vpack.c.bf16 %v4375, %v4374
        %s4392 = scalar_lea.vmem %s5, 224
        %v4393 = vld [vmem:[%s4392] sm:$0xf]
        %v4394 = vld [vmem:[%s4392 + $0x4] sm:$0xf]
        %v4395 = vld [vmem:[%s4392 + $0x8] sm:$0xf]
        %v4396 = vld [vmem:[%s4392 + $0xc] sm:$0xf]
        %v4397 = vld [vmem:[%s4392 + $0x10] sm:$0xf]
        %v4398 = vld [vmem:[%s4392 + $0x14] sm:$0xf]
        %v4399 = vld [vmem:[%s4392 + $0x18] sm:$0xf]
        %v4400 = vld [vmem:[%s4392 + $0x1c] sm:$0xf]
        %v4409 = vunpack.c.l.b16 %v4393
        %v4410 = vunpack.c.l.b16 %v4394
        %v4411 = vunpack.c.l.b16 %v4395
        %v4412 = vunpack.c.l.b16 %v4396
        %v4413 = vunpack.c.l.b16 %v4397
        %v4414 = vunpack.c.l.b16 %v4398
        %v4415 = vunpack.c.l.b16 %v4399
        %v4416 = vunpack.c.l.b16 %v4400
        %v4417 = vpack.c.b16 %v4410, %v4409
        %v4418 = vpack.c.b16 %v4412, %v4411
        %v4419 = vpack.c.b16 %v4414, %v4413
        %v4420 = vpack.c.b16 %v4416, %v4415
        %v4426 = vsel %vm1346, %v4376, 0
        %v4429 = vsel %vm1346, %v4377, 0
        %v4432 = vsel %vm1346, %v4378, 0
        %v4435 = vsel %vm1346, %v4379, 0
        %v4438 = vsel %vm1346, %v4380, 0
        %v4441 = vsel %vm1346, %v4381, 0
        %v4444 = vsel %vm1346, %v4382, 0
        %v4447 = vsel %vm1346, %v4383, 0
        %v4450 = vsel %vm1346, %v4384, 0
        %v4453 = vsel %vm1346, %v4385, 0
        %v4456 = vsel %vm1346, %v4386, 0
        %v4459 = vsel %vm1346, %v4387, 0
        %v4462 = vsel %vm1346, %v4388, 0
        %v4465 = vsel %vm1346, %v4389, 0
        %v4468 = vsel %vm1346, %v4390, 0
        %v4471 = vsel %vm1346, %v4391, 0
        %4473 = vmatprep.subr.bf16.mxu0 0
        %4474 = vmatpush1.bf16.msra.mxu0 0
        %4475 = vmatprep.subr.bf16.mxu0 0
        %4476 = vmatpush1.bf16.msra.mxu0 0
        %4477 = vmatprep.subr.bf16.mxu0 0
        %4478 = vmatpush1.bf16.msra.mxu0 0
        %4479 = vmatprep.subr.bf16.mxu0 0
        %4480 = vmatpush1.bf16.msra.mxu0 0
        %4481 = vmatprep.subr.bf16.mxu0 0
        %4482 = vmatpush1.bf16.msra.mxu0 %v4420
        %4483 = vmatprep.subr.bf16.mxu0 0
        %4484 = vmatpush1.bf16.msra.mxu0 %v4419
        %4485 = vmatprep.subr.bf16.mxu0 0
        %4486 = vmatpush1.bf16.msra.mxu0 %v4418
        %4487 = vmatprep.subr.bf16.mxu0 0
        %4488 = vmatpush1.bf16.msra.mxu0 %v4417
        %4489 = vmatprep.subr.bf16.mxu0 0
        %4490 = vmatpush2.bf16.msra.mxu0 0
        %4491 = vmatprep.subr.bf16.mxu0 0
        %4492 = vmatpush2.bf16.msra.mxu0 0
        %4493 = vmatprep.subr.bf16.mxu0 0
        %4494 = vmatpush2.bf16.msra.mxu0 0
        %4495 = vmatprep.subr.bf16.mxu0 0
        %4496 = vmatpush2.bf16.msra.mxu0 0
        %4497 = vmatprep.subr.bf16.mxu0 0
        %4498 = vmatpush2.bf16.msra.mxu0 0
        %4499 = vmatprep.subr.bf16.mxu0 0
        %4500 = vmatpush2.bf16.msra.mxu0 0
        %4501 = vmatprep.subr.bf16.mxu0 0
        %4502 = vmatpush2.bf16.msra.mxu0 0
        %4503 = vmatprep.subr.bf16.mxu0 0
        %4504 = vmatpush2.bf16.msra.mxu0 0
        %4505 = vmatprep.mubr.bf16.mxu0 0
        %4506 = vmatmul.mubr.bf16.gmra.mxu0 %v4426
        %v4507 = vpop.f32.mrf.mxu0
        %v4508 = vadd.f32 0.0, %v4507
        %v4509 = vpop.f32.mrf.mxu0
        %v4510 = vpop.f32.mrf.mxu0
        %v4511 = vadd.f32 0.0, %v4510
        %v4512 = vpop.f32.mrf.mxu0
        %4513 = vmatprep.mubr.bf16.mxu0 0
        %4514 = vmatmul.mubr.bf16.gmra.mxu0 %v4429
        %v4515 = vpop.f32.mrf.mxu0
        %v4516 = vadd.f32 0.0, %v4515
        %v4517 = vpop.f32.mrf.mxu0
        %v4518 = vpop.f32.mrf.mxu0
        %v4519 = vadd.f32 0.0, %v4518
        %v4520 = vpop.f32.mrf.mxu0
        %4521 = vmatprep.mubr.bf16.mxu0 0
        %4522 = vmatmul.mubr.bf16.gmra.mxu0 %v4432
        %v4523 = vpop.f32.mrf.mxu0
        %v4524 = vadd.f32 0.0, %v4523
        %v4525 = vpop.f32.mrf.mxu0
        %v4526 = vpop.f32.mrf.mxu0
        %v4527 = vadd.f32 0.0, %v4526
        %v4528 = vpop.f32.mrf.mxu0
        %4529 = vmatprep.mubr.bf16.mxu0 0
        %4530 = vmatmul.mubr.bf16.gmra.mxu0 %v4435
        %v4531 = vpop.f32.mrf.mxu0
        %v4532 = vadd.f32 0.0, %v4531
        %v4533 = vpop.f32.mrf.mxu0
        %v4534 = vpop.f32.mrf.mxu0
        %v4535 = vadd.f32 0.0, %v4534
        %v4536 = vpop.f32.mrf.mxu0
        %4537 = vmatprep.mubr.bf16.mxu0 0
        %4538 = vmatmul.mubr.bf16.gmra.mxu0 %v4438
        %v4539 = vpop.f32.mrf.mxu0
        %v4540 = vadd.f32 0.0, %v4539
        %v4541 = vpop.f32.mrf.mxu0
        %v4542 = vpop.f32.mrf.mxu0
        %v4543 = vadd.f32 0.0, %v4542
        %v4544 = vpop.f32.mrf.mxu0
        %4545 = vmatprep.mubr.bf16.mxu0 0
        %4546 = vmatmul.mubr.bf16.gmra.mxu0 %v4441
        %v4547 = vpop.f32.mrf.mxu0
        %v4548 = vadd.f32 0.0, %v4547
        %v4549 = vpop.f32.mrf.mxu0
        %v4550 = vpop.f32.mrf.mxu0
        %v4551 = vadd.f32 0.0, %v4550
        %v4552 = vpop.f32.mrf.mxu0
        %4553 = vmatprep.mubr.bf16.mxu0 0
        %4554 = vmatmul.mubr.bf16.gmra.mxu0 %v4444
        %v4555 = vpop.f32.mrf.mxu0
        %v4556 = vadd.f32 0.0, %v4555
        %v4557 = vpop.f32.mrf.mxu0
        %v4558 = vpop.f32.mrf.mxu0
        %v4559 = vadd.f32 0.0, %v4558
        %v4560 = vpop.f32.mrf.mxu0
        %4561 = vmatprep.mubr.bf16.mxu0 0
        %4562 = vmatmul.mubr.bf16.gmra.mxu0 %v4447
        %v4563 = vpop.f32.mrf.mxu0
        %v4564 = vadd.f32 0.0, %v4563
        %v4565 = vpop.f32.mrf.mxu0
        %v4566 = vpop.f32.mrf.mxu0
        %v4567 = vadd.f32 0.0, %v4566
        %v4568 = vpop.f32.mrf.mxu0
        %4569 = vmatprep.mubr.bf16.mxu0 0
        %4570 = vmatmul.mubr.bf16.gmra.mxu0 %v4450
        %v4571 = vpop.f32.mrf.mxu0
        %v4572 = vadd.f32 0.0, %v4571
        %v4573 = vpop.f32.mrf.mxu0
        %v4574 = vpop.f32.mrf.mxu0
        %v4575 = vadd.f32 0.0, %v4574
        %v4576 = vpop.f32.mrf.mxu0
        %4577 = vmatprep.mubr.bf16.mxu0 0
        %4578 = vmatmul.mubr.bf16.gmra.mxu0 %v4453
        %v4579 = vpop.f32.mrf.mxu0
        %v4580 = vadd.f32 0.0, %v4579
        %v4581 = vpop.f32.mrf.mxu0
        %v4582 = vpop.f32.mrf.mxu0
        %v4583 = vadd.f32 0.0, %v4582
        %v4584 = vpop.f32.mrf.mxu0
        %4585 = vmatprep.mubr.bf16.mxu0 0
        %4586 = vmatmul.mubr.bf16.gmra.mxu0 %v4456
        %v4587 = vpop.f32.mrf.mxu0
        %v4588 = vadd.f32 0.0, %v4587
        %v4589 = vpop.f32.mrf.mxu0
        %v4590 = vpop.f32.mrf.mxu0
        %v4591 = vadd.f32 0.0, %v4590
        %v4592 = vpop.f32.mrf.mxu0
        %4593 = vmatprep.mubr.bf16.mxu0 0
        %4594 = vmatmul.mubr.bf16.gmra.mxu0 %v4459
        %v4595 = vpop.f32.mrf.mxu0
        %v4596 = vadd.f32 0.0, %v4595
        %v4597 = vpop.f32.mrf.mxu0
        %v4598 = vpop.f32.mrf.mxu0
        %v4599 = vadd.f32 0.0, %v4598
        %v4600 = vpop.f32.mrf.mxu0
        %4601 = vmatprep.mubr.bf16.mxu0 0
        %4602 = vmatmul.mubr.bf16.gmra.mxu0 %v4462
        %v4603 = vpop.f32.mrf.mxu0
        %v4604 = vadd.f32 0.0, %v4603
        %v4605 = vpop.f32.mrf.mxu0
        %v4606 = vpop.f32.mrf.mxu0
        %v4607 = vadd.f32 0.0, %v4606
        %v4608 = vpop.f32.mrf.mxu0
        %4609 = vmatprep.mubr.bf16.mxu0 0
        %4610 = vmatmul.mubr.bf16.gmra.mxu0 %v4465
        %v4611 = vpop.f32.mrf.mxu0
        %v4612 = vadd.f32 0.0, %v4611
        %v4613 = vpop.f32.mrf.mxu0
        %v4614 = vpop.f32.mrf.mxu0
        %v4615 = vadd.f32 0.0, %v4614
        %v4616 = vpop.f32.mrf.mxu0
        %4617 = vmatprep.mubr.bf16.mxu0 0
        %4618 = vmatmul.mubr.bf16.gmra.mxu0 %v4468
        %v4619 = vpop.f32.mrf.mxu0
        %v4620 = vadd.f32 0.0, %v4619
        %v4621 = vpop.f32.mrf.mxu0
        %v4622 = vpop.f32.mrf.mxu0
        %v4623 = vadd.f32 0.0, %v4622
        %v4624 = vpop.f32.mrf.mxu0
        %4625 = vmatprep.mubr.bf16.mxu0 0
        %4626 = vmatmul.mubr.bf16.gmra.mxu0 %v4471
        %v4627 = vpop.f32.mrf.mxu0
        %v4628 = vadd.f32 0.0, %v4627
        %v4629 = vpop.f32.mrf.mxu0
        %v4630 = vpop.f32.mrf.mxu0
        %v4631 = vadd.f32 0.0, %v4630
        %v4632 = vpop.f32.mrf.mxu0
        %4633 = vdwg.mxu0
        %v4634 = vadd.f32 %v4312, %v4508
        %v4635 = vadd.f32 %v4313, %v4511
        %v4636 = vadd.f32 %v4314, %v4516
        %v4637 = vadd.f32 %v4315, %v4519
        %v4638 = vadd.f32 %v4316, %v4524
        %v4639 = vadd.f32 %v4317, %v4527
        %v4640 = vadd.f32 %v4318, %v4532
        %v4641 = vadd.f32 %v4319, %v4535
        %v4642 = vadd.f32 %v4320, %v4540
        %v4643 = vadd.f32 %v4321, %v4543
        %v4644 = vadd.f32 %v4322, %v4548
        %v4645 = vadd.f32 %v4323, %v4551
        %v4646 = vadd.f32 %v4324, %v4556
        %v4647 = vadd.f32 %v4325, %v4559
        %v4648 = vadd.f32 %v4326, %v4564
        %v4649 = vadd.f32 %v4327, %v4567
        %v4650 = vadd.f32 %v4328, %v4572
        %v4651 = vadd.f32 %v4329, %v4575
        %v4652 = vadd.f32 %v4330, %v4580
        %v4653 = vadd.f32 %v4331, %v4583
        %v4654 = vadd.f32 %v4332, %v4588
        %v4655 = vadd.f32 %v4333, %v4591
        %v4656 = vadd.f32 %v4334, %v4596
        %v4657 = vadd.f32 %v4335, %v4599
        %v4658 = vadd.f32 %v4336, %v4604
        %v4659 = vadd.f32 %v4337, %v4607
        %v4660 = vadd.f32 %v4338, %v4612
        %v4661 = vadd.f32 %v4339, %v4615
        %v4662 = vadd.f32 %v4340, %v4620
        %v4663 = vadd.f32 %v4341, %v4623
        %v4664 = vadd.f32 %v4342, %v4628
        %v4665 = vadd.f32 %v4343, %v4631
        %v4666 = vld [vmem:[#allocation2 + $0x29] sm:$0xff]
        %v4667 = vld [vmem:[#allocation2 + $0x31] sm:$0xff]
        %v4668 = vld [vmem:[#allocation2 + $0x39] sm:$0xff]
        %v4669 = vld [vmem:[#allocation2 + $0x41] sm:$0xff]
        %v4670 = vld [vmem:[#allocation2 + $0x49] sm:$0xff]
        %v4671 = vld [vmem:[#allocation2 + $0x51] sm:$0xff]
        %v4672 = vld [vmem:[#allocation2 + $0x59] sm:$0xff]
        %v4673 = vld [vmem:[#allocation2 + $0x61] sm:$0xff]
        %v4674 = vld [vmem:[#allocation2 + $0x69] sm:$0xff]
        %v4675 = vld [vmem:[#allocation2 + $0x71] sm:$0xff]
        %v4676 = vld [vmem:[#allocation2 + $0x79] sm:$0xff]
        %v4677 = vld [vmem:[#allocation2 + $0x81] sm:$0xff]
        %v4678 = vld [vmem:[#allocation2 + $0x89] sm:$0xff]
        %v4679 = vld [vmem:[#allocation2 + $0x91] sm:$0xff]
        %v4680 = vld [vmem:[#allocation2 + $0x99] sm:$0xff]
        %v4681 = vld [vmem:[#allocation2 + $0xa1] sm:$0xff]
        %v4682 = vld [vmem:[#allocation2 + $0xa9] sm:$0xff]
        %v4683 = vld [vmem:[#allocation2 + $0xb1] sm:$0xff]
        %v4684 = vld [vmem:[#allocation2 + $0xb9] sm:$0xff]
        %v4685 = vld [vmem:[#allocation2 + $0xc1] sm:$0xff]
        %v4686 = vld [vmem:[#allocation2 + $0xc9] sm:$0xff]
        %v4687 = vld [vmem:[#allocation2 + $0xd1] sm:$0xff]
        %v4688 = vld [vmem:[#allocation2 + $0xd9] sm:$0xff]
        %v4689 = vld [vmem:[#allocation2 + $0xe1] sm:$0xff]
        %v4690 = vld [vmem:[#allocation2 + $0xe9] sm:$0xff]
        %v4691 = vld [vmem:[#allocation2 + $0xf1] sm:$0xff]
        %v4692 = vld [vmem:[#allocation2 + $0xf9] sm:$0xff]
        %v4693 = vld [vmem:[#allocation2 + $0x101] sm:$0xff]
        %v4694 = vld [vmem:[#allocation2 + $0x109] sm:$0xff]
        %v4695 = vld [vmem:[#allocation2 + $0x111] sm:$0xff]
        %v4696 = vld [vmem:[#allocation2 + $0x119] sm:$0xff]
        %v4697 = vld [vmem:[#allocation2 + $0x121] sm:$0xff]
        %v4698 = vsel %vm2638, %v4666, 0.0
        %v4699 = vsel %vm2639, %v4667, 0.0
        %v4700 = vsel %vm2640, %v4668, 0.0
        %v4701 = vsel %vm2641, %v4669, 0.0
        %v4702 = vsel %vm2642, %v4670, 0.0
        %v4703 = vsel %vm2643, %v4671, 0.0
        %v4704 = vsel %vm2644, %v4672, 0.0
        %v4705 = vsel %vm2645, %v4673, 0.0
        %v4706 = vsel %vm2646, %v4674, 0.0
        %v4707 = vsel %vm2647, %v4675, 0.0
        %v4708 = vsel %vm2648, %v4676, 0.0
        %v4709 = vsel %vm2649, %v4677, 0.0
        %v4710 = vsel %vm2650, %v4678, 0.0
        %v4711 = vsel %vm2651, %v4679, 0.0
        %v4712 = vsel %vm2652, %v4680, 0.0
        %v4713 = vsel %vm2653, %v4681, 0.0
        %v4714 = vsel %vm2654, %v4682, 0.0
        %v4715 = vsel %vm2655, %v4683, 0.0
        %v4716 = vsel %vm2656, %v4684, 0.0
        %v4717 = vsel %vm2657, %v4685, 0.0
        %v4718 = vsel %vm2658, %v4686, 0.0
        %v4719 = vsel %vm2659, %v4687, 0.0
        %v4720 = vsel %vm2660, %v4688, 0.0
        %v4721 = vsel %vm2661, %v4689, 0.0
        %v4722 = vsel %vm2662, %v4690, 0.0
        %v4723 = vsel %vm2663, %v4691, 0.0
        %v4724 = vsel %vm2664, %v4692, 0.0
        %v4725 = vsel %vm2665, %v4693, 0.0
        %v4726 = vsel %vm2666, %v4694, 0.0
        %v4727 = vsel %vm2667, %v4695, 0.0
        %v4728 = vsel %vm2668, %v4696, 0.0
        %v4729 = vsel %vm2669, %v4697, 0.0
        %v4730 = vpack.c.bf16 %v4699, %v4698
        %v4731 = vpack.c.bf16 %v4701, %v4700
        %v4732 = vpack.c.bf16 %v4703, %v4702
        %v4733 = vpack.c.bf16 %v4705, %v4704
        %v4734 = vpack.c.bf16 %v4707, %v4706
        %v4735 = vpack.c.bf16 %v4709, %v4708
        %v4736 = vpack.c.bf16 %v4711, %v4710
        %v4737 = vpack.c.bf16 %v4713, %v4712
        %v4738 = vpack.c.bf16 %v4715, %v4714
        %v4739 = vpack.c.bf16 %v4717, %v4716
        %v4740 = vpack.c.bf16 %v4719, %v4718
        %v4741 = vpack.c.bf16 %v4721, %v4720
        %v4742 = vpack.c.bf16 %v4723, %v4722
        %v4743 = vpack.c.bf16 %v4725, %v4724
        %v4744 = vpack.c.bf16 %v4727, %v4726
        %v4745 = vpack.c.bf16 %v4729, %v4728
        %s4746 = scalar_lea.vmem %s5, 256
        %v4747 = vld [vmem:[%s4746] sm:$0xf]
        %v4748 = vld [vmem:[%s4746 + $0x4] sm:$0xf]
        %v4749 = vld [vmem:[%s4746 + $0x8] sm:$0xf]
        %v4750 = vld [vmem:[%s4746 + $0xc] sm:$0xf]
        %v4751 = vld [vmem:[%s4746 + $0x10] sm:$0xf]
        %v4752 = vld [vmem:[%s4746 + $0x14] sm:$0xf]
        %v4753 = vld [vmem:[%s4746 + $0x18] sm:$0xf]
        %v4754 = vld [vmem:[%s4746 + $0x1c] sm:$0xf]
        %v4763 = vunpack.c.l.b16 %v4747
        %v4764 = vunpack.c.l.b16 %v4748
        %v4765 = vunpack.c.l.b16 %v4749
        %v4766 = vunpack.c.l.b16 %v4750
        %v4767 = vunpack.c.l.b16 %v4751
        %v4768 = vunpack.c.l.b16 %v4752
        %v4769 = vunpack.c.l.b16 %v4753
        %v4770 = vunpack.c.l.b16 %v4754
        %v4771 = vpack.c.b16 %v4764, %v4763
        %v4772 = vpack.c.b16 %v4766, %v4765
        %v4773 = vpack.c.b16 %v4768, %v4767
        %v4774 = vpack.c.b16 %v4770, %v4769
        %v4780 = vsel %vm1346, %v4730, 0
        %v4783 = vsel %vm1346, %v4731, 0
        %v4786 = vsel %vm1346, %v4732, 0
        %v4789 = vsel %vm1346, %v4733, 0
        %v4792 = vsel %vm1346, %v4734, 0
        %v4795 = vsel %vm1346, %v4735, 0
        %v4798 = vsel %vm1346, %v4736, 0
        %v4801 = vsel %vm1346, %v4737, 0
        %v4804 = vsel %vm1346, %v4738, 0
        %v4807 = vsel %vm1346, %v4739, 0
        %v4810 = vsel %vm1346, %v4740, 0
        %v4813 = vsel %vm1346, %v4741, 0
        %v4816 = vsel %vm1346, %v4742, 0
        %v4819 = vsel %vm1346, %v4743, 0
        %v4822 = vsel %vm1346, %v4744, 0
        %v4825 = vsel %vm1346, %v4745, 0
        %4827 = vmatprep.subr.bf16.mxu0 0
        %4828 = vmatpush1.bf16.msra.mxu0 0
        %4829 = vmatprep.subr.bf16.mxu0 0
        %4830 = vmatpush1.bf16.msra.mxu0 0
        %4831 = vmatprep.subr.bf16.mxu0 0
        %4832 = vmatpush1.bf16.msra.mxu0 0
        %4833 = vmatprep.subr.bf16.mxu0 0
        %4834 = vmatpush1.bf16.msra.mxu0 0
        %4835 = vmatprep.subr.bf16.mxu0 0
        %4836 = vmatpush1.bf16.msra.mxu0 %v4774
        %4837 = vmatprep.subr.bf16.mxu0 0
        %4838 = vmatpush1.bf16.msra.mxu0 %v4773
        %4839 = vmatprep.subr.bf16.mxu0 0
        %4840 = vmatpush1.bf16.msra.mxu0 %v4772
        %4841 = vmatprep.subr.bf16.mxu0 0
        %4842 = vmatpush1.bf16.msra.mxu0 %v4771
        %4843 = vmatprep.subr.bf16.mxu0 0
        %4844 = vmatpush2.bf16.msra.mxu0 0
        %4845 = vmatprep.subr.bf16.mxu0 0
        %4846 = vmatpush2.bf16.msra.mxu0 0
        %4847 = vmatprep.subr.bf16.mxu0 0
        %4848 = vmatpush2.bf16.msra.mxu0 0
        %4849 = vmatprep.subr.bf16.mxu0 0
        %4850 = vmatpush2.bf16.msra.mxu0 0
        %4851 = vmatprep.subr.bf16.mxu0 0
        %4852 = vmatpush2.bf16.msra.mxu0 0
        %4853 = vmatprep.subr.bf16.mxu0 0
        %4854 = vmatpush2.bf16.msra.mxu0 0
        %4855 = vmatprep.subr.bf16.mxu0 0
        %4856 = vmatpush2.bf16.msra.mxu0 0
        %4857 = vmatprep.subr.bf16.mxu0 0
        %4858 = vmatpush2.bf16.msra.mxu0 0
        %4859 = vmatprep.mubr.bf16.mxu0 0
        %4860 = vmatmul.mubr.bf16.gmra.mxu0 %v4780
        %v4861 = vpop.f32.mrf.mxu0
        %v4862 = vadd.f32 0.0, %v4861
        %v4863 = vpop.f32.mrf.mxu0
        %v4864 = vpop.f32.mrf.mxu0
        %v4865 = vadd.f32 0.0, %v4864
        %v4866 = vpop.f32.mrf.mxu0
        %4867 = vmatprep.mubr.bf16.mxu0 0
        %4868 = vmatmul.mubr.bf16.gmra.mxu0 %v4783
        %v4869 = vpop.f32.mrf.mxu0
        %v4870 = vadd.f32 0.0, %v4869
        %v4871 = vpop.f32.mrf.mxu0
        %v4872 = vpop.f32.mrf.mxu0
        %v4873 = vadd.f32 0.0, %v4872
        %v4874 = vpop.f32.mrf.mxu0
        %4875 = vmatprep.mubr.bf16.mxu0 0
        %4876 = vmatmul.mubr.bf16.gmra.mxu0 %v4786
        %v4877 = vpop.f32.mrf.mxu0
        %v4878 = vadd.f32 0.0, %v4877
        %v4879 = vpop.f32.mrf.mxu0
        %v4880 = vpop.f32.mrf.mxu0
        %v4881 = vadd.f32 0.0, %v4880
        %v4882 = vpop.f32.mrf.mxu0
        %4883 = vmatprep.mubr.bf16.mxu0 0
        %4884 = vmatmul.mubr.bf16.gmra.mxu0 %v4789
        %v4885 = vpop.f32.mrf.mxu0
        %v4886 = vadd.f32 0.0, %v4885
        %v4887 = vpop.f32.mrf.mxu0
        %v4888 = vpop.f32.mrf.mxu0
        %v4889 = vadd.f32 0.0, %v4888
        %v4890 = vpop.f32.mrf.mxu0
        %4891 = vmatprep.mubr.bf16.mxu0 0
        %4892 = vmatmul.mubr.bf16.gmra.mxu0 %v4792
        %v4893 = vpop.f32.mrf.mxu0
        %v4894 = vadd.f32 0.0, %v4893
        %v4895 = vpop.f32.mrf.mxu0
        %v4896 = vpop.f32.mrf.mxu0
        %v4897 = vadd.f32 0.0, %v4896
        %v4898 = vpop.f32.mrf.mxu0
        %4899 = vmatprep.mubr.bf16.mxu0 0
        %4900 = vmatmul.mubr.bf16.gmra.mxu0 %v4795
        %v4901 = vpop.f32.mrf.mxu0
        %v4902 = vadd.f32 0.0, %v4901
        %v4903 = vpop.f32.mrf.mxu0
        %v4904 = vpop.f32.mrf.mxu0
        %v4905 = vadd.f32 0.0, %v4904
        %v4906 = vpop.f32.mrf.mxu0
        %4907 = vmatprep.mubr.bf16.mxu0 0
        %4908 = vmatmul.mubr.bf16.gmra.mxu0 %v4798
        %v4909 = vpop.f32.mrf.mxu0
        %v4910 = vadd.f32 0.0, %v4909
        %v4911 = vpop.f32.mrf.mxu0
        %v4912 = vpop.f32.mrf.mxu0
        %v4913 = vadd.f32 0.0, %v4912
        %v4914 = vpop.f32.mrf.mxu0
        %4915 = vmatprep.mubr.bf16.mxu0 0
        %4916 = vmatmul.mubr.bf16.gmra.mxu0 %v4801
        %v4917 = vpop.f32.mrf.mxu0
        %v4918 = vadd.f32 0.0, %v4917
        %v4919 = vpop.f32.mrf.mxu0
        %v4920 = vpop.f32.mrf.mxu0
        %v4921 = vadd.f32 0.0, %v4920
        %v4922 = vpop.f32.mrf.mxu0
        %4923 = vmatprep.mubr.bf16.mxu0 0
        %4924 = vmatmul.mubr.bf16.gmra.mxu0 %v4804
        %v4925 = vpop.f32.mrf.mxu0
        %v4926 = vadd.f32 0.0, %v4925
        %v4927 = vpop.f32.mrf.mxu0
        %v4928 = vpop.f32.mrf.mxu0
        %v4929 = vadd.f32 0.0, %v4928
        %v4930 = vpop.f32.mrf.mxu0
        %4931 = vmatprep.mubr.bf16.mxu0 0
        %4932 = vmatmul.mubr.bf16.gmra.mxu0 %v4807
        %v4933 = vpop.f32.mrf.mxu0
        %v4934 = vadd.f32 0.0, %v4933
        %v4935 = vpop.f32.mrf.mxu0
        %v4936 = vpop.f32.mrf.mxu0
        %v4937 = vadd.f32 0.0, %v4936
        %v4938 = vpop.f32.mrf.mxu0
        %4939 = vmatprep.mubr.bf16.mxu0 0
        %4940 = vmatmul.mubr.bf16.gmra.mxu0 %v4810
        %v4941 = vpop.f32.mrf.mxu0
        %v4942 = vadd.f32 0.0, %v4941
        %v4943 = vpop.f32.mrf.mxu0
        %v4944 = vpop.f32.mrf.mxu0
        %v4945 = vadd.f32 0.0, %v4944
        %v4946 = vpop.f32.mrf.mxu0
        %4947 = vmatprep.mubr.bf16.mxu0 0
        %4948 = vmatmul.mubr.bf16.gmra.mxu0 %v4813
        %v4949 = vpop.f32.mrf.mxu0
        %v4950 = vadd.f32 0.0, %v4949
        %v4951 = vpop.f32.mrf.mxu0
        %v4952 = vpop.f32.mrf.mxu0
        %v4953 = vadd.f32 0.0, %v4952
        %v4954 = vpop.f32.mrf.mxu0
        %4955 = vmatprep.mubr.bf16.mxu0 0
        %4956 = vmatmul.mubr.bf16.gmra.mxu0 %v4816
        %v4957 = vpop.f32.mrf.mxu0
        %v4958 = vadd.f32 0.0, %v4957
        %v4959 = vpop.f32.mrf.mxu0
        %v4960 = vpop.f32.mrf.mxu0
        %v4961 = vadd.f32 0.0, %v4960
        %v4962 = vpop.f32.mrf.mxu0
        %4963 = vmatprep.mubr.bf16.mxu0 0
        %4964 = vmatmul.mubr.bf16.gmra.mxu0 %v4819
        %v4965 = vpop.f32.mrf.mxu0
        %v4966 = vadd.f32 0.0, %v4965
        %v4967 = vpop.f32.mrf.mxu0
        %v4968 = vpop.f32.mrf.mxu0
        %v4969 = vadd.f32 0.0, %v4968
        %v4970 = vpop.f32.mrf.mxu0
        %4971 = vmatprep.mubr.bf16.mxu0 0
        %4972 = vmatmul.mubr.bf16.gmra.mxu0 %v4822
        %v4973 = vpop.f32.mrf.mxu0
        %v4974 = vadd.f32 0.0, %v4973
        %v4975 = vpop.f32.mrf.mxu0
        %v4976 = vpop.f32.mrf.mxu0
        %v4977 = vadd.f32 0.0, %v4976
        %v4978 = vpop.f32.mrf.mxu0
        %4979 = vmatprep.mubr.bf16.mxu0 0
        %4980 = vmatmul.mubr.bf16.gmra.mxu0 %v4825
        %v4981 = vpop.f32.mrf.mxu0
        %v4982 = vadd.f32 0.0, %v4981
        %v4983 = vpop.f32.mrf.mxu0
        %v4984 = vpop.f32.mrf.mxu0
        %v4985 = vadd.f32 0.0, %v4984
        %v4986 = vpop.f32.mrf.mxu0
        %4987 = vdwg.mxu0
        %v4988 = vadd.f32 %v4634, %v4862
        %v4989 = vadd.f32 %v4635, %v4865
        %v4990 = vadd.f32 %v4636, %v4870
        %v4991 = vadd.f32 %v4637, %v4873
        %v4992 = vadd.f32 %v4638, %v4878
        %v4993 = vadd.f32 %v4639, %v4881
        %v4994 = vadd.f32 %v4640, %v4886
        %v4995 = vadd.f32 %v4641, %v4889
        %v4996 = vadd.f32 %v4642, %v4894
        %v4997 = vadd.f32 %v4643, %v4897
        %v4998 = vadd.f32 %v4644, %v4902
        %v4999 = vadd.f32 %v4645, %v4905
        %v5000 = vadd.f32 %v4646, %v4910
        %v5001 = vadd.f32 %v4647, %v4913
        %v5002 = vadd.f32 %v4648, %v4918
        %v5003 = vadd.f32 %v4649, %v4921
        %v5004 = vadd.f32 %v4650, %v4926
        %v5005 = vadd.f32 %v4651, %v4929
        %v5006 = vadd.f32 %v4652, %v4934
        %v5007 = vadd.f32 %v4653, %v4937
        %v5008 = vadd.f32 %v4654, %v4942
        %v5009 = vadd.f32 %v4655, %v4945
        %v5010 = vadd.f32 %v4656, %v4950
        %v5011 = vadd.f32 %v4657, %v4953
        %v5012 = vadd.f32 %v4658, %v4958
        %v5013 = vadd.f32 %v4659, %v4961
        %v5014 = vadd.f32 %v4660, %v4966
        %v5015 = vadd.f32 %v4661, %v4969
        %v5016 = vadd.f32 %v4662, %v4974
        %v5017 = vadd.f32 %v4663, %v4977
        %v5018 = vadd.f32 %v4664, %v4982
        %v5019 = vadd.f32 %v4665, %v4985
        %v5021 = vlaneseq
        %v5022 = vshrl.u32 %v5021, 7
        %v5023 = vsub.s32 0, %v5022
        %v5024 = vrot.slane %v1866, %v5023
        %v5026 = vadd.f32 %v4988, %v5024
        %v5027 = vadd.f32 %v4989, %v5024
        %v5028 = vadd.f32 %v4990, %v5024
        %v5029 = vadd.f32 %v4991, %v5024
        %v5030 = vadd.f32 %v4992, %v5024
        %v5031 = vadd.f32 %v4993, %v5024
        %v5032 = vadd.f32 %v4994, %v5024
        %v5033 = vadd.f32 %v4995, %v5024
        %v5034 = vadd.f32 %v4996, %v5024
        %v5035 = vadd.f32 %v4997, %v5024
        %v5036 = vadd.f32 %v4998, %v5024
        %v5037 = vadd.f32 %v4999, %v5024
        %v5038 = vadd.f32 %v5000, %v5024
        %v5039 = vadd.f32 %v5001, %v5024
        %v5040 = vadd.f32 %v5002, %v5024
        %v5041 = vadd.f32 %v5003, %v5024
        %v5042 = vadd.f32 %v5004, %v5024
        %v5043 = vadd.f32 %v5005, %v5024
        %v5044 = vadd.f32 %v5006, %v5024
        %v5045 = vadd.f32 %v5007, %v5024
        %v5046 = vadd.f32 %v5008, %v5024
        %v5047 = vadd.f32 %v5009, %v5024
        %v5048 = vadd.f32 %v5010, %v5024
        %v5049 = vadd.f32 %v5011, %v5024
        %v5050 = vadd.f32 %v5012, %v5024
        %v5051 = vadd.f32 %v5013, %v5024
        %v5052 = vadd.f32 %v5014, %v5024
        %v5053 = vadd.f32 %v5015, %v5024
        %v5054 = vadd.f32 %v5016, %v5024
        %v5055 = vadd.f32 %v5017, %v5024
        %v5056 = vadd.f32 %v5018, %v5024
        %v5057 = vadd.f32 %v5019, %v5024
        %v5058 = vxor.u32 %v5026, 2147483648
        %v5059 = vxor.u32 %v5027, 2147483648
        %v5060 = vxor.u32 %v5028, 2147483648
        %v5061 = vxor.u32 %v5029, 2147483648
        %v5062 = vxor.u32 %v5030, 2147483648
        %v5063 = vxor.u32 %v5031, 2147483648
        %v5064 = vxor.u32 %v5032, 2147483648
        %v5065 = vxor.u32 %v5033, 2147483648
        %v5066 = vxor.u32 %v5034, 2147483648
        %v5067 = vxor.u32 %v5035, 2147483648
        %v5068 = vxor.u32 %v5036, 2147483648
        %v5069 = vxor.u32 %v5037, 2147483648
        %v5070 = vxor.u32 %v5038, 2147483648
        %v5071 = vxor.u32 %v5039, 2147483648
        %v5072 = vxor.u32 %v5040, 2147483648
        %v5073 = vxor.u32 %v5041, 2147483648
        %v5074 = vxor.u32 %v5042, 2147483648
        %v5075 = vxor.u32 %v5043, 2147483648
        %v5076 = vxor.u32 %v5044, 2147483648
        %v5077 = vxor.u32 %v5045, 2147483648
        %v5078 = vxor.u32 %v5046, 2147483648
        %v5079 = vxor.u32 %v5047, 2147483648
        %v5080 = vxor.u32 %v5048, 2147483648
        %v5081 = vxor.u32 %v5049, 2147483648
        %v5082 = vxor.u32 %v5050, 2147483648
        %v5083 = vxor.u32 %v5051, 2147483648
        %v5084 = vxor.u32 %v5052, 2147483648
        %v5085 = vxor.u32 %v5053, 2147483648
        %v5086 = vxor.u32 %v5054, 2147483648
        %v5087 = vxor.u32 %v5055, 2147483648
        %v5088 = vxor.u32 %v5056, 2147483648
        %v5089 = vxor.u32 %v5057, 2147483648
        %v5090 = vmul.f32 %v5058, 1.442695
        %v5091 = vpow.pop %v5090
        %v5092 = vmul.f32 %v5059, 1.442695
        %v5093 = vpow.pop %v5092
        %v5094 = vmul.f32 %v5060, 1.442695
        %v5095 = vpow.pop %v5094
        %v5096 = vmul.f32 %v5061, 1.442695
        %v5097 = vpow.pop %v5096
        %v5098 = vmul.f32 %v5062, 1.442695
        %v5099 = vpow.pop %v5098
        %v5100 = vmul.f32 %v5063, 1.442695
        %v5101 = vpow.pop %v5100
        %v5102 = vmul.f32 %v5064, 1.442695
        %v5103 = vpow.pop %v5102
        %v5104 = vmul.f32 %v5065, 1.442695
        %v5105 = vpow.pop %v5104
        %v5106 = vmul.f32 %v5066, 1.442695
        %v5107 = vpow.pop %v5106
        %v5108 = vmul.f32 %v5067, 1.442695
        %v5109 = vpow.pop %v5108
        %v5110 = vmul.f32 %v5068, 1.442695
        %v5111 = vpow.pop %v5110
        %v5112 = vmul.f32 %v5069, 1.442695
        %v5113 = vpow.pop %v5112
        %v5114 = vmul.f32 %v5070, 1.442695
        %v5115 = vpow.pop %v5114
        %v5116 = vmul.f32 %v5071, 1.442695
        %v5117 = vpow.pop %v5116
        %v5118 = vmul.f32 %v5072, 1.442695
        %v5119 = vpow.pop %v5118
        %v5120 = vmul.f32 %v5073, 1.442695
        %v5121 = vpow.pop %v5120
        %v5122 = vmul.f32 %v5074, 1.442695
        %v5123 = vpow.pop %v5122
        %v5124 = vmul.f32 %v5075, 1.442695
        %v5125 = vpow.pop %v5124
        %v5126 = vmul.f32 %v5076, 1.442695
        %v5127 = vpow.pop %v5126
        %v5128 = vmul.f32 %v5077, 1.442695
        %v5129 = vpow.pop %v5128
        %v5130 = vmul.f32 %v5078, 1.442695
        %v5131 = vpow.pop %v5130
        %v5132 = vmul.f32 %v5079, 1.442695
        %v5133 = vpow.pop %v5132
        %v5134 = vmul.f32 %v5080, 1.442695
        %v5135 = vpow.pop %v5134
        %v5136 = vmul.f32 %v5081, 1.442695
        %v5137 = vpow.pop %v5136
        %v5138 = vmul.f32 %v5082, 1.442695
        %v5139 = vpow.pop %v5138
        %v5140 = vmul.f32 %v5083, 1.442695
        %v5141 = vpow.pop %v5140
        %v5142 = vmul.f32 %v5084, 1.442695
        %v5143 = vpow.pop %v5142
        %v5144 = vmul.f32 %v5085, 1.442695
        %v5145 = vpow.pop %v5144
        %v5146 = vmul.f32 %v5086, 1.442695
        %v5147 = vpow.pop %v5146
        %v5148 = vmul.f32 %v5087, 1.442695
        %v5149 = vpow.pop %v5148
        %v5150 = vmul.f32 %v5088, 1.442695
        %v5151 = vpow.pop %v5150
        %v5152 = vmul.f32 %v5089, 1.442695
        %v5153 = vpow.pop %v5152
        %v5154 = vadd.f32 %v5091, 1.0
        %v5155 = vadd.f32 %v5093, 1.0
        %v5156 = vadd.f32 %v5095, 1.0
        %v5157 = vadd.f32 %v5097, 1.0
        %v5158 = vadd.f32 %v5099, 1.0
        %v5159 = vadd.f32 %v5101, 1.0
        %v5160 = vadd.f32 %v5103, 1.0
        %v5161 = vadd.f32 %v5105, 1.0
        %v5162 = vadd.f32 %v5107, 1.0
        %v5163 = vadd.f32 %v5109, 1.0
        %v5164 = vadd.f32 %v5111, 1.0
        %v5165 = vadd.f32 %v5113, 1.0
        %v5166 = vadd.f32 %v5115, 1.0
        %v5167 = vadd.f32 %v5117, 1.0
        %v5168 = vadd.f32 %v5119, 1.0
        %v5169 = vadd.f32 %v5121, 1.0
        %v5170 = vadd.f32 %v5123, 1.0
        %v5171 = vadd.f32 %v5125, 1.0
        %v5172 = vadd.f32 %v5127, 1.0
        %v5173 = vadd.f32 %v5129, 1.0
        %v5174 = vadd.f32 %v5131, 1.0
        %v5175 = vadd.f32 %v5133, 1.0
        %v5176 = vadd.f32 %v5135, 1.0
        %v5177 = vadd.f32 %v5137, 1.0
        %v5178 = vadd.f32 %v5139, 1.0
        %v5179 = vadd.f32 %v5141, 1.0
        %v5180 = vadd.f32 %v5143, 1.0
        %v5181 = vadd.f32 %v5145, 1.0
        %v5182 = vadd.f32 %v5147, 1.0
        %v5183 = vadd.f32 %v5149, 1.0
        %v5184 = vadd.f32 %v5151, 1.0
        %v5185 = vadd.f32 %v5153, 1.0
        %v5186 = vrcp.pop %v5154
        %v5187 = vmul.f32 1.0, %v5186
        %v5188 = vrcp.pop %v5155
        %v5189 = vmul.f32 1.0, %v5188
        %v5190 = vrcp.pop %v5156
        %v5191 = vmul.f32 1.0, %v5190
        %v5192 = vrcp.pop %v5157
        %v5193 = vmul.f32 1.0, %v5192
        %v5194 = vrcp.pop %v5158
        %v5195 = vmul.f32 1.0, %v5194
        %v5196 = vrcp.pop %v5159
        %v5197 = vmul.f32 1.0, %v5196
        %v5198 = vrcp.pop %v5160
        %v5199 = vmul.f32 1.0, %v5198
        %v5200 = vrcp.pop %v5161
        %v5201 = vmul.f32 1.0, %v5200
        %v5202 = vrcp.pop %v5162
        %v5203 = vmul.f32 1.0, %v5202
        %v5204 = vrcp.pop %v5163
        %v5205 = vmul.f32 1.0, %v5204
        %v5206 = vrcp.pop %v5164
        %v5207 = vmul.f32 1.0, %v5206
        %v5208 = vrcp.pop %v5165
        %v5209 = vmul.f32 1.0, %v5208
        %v5210 = vrcp.pop %v5166
        %v5211 = vmul.f32 1.0, %v5210
        %v5212 = vrcp.pop %v5167
        %v5213 = vmul.f32 1.0, %v5212
        %v5214 = vrcp.pop %v5168
        %v5215 = vmul.f32 1.0, %v5214
        %v5216 = vrcp.pop %v5169
        %v5217 = vmul.f32 1.0, %v5216
        %v5218 = vrcp.pop %v5170
        %v5219 = vmul.f32 1.0, %v5218
        %v5220 = vrcp.pop %v5171
        %v5221 = vmul.f32 1.0, %v5220
        %v5222 = vrcp.pop %v5172
        %v5223 = vmul.f32 1.0, %v5222
        %v5224 = vrcp.pop %v5173
        %v5225 = vmul.f32 1.0, %v5224
        %v5226 = vrcp.pop %v5174
        %v5227 = vmul.f32 1.0, %v5226
        %v5228 = vrcp.pop %v5175
        %v5229 = vmul.f32 1.0, %v5228
        %v5230 = vrcp.pop %v5176
        %v5231 = vmul.f32 1.0, %v5230
        %v5232 = vrcp.pop %v5177
        %v5233 = vmul.f32 1.0, %v5232
        %v5234 = vrcp.pop %v5178
        %v5235 = vmul.f32 1.0, %v5234
        %v5236 = vrcp.pop %v5179
        %v5237 = vmul.f32 1.0, %v5236
        %v5238 = vrcp.pop %v5180
        %v5239 = vmul.f32 1.0, %v5238
        %v5240 = vrcp.pop %v5181
        %v5241 = vmul.f32 1.0, %v5240
        %v5242 = vrcp.pop %v5182
        %v5243 = vmul.f32 1.0, %v5242
        %v5244 = vrcp.pop %v5183
        %v5245 = vmul.f32 1.0, %v5244
        %v5246 = vrcp.pop %v5184
        %v5247 = vmul.f32 1.0, %v5246
        %v5248 = vrcp.pop %v5185
        %v5249 = vmul.f32 1.0, %v5248
        %v5250 = vmul.f32 %v5026, %v5187
        %v5251 = vmul.f32 %v5027, %v5189
        %v5252 = vmul.f32 %v5028, %v5191
        %v5253 = vmul.f32 %v5029, %v5193
        %v5254 = vmul.f32 %v5030, %v5195
        %v5255 = vmul.f32 %v5031, %v5197
        %v5256 = vmul.f32 %v5032, %v5199
        %v5257 = vmul.f32 %v5033, %v5201
        %v5258 = vmul.f32 %v5034, %v5203
        %v5259 = vmul.f32 %v5035, %v5205
        %v5260 = vmul.f32 %v5036, %v5207
        %v5261 = vmul.f32 %v5037, %v5209
        %v5262 = vmul.f32 %v5038, %v5211
        %v5263 = vmul.f32 %v5039, %v5213
        %v5264 = vmul.f32 %v5040, %v5215
        %v5265 = vmul.f32 %v5041, %v5217
        %v5266 = vmul.f32 %v5042, %v5219
        %v5267 = vmul.f32 %v5043, %v5221
        %v5268 = vmul.f32 %v5044, %v5223
        %v5269 = vmul.f32 %v5045, %v5225
        %v5270 = vmul.f32 %v5046, %v5227
        %v5271 = vmul.f32 %v5047, %v5229
        %v5272 = vmul.f32 %v5048, %v5231
        %v5273 = vmul.f32 %v5049, %v5233
        %v5274 = vmul.f32 %v5050, %v5235
        %v5275 = vmul.f32 %v5051, %v5237
        %v5276 = vmul.f32 %v5052, %v5239
        %v5277 = vmul.f32 %v5053, %v5241
        %v5278 = vmul.f32 %v5054, %v5243
        %v5279 = vmul.f32 %v5055, %v5245
        %v5280 = vmul.f32 %v5056, %v5247
        %v5281 = vmul.f32 %v5057, %v5249
        %v5282 = vld [vmem:[%s8] sm:$0x1]
        %5283 = vst.msk [vmem:[#allocation2 + $0x18] sm:$0xff] %vm1346, %v5250
        %5284 = vst.msk [vmem:[#allocation2 + $0x20] sm:$0xff] %vm1346, %v5251
        %5285 = vst.msk [vmem:[#allocation2 + $0x28] sm:$0xff] %vm1346, %v5252
        %5286 = vst.msk [vmem:[#allocation2 + $0x30] sm:$0xff] %vm1346, %v5253
        %5287 = vst.msk [vmem:[#allocation2 + $0x38] sm:$0xff] %vm1346, %v5254
        %5288 = vst.msk [vmem:[#allocation2 + $0x40] sm:$0xff] %vm1346, %v5255
        %5289 = vst.msk [vmem:[#allocation2 + $0x48] sm:$0xff] %vm1346, %v5256
        %5290 = vst.msk [vmem:[#allocation2 + $0x50] sm:$0xff] %vm1346, %v5257
        %5291 = vst.msk [vmem:[#allocation2 + $0x58] sm:$0xff] %vm1346, %v5258
        %5292 = vst.msk [vmem:[#allocation2 + $0x60] sm:$0xff] %vm1346, %v5259
        %5293 = vst.msk [vmem:[#allocation2 + $0x68] sm:$0xff] %vm1346, %v5260
        %5294 = vst.msk [vmem:[#allocation2 + $0x70] sm:$0xff] %vm1346, %v5261
        %5295 = vst.msk [vmem:[#allocation2 + $0x78] sm:$0xff] %vm1346, %v5262
        %5296 = vst.msk [vmem:[#allocation2 + $0x80] sm:$0xff] %vm1346, %v5263
        %5297 = vst.msk [vmem:[#allocation2 + $0x88] sm:$0xff] %vm1346, %v5264
        %5298 = vst.msk [vmem:[#allocation2 + $0x90] sm:$0xff] %vm1346, %v5265
        %5299 = vst.msk [vmem:[#allocation2 + $0x98] sm:$0xff] %vm1346, %v5266
        %5300 = vst.msk [vmem:[#allocation2 + $0xa0] sm:$0xff] %vm1346, %v5267
        %5301 = vst.msk [vmem:[#allocation2 + $0xa8] sm:$0xff] %vm1346, %v5268
        %5302 = vst.msk [vmem:[#allocation2 + $0xb0] sm:$0xff] %vm1346, %v5269
        %5303 = vst.msk [vmem:[#allocation2 + $0xb8] sm:$0xff] %vm1346, %v5270
        %5304 = vst.msk [vmem:[#allocation2 + $0xc0] sm:$0xff] %vm1346, %v5271
        %5305 = vst.msk [vmem:[#allocation2 + $0xc8] sm:$0xff] %vm1346, %v5272
        %5306 = vst.msk [vmem:[#allocation2 + $0xd0] sm:$0xff] %vm1346, %v5273
        %5307 = vst.msk [vmem:[#allocation2 + $0xd8] sm:$0xff] %vm1346, %v5274
        %5308 = vst.msk [vmem:[#allocation2 + $0xe0] sm:$0xff] %vm1346, %v5275
        %5309 = vst.msk [vmem:[#allocation2 + $0xe8] sm:$0xff] %vm1346, %v5276
        %5310 = vst.msk [vmem:[#allocation2 + $0xf0] sm:$0xff] %vm1346, %v5277
        %5311 = vst.msk [vmem:[#allocation2 + $0xf8] sm:$0xff] %vm1346, %v5278
        %5312 = vst.msk [vmem:[#allocation2 + $0x100] sm:$0xff] %vm1346, %v5279
        %5313 = vst.msk [vmem:[#allocation2 + $0x108] sm:$0xff] %vm1346, %v5280
        %5314 = vst.msk [vmem:[#allocation2 + $0x110] sm:$0xff] %vm1346, %v5281
        %v5315 = vld [vmem:[#allocation2 + $0x7] sm:$0xff]
        %v5316 = vld [vmem:[#allocation2 + $0xf] sm:$0xff]
        %v5317 = vld [vmem:[#allocation2 + $0x17] sm:$0xff]
        %v5318 = vld [vmem:[#allocation2 + $0x1f] sm:$0xff]
        %v5319 = vld [vmem:[#allocation2 + $0x27] sm:$0xff]
        %v5320 = vld [vmem:[#allocation2 + $0x2f] sm:$0xff]
        %v5321 = vld [vmem:[#allocation2 + $0x37] sm:$0xff]
        %v5322 = vld [vmem:[#allocation2 + $0x3f] sm:$0xff]
        %v5323 = vld [vmem:[#allocation2 + $0x47] sm:$0xff]
        %v5324 = vld [vmem:[#allocation2 + $0x4f] sm:$0xff]
        %v5325 = vld [vmem:[#allocation2 + $0x57] sm:$0xff]
        %v5326 = vld [vmem:[#allocation2 + $0x5f] sm:$0xff]
        %v5327 = vld [vmem:[#allocation2 + $0x67] sm:$0xff]
        %v5328 = vld [vmem:[#allocation2 + $0x6f] sm:$0xff]
        %v5329 = vld [vmem:[#allocation2 + $0x77] sm:$0xff]
        %v5330 = vld [vmem:[#allocation2 + $0x7f] sm:$0xff]
        %v5331 = vld [vmem:[#allocation2 + $0x87] sm:$0xff]
        %v5332 = vld [vmem:[#allocation2 + $0x8f] sm:$0xff]
        %v5333 = vld [vmem:[#allocation2 + $0x97] sm:$0xff]
        %v5334 = vld [vmem:[#allocation2 + $0x9f] sm:$0xff]
        %v5335 = vld [vmem:[#allocation2 + $0xa7] sm:$0xff]
        %v5336 = vld [vmem:[#allocation2 + $0xaf] sm:$0xff]
        %v5337 = vld [vmem:[#allocation2 + $0xb7] sm:$0xff]
        %v5338 = vld [vmem:[#allocation2 + $0xbf] sm:$0xff]
        %v5339 = vld [vmem:[#allocation2 + $0xc7] sm:$0xff]
        %v5340 = vld [vmem:[#allocation2 + $0xcf] sm:$0xff]
        %v5341 = vld [vmem:[#allocation2 + $0xd7] sm:$0xff]
        %v5342 = vld [vmem:[#allocation2 + $0xdf] sm:$0xff]
        %v5343 = vld [vmem:[#allocation2 + $0xe7] sm:$0xff]
        %v5344 = vld [vmem:[#allocation2 + $0xef] sm:$0xff]
        %v5345 = vld [vmem:[#allocation2 + $0xf7] sm:$0xff]
        %v5346 = vld [vmem:[#allocation2 + $0xff] sm:$0xff]
        %v5347 = vsel %vm1963, %v5315, 0.0
        %v5348 = vsel %vm1964, %v5316, 0.0
        %v5349 = vsel %vm1965, %v5317, 0.0
        %v5350 = vsel %vm1966, %v5318, 0.0
        %v5351 = vsel %vm1967, %v5319, 0.0
        %v5352 = vsel %vm1968, %v5320, 0.0
        %v5353 = vsel %vm1969, %v5321, 0.0
        %v5354 = vsel %vm1970, %v5322, 0.0
        %v5355 = vsel %vm1971, %v5323, 0.0
        %v5356 = vsel %vm1972, %v5324, 0.0
        %v5357 = vsel %vm1973, %v5325, 0.0
        %v5358 = vsel %vm1974, %v5326, 0.0
        %v5359 = vsel %vm1975, %v5327, 0.0
        %v5360 = vsel %vm1976, %v5328, 0.0
        %v5361 = vsel %vm1977, %v5329, 0.0
        %v5362 = vsel %vm1978, %v5330, 0.0
        %v5363 = vsel %vm1979, %v5331, 0.0
        %v5364 = vsel %vm1980, %v5332, 0.0
        %v5365 = vsel %vm1981, %v5333, 0.0
        %v5366 = vsel %vm1982, %v5334, 0.0
        %v5367 = vsel %vm1983, %v5335, 0.0
        %v5368 = vsel %vm1984, %v5336, 0.0
        %v5369 = vsel %vm1985, %v5337, 0.0
        %v5370 = vsel %vm1986, %v5338, 0.0
        %v5371 = vsel %vm1987, %v5339, 0.0
        %v5372 = vsel %vm1988, %v5340, 0.0
        %v5373 = vsel %vm1989, %v5341, 0.0
        %v5374 = vsel %vm1990, %v5342, 0.0
        %v5375 = vsel %vm1991, %v5343, 0.0
        %v5376 = vsel %vm1992, %v5344, 0.0
        %v5377 = vsel %vm1993, %v5345, 0.0
        %v5378 = vsel %vm1994, %v5346, 0.0
        %v5379 = vpack.c.bf16 %v5348, %v5347
        %v5380 = vpack.c.bf16 %v5350, %v5349
        %v5381 = vpack.c.bf16 %v5352, %v5351
        %v5382 = vpack.c.bf16 %v5354, %v5353
        %v5383 = vpack.c.bf16 %v5356, %v5355
        %v5384 = vpack.c.bf16 %v5358, %v5357
        %v5385 = vpack.c.bf16 %v5360, %v5359
        %v5386 = vpack.c.bf16 %v5362, %v5361
        %v5387 = vpack.c.bf16 %v5364, %v5363
        %v5388 = vpack.c.bf16 %v5366, %v5365
        %v5389 = vpack.c.bf16 %v5368, %v5367
        %v5390 = vpack.c.bf16 %v5370, %v5369
        %v5391 = vpack.c.bf16 %v5372, %v5371
        %v5392 = vpack.c.bf16 %v5374, %v5373
        %v5393 = vpack.c.bf16 %v5376, %v5375
        %v5394 = vpack.c.bf16 %v5378, %v5377
        %v5395 = vld [vmem:[%s7] sm:$0xf]
        %v5396 = vld [vmem:[%s7 + $0x4] sm:$0xf]
        %v5397 = vld [vmem:[%s7 + $0x8] sm:$0xf]
        %v5398 = vld [vmem:[%s7 + $0xc] sm:$0xf]
        %v5399 = vld [vmem:[%s7 + $0x10] sm:$0xf]
        %v5400 = vld [vmem:[%s7 + $0x14] sm:$0xf]
        %v5401 = vld [vmem:[%s7 + $0x18] sm:$0xf]
        %v5402 = vld [vmem:[%s7 + $0x1c] sm:$0xf]
        %v5403 = vld [vmem:[#allocation2 + $0x8] sm:$0xff]
        %v5404 = vld [vmem:[#allocation2 + $0x10] sm:$0xff]
        %v5405 = vld [vmem:[#allocation2 + $0x18] sm:$0xff]
        %v5406 = vld [vmem:[#allocation2 + $0x20] sm:$0xff]
        %v5407 = vld [vmem:[#allocation2 + $0x28] sm:$0xff]
        %v5408 = vld [vmem:[#allocation2 + $0x30] sm:$0xff]
        %v5409 = vld [vmem:[#allocation2 + $0x38] sm:$0xff]
        %v5410 = vld [vmem:[#allocation2 + $0x40] sm:$0xff]
        %v5411 = vld [vmem:[#allocation2 + $0x48] sm:$0xff]
        %v5412 = vld [vmem:[#allocation2 + $0x50] sm:$0xff]
        %v5413 = vld [vmem:[#allocation2 + $0x58] sm:$0xff]
        %v5414 = vld [vmem:[#allocation2 + $0x60] sm:$0xff]
        %v5415 = vld [vmem:[#allocation2 + $0x68] sm:$0xff]
        %v5416 = vld [vmem:[#allocation2 + $0x70] sm:$0xff]
        %v5417 = vld [vmem:[#allocation2 + $0x78] sm:$0xff]
        %v5418 = vld [vmem:[#allocation2 + $0x80] sm:$0xff]
        %v5419 = vld [vmem:[#allocation2 + $0x88] sm:$0xff]
        %v5420 = vld [vmem:[#allocation2 + $0x90] sm:$0xff]
        %v5421 = vld [vmem:[#allocation2 + $0x98] sm:$0xff]
        %v5422 = vld [vmem:[#allocation2 + $0xa0] sm:$0xff]
        %v5423 = vld [vmem:[#allocation2 + $0xa8] sm:$0xff]
        %v5424 = vld [vmem:[#allocation2 + $0xb0] sm:$0xff]
        %v5425 = vld [vmem:[#allocation2 + $0xb8] sm:$0xff]
        %v5426 = vld [vmem:[#allocation2 + $0xc0] sm:$0xff]
        %v5427 = vld [vmem:[#allocation2 + $0xc8] sm:$0xff]
        %v5428 = vld [vmem:[#allocation2 + $0xd0] sm:$0xff]
        %v5429 = vld [vmem:[#allocation2 + $0xd8] sm:$0xff]
        %v5430 = vld [vmem:[#allocation2 + $0xe0] sm:$0xff]
        %v5431 = vld [vmem:[#allocation2 + $0xe8] sm:$0xff]
        %v5432 = vld [vmem:[#allocation2 + $0xf0] sm:$0xff]
        %v5433 = vld [vmem:[#allocation2 + $0xf8] sm:$0xff]
        %v5434 = vld [vmem:[#allocation2 + $0x100] sm:$0xff]
        %v5435 = vpack.c.bf16 %v5404, %v5403
        %v5436 = vpack.c.bf16 %v5406, %v5405
        %v5437 = vpack.c.bf16 %v5408, %v5407
        %v5438 = vpack.c.bf16 %v5410, %v5409
        %v5439 = vpack.c.bf16 %v5412, %v5411
        %v5440 = vpack.c.bf16 %v5414, %v5413
        %v5441 = vpack.c.bf16 %v5416, %v5415
        %v5442 = vpack.c.bf16 %v5418, %v5417
        %v5443 = vpack.c.bf16 %v5420, %v5419
        %v5444 = vpack.c.bf16 %v5422, %v5421
        %v5445 = vpack.c.bf16 %v5424, %v5423
        %v5446 = vpack.c.bf16 %v5426, %v5425
        %v5447 = vpack.c.bf16 %v5428, %v5427
        %v5448 = vpack.c.bf16 %v5430, %v5429
        %v5449 = vpack.c.bf16 %v5432, %v5431
        %v5450 = vpack.c.bf16 %v5434, %v5433
        %s5451 = scalar_lea.vmem %s7, 32
        %v5452 = vld [vmem:[%s5451] sm:$0xf]
        %v5453 = vld [vmem:[%s5451 + $0x4] sm:$0xf]
        %v5454 = vld [vmem:[%s5451 + $0x8] sm:$0xf]
        %v5455 = vld [vmem:[%s5451 + $0xc] sm:$0xf]
        %v5456 = vld [vmem:[%s5451 + $0x10] sm:$0xf]
        %v5457 = vld [vmem:[%s5451 + $0x14] sm:$0xf]
        %v5458 = vld [vmem:[%s5451 + $0x18] sm:$0xf]
        %v5459 = vld [vmem:[%s5451 + $0x1c] sm:$0xf]
        %v5468 = vunpack.c.l.b16 %v5452
        %v5469 = vunpack.c.l.b16 %v5453
        %v5470 = vunpack.c.l.b16 %v5454
        %v5471 = vunpack.c.l.b16 %v5455
        %v5472 = vunpack.c.l.b16 %v5456
        %v5473 = vunpack.c.l.b16 %v5457
        %v5474 = vunpack.c.l.b16 %v5458
        %v5475 = vunpack.c.l.b16 %v5459
        %v5476 = vpack.c.b16 %v5469, %v5468
        %v5477 = vpack.c.b16 %v5471, %v5470
        %v5478 = vpack.c.b16 %v5473, %v5472
        %v5479 = vpack.c.b16 %v5475, %v5474
        %v5485 = vsel %vm1346, %v5435, 0
        %v5488 = vsel %vm1346, %v5436, 0
        %v5491 = vsel %vm1346, %v5437, 0
        %v5494 = vsel %vm1346, %v5438, 0
        %v5497 = vsel %vm1346, %v5439, 0
        %v5500 = vsel %vm1346, %v5440, 0
        %v5503 = vsel %vm1346, %v5441, 0
        %v5506 = vsel %vm1346, %v5442, 0
        %v5509 = vsel %vm1346, %v5443, 0
        %v5512 = vsel %vm1346, %v5444, 0
        %v5515 = vsel %vm1346, %v5445, 0
        %v5518 = vsel %vm1346, %v5446, 0
        %v5521 = vsel %vm1346, %v5447, 0
        %v5524 = vsel %vm1346, %v5448, 0
        %v5527 = vsel %vm1346, %v5449, 0
        %v5530 = vsel %vm1346, %v5450, 0
        %5532 = vmatprep.subr.bf16.mxu0 0
        %5533 = vmatpush1.bf16.msra.mxu0 0
        %5534 = vmatprep.subr.bf16.mxu0 0
        %5535 = vmatpush1.bf16.msra.mxu0 0
        %5536 = vmatprep.subr.bf16.mxu0 0
        %5537 = vmatpush1.bf16.msra.mxu0 0
        %5538 = vmatprep.subr.bf16.mxu0 0
        %5539 = vmatpush1.bf16.msra.mxu0 0
        %5540 = vmatprep.subr.bf16.mxu0 0
        %5541 = vmatpush1.bf16.msra.mxu0 %v5479
        %5542 = vmatprep.subr.bf16.mxu0 0
        %5543 = vmatpush1.bf16.msra.mxu0 %v5478
        %5544 = vmatprep.subr.bf16.mxu0 0
        %5545 = vmatpush1.bf16.msra.mxu0 %v5477
        %5546 = vmatprep.subr.bf16.mxu0 0
        %5547 = vmatpush1.bf16.msra.mxu0 %v5476
        %5548 = vmatprep.subr.bf16.mxu0 0
        %5549 = vmatpush2.bf16.msra.mxu0 0
        %5550 = vmatprep.subr.bf16.mxu0 0
        %5551 = vmatpush2.bf16.msra.mxu0 0
        %5552 = vmatprep.subr.bf16.mxu0 0
        %5553 = vmatpush2.bf16.msra.mxu0 0
        %5554 = vmatprep.subr.bf16.mxu0 0
        %5555 = vmatpush2.bf16.msra.mxu0 0
        %5556 = vmatprep.subr.bf16.mxu0 0
        %5557 = vmatpush2.bf16.msra.mxu0 0
        %5558 = vmatprep.subr.bf16.mxu0 0
        %5559 = vmatpush2.bf16.msra.mxu0 0
        %5560 = vmatprep.subr.bf16.mxu0 0
        %5561 = vmatpush2.bf16.msra.mxu0 0
        %5562 = vmatprep.subr.bf16.mxu0 0
        %5563 = vmatpush2.bf16.msra.mxu0 0
        %5564 = vmatprep.mubr.bf16.mxu0 0
        %5565 = vmatmul.mubr.bf16.gmra.mxu0 %v5485
        %v5566 = vpop.f32.mrf.mxu0
        %v5567 = vadd.f32 0.0, %v5566
        %v5568 = vpop.f32.mrf.mxu0
        %v5569 = vpop.f32.mrf.mxu0
        %v5570 = vadd.f32 0.0, %v5569
        %v5571 = vpop.f32.mrf.mxu0
        %5572 = vmatprep.mubr.bf16.mxu0 0
        %5573 = vmatmul.mubr.bf16.gmra.mxu0 %v5488
        %v5574 = vpop.f32.mrf.mxu0
        %v5575 = vadd.f32 0.0, %v5574
        %v5576 = vpop.f32.mrf.mxu0
        %v5577 = vpop.f32.mrf.mxu0
        %v5578 = vadd.f32 0.0, %v5577
        %v5579 = vpop.f32.mrf.mxu0
        %5580 = vmatprep.mubr.bf16.mxu0 0
        %5581 = vmatmul.mubr.bf16.gmra.mxu0 %v5491
        %v5582 = vpop.f32.mrf.mxu0
        %v5583 = vadd.f32 0.0, %v5582
        %v5584 = vpop.f32.mrf.mxu0
        %v5585 = vpop.f32.mrf.mxu0
        %v5586 = vadd.f32 0.0, %v5585
        %v5587 = vpop.f32.mrf.mxu0
        %5588 = vmatprep.mubr.bf16.mxu0 0
        %5589 = vmatmul.mubr.bf16.gmra.mxu0 %v5494
        %v5590 = vpop.f32.mrf.mxu0
        %v5591 = vadd.f32 0.0, %v5590
        %v5592 = vpop.f32.mrf.mxu0
        %v5593 = vpop.f32.mrf.mxu0
        %v5594 = vadd.f32 0.0, %v5593
        %v5595 = vpop.f32.mrf.mxu0
        %5596 = vmatprep.mubr.bf16.mxu0 0
        %5597 = vmatmul.mubr.bf16.gmra.mxu0 %v5497
        %v5598 = vpop.f32.mrf.mxu0
        %v5599 = vadd.f32 0.0, %v5598
        %v5600 = vpop.f32.mrf.mxu0
        %v5601 = vpop.f32.mrf.mxu0
        %v5602 = vadd.f32 0.0, %v5601
        %v5603 = vpop.f32.mrf.mxu0
        %5604 = vmatprep.mubr.bf16.mxu0 0
        %5605 = vmatmul.mubr.bf16.gmra.mxu0 %v5500
        %v5606 = vpop.f32.mrf.mxu0
        %v5607 = vadd.f32 0.0, %v5606
        %v5608 = vpop.f32.mrf.mxu0
        %v5609 = vpop.f32.mrf.mxu0
        %v5610 = vadd.f32 0.0, %v5609
        %v5611 = vpop.f32.mrf.mxu0
        %5612 = vmatprep.mubr.bf16.mxu0 0
        %5613 = vmatmul.mubr.bf16.gmra.mxu0 %v5503
        %v5614 = vpop.f32.mrf.mxu0
        %v5615 = vadd.f32 0.0, %v5614
        %v5616 = vpop.f32.mrf.mxu0
        %v5617 = vpop.f32.mrf.mxu0
        %v5618 = vadd.f32 0.0, %v5617
        %v5619 = vpop.f32.mrf.mxu0
        %5620 = vmatprep.mubr.bf16.mxu0 0
        %5621 = vmatmul.mubr.bf16.gmra.mxu0 %v5506
        %v5622 = vpop.f32.mrf.mxu0
        %v5623 = vadd.f32 0.0, %v5622
        %v5624 = vpop.f32.mrf.mxu0
        %v5625 = vpop.f32.mrf.mxu0
        %v5626 = vadd.f32 0.0, %v5625
        %v5627 = vpop.f32.mrf.mxu0
        %5628 = vmatprep.mubr.bf16.mxu0 0
        %5629 = vmatmul.mubr.bf16.gmra.mxu0 %v5509
        %v5630 = vpop.f32.mrf.mxu0
        %v5631 = vadd.f32 0.0, %v5630
        %v5632 = vpop.f32.mrf.mxu0
        %v5633 = vpop.f32.mrf.mxu0
        %v5634 = vadd.f32 0.0, %v5633
        %v5635 = vpop.f32.mrf.mxu0
        %5636 = vmatprep.mubr.bf16.mxu0 0
        %5637 = vmatmul.mubr.bf16.gmra.mxu0 %v5512
        %v5638 = vpop.f32.mrf.mxu0
        %v5639 = vadd.f32 0.0, %v5638
        %v5640 = vpop.f32.mrf.mxu0
        %v5641 = vpop.f32.mrf.mxu0
        %v5642 = vadd.f32 0.0, %v5641
        %v5643 = vpop.f32.mrf.mxu0
        %5644 = vmatprep.mubr.bf16.mxu0 0
        %5645 = vmatmul.mubr.bf16.gmra.mxu0 %v5515
        %v5646 = vpop.f32.mrf.mxu0
        %v5647 = vadd.f32 0.0, %v5646
        %v5648 = vpop.f32.mrf.mxu0
        %v5649 = vpop.f32.mrf.mxu0
        %v5650 = vadd.f32 0.0, %v5649
        %v5651 = vpop.f32.mrf.mxu0
        %5652 = vmatprep.mubr.bf16.mxu0 0
        %5653 = vmatmul.mubr.bf16.gmra.mxu0 %v5518
        %v5654 = vpop.f32.mrf.mxu0
        %v5655 = vadd.f32 0.0, %v5654
        %v5656 = vpop.f32.mrf.mxu0
        %v5657 = vpop.f32.mrf.mxu0
        %v5658 = vadd.f32 0.0, %v5657
        %v5659 = vpop.f32.mrf.mxu0
        %5660 = vmatprep.mubr.bf16.mxu0 0
        %5661 = vmatmul.mubr.bf16.gmra.mxu0 %v5521
        %v5662 = vpop.f32.mrf.mxu0
        %v5663 = vadd.f32 0.0, %v5662
        %v5664 = vpop.f32.mrf.mxu0
        %v5665 = vpop.f32.mrf.mxu0
        %v5666 = vadd.f32 0.0, %v5665
        %v5667 = vpop.f32.mrf.mxu0
        %5668 = vmatprep.mubr.bf16.mxu0 0
        %5669 = vmatmul.mubr.bf16.gmra.mxu0 %v5524
        %v5670 = vpop.f32.mrf.mxu0
        %v5671 = vadd.f32 0.0, %v5670
        %v5672 = vpop.f32.mrf.mxu0
        %v5673 = vpop.f32.mrf.mxu0
        %v5674 = vadd.f32 0.0, %v5673
        %v5675 = vpop.f32.mrf.mxu0
        %5676 = vmatprep.mubr.bf16.mxu0 0
        %5677 = vmatmul.mubr.bf16.gmra.mxu0 %v5527
        %v5678 = vpop.f32.mrf.mxu0
        %v5679 = vadd.f32 0.0, %v5678
        %v5680 = vpop.f32.mrf.mxu0
        %v5681 = vpop.f32.mrf.mxu0
        %v5682 = vadd.f32 0.0, %v5681
        %v5683 = vpop.f32.mrf.mxu0
        %5684 = vmatprep.mubr.bf16.mxu0 0
        %5685 = vmatmul.mubr.bf16.gmra.mxu0 %v5530
        %v5686 = vpop.f32.mrf.mxu0
        %v5687 = vadd.f32 0.0, %v5686
        %v5688 = vpop.f32.mrf.mxu0
        %v5689 = vpop.f32.mrf.mxu0
        %v5690 = vadd.f32 0.0, %v5689
        %v5691 = vpop.f32.mrf.mxu0
        %5692 = vdwg.mxu0
        %v5701 = vunpack.c.l.b16 %v5395
        %v5702 = vunpack.c.l.b16 %v5396
        %v5703 = vunpack.c.l.b16 %v5397
        %v5704 = vunpack.c.l.b16 %v5398
        %v5705 = vunpack.c.l.b16 %v5399
        %v5706 = vunpack.c.l.b16 %v5400
        %v5707 = vunpack.c.l.b16 %v5401
        %v5708 = vunpack.c.l.b16 %v5402
        %v5709 = vpack.c.b16 %v5702, %v5701
        %v5710 = vpack.c.b16 %v5704, %v5703
        %v5711 = vpack.c.b16 %v5706, %v5705
        %v5712 = vpack.c.b16 %v5708, %v5707
        %v5718 = vsel %vm1346, %v5379, 0
        %v5721 = vsel %vm1346, %v5380, 0
        %v5724 = vsel %vm1346, %v5381, 0
        %v5727 = vsel %vm1346, %v5382, 0
        %v5730 = vsel %vm1346, %v5383, 0
        %v5733 = vsel %vm1346, %v5384, 0
        %v5736 = vsel %vm1346, %v5385, 0
        %v5739 = vsel %vm1346, %v5386, 0
        %v5742 = vsel %vm1346, %v5387, 0
        %v5745 = vsel %vm1346, %v5388, 0
        %v5748 = vsel %vm1346, %v5389, 0
        %v5751 = vsel %vm1346, %v5390, 0
        %v5754 = vsel %vm1346, %v5391, 0
        %v5757 = vsel %vm1346, %v5392, 0
        %v5760 = vsel %vm1346, %v5393, 0
        %v5763 = vsel %vm1346, %v5394, 0
        %5765 = vmatprep.subr.bf16.mxu0 0
        %5766 = vmatpush1.bf16.msra.mxu0 0
        %5767 = vmatprep.subr.bf16.mxu0 0
        %5768 = vmatpush1.bf16.msra.mxu0 0
        %5769 = vmatprep.subr.bf16.mxu0 0
        %5770 = vmatpush1.bf16.msra.mxu0 0
        %5771 = vmatprep.subr.bf16.mxu0 0
        %5772 = vmatpush1.bf16.msra.mxu0 0
        %5773 = vmatprep.subr.bf16.mxu0 0
        %5774 = vmatpush1.bf16.msra.mxu0 %v5712
        %5775 = vmatprep.subr.bf16.mxu0 0
        %5776 = vmatpush1.bf16.msra.mxu0 %v5711
        %5777 = vmatprep.subr.bf16.mxu0 0
        %5778 = vmatpush1.bf16.msra.mxu0 %v5710
        %5779 = vmatprep.subr.bf16.mxu0 0
        %5780 = vmatpush1.bf16.msra.mxu0 %v5709
        %5781 = vmatprep.subr.bf16.mxu0 0
        %5782 = vmatpush2.bf16.msra.mxu0 0
        %5783 = vmatprep.subr.bf16.mxu0 0
        %5784 = vmatpush2.bf16.msra.mxu0 0
        %5785 = vmatprep.subr.bf16.mxu0 0
        %5786 = vmatpush2.bf16.msra.mxu0 0
        %5787 = vmatprep.subr.bf16.mxu0 0
        %5788 = vmatpush2.bf16.msra.mxu0 0
        %5789 = vmatprep.subr.bf16.mxu0 0
        %5790 = vmatpush2.bf16.msra.mxu0 0
        %5791 = vmatprep.subr.bf16.mxu0 0
        %5792 = vmatpush2.bf16.msra.mxu0 0
        %5793 = vmatprep.subr.bf16.mxu0 0
        %5794 = vmatpush2.bf16.msra.mxu0 0
        %5795 = vmatprep.subr.bf16.mxu0 0
        %5796 = vmatpush2.bf16.msra.mxu0 0
        %5797 = vmatprep.mubr.bf16.mxu0 0
        %5798 = vmatmul.mubr.bf16.gmra.mxu0 %v5718
        %v5799 = vpop.f32.mrf.mxu0
        %v5800 = vadd.f32 %v5567, %v5799
        %v5801 = vpop.f32.mrf.mxu0
        %v5802 = vpop.f32.mrf.mxu0
        %v5803 = vadd.f32 %v5570, %v5802
        %v5804 = vpop.f32.mrf.mxu0
        %5805 = vmatprep.mubr.bf16.mxu0 0
        %5806 = vmatmul.mubr.bf16.gmra.mxu0 %v5721
        %v5807 = vpop.f32.mrf.mxu0
        %v5808 = vadd.f32 %v5575, %v5807
        %v5809 = vpop.f32.mrf.mxu0
        %v5810 = vpop.f32.mrf.mxu0
        %v5811 = vadd.f32 %v5578, %v5810
        %v5812 = vpop.f32.mrf.mxu0
        %5813 = vmatprep.mubr.bf16.mxu0 0
        %5814 = vmatmul.mubr.bf16.gmra.mxu0 %v5724
        %v5815 = vpop.f32.mrf.mxu0
        %v5816 = vadd.f32 %v5583, %v5815
        %v5817 = vpop.f32.mrf.mxu0
        %v5818 = vpop.f32.mrf.mxu0
        %v5819 = vadd.f32 %v5586, %v5818
        %v5820 = vpop.f32.mrf.mxu0
        %5821 = vmatprep.mubr.bf16.mxu0 0
        %5822 = vmatmul.mubr.bf16.gmra.mxu0 %v5727
        %v5823 = vpop.f32.mrf.mxu0
        %v5824 = vadd.f32 %v5591, %v5823
        %v5825 = vpop.f32.mrf.mxu0
        %v5826 = vpop.f32.mrf.mxu0
        %v5827 = vadd.f32 %v5594, %v5826
        %v5828 = vpop.f32.mrf.mxu0
        %5829 = vmatprep.mubr.bf16.mxu0 0
        %5830 = vmatmul.mubr.bf16.gmra.mxu0 %v5730
        %v5831 = vpop.f32.mrf.mxu0
        %v5832 = vadd.f32 %v5599, %v5831
        %v5833 = vpop.f32.mrf.mxu0
        %v5834 = vpop.f32.mrf.mxu0
        %v5835 = vadd.f32 %v5602, %v5834
        %v5836 = vpop.f32.mrf.mxu0
        %5837 = vmatprep.mubr.bf16.mxu0 0
        %5838 = vmatmul.mubr.bf16.gmra.mxu0 %v5733
        %v5839 = vpop.f32.mrf.mxu0
        %v5840 = vadd.f32 %v5607, %v5839
        %v5841 = vpop.f32.mrf.mxu0
        %v5842 = vpop.f32.mrf.mxu0
        %v5843 = vadd.f32 %v5610, %v5842
        %v5844 = vpop.f32.mrf.mxu0
        %5845 = vmatprep.mubr.bf16.mxu0 0
        %5846 = vmatmul.mubr.bf16.gmra.mxu0 %v5736
        %v5847 = vpop.f32.mrf.mxu0
        %v5848 = vadd.f32 %v5615, %v5847
        %v5849 = vpop.f32.mrf.mxu0
        %v5850 = vpop.f32.mrf.mxu0
        %v5851 = vadd.f32 %v5618, %v5850
        %v5852 = vpop.f32.mrf.mxu0
        %5853 = vmatprep.mubr.bf16.mxu0 0
        %5854 = vmatmul.mubr.bf16.gmra.mxu0 %v5739
        %v5855 = vpop.f32.mrf.mxu0
        %v5856 = vadd.f32 %v5623, %v5855
        %v5857 = vpop.f32.mrf.mxu0
        %v5858 = vpop.f32.mrf.mxu0
        %v5859 = vadd.f32 %v5626, %v5858
        %v5860 = vpop.f32.mrf.mxu0
        %5861 = vmatprep.mubr.bf16.mxu0 0
        %5862 = vmatmul.mubr.bf16.gmra.mxu0 %v5742
        %v5863 = vpop.f32.mrf.mxu0
        %v5864 = vadd.f32 %v5631, %v5863
        %v5865 = vpop.f32.mrf.mxu0
        %v5866 = vpop.f32.mrf.mxu0
        %v5867 = vadd.f32 %v5634, %v5866
        %v5868 = vpop.f32.mrf.mxu0
        %5869 = vmatprep.mubr.bf16.mxu0 0
        %5870 = vmatmul.mubr.bf16.gmra.mxu0 %v5745
        %v5871 = vpop.f32.mrf.mxu0
        %v5872 = vadd.f32 %v5639, %v5871
        %v5873 = vpop.f32.mrf.mxu0
        %v5874 = vpop.f32.mrf.mxu0
        %v5875 = vadd.f32 %v5642, %v5874
        %v5876 = vpop.f32.mrf.mxu0
        %5877 = vmatprep.mubr.bf16.mxu0 0
        %5878 = vmatmul.mubr.bf16.gmra.mxu0 %v5748
        %v5879 = vpop.f32.mrf.mxu0
        %v5880 = vadd.f32 %v5647, %v5879
        %v5881 = vpop.f32.mrf.mxu0
        %v5882 = vpop.f32.mrf.mxu0
        %v5883 = vadd.f32 %v5650, %v5882
        %v5884 = vpop.f32.mrf.mxu0
        %5885 = vmatprep.mubr.bf16.mxu0 0
        %5886 = vmatmul.mubr.bf16.gmra.mxu0 %v5751
        %v5887 = vpop.f32.mrf.mxu0
        %v5888 = vadd.f32 %v5655, %v5887
        %v5889 = vpop.f32.mrf.mxu0
        %v5890 = vpop.f32.mrf.mxu0
        %v5891 = vadd.f32 %v5658, %v5890
        %v5892 = vpop.f32.mrf.mxu0
        %5893 = vmatprep.mubr.bf16.mxu0 0
        %5894 = vmatmul.mubr.bf16.gmra.mxu0 %v5754
        %v5895 = vpop.f32.mrf.mxu0
        %v5896 = vadd.f32 %v5663, %v5895
        %v5897 = vpop.f32.mrf.mxu0
        %v5898 = vpop.f32.mrf.mxu0
        %v5899 = vadd.f32 %v5666, %v5898
        %v5900 = vpop.f32.mrf.mxu0
        %5901 = vmatprep.mubr.bf16.mxu0 0
        %5902 = vmatmul.mubr.bf16.gmra.mxu0 %v5757
        %v5903 = vpop.f32.mrf.mxu0
        %v5904 = vadd.f32 %v5671, %v5903
        %v5905 = vpop.f32.mrf.mxu0
        %v5906 = vpop.f32.mrf.mxu0
        %v5907 = vadd.f32 %v5674, %v5906
        %v5908 = vpop.f32.mrf.mxu0
        %5909 = vmatprep.mubr.bf16.mxu0 0
        %5910 = vmatmul.mubr.bf16.gmra.mxu0 %v5760
        %v5911 = vpop.f32.mrf.mxu0
        %v5912 = vadd.f32 %v5679, %v5911
        %v5913 = vpop.f32.mrf.mxu0
        %v5914 = vpop.f32.mrf.mxu0
        %v5915 = vadd.f32 %v5682, %v5914
        %v5916 = vpop.f32.mrf.mxu0
        %5917 = vmatprep.mubr.bf16.mxu0 0
        %5918 = vmatmul.mubr.bf16.gmra.mxu0 %v5763
        %v5919 = vpop.f32.mrf.mxu0
        %v5920 = vadd.f32 %v5687, %v5919
        %v5921 = vpop.f32.mrf.mxu0
        %v5922 = vpop.f32.mrf.mxu0
        %v5923 = vadd.f32 %v5690, %v5922
        %v5924 = vpop.f32.mrf.mxu0
        %5925 = vdwg.mxu0
        %v5926 = vld [vmem:[#allocation2 + $0x9] sm:$0xff]
        %v5927 = vld [vmem:[#allocation2 + $0x11] sm:$0xff]
        %v5928 = vld [vmem:[#allocation2 + $0x19] sm:$0xff]
        %v5929 = vld [vmem:[#allocation2 + $0x21] sm:$0xff]
        %v5930 = vld [vmem:[#allocation2 + $0x29] sm:$0xff]
        %v5931 = vld [vmem:[#allocation2 + $0x31] sm:$0xff]
        %v5932 = vld [vmem:[#allocation2 + $0x39] sm:$0xff]
        %v5933 = vld [vmem:[#allocation2 + $0x41] sm:$0xff]
        %v5934 = vld [vmem:[#allocation2 + $0x49] sm:$0xff]
        %v5935 = vld [vmem:[#allocation2 + $0x51] sm:$0xff]
        %v5936 = vld [vmem:[#allocation2 + $0x59] sm:$0xff]
        %v5937 = vld [vmem:[#allocation2 + $0x61] sm:$0xff]
        %v5938 = vld [vmem:[#allocation2 + $0x69] sm:$0xff]
        %v5939 = vld [vmem:[#allocation2 + $0x71] sm:$0xff]
        %v5940 = vld [vmem:[#allocation2 + $0x79] sm:$0xff]
        %v5941 = vld [vmem:[#allocation2 + $0x81] sm:$0xff]
        %v5942 = vld [vmem:[#allocation2 + $0x89] sm:$0xff]
        %v5943 = vld [vmem:[#allocation2 + $0x91] sm:$0xff]
        %v5944 = vld [vmem:[#allocation2 + $0x99] sm:$0xff]
        %v5945 = vld [vmem:[#allocation2 + $0xa1] sm:$0xff]
        %v5946 = vld [vmem:[#allocation2 + $0xa9] sm:$0xff]
        %v5947 = vld [vmem:[#allocation2 + $0xb1] sm:$0xff]
        %v5948 = vld [vmem:[#allocation2 + $0xb9] sm:$0xff]
        %v5949 = vld [vmem:[#allocation2 + $0xc1] sm:$0xff]
        %v5950 = vld [vmem:[#allocation2 + $0xc9] sm:$0xff]
        %v5951 = vld [vmem:[#allocation2 + $0xd1] sm:$0xff]
        %v5952 = vld [vmem:[#allocation2 + $0xd9] sm:$0xff]
        %v5953 = vld [vmem:[#allocation2 + $0xe1] sm:$0xff]
        %v5954 = vld [vmem:[#allocation2 + $0xe9] sm:$0xff]
        %v5955 = vld [vmem:[#allocation2 + $0xf1] sm:$0xff]
        %v5956 = vld [vmem:[#allocation2 + $0xf9] sm:$0xff]
        %v5957 = vld [vmem:[#allocation2 + $0x101] sm:$0xff]
        %v5958 = vsel %vm2638, %v5926, 0.0
        %v5959 = vsel %vm2639, %v5927, 0.0
        %v5960 = vsel %vm2640, %v5928, 0.0
        %v5961 = vsel %vm2641, %v5929, 0.0
        %v5962 = vsel %vm2642, %v5930, 0.0
        %v5963 = vsel %vm2643, %v5931, 0.0
        %v5964 = vsel %vm2644, %v5932, 0.0
        %v5965 = vsel %vm2645, %v5933, 0.0
        %v5966 = vsel %vm2646, %v5934, 0.0
        %v5967 = vsel %vm2647, %v5935, 0.0
        %v5968 = vsel %vm2648, %v5936, 0.0
        %v5969 = vsel %vm2649, %v5937, 0.0
        %v5970 = vsel %vm2650, %v5938, 0.0
        %v5971 = vsel %vm2651, %v5939, 0.0
        %v5972 = vsel %vm2652, %v5940, 0.0
        %v5973 = vsel %vm2653, %v5941, 0.0
        %v5974 = vsel %vm2654, %v5942, 0.0
        %v5975 = vsel %vm2655, %v5943, 0.0
        %v5976 = vsel %vm2656, %v5944, 0.0
        %v5977 = vsel %vm2657, %v5945, 0.0
        %v5978 = vsel %vm2658, %v5946, 0.0
        %v5979 = vsel %vm2659, %v5947, 0.0
        %v5980 = vsel %vm2660, %v5948, 0.0
        %v5981 = vsel %vm2661, %v5949, 0.0
        %v5982 = vsel %vm2662, %v5950, 0.0
        %v5983 = vsel %vm2663, %v5951, 0.0
        %v5984 = vsel %vm2664, %v5952, 0.0
        %v5985 = vsel %vm2665, %v5953, 0.0
        %v5986 = vsel %vm2666, %v5954, 0.0
        %v5987 = vsel %vm2667, %v5955, 0.0
        %v5988 = vsel %vm2668, %v5956, 0.0
        %v5989 = vsel %vm2669, %v5957, 0.0
        %v5990 = vpack.c.bf16 %v5959, %v5958
        %v5991 = vpack.c.bf16 %v5961, %v5960
        %v5992 = vpack.c.bf16 %v5963, %v5962
        %v5993 = vpack.c.bf16 %v5965, %v5964
        %v5994 = vpack.c.bf16 %v5967, %v5966
        %v5995 = vpack.c.bf16 %v5969, %v5968
        %v5996 = vpack.c.bf16 %v5971, %v5970
        %v5997 = vpack.c.bf16 %v5973, %v5972
        %v5998 = vpack.c.bf16 %v5975, %v5974
        %v5999 = vpack.c.bf16 %v5977, %v5976
        %v6000 = vpack.c.bf16 %v5979, %v5978
        %v6001 = vpack.c.bf16 %v5981, %v5980
        %v6002 = vpack.c.bf16 %v5983, %v5982
        %v6003 = vpack.c.bf16 %v5985, %v5984
        %v6004 = vpack.c.bf16 %v5987, %v5986
        %v6005 = vpack.c.bf16 %v5989, %v5988
        %s6006 = scalar_lea.vmem %s7, 64
        %v6007 = vld [vmem:[%s6006] sm:$0xf]
        %v6008 = vld [vmem:[%s6006 + $0x4] sm:$0xf]
        %v6009 = vld [vmem:[%s6006 + $0x8] sm:$0xf]
        %v6010 = vld [vmem:[%s6006 + $0xc] sm:$0xf]
        %v6011 = vld [vmem:[%s6006 + $0x10] sm:$0xf]
        %v6012 = vld [vmem:[%s6006 + $0x14] sm:$0xf]
        %v6013 = vld [vmem:[%s6006 + $0x18] sm:$0xf]
        %v6014 = vld [vmem:[%s6006 + $0x1c] sm:$0xf]
        %v6023 = vunpack.c.l.b16 %v6007
        %v6024 = vunpack.c.l.b16 %v6008
        %v6025 = vunpack.c.l.b16 %v6009
        %v6026 = vunpack.c.l.b16 %v6010
        %v6027 = vunpack.c.l.b16 %v6011
        %v6028 = vunpack.c.l.b16 %v6012
        %v6029 = vunpack.c.l.b16 %v6013
        %v6030 = vunpack.c.l.b16 %v6014
        %v6031 = vpack.c.b16 %v6024, %v6023
        %v6032 = vpack.c.b16 %v6026, %v6025
        %v6033 = vpack.c.b16 %v6028, %v6027
        %v6034 = vpack.c.b16 %v6030, %v6029
        %v6040 = vsel %vm1346, %v5990, 0
        %v6043 = vsel %vm1346, %v5991, 0
        %v6046 = vsel %vm1346, %v5992, 0
        %v6049 = vsel %vm1346, %v5993, 0
        %v6052 = vsel %vm1346, %v5994, 0
        %v6055 = vsel %vm1346, %v5995, 0
        %v6058 = vsel %vm1346, %v5996, 0
        %v6061 = vsel %vm1346, %v5997, 0
        %v6064 = vsel %vm1346, %v5998, 0
        %v6067 = vsel %vm1346, %v5999, 0
        %v6070 = vsel %vm1346, %v6000, 0
        %v6073 = vsel %vm1346, %v6001, 0
        %v6076 = vsel %vm1346, %v6002, 0
        %v6079 = vsel %vm1346, %v6003, 0
        %v6082 = vsel %vm1346, %v6004, 0
        %v6085 = vsel %vm1346, %v6005, 0
        %6087 = vmatprep.subr.bf16.mxu0 0
        %6088 = vmatpush1.bf16.msra.mxu0 0
        %6089 = vmatprep.subr.bf16.mxu0 0
        %6090 = vmatpush1.bf16.msra.mxu0 0
        %6091 = vmatprep.subr.bf16.mxu0 0
        %6092 = vmatpush1.bf16.msra.mxu0 0
        %6093 = vmatprep.subr.bf16.mxu0 0
        %6094 = vmatpush1.bf16.msra.mxu0 0
        %6095 = vmatprep.subr.bf16.mxu0 0
        %6096 = vmatpush1.bf16.msra.mxu0 %v6034
        %6097 = vmatprep.subr.bf16.mxu0 0
        %6098 = vmatpush1.bf16.msra.mxu0 %v6033
        %6099 = vmatprep.subr.bf16.mxu0 0
        %6100 = vmatpush1.bf16.msra.mxu0 %v6032
        %6101 = vmatprep.subr.bf16.mxu0 0
        %6102 = vmatpush1.bf16.msra.mxu0 %v6031
        %6103 = vmatprep.subr.bf16.mxu0 0
        %6104 = vmatpush2.bf16.msra.mxu0 0
        %6105 = vmatprep.subr.bf16.mxu0 0
        %6106 = vmatpush2.bf16.msra.mxu0 0
        %6107 = vmatprep.subr.bf16.mxu0 0
        %6108 = vmatpush2.bf16.msra.mxu0 0
        %6109 = vmatprep.subr.bf16.mxu0 0
        %6110 = vmatpush2.bf16.msra.mxu0 0
        %6111 = vmatprep.subr.bf16.mxu0 0
        %6112 = vmatpush2.bf16.msra.mxu0 0
        %6113 = vmatprep.subr.bf16.mxu0 0
        %6114 = vmatpush2.bf16.msra.mxu0 0
        %6115 = vmatprep.subr.bf16.mxu0 0
        %6116 = vmatpush2.bf16.msra.mxu0 0
        %6117 = vmatprep.subr.bf16.mxu0 0
        %6118 = vmatpush2.bf16.msra.mxu0 0
        %6119 = vmatprep.mubr.bf16.mxu0 0
        %6120 = vmatmul.mubr.bf16.gmra.mxu0 %v6040
        %v6121 = vpop.f32.mrf.mxu0
        %v6122 = vadd.f32 0.0, %v6121
        %v6123 = vpop.f32.mrf.mxu0
        %v6124 = vpop.f32.mrf.mxu0
        %v6125 = vadd.f32 0.0, %v6124
        %v6126 = vpop.f32.mrf.mxu0
        %6127 = vmatprep.mubr.bf16.mxu0 0
        %6128 = vmatmul.mubr.bf16.gmra.mxu0 %v6043
        %v6129 = vpop.f32.mrf.mxu0
        %v6130 = vadd.f32 0.0, %v6129
        %v6131 = vpop.f32.mrf.mxu0
        %v6132 = vpop.f32.mrf.mxu0
        %v6133 = vadd.f32 0.0, %v6132
        %v6134 = vpop.f32.mrf.mxu0
        %6135 = vmatprep.mubr.bf16.mxu0 0
        %6136 = vmatmul.mubr.bf16.gmra.mxu0 %v6046
        %v6137 = vpop.f32.mrf.mxu0
        %v6138 = vadd.f32 0.0, %v6137
        %v6139 = vpop.f32.mrf.mxu0
        %v6140 = vpop.f32.mrf.mxu0
        %v6141 = vadd.f32 0.0, %v6140
        %v6142 = vpop.f32.mrf.mxu0
        %6143 = vmatprep.mubr.bf16.mxu0 0
        %6144 = vmatmul.mubr.bf16.gmra.mxu0 %v6049
        %v6145 = vpop.f32.mrf.mxu0
        %v6146 = vadd.f32 0.0, %v6145
        %v6147 = vpop.f32.mrf.mxu0
        %v6148 = vpop.f32.mrf.mxu0
        %v6149 = vadd.f32 0.0, %v6148
        %v6150 = vpop.f32.mrf.mxu0
        %6151 = vmatprep.mubr.bf16.mxu0 0
        %6152 = vmatmul.mubr.bf16.gmra.mxu0 %v6052
        %v6153 = vpop.f32.mrf.mxu0
        %v6154 = vadd.f32 0.0, %v6153
        %v6155 = vpop.f32.mrf.mxu0
        %v6156 = vpop.f32.mrf.mxu0
        %v6157 = vadd.f32 0.0, %v6156
        %v6158 = vpop.f32.mrf.mxu0
        %6159 = vmatprep.mubr.bf16.mxu0 0
        %6160 = vmatmul.mubr.bf16.gmra.mxu0 %v6055
        %v6161 = vpop.f32.mrf.mxu0
        %v6162 = vadd.f32 0.0, %v6161
        %v6163 = vpop.f32.mrf.mxu0
        %v6164 = vpop.f32.mrf.mxu0
        %v6165 = vadd.f32 0.0, %v6164
        %v6166 = vpop.f32.mrf.mxu0
        %6167 = vmatprep.mubr.bf16.mxu0 0
        %6168 = vmatmul.mubr.bf16.gmra.mxu0 %v6058
        %v6169 = vpop.f32.mrf.mxu0
        %v6170 = vadd.f32 0.0, %v6169
        %v6171 = vpop.f32.mrf.mxu0
        %v6172 = vpop.f32.mrf.mxu0
        %v6173 = vadd.f32 0.0, %v6172
        %v6174 = vpop.f32.mrf.mxu0
        %6175 = vmatprep.mubr.bf16.mxu0 0
        %6176 = vmatmul.mubr.bf16.gmra.mxu0 %v6061
        %v6177 = vpop.f32.mrf.mxu0
        %v6178 = vadd.f32 0.0, %v6177
        %v6179 = vpop.f32.mrf.mxu0
        %v6180 = vpop.f32.mrf.mxu0
        %v6181 = vadd.f32 0.0, %v6180
        %v6182 = vpop.f32.mrf.mxu0
        %6183 = vmatprep.mubr.bf16.mxu0 0
        %6184 = vmatmul.mubr.bf16.gmra.mxu0 %v6064
        %v6185 = vpop.f32.mrf.mxu0
        %v6186 = vadd.f32 0.0, %v6185
        %v6187 = vpop.f32.mrf.mxu0
        %v6188 = vpop.f32.mrf.mxu0
        %v6189 = vadd.f32 0.0, %v6188
        %v6190 = vpop.f32.mrf.mxu0
        %6191 = vmatprep.mubr.bf16.mxu0 0
        %6192 = vmatmul.mubr.bf16.gmra.mxu0 %v6067
        %v6193 = vpop.f32.mrf.mxu0
        %v6194 = vadd.f32 0.0, %v6193
        %v6195 = vpop.f32.mrf.mxu0
        %v6196 = vpop.f32.mrf.mxu0
        %v6197 = vadd.f32 0.0, %v6196
        %v6198 = vpop.f32.mrf.mxu0
        %6199 = vmatprep.mubr.bf16.mxu0 0
        %6200 = vmatmul.mubr.bf16.gmra.mxu0 %v6070
        %v6201 = vpop.f32.mrf.mxu0
        %v6202 = vadd.f32 0.0, %v6201
        %v6203 = vpop.f32.mrf.mxu0
        %v6204 = vpop.f32.mrf.mxu0
        %v6205 = vadd.f32 0.0, %v6204
        %v6206 = vpop.f32.mrf.mxu0
        %6207 = vmatprep.mubr.bf16.mxu0 0
        %6208 = vmatmul.mubr.bf16.gmra.mxu0 %v6073
        %v6209 = vpop.f32.mrf.mxu0
        %v6210 = vadd.f32 0.0, %v6209
        %v6211 = vpop.f32.mrf.mxu0
        %v6212 = vpop.f32.mrf.mxu0
        %v6213 = vadd.f32 0.0, %v6212
        %v6214 = vpop.f32.mrf.mxu0
        %6215 = vmatprep.mubr.bf16.mxu0 0
        %6216 = vmatmul.mubr.bf16.gmra.mxu0 %v6076
        %v6217 = vpop.f32.mrf.mxu0
        %v6218 = vadd.f32 0.0, %v6217
        %v6219 = vpop.f32.mrf.mxu0
        %v6220 = vpop.f32.mrf.mxu0
        %v6221 = vadd.f32 0.0, %v6220
        %v6222 = vpop.f32.mrf.mxu0
        %6223 = vmatprep.mubr.bf16.mxu0 0
        %6224 = vmatmul.mubr.bf16.gmra.mxu0 %v6079
        %v6225 = vpop.f32.mrf.mxu0
        %v6226 = vadd.f32 0.0, %v6225
        %v6227 = vpop.f32.mrf.mxu0
        %v6228 = vpop.f32.mrf.mxu0
        %v6229 = vadd.f32 0.0, %v6228
        %v6230 = vpop.f32.mrf.mxu0
        %6231 = vmatprep.mubr.bf16.mxu0 0
        %6232 = vmatmul.mubr.bf16.gmra.mxu0 %v6082
        %v6233 = vpop.f32.mrf.mxu0
        %v6234 = vadd.f32 0.0, %v6233
        %v6235 = vpop.f32.mrf.mxu0
        %v6236 = vpop.f32.mrf.mxu0
        %v6237 = vadd.f32 0.0, %v6236
        %v6238 = vpop.f32.mrf.mxu0
        %6239 = vmatprep.mubr.bf16.mxu0 0
        %6240 = vmatmul.mubr.bf16.gmra.mxu0 %v6085
        %v6241 = vpop.f32.mrf.mxu0
        %v6242 = vadd.f32 0.0, %v6241
        %v6243 = vpop.f32.mrf.mxu0
        %v6244 = vpop.f32.mrf.mxu0
        %v6245 = vadd.f32 0.0, %v6244
        %v6246 = vpop.f32.mrf.mxu0
        %6247 = vdwg.mxu0
        %v6248 = vadd.f32 %v5800, %v6122
        %v6249 = vadd.f32 %v5803, %v6125
        %v6250 = vadd.f32 %v5808, %v6130
        %v6251 = vadd.f32 %v5811, %v6133
        %v6252 = vadd.f32 %v5816, %v6138
        %v6253 = vadd.f32 %v5819, %v6141
        %v6254 = vadd.f32 %v5824, %v6146
        %v6255 = vadd.f32 %v5827, %v6149
        %v6256 = vadd.f32 %v5832, %v6154
        %v6257 = vadd.f32 %v5835, %v6157
        %v6258 = vadd.f32 %v5840, %v6162
        %v6259 = vadd.f32 %v5843, %v6165
        %v6260 = vadd.f32 %v5848, %v6170
        %v6261 = vadd.f32 %v5851, %v6173
        %v6262 = vadd.f32 %v5856, %v6178
        %v6263 = vadd.f32 %v5859, %v6181
        %v6264 = vadd.f32 %v5864, %v6186
        %v6265 = vadd.f32 %v5867, %v6189
        %v6266 = vadd.f32 %v5872, %v6194
        %v6267 = vadd.f32 %v5875, %v6197
        %v6268 = vadd.f32 %v5880, %v6202
        %v6269 = vadd.f32 %v5883, %v6205
        %v6270 = vadd.f32 %v5888, %v6210
        %v6271 = vadd.f32 %v5891, %v6213
        %v6272 = vadd.f32 %v5896, %v6218
        %v6273 = vadd.f32 %v5899, %v6221
        %v6274 = vadd.f32 %v5904, %v6226
        %v6275 = vadd.f32 %v5907, %v6229
        %v6276 = vadd.f32 %v5912, %v6234
        %v6277 = vadd.f32 %v5915, %v6237
        %v6278 = vadd.f32 %v5920, %v6242
        %v6279 = vadd.f32 %v5923, %v6245
        %v6280 = vld [vmem:[#allocation2 + $0x17] sm:$0xff]
        %v6281 = vld [vmem:[#allocation2 + $0x1f] sm:$0xff]
        %v6282 = vld [vmem:[#allocation2 + $0x27] sm:$0xff]
        %v6283 = vld [vmem:[#allocation2 + $0x2f] sm:$0xff]
        %v6284 = vld [vmem:[#allocation2 + $0x37] sm:$0xff]
        %v6285 = vld [vmem:[#allocation2 + $0x3f] sm:$0xff]
        %v6286 = vld [vmem:[#allocation2 + $0x47] sm:$0xff]
        %v6287 = vld [vmem:[#allocation2 + $0x4f] sm:$0xff]
        %v6288 = vld [vmem:[#allocation2 + $0x57] sm:$0xff]
        %v6289 = vld [vmem:[#allocation2 + $0x5f] sm:$0xff]
        %v6290 = vld [vmem:[#allocation2 + $0x67] sm:$0xff]
        %v6291 = vld [vmem:[#allocation2 + $0x6f] sm:$0xff]
        %v6292 = vld [vmem:[#allocation2 + $0x77] sm:$0xff]
        %v6293 = vld [vmem:[#allocation2 + $0x7f] sm:$0xff]
        %v6294 = vld [vmem:[#allocation2 + $0x87] sm:$0xff]
        %v6295 = vld [vmem:[#allocation2 + $0x8f] sm:$0xff]
        %v6296 = vld [vmem:[#allocation2 + $0x97] sm:$0xff]
        %v6297 = vld [vmem:[#allocation2 + $0x9f] sm:$0xff]
        %v6298 = vld [vmem:[#allocation2 + $0xa7] sm:$0xff]
        %v6299 = vld [vmem:[#allocation2 + $0xaf] sm:$0xff]
        %v6300 = vld [vmem:[#allocation2 + $0xb7] sm:$0xff]
        %v6301 = vld [vmem:[#allocation2 + $0xbf] sm:$0xff]
        %v6302 = vld [vmem:[#allocation2 + $0xc7] sm:$0xff]
        %v6303 = vld [vmem:[#allocation2 + $0xcf] sm:$0xff]
        %v6304 = vld [vmem:[#allocation2 + $0xd7] sm:$0xff]
        %v6305 = vld [vmem:[#allocation2 + $0xdf] sm:$0xff]
        %v6306 = vld [vmem:[#allocation2 + $0xe7] sm:$0xff]
        %v6307 = vld [vmem:[#allocation2 + $0xef] sm:$0xff]
        %v6308 = vld [vmem:[#allocation2 + $0xf7] sm:$0xff]
        %v6309 = vld [vmem:[#allocation2 + $0xff] sm:$0xff]
        %v6310 = vld [vmem:[#allocation2 + $0x107] sm:$0xff]
        %v6311 = vld [vmem:[#allocation2 + $0x10f] sm:$0xff]
        %v6312 = vsel %vm1963, %v6280, 0.0
        %v6313 = vsel %vm1964, %v6281, 0.0
        %v6314 = vsel %vm1965, %v6282, 0.0
        %v6315 = vsel %vm1966, %v6283, 0.0
        %v6316 = vsel %vm1967, %v6284, 0.0
        %v6317 = vsel %vm1968, %v6285, 0.0
        %v6318 = vsel %vm1969, %v6286, 0.0
        %v6319 = vsel %vm1970, %v6287, 0.0
        %v6320 = vsel %vm1971, %v6288, 0.0
        %v6321 = vsel %vm1972, %v6289, 0.0
        %v6322 = vsel %vm1973, %v6290, 0.0
        %v6323 = vsel %vm1974, %v6291, 0.0
        %v6324 = vsel %vm1975, %v6292, 0.0
        %v6325 = vsel %vm1976, %v6293, 0.0
        %v6326 = vsel %vm1977, %v6294, 0.0
        %v6327 = vsel %vm1978, %v6295, 0.0
        %v6328 = vsel %vm1979, %v6296, 0.0
        %v6329 = vsel %vm1980, %v6297, 0.0
        %v6330 = vsel %vm1981, %v6298, 0.0
        %v6331 = vsel %vm1982, %v6299, 0.0
        %v6332 = vsel %vm1983, %v6300, 0.0
        %v6333 = vsel %vm1984, %v6301, 0.0
        %v6334 = vsel %vm1985, %v6302, 0.0
        %v6335 = vsel %vm1986, %v6303, 0.0
        %v6336 = vsel %vm1987, %v6304, 0.0
        %v6337 = vsel %vm1988, %v6305, 0.0
        %v6338 = vsel %vm1989, %v6306, 0.0
        %v6339 = vsel %vm1990, %v6307, 0.0
        %v6340 = vsel %vm1991, %v6308, 0.0
        %v6341 = vsel %vm1992, %v6309, 0.0
        %v6342 = vsel %vm1993, %v6310, 0.0
        %v6343 = vsel %vm1994, %v6311, 0.0
        %v6344 = vpack.c.bf16 %v6313, %v6312
        %v6345 = vpack.c.bf16 %v6315, %v6314
        %v6346 = vpack.c.bf16 %v6317, %v6316
        %v6347 = vpack.c.bf16 %v6319, %v6318
        %v6348 = vpack.c.bf16 %v6321, %v6320
        %v6349 = vpack.c.bf16 %v6323, %v6322
        %v6350 = vpack.c.bf16 %v6325, %v6324
        %v6351 = vpack.c.bf16 %v6327, %v6326
        %v6352 = vpack.c.bf16 %v6329, %v6328
        %v6353 = vpack.c.bf16 %v6331, %v6330
        %v6354 = vpack.c.bf16 %v6333, %v6332
        %v6355 = vpack.c.bf16 %v6335, %v6334
        %v6356 = vpack.c.bf16 %v6337, %v6336
        %v6357 = vpack.c.bf16 %v6339, %v6338
        %v6358 = vpack.c.bf16 %v6341, %v6340
        %v6359 = vpack.c.bf16 %v6343, %v6342
        %s6360 = scalar_lea.vmem %s7, 96
        %v6361 = vld [vmem:[%s6360] sm:$0xf]
        %v6362 = vld [vmem:[%s6360 + $0x4] sm:$0xf]
        %v6363 = vld [vmem:[%s6360 + $0x8] sm:$0xf]
        %v6364 = vld [vmem:[%s6360 + $0xc] sm:$0xf]
        %v6365 = vld [vmem:[%s6360 + $0x10] sm:$0xf]
        %v6366 = vld [vmem:[%s6360 + $0x14] sm:$0xf]
        %v6367 = vld [vmem:[%s6360 + $0x18] sm:$0xf]
        %v6368 = vld [vmem:[%s6360 + $0x1c] sm:$0xf]
        %v6377 = vunpack.c.l.b16 %v6361
        %v6378 = vunpack.c.l.b16 %v6362
        %v6379 = vunpack.c.l.b16 %v6363
        %v6380 = vunpack.c.l.b16 %v6364
        %v6381 = vunpack.c.l.b16 %v6365
        %v6382 = vunpack.c.l.b16 %v6366
        %v6383 = vunpack.c.l.b16 %v6367
        %v6384 = vunpack.c.l.b16 %v6368
        %v6385 = vpack.c.b16 %v6378, %v6377
        %v6386 = vpack.c.b16 %v6380, %v6379
        %v6387 = vpack.c.b16 %v6382, %v6381
        %v6388 = vpack.c.b16 %v6384, %v6383
        %v6394 = vsel %vm1346, %v6344, 0
        %v6397 = vsel %vm1346, %v6345, 0
        %v6400 = vsel %vm1346, %v6346, 0
        %v6403 = vsel %vm1346, %v6347, 0
        %v6406 = vsel %vm1346, %v6348, 0
        %v6409 = vsel %vm1346, %v6349, 0
        %v6412 = vsel %vm1346, %v6350, 0
        %v6415 = vsel %vm1346, %v6351, 0
        %v6418 = vsel %vm1346, %v6352, 0
        %v6421 = vsel %vm1346, %v6353, 0
        %v6424 = vsel %vm1346, %v6354, 0
        %v6427 = vsel %vm1346, %v6355, 0
        %v6430 = vsel %vm1346, %v6356, 0
        %v6433 = vsel %vm1346, %v6357, 0
        %v6436 = vsel %vm1346, %v6358, 0
        %v6439 = vsel %vm1346, %v6359, 0
        %6441 = vmatprep.subr.bf16.mxu0 0
        %6442 = vmatpush1.bf16.msra.mxu0 0
        %6443 = vmatprep.subr.bf16.mxu0 0
        %6444 = vmatpush1.bf16.msra.mxu0 0
        %6445 = vmatprep.subr.bf16.mxu0 0
        %6446 = vmatpush1.bf16.msra.mxu0 0
        %6447 = vmatprep.subr.bf16.mxu0 0
        %6448 = vmatpush1.bf16.msra.mxu0 0
        %6449 = vmatprep.subr.bf16.mxu0 0
        %6450 = vmatpush1.bf16.msra.mxu0 %v6388
        %6451 = vmatprep.subr.bf16.mxu0 0
        %6452 = vmatpush1.bf16.msra.mxu0 %v6387
        %6453 = vmatprep.subr.bf16.mxu0 0
        %6454 = vmatpush1.bf16.msra.mxu0 %v6386
        %6455 = vmatprep.subr.bf16.mxu0 0
        %6456 = vmatpush1.bf16.msra.mxu0 %v6385
        %6457 = vmatprep.subr.bf16.mxu0 0
        %6458 = vmatpush2.bf16.msra.mxu0 0
        %6459 = vmatprep.subr.bf16.mxu0 0
        %6460 = vmatpush2.bf16.msra.mxu0 0
        %6461 = vmatprep.subr.bf16.mxu0 0
        %6462 = vmatpush2.bf16.msra.mxu0 0
        %6463 = vmatprep.subr.bf16.mxu0 0
        %6464 = vmatpush2.bf16.msra.mxu0 0
        %6465 = vmatprep.subr.bf16.mxu0 0
        %6466 = vmatpush2.bf16.msra.mxu0 0
        %6467 = vmatprep.subr.bf16.mxu0 0
        %6468 = vmatpush2.bf16.msra.mxu0 0
        %6469 = vmatprep.subr.bf16.mxu0 0
        %6470 = vmatpush2.bf16.msra.mxu0 0
        %6471 = vmatprep.subr.bf16.mxu0 0
        %6472 = vmatpush2.bf16.msra.mxu0 0
        %6473 = vmatprep.mubr.bf16.mxu0 0
        %6474 = vmatmul.mubr.bf16.gmra.mxu0 %v6394
        %v6475 = vpop.f32.mrf.mxu0
        %v6476 = vadd.f32 0.0, %v6475
        %v6477 = vpop.f32.mrf.mxu0
        %v6478 = vpop.f32.mrf.mxu0
        %v6479 = vadd.f32 0.0, %v6478
        %v6480 = vpop.f32.mrf.mxu0
        %6481 = vmatprep.mubr.bf16.mxu0 0
        %6482 = vmatmul.mubr.bf16.gmra.mxu0 %v6397
        %v6483 = vpop.f32.mrf.mxu0
        %v6484 = vadd.f32 0.0, %v6483
        %v6485 = vpop.f32.mrf.mxu0
        %v6486 = vpop.f32.mrf.mxu0
        %v6487 = vadd.f32 0.0, %v6486
        %v6488 = vpop.f32.mrf.mxu0
        %6489 = vmatprep.mubr.bf16.mxu0 0
        %6490 = vmatmul.mubr.bf16.gmra.mxu0 %v6400
        %v6491 = vpop.f32.mrf.mxu0
        %v6492 = vadd.f32 0.0, %v6491
        %v6493 = vpop.f32.mrf.mxu0
        %v6494 = vpop.f32.mrf.mxu0
        %v6495 = vadd.f32 0.0, %v6494
        %v6496 = vpop.f32.mrf.mxu0
        %6497 = vmatprep.mubr.bf16.mxu0 0
        %6498 = vmatmul.mubr.bf16.gmra.mxu0 %v6403
        %v6499 = vpop.f32.mrf.mxu0
        %v6500 = vadd.f32 0.0, %v6499
        %v6501 = vpop.f32.mrf.mxu0
        %v6502 = vpop.f32.mrf.mxu0
        %v6503 = vadd.f32 0.0, %v6502
        %v6504 = vpop.f32.mrf.mxu0
        %6505 = vmatprep.mubr.bf16.mxu0 0
        %6506 = vmatmul.mubr.bf16.gmra.mxu0 %v6406
        %v6507 = vpop.f32.mrf.mxu0
        %v6508 = vadd.f32 0.0, %v6507
        %v6509 = vpop.f32.mrf.mxu0
        %v6510 = vpop.f32.mrf.mxu0
        %v6511 = vadd.f32 0.0, %v6510
        %v6512 = vpop.f32.mrf.mxu0
        %6513 = vmatprep.mubr.bf16.mxu0 0
        %6514 = vmatmul.mubr.bf16.gmra.mxu0 %v6409
        %v6515 = vpop.f32.mrf.mxu0
        %v6516 = vadd.f32 0.0, %v6515
        %v6517 = vpop.f32.mrf.mxu0
        %v6518 = vpop.f32.mrf.mxu0
        %v6519 = vadd.f32 0.0, %v6518
        %v6520 = vpop.f32.mrf.mxu0
        %6521 = vmatprep.mubr.bf16.mxu0 0
        %6522 = vmatmul.mubr.bf16.gmra.mxu0 %v6412
        %v6523 = vpop.f32.mrf.mxu0
        %v6524 = vadd.f32 0.0, %v6523
        %v6525 = vpop.f32.mrf.mxu0
        %v6526 = vpop.f32.mrf.mxu0
        %v6527 = vadd.f32 0.0, %v6526
        %v6528 = vpop.f32.mrf.mxu0
        %6529 = vmatprep.mubr.bf16.mxu0 0
        %6530 = vmatmul.mubr.bf16.gmra.mxu0 %v6415
        %v6531 = vpop.f32.mrf.mxu0
        %v6532 = vadd.f32 0.0, %v6531
        %v6533 = vpop.f32.mrf.mxu0
        %v6534 = vpop.f32.mrf.mxu0
        %v6535 = vadd.f32 0.0, %v6534
        %v6536 = vpop.f32.mrf.mxu0
        %6537 = vmatprep.mubr.bf16.mxu0 0
        %6538 = vmatmul.mubr.bf16.gmra.mxu0 %v6418
        %v6539 = vpop.f32.mrf.mxu0
        %v6540 = vadd.f32 0.0, %v6539
        %v6541 = vpop.f32.mrf.mxu0
        %v6542 = vpop.f32.mrf.mxu0
        %v6543 = vadd.f32 0.0, %v6542
        %v6544 = vpop.f32.mrf.mxu0
        %6545 = vmatprep.mubr.bf16.mxu0 0
        %6546 = vmatmul.mubr.bf16.gmra.mxu0 %v6421
        %v6547 = vpop.f32.mrf.mxu0
        %v6548 = vadd.f32 0.0, %v6547
        %v6549 = vpop.f32.mrf.mxu0
        %v6550 = vpop.f32.mrf.mxu0
        %v6551 = vadd.f32 0.0, %v6550
        %v6552 = vpop.f32.mrf.mxu0
        %6553 = vmatprep.mubr.bf16.mxu0 0
        %6554 = vmatmul.mubr.bf16.gmra.mxu0 %v6424
        %v6555 = vpop.f32.mrf.mxu0
        %v6556 = vadd.f32 0.0, %v6555
        %v6557 = vpop.f32.mrf.mxu0
        %v6558 = vpop.f32.mrf.mxu0
        %v6559 = vadd.f32 0.0, %v6558
        %v6560 = vpop.f32.mrf.mxu0
        %6561 = vmatprep.mubr.bf16.mxu0 0
        %6562 = vmatmul.mubr.bf16.gmra.mxu0 %v6427
        %v6563 = vpop.f32.mrf.mxu0
        %v6564 = vadd.f32 0.0, %v6563
        %v6565 = vpop.f32.mrf.mxu0
        %v6566 = vpop.f32.mrf.mxu0
        %v6567 = vadd.f32 0.0, %v6566
        %v6568 = vpop.f32.mrf.mxu0
        %6569 = vmatprep.mubr.bf16.mxu0 0
        %6570 = vmatmul.mubr.bf16.gmra.mxu0 %v6430
        %v6571 = vpop.f32.mrf.mxu0
        %v6572 = vadd.f32 0.0, %v6571
        %v6573 = vpop.f32.mrf.mxu0
        %v6574 = vpop.f32.mrf.mxu0
        %v6575 = vadd.f32 0.0, %v6574
        %v6576 = vpop.f32.mrf.mxu0
        %6577 = vmatprep.mubr.bf16.mxu0 0
        %6578 = vmatmul.mubr.bf16.gmra.mxu0 %v6433
        %v6579 = vpop.f32.mrf.mxu0
        %v6580 = vadd.f32 0.0, %v6579
        %v6581 = vpop.f32.mrf.mxu0
        %v6582 = vpop.f32.mrf.mxu0
        %v6583 = vadd.f32 0.0, %v6582
        %v6584 = vpop.f32.mrf.mxu0
        %6585 = vmatprep.mubr.bf16.mxu0 0
        %6586 = vmatmul.mubr.bf16.gmra.mxu0 %v6436
        %v6587 = vpop.f32.mrf.mxu0
        %v6588 = vadd.f32 0.0, %v6587
        %v6589 = vpop.f32.mrf.mxu0
        %v6590 = vpop.f32.mrf.mxu0
        %v6591 = vadd.f32 0.0, %v6590
        %v6592 = vpop.f32.mrf.mxu0
        %6593 = vmatprep.mubr.bf16.mxu0 0
        %6594 = vmatmul.mubr.bf16.gmra.mxu0 %v6439
        %v6595 = vpop.f32.mrf.mxu0
        %v6596 = vadd.f32 0.0, %v6595
        %v6597 = vpop.f32.mrf.mxu0
        %v6598 = vpop.f32.mrf.mxu0
        %v6599 = vadd.f32 0.0, %v6598
        %v6600 = vpop.f32.mrf.mxu0
        %6601 = vdwg.mxu0
        %v6602 = vadd.f32 %v6248, %v6476
        %v6603 = vadd.f32 %v6249, %v6479
        %v6604 = vadd.f32 %v6250, %v6484
        %v6605 = vadd.f32 %v6251, %v6487
        %v6606 = vadd.f32 %v6252, %v6492
        %v6607 = vadd.f32 %v6253, %v6495
        %v6608 = vadd.f32 %v6254, %v6500
        %v6609 = vadd.f32 %v6255, %v6503
        %v6610 = vadd.f32 %v6256, %v6508
        %v6611 = vadd.f32 %v6257, %v6511
        %v6612 = vadd.f32 %v6258, %v6516
        %v6613 = vadd.f32 %v6259, %v6519
        %v6614 = vadd.f32 %v6260, %v6524
        %v6615 = vadd.f32 %v6261, %v6527
        %v6616 = vadd.f32 %v6262, %v6532
        %v6617 = vadd.f32 %v6263, %v6535
        %v6618 = vadd.f32 %v6264, %v6540
        %v6619 = vadd.f32 %v6265, %v6543
        %v6620 = vadd.f32 %v6266, %v6548
        %v6621 = vadd.f32 %v6267, %v6551
        %v6622 = vadd.f32 %v6268, %v6556
        %v6623 = vadd.f32 %v6269, %v6559
        %v6624 = vadd.f32 %v6270, %v6564
        %v6625 = vadd.f32 %v6271, %v6567
        %v6626 = vadd.f32 %v6272, %v6572
        %v6627 = vadd.f32 %v6273, %v6575
        %v6628 = vadd.f32 %v6274, %v6580
        %v6629 = vadd.f32 %v6275, %v6583
        %v6630 = vadd.f32 %v6276, %v6588
        %v6631 = vadd.f32 %v6277, %v6591
        %v6632 = vadd.f32 %v6278, %v6596
        %v6633 = vadd.f32 %v6279, %v6599
        %v6634 = vpack.c.bf16 %v5251, %v5250
        %v6635 = vpack.c.bf16 %v5253, %v5252
        %v6636 = vpack.c.bf16 %v5255, %v5254
        %v6637 = vpack.c.bf16 %v5257, %v5256
        %v6638 = vpack.c.bf16 %v5259, %v5258
        %v6639 = vpack.c.bf16 %v5261, %v5260
        %v6640 = vpack.c.bf16 %v5263, %v5262
        %v6641 = vpack.c.bf16 %v5265, %v5264
        %v6642 = vpack.c.bf16 %v5267, %v5266
        %v6643 = vpack.c.bf16 %v5269, %v5268
        %v6644 = vpack.c.bf16 %v5271, %v5270
        %v6645 = vpack.c.bf16 %v5273, %v5272
        %v6646 = vpack.c.bf16 %v5275, %v5274
        %v6647 = vpack.c.bf16 %v5277, %v5276
        %v6648 = vpack.c.bf16 %v5279, %v5278
        %v6649 = vpack.c.bf16 %v5281, %v5280
        %s6650 = scalar_lea.vmem %s7, 128
        %v6651 = vld [vmem:[%s6650] sm:$0xf]
        %v6652 = vld [vmem:[%s6650 + $0x4] sm:$0xf]
        %v6653 = vld [vmem:[%s6650 + $0x8] sm:$0xf]
        %v6654 = vld [vmem:[%s6650 + $0xc] sm:$0xf]
        %v6655 = vld [vmem:[%s6650 + $0x10] sm:$0xf]
        %v6656 = vld [vmem:[%s6650 + $0x14] sm:$0xf]
        %v6657 = vld [vmem:[%s6650 + $0x18] sm:$0xf]
        %v6658 = vld [vmem:[%s6650 + $0x1c] sm:$0xf]
        %v6667 = vunpack.c.l.b16 %v6651
        %v6668 = vunpack.c.l.b16 %v6652
        %v6669 = vunpack.c.l.b16 %v6653
        %v6670 = vunpack.c.l.b16 %v6654
        %v6671 = vunpack.c.l.b16 %v6655
        %v6672 = vunpack.c.l.b16 %v6656
        %v6673 = vunpack.c.l.b16 %v6657
        %v6674 = vunpack.c.l.b16 %v6658
        %v6675 = vpack.c.b16 %v6668, %v6667
        %v6676 = vpack.c.b16 %v6670, %v6669
        %v6677 = vpack.c.b16 %v6672, %v6671
        %v6678 = vpack.c.b16 %v6674, %v6673
        %v6684 = vsel %vm1346, %v6634, 0
        %v6687 = vsel %vm1346, %v6635, 0
        %v6690 = vsel %vm1346, %v6636, 0
        %v6693 = vsel %vm1346, %v6637, 0
        %v6696 = vsel %vm1346, %v6638, 0
        %v6699 = vsel %vm1346, %v6639, 0
        %v6702 = vsel %vm1346, %v6640, 0
        %v6705 = vsel %vm1346, %v6641, 0
        %v6708 = vsel %vm1346, %v6642, 0
        %v6711 = vsel %vm1346, %v6643, 0
        %v6714 = vsel %vm1346, %v6644, 0
        %v6717 = vsel %vm1346, %v6645, 0
        %v6720 = vsel %vm1346, %v6646, 0
        %v6723 = vsel %vm1346, %v6647, 0
        %v6726 = vsel %vm1346, %v6648, 0
        %v6729 = vsel %vm1346, %v6649, 0
        %6731 = vmatprep.subr.bf16.mxu0 0
        %6732 = vmatpush1.bf16.msra.mxu0 0
        %6733 = vmatprep.subr.bf16.mxu0 0
        %6734 = vmatpush1.bf16.msra.mxu0 0
        %6735 = vmatprep.subr.bf16.mxu0 0
        %6736 = vmatpush1.bf16.msra.mxu0 0
        %6737 = vmatprep.subr.bf16.mxu0 0
        %6738 = vmatpush1.bf16.msra.mxu0 0
        %6739 = vmatprep.subr.bf16.mxu0 0
        %6740 = vmatpush1.bf16.msra.mxu0 %v6678
        %6741 = vmatprep.subr.bf16.mxu0 0
        %6742 = vmatpush1.bf16.msra.mxu0 %v6677
        %6743 = vmatprep.subr.bf16.mxu0 0
        %6744 = vmatpush1.bf16.msra.mxu0 %v6676
        %6745 = vmatprep.subr.bf16.mxu0 0
        %6746 = vmatpush1.bf16.msra.mxu0 %v6675
        %6747 = vmatprep.subr.bf16.mxu0 0
        %6748 = vmatpush2.bf16.msra.mxu0 0
        %6749 = vmatprep.subr.bf16.mxu0 0
        %6750 = vmatpush2.bf16.msra.mxu0 0
        %6751 = vmatprep.subr.bf16.mxu0 0
        %6752 = vmatpush2.bf16.msra.mxu0 0
        %6753 = vmatprep.subr.bf16.mxu0 0
        %6754 = vmatpush2.bf16.msra.mxu0 0
        %6755 = vmatprep.subr.bf16.mxu0 0
        %6756 = vmatpush2.bf16.msra.mxu0 0
        %6757 = vmatprep.subr.bf16.mxu0 0
        %6758 = vmatpush2.bf16.msra.mxu0 0
        %6759 = vmatprep.subr.bf16.mxu0 0
        %6760 = vmatpush2.bf16.msra.mxu0 0
        %6761 = vmatprep.subr.bf16.mxu0 0
        %6762 = vmatpush2.bf16.msra.mxu0 0
        %6763 = vmatprep.mubr.bf16.mxu0 0
        %6764 = vmatmul.mubr.bf16.gmra.mxu0 %v6684
        %v6765 = vpop.f32.mrf.mxu0
        %v6766 = vadd.f32 0.0, %v6765
        %v6767 = vpop.f32.mrf.mxu0
        %v6768 = vpop.f32.mrf.mxu0
        %v6769 = vadd.f32 0.0, %v6768
        %v6770 = vpop.f32.mrf.mxu0
        %6771 = vmatprep.mubr.bf16.mxu0 0
        %6772 = vmatmul.mubr.bf16.gmra.mxu0 %v6687
        %v6773 = vpop.f32.mrf.mxu0
        %v6774 = vadd.f32 0.0, %v6773
        %v6775 = vpop.f32.mrf.mxu0
        %v6776 = vpop.f32.mrf.mxu0
        %v6777 = vadd.f32 0.0, %v6776
        %v6778 = vpop.f32.mrf.mxu0
        %6779 = vmatprep.mubr.bf16.mxu0 0
        %6780 = vmatmul.mubr.bf16.gmra.mxu0 %v6690
        %v6781 = vpop.f32.mrf.mxu0
        %v6782 = vadd.f32 0.0, %v6781
        %v6783 = vpop.f32.mrf.mxu0
        %v6784 = vpop.f32.mrf.mxu0
        %v6785 = vadd.f32 0.0, %v6784
        %v6786 = vpop.f32.mrf.mxu0
        %6787 = vmatprep.mubr.bf16.mxu0 0
        %6788 = vmatmul.mubr.bf16.gmra.mxu0 %v6693
        %v6789 = vpop.f32.mrf.mxu0
        %v6790 = vadd.f32 0.0, %v6789
        %v6791 = vpop.f32.mrf.mxu0
        %v6792 = vpop.f32.mrf.mxu0
        %v6793 = vadd.f32 0.0, %v6792
        %v6794 = vpop.f32.mrf.mxu0
        %6795 = vmatprep.mubr.bf16.mxu0 0
        %6796 = vmatmul.mubr.bf16.gmra.mxu0 %v6696
        %v6797 = vpop.f32.mrf.mxu0
        %v6798 = vadd.f32 0.0, %v6797
        %v6799 = vpop.f32.mrf.mxu0
        %v6800 = vpop.f32.mrf.mxu0
        %v6801 = vadd.f32 0.0, %v6800
        %v6802 = vpop.f32.mrf.mxu0
        %6803 = vmatprep.mubr.bf16.mxu0 0
        %6804 = vmatmul.mubr.bf16.gmra.mxu0 %v6699
        %v6805 = vpop.f32.mrf.mxu0
        %v6806 = vadd.f32 0.0, %v6805
        %v6807 = vpop.f32.mrf.mxu0
        %v6808 = vpop.f32.mrf.mxu0
        %v6809 = vadd.f32 0.0, %v6808
        %v6810 = vpop.f32.mrf.mxu0
        %6811 = vmatprep.mubr.bf16.mxu0 0
        %6812 = vmatmul.mubr.bf16.gmra.mxu0 %v6702
        %v6813 = vpop.f32.mrf.mxu0
        %v6814 = vadd.f32 0.0, %v6813
        %v6815 = vpop.f32.mrf.mxu0
        %v6816 = vpop.f32.mrf.mxu0
        %v6817 = vadd.f32 0.0, %v6816
        %v6818 = vpop.f32.mrf.mxu0
        %6819 = vmatprep.mubr.bf16.mxu0 0
        %6820 = vmatmul.mubr.bf16.gmra.mxu0 %v6705
        %v6821 = vpop.f32.mrf.mxu0
        %v6822 = vadd.f32 0.0, %v6821
        %v6823 = vpop.f32.mrf.mxu0
        %v6824 = vpop.f32.mrf.mxu0
        %v6825 = vadd.f32 0.0, %v6824
        %v6826 = vpop.f32.mrf.mxu0
        %6827 = vmatprep.mubr.bf16.mxu0 0
        %6828 = vmatmul.mubr.bf16.gmra.mxu0 %v6708
        %v6829 = vpop.f32.mrf.mxu0
        %v6830 = vadd.f32 0.0, %v6829
        %v6831 = vpop.f32.mrf.mxu0
        %v6832 = vpop.f32.mrf.mxu0
        %v6833 = vadd.f32 0.0, %v6832
        %v6834 = vpop.f32.mrf.mxu0
        %6835 = vmatprep.mubr.bf16.mxu0 0
        %6836 = vmatmul.mubr.bf16.gmra.mxu0 %v6711
        %v6837 = vpop.f32.mrf.mxu0
        %v6838 = vadd.f32 0.0, %v6837
        %v6839 = vpop.f32.mrf.mxu0
        %v6840 = vpop.f32.mrf.mxu0
        %v6841 = vadd.f32 0.0, %v6840
        %v6842 = vpop.f32.mrf.mxu0
        %6843 = vmatprep.mubr.bf16.mxu0 0
        %6844 = vmatmul.mubr.bf16.gmra.mxu0 %v6714
        %v6845 = vpop.f32.mrf.mxu0
        %v6846 = vadd.f32 0.0, %v6845
        %v6847 = vpop.f32.mrf.mxu0
        %v6848 = vpop.f32.mrf.mxu0
        %v6849 = vadd.f32 0.0, %v6848
        %v6850 = vpop.f32.mrf.mxu0
        %6851 = vmatprep.mubr.bf16.mxu0 0
        %6852 = vmatmul.mubr.bf16.gmra.mxu0 %v6717
        %v6853 = vpop.f32.mrf.mxu0
        %v6854 = vadd.f32 0.0, %v6853
        %v6855 = vpop.f32.mrf.mxu0
        %v6856 = vpop.f32.mrf.mxu0
        %v6857 = vadd.f32 0.0, %v6856
        %v6858 = vpop.f32.mrf.mxu0
        %6859 = vmatprep.mubr.bf16.mxu0 0
        %6860 = vmatmul.mubr.bf16.gmra.mxu0 %v6720
        %v6861 = vpop.f32.mrf.mxu0
        %v6862 = vadd.f32 0.0, %v6861
        %v6863 = vpop.f32.mrf.mxu0
        %v6864 = vpop.f32.mrf.mxu0
        %v6865 = vadd.f32 0.0, %v6864
        %v6866 = vpop.f32.mrf.mxu0
        %6867 = vmatprep.mubr.bf16.mxu0 0
        %6868 = vmatmul.mubr.bf16.gmra.mxu0 %v6723
        %v6869 = vpop.f32.mrf.mxu0
        %v6870 = vadd.f32 0.0, %v6869
        %v6871 = vpop.f32.mrf.mxu0
        %v6872 = vpop.f32.mrf.mxu0
        %v6873 = vadd.f32 0.0, %v6872
        %v6874 = vpop.f32.mrf.mxu0
        %6875 = vmatprep.mubr.bf16.mxu0 0
        %6876 = vmatmul.mubr.bf16.gmra.mxu0 %v6726
        %v6877 = vpop.f32.mrf.mxu0
        %v6878 = vadd.f32 0.0, %v6877
        %v6879 = vpop.f32.mrf.mxu0
        %v6880 = vpop.f32.mrf.mxu0
        %v6881 = vadd.f32 0.0, %v6880
        %v6882 = vpop.f32.mrf.mxu0
        %6883 = vmatprep.mubr.bf16.mxu0 0
        %6884 = vmatmul.mubr.bf16.gmra.mxu0 %v6729
        %v6885 = vpop.f32.mrf.mxu0
        %v6886 = vadd.f32 0.0, %v6885
        %v6887 = vpop.f32.mrf.mxu0
        %v6888 = vpop.f32.mrf.mxu0
        %v6889 = vadd.f32 0.0, %v6888
        %v6890 = vpop.f32.mrf.mxu0
        %6891 = vdwg.mxu0
        %v6892 = vadd.f32 %v6602, %v6766
        %v6893 = vadd.f32 %v6603, %v6769
        %v6894 = vadd.f32 %v6604, %v6774
        %v6895 = vadd.f32 %v6605, %v6777
        %v6896 = vadd.f32 %v6606, %v6782
        %v6897 = vadd.f32 %v6607, %v6785
        %v6898 = vadd.f32 %v6608, %v6790
        %v6899 = vadd.f32 %v6609, %v6793
        %v6900 = vadd.f32 %v6610, %v6798
        %v6901 = vadd.f32 %v6611, %v6801
        %v6902 = vadd.f32 %v6612, %v6806
        %v6903 = vadd.f32 %v6613, %v6809
        %v6904 = vadd.f32 %v6614, %v6814
        %v6905 = vadd.f32 %v6615, %v6817
        %v6906 = vadd.f32 %v6616, %v6822
        %v6907 = vadd.f32 %v6617, %v6825
        %v6908 = vadd.f32 %v6618, %v6830
        %v6909 = vadd.f32 %v6619, %v6833
        %v6910 = vadd.f32 %v6620, %v6838
        %v6911 = vadd.f32 %v6621, %v6841
        %v6912 = vadd.f32 %v6622, %v6846
        %v6913 = vadd.f32 %v6623, %v6849
        %v6914 = vadd.f32 %v6624, %v6854
        %v6915 = vadd.f32 %v6625, %v6857
        %v6916 = vadd.f32 %v6626, %v6862
        %v6917 = vadd.f32 %v6627, %v6865
        %v6918 = vadd.f32 %v6628, %v6870
        %v6919 = vadd.f32 %v6629, %v6873
        %v6920 = vadd.f32 %v6630, %v6878
        %v6921 = vadd.f32 %v6631, %v6881
        %v6922 = vadd.f32 %v6632, %v6886
        %v6923 = vadd.f32 %v6633, %v6889
        %v6924 = vld [vmem:[#allocation2 + $0x19] sm:$0xff]
        %v6925 = vld [vmem:[#allocation2 + $0x21] sm:$0xff]
        %v6926 = vld [vmem:[#allocation2 + $0x29] sm:$0xff]
        %v6927 = vld [vmem:[#allocation2 + $0x31] sm:$0xff]
        %v6928 = vld [vmem:[#allocation2 + $0x39] sm:$0xff]
        %v6929 = vld [vmem:[#allocation2 + $0x41] sm:$0xff]
        %v6930 = vld [vmem:[#allocation2 + $0x49] sm:$0xff]
        %v6931 = vld [vmem:[#allocation2 + $0x51] sm:$0xff]
        %v6932 = vld [vmem:[#allocation2 + $0x59] sm:$0xff]
        %v6933 = vld [vmem:[#allocation2 + $0x61] sm:$0xff]
        %v6934 = vld [vmem:[#allocation2 + $0x69] sm:$0xff]
        %v6935 = vld [vmem:[#allocation2 + $0x71] sm:$0xff]
        %v6936 = vld [vmem:[#allocation2 + $0x79] sm:$0xff]
        %v6937 = vld [vmem:[#allocation2 + $0x81] sm:$0xff]
        %v6938 = vld [vmem:[#allocation2 + $0x89] sm:$0xff]
        %v6939 = vld [vmem:[#allocation2 + $0x91] sm:$0xff]
        %v6940 = vld [vmem:[#allocation2 + $0x99] sm:$0xff]
        %v6941 = vld [vmem:[#allocation2 + $0xa1] sm:$0xff]
        %v6942 = vld [vmem:[#allocation2 + $0xa9] sm:$0xff]
        %v6943 = vld [vmem:[#allocation2 + $0xb1] sm:$0xff]
        %v6944 = vld [vmem:[#allocation2 + $0xb9] sm:$0xff]
        %v6945 = vld [vmem:[#allocation2 + $0xc1] sm:$0xff]
        %v6946 = vld [vmem:[#allocation2 + $0xc9] sm:$0xff]
        %v6947 = vld [vmem:[#allocation2 + $0xd1] sm:$0xff]
        %v6948 = vld [vmem:[#allocation2 + $0xd9] sm:$0xff]
        %v6949 = vld [vmem:[#allocation2 + $0xe1] sm:$0xff]
        %v6950 = vld [vmem:[#allocation2 + $0xe9] sm:$0xff]
        %v6951 = vld [vmem:[#allocation2 + $0xf1] sm:$0xff]
        %v6952 = vld [vmem:[#allocation2 + $0xf9] sm:$0xff]
        %v6953 = vld [vmem:[#allocation2 + $0x101] sm:$0xff]
        %v6954 = vld [vmem:[#allocation2 + $0x109] sm:$0xff]
        %v6955 = vld [vmem:[#allocation2 + $0x111] sm:$0xff]
        %v6956 = vsel %vm2638, %v6924, 0.0
        %v6957 = vsel %vm2639, %v6925, 0.0
        %v6958 = vsel %vm2640, %v6926, 0.0
        %v6959 = vsel %vm2641, %v6927, 0.0
        %v6960 = vsel %vm2642, %v6928, 0.0
        %v6961 = vsel %vm2643, %v6929, 0.0
        %v6962 = vsel %vm2644, %v6930, 0.0
        %v6963 = vsel %vm2645, %v6931, 0.0
        %v6964 = vsel %vm2646, %v6932, 0.0
        %v6965 = vsel %vm2647, %v6933, 0.0
        %v6966 = vsel %vm2648, %v6934, 0.0
        %v6967 = vsel %vm2649, %v6935, 0.0
        %v6968 = vsel %vm2650, %v6936, 0.0
        %v6969 = vsel %vm2651, %v6937, 0.0
        %v6970 = vsel %vm2652, %v6938, 0.0
        %v6971 = vsel %vm2653, %v6939, 0.0
        %v6972 = vsel %vm2654, %v6940, 0.0
        %v6973 = vsel %vm2655, %v6941, 0.0
        %v6974 = vsel %vm2656, %v6942, 0.0
        %v6975 = vsel %vm2657, %v6943, 0.0
        %v6976 = vsel %vm2658, %v6944, 0.0
        %v6977 = vsel %vm2659, %v6945, 0.0
        %v6978 = vsel %vm2660, %v6946, 0.0
        %v6979 = vsel %vm2661, %v6947, 0.0
        %v6980 = vsel %vm2662, %v6948, 0.0
        %v6981 = vsel %vm2663, %v6949, 0.0
        %v6982 = vsel %vm2664, %v6950, 0.0
        %v6983 = vsel %vm2665, %v6951, 0.0
        %v6984 = vsel %vm2666, %v6952, 0.0
        %v6985 = vsel %vm2667, %v6953, 0.0
        %v6986 = vsel %vm2668, %v6954, 0.0
        %v6987 = vsel %vm2669, %v6955, 0.0
        %v6988 = vpack.c.bf16 %v6957, %v6956
        %v6989 = vpack.c.bf16 %v6959, %v6958
        %v6990 = vpack.c.bf16 %v6961, %v6960
        %v6991 = vpack.c.bf16 %v6963, %v6962
        %v6992 = vpack.c.bf16 %v6965, %v6964
        %v6993 = vpack.c.bf16 %v6967, %v6966
        %v6994 = vpack.c.bf16 %v6969, %v6968
        %v6995 = vpack.c.bf16 %v6971, %v6970
        %v6996 = vpack.c.bf16 %v6973, %v6972
        %v6997 = vpack.c.bf16 %v6975, %v6974
        %v6998 = vpack.c.bf16 %v6977, %v6976
        %v6999 = vpack.c.bf16 %v6979, %v6978
        %v7000 = vpack.c.bf16 %v6981, %v6980
        %v7001 = vpack.c.bf16 %v6983, %v6982
        %v7002 = vpack.c.bf16 %v6985, %v6984
        %v7003 = vpack.c.bf16 %v6987, %v6986
        %s7004 = scalar_lea.vmem %s7, 160
        %v7005 = vld [vmem:[%s7004] sm:$0xf]
        %v7006 = vld [vmem:[%s7004 + $0x4] sm:$0xf]
        %v7007 = vld [vmem:[%s7004 + $0x8] sm:$0xf]
        %v7008 = vld [vmem:[%s7004 + $0xc] sm:$0xf]
        %v7009 = vld [vmem:[%s7004 + $0x10] sm:$0xf]
        %v7010 = vld [vmem:[%s7004 + $0x14] sm:$0xf]
        %v7011 = vld [vmem:[%s7004 + $0x18] sm:$0xf]
        %v7012 = vld [vmem:[%s7004 + $0x1c] sm:$0xf]
        %v7021 = vunpack.c.l.b16 %v7005
        %v7022 = vunpack.c.l.b16 %v7006
        %v7023 = vunpack.c.l.b16 %v7007
        %v7024 = vunpack.c.l.b16 %v7008
        %v7025 = vunpack.c.l.b16 %v7009
        %v7026 = vunpack.c.l.b16 %v7010
        %v7027 = vunpack.c.l.b16 %v7011
        %v7028 = vunpack.c.l.b16 %v7012
        %v7029 = vpack.c.b16 %v7022, %v7021
        %v7030 = vpack.c.b16 %v7024, %v7023
        %v7031 = vpack.c.b16 %v7026, %v7025
        %v7032 = vpack.c.b16 %v7028, %v7027
        %v7038 = vsel %vm1346, %v6988, 0
        %v7041 = vsel %vm1346, %v6989, 0
        %v7044 = vsel %vm1346, %v6990, 0
        %v7047 = vsel %vm1346, %v6991, 0
        %v7050 = vsel %vm1346, %v6992, 0
        %v7053 = vsel %vm1346, %v6993, 0
        %v7056 = vsel %vm1346, %v6994, 0
        %v7059 = vsel %vm1346, %v6995, 0
        %v7062 = vsel %vm1346, %v6996, 0
        %v7065 = vsel %vm1346, %v6997, 0
        %v7068 = vsel %vm1346, %v6998, 0
        %v7071 = vsel %vm1346, %v6999, 0
        %v7074 = vsel %vm1346, %v7000, 0
        %v7077 = vsel %vm1346, %v7001, 0
        %v7080 = vsel %vm1346, %v7002, 0
        %v7083 = vsel %vm1346, %v7003, 0
        %7085 = vmatprep.subr.bf16.mxu0 0
        %7086 = vmatpush1.bf16.msra.mxu0 0
        %7087 = vmatprep.subr.bf16.mxu0 0
        %7088 = vmatpush1.bf16.msra.mxu0 0
        %7089 = vmatprep.subr.bf16.mxu0 0
        %7090 = vmatpush1.bf16.msra.mxu0 0
        %7091 = vmatprep.subr.bf16.mxu0 0
        %7092 = vmatpush1.bf16.msra.mxu0 0
        %7093 = vmatprep.subr.bf16.mxu0 0
        %7094 = vmatpush1.bf16.msra.mxu0 %v7032
        %7095 = vmatprep.subr.bf16.mxu0 0
        %7096 = vmatpush1.bf16.msra.mxu0 %v7031
        %7097 = vmatprep.subr.bf16.mxu0 0
        %7098 = vmatpush1.bf16.msra.mxu0 %v7030
        %7099 = vmatprep.subr.bf16.mxu0 0
        %7100 = vmatpush1.bf16.msra.mxu0 %v7029
        %7101 = vmatprep.subr.bf16.mxu0 0
        %7102 = vmatpush2.bf16.msra.mxu0 0
        %7103 = vmatprep.subr.bf16.mxu0 0
        %7104 = vmatpush2.bf16.msra.mxu0 0
        %7105 = vmatprep.subr.bf16.mxu0 0
        %7106 = vmatpush2.bf16.msra.mxu0 0
        %7107 = vmatprep.subr.bf16.mxu0 0
        %7108 = vmatpush2.bf16.msra.mxu0 0
        %7109 = vmatprep.subr.bf16.mxu0 0
        %7110 = vmatpush2.bf16.msra.mxu0 0
        %7111 = vmatprep.subr.bf16.mxu0 0
        %7112 = vmatpush2.bf16.msra.mxu0 0
        %7113 = vmatprep.subr.bf16.mxu0 0
        %7114 = vmatpush2.bf16.msra.mxu0 0
        %7115 = vmatprep.subr.bf16.mxu0 0
        %7116 = vmatpush2.bf16.msra.mxu0 0
        %7117 = vmatprep.mubr.bf16.mxu0 0
        %7118 = vmatmul.mubr.bf16.gmra.mxu0 %v7038
        %v7119 = vpop.f32.mrf.mxu0
        %v7120 = vadd.f32 0.0, %v7119
        %v7121 = vpop.f32.mrf.mxu0
        %v7122 = vpop.f32.mrf.mxu0
        %v7123 = vadd.f32 0.0, %v7122
        %v7124 = vpop.f32.mrf.mxu0
        %7125 = vmatprep.mubr.bf16.mxu0 0
        %7126 = vmatmul.mubr.bf16.gmra.mxu0 %v7041
        %v7127 = vpop.f32.mrf.mxu0
        %v7128 = vadd.f32 0.0, %v7127
        %v7129 = vpop.f32.mrf.mxu0
        %v7130 = vpop.f32.mrf.mxu0
        %v7131 = vadd.f32 0.0, %v7130
        %v7132 = vpop.f32.mrf.mxu0
        %7133 = vmatprep.mubr.bf16.mxu0 0
        %7134 = vmatmul.mubr.bf16.gmra.mxu0 %v7044
        %v7135 = vpop.f32.mrf.mxu0
        %v7136 = vadd.f32 0.0, %v7135
        %v7137 = vpop.f32.mrf.mxu0
        %v7138 = vpop.f32.mrf.mxu0
        %v7139 = vadd.f32 0.0, %v7138
        %v7140 = vpop.f32.mrf.mxu0
        %7141 = vmatprep.mubr.bf16.mxu0 0
        %7142 = vmatmul.mubr.bf16.gmra.mxu0 %v7047
        %v7143 = vpop.f32.mrf.mxu0
        %v7144 = vadd.f32 0.0, %v7143
        %v7145 = vpop.f32.mrf.mxu0
        %v7146 = vpop.f32.mrf.mxu0
        %v7147 = vadd.f32 0.0, %v7146
        %v7148 = vpop.f32.mrf.mxu0
        %7149 = vmatprep.mubr.bf16.mxu0 0
        %7150 = vmatmul.mubr.bf16.gmra.mxu0 %v7050
        %v7151 = vpop.f32.mrf.mxu0
        %v7152 = vadd.f32 0.0, %v7151
        %v7153 = vpop.f32.mrf.mxu0
        %v7154 = vpop.f32.mrf.mxu0
        %v7155 = vadd.f32 0.0, %v7154
        %v7156 = vpop.f32.mrf.mxu0
        %7157 = vmatprep.mubr.bf16.mxu0 0
        %7158 = vmatmul.mubr.bf16.gmra.mxu0 %v7053
        %v7159 = vpop.f32.mrf.mxu0
        %v7160 = vadd.f32 0.0, %v7159
        %v7161 = vpop.f32.mrf.mxu0
        %v7162 = vpop.f32.mrf.mxu0
        %v7163 = vadd.f32 0.0, %v7162
        %v7164 = vpop.f32.mrf.mxu0
        %7165 = vmatprep.mubr.bf16.mxu0 0
        %7166 = vmatmul.mubr.bf16.gmra.mxu0 %v7056
        %v7167 = vpop.f32.mrf.mxu0
        %v7168 = vadd.f32 0.0, %v7167
        %v7169 = vpop.f32.mrf.mxu0
        %v7170 = vpop.f32.mrf.mxu0
        %v7171 = vadd.f32 0.0, %v7170
        %v7172 = vpop.f32.mrf.mxu0
        %7173 = vmatprep.mubr.bf16.mxu0 0
        %7174 = vmatmul.mubr.bf16.gmra.mxu0 %v7059
        %v7175 = vpop.f32.mrf.mxu0
        %v7176 = vadd.f32 0.0, %v7175
        %v7177 = vpop.f32.mrf.mxu0
        %v7178 = vpop.f32.mrf.mxu0
        %v7179 = vadd.f32 0.0, %v7178
        %v7180 = vpop.f32.mrf.mxu0
        %7181 = vmatprep.mubr.bf16.mxu0 0
        %7182 = vmatmul.mubr.bf16.gmra.mxu0 %v7062
        %v7183 = vpop.f32.mrf.mxu0
        %v7184 = vadd.f32 0.0, %v7183
        %v7185 = vpop.f32.mrf.mxu0
        %v7186 = vpop.f32.mrf.mxu0
        %v7187 = vadd.f32 0.0, %v7186
        %v7188 = vpop.f32.mrf.mxu0
        %7189 = vmatprep.mubr.bf16.mxu0 0
        %7190 = vmatmul.mubr.bf16.gmra.mxu0 %v7065
        %v7191 = vpop.f32.mrf.mxu0
        %v7192 = vadd.f32 0.0, %v7191
        %v7193 = vpop.f32.mrf.mxu0
        %v7194 = vpop.f32.mrf.mxu0
        %v7195 = vadd.f32 0.0, %v7194
        %v7196 = vpop.f32.mrf.mxu0
        %7197 = vmatprep.mubr.bf16.mxu0 0
        %7198 = vmatmul.mubr.bf16.gmra.mxu0 %v7068
        %v7199 = vpop.f32.mrf.mxu0
        %v7200 = vadd.f32 0.0, %v7199
        %v7201 = vpop.f32.mrf.mxu0
        %v7202 = vpop.f32.mrf.mxu0
        %v7203 = vadd.f32 0.0, %v7202
        %v7204 = vpop.f32.mrf.mxu0
        %7205 = vmatprep.mubr.bf16.mxu0 0
        %7206 = vmatmul.mubr.bf16.gmra.mxu0 %v7071
        %v7207 = vpop.f32.mrf.mxu0
        %v7208 = vadd.f32 0.0, %v7207
        %v7209 = vpop.f32.mrf.mxu0
        %v7210 = vpop.f32.mrf.mxu0
        %v7211 = vadd.f32 0.0, %v7210
        %v7212 = vpop.f32.mrf.mxu0
        %7213 = vmatprep.mubr.bf16.mxu0 0
        %7214 = vmatmul.mubr.bf16.gmra.mxu0 %v7074
        %v7215 = vpop.f32.mrf.mxu0
        %v7216 = vadd.f32 0.0, %v7215
        %v7217 = vpop.f32.mrf.mxu0
        %v7218 = vpop.f32.mrf.mxu0
        %v7219 = vadd.f32 0.0, %v7218
        %v7220 = vpop.f32.mrf.mxu0
        %7221 = vmatprep.mubr.bf16.mxu0 0
        %7222 = vmatmul.mubr.bf16.gmra.mxu0 %v7077
        %v7223 = vpop.f32.mrf.mxu0
        %v7224 = vadd.f32 0.0, %v7223
        %v7225 = vpop.f32.mrf.mxu0
        %v7226 = vpop.f32.mrf.mxu0
        %v7227 = vadd.f32 0.0, %v7226
        %v7228 = vpop.f32.mrf.mxu0
        %7229 = vmatprep.mubr.bf16.mxu0 0
        %7230 = vmatmul.mubr.bf16.gmra.mxu0 %v7080
        %v7231 = vpop.f32.mrf.mxu0
        %v7232 = vadd.f32 0.0, %v7231
        %v7233 = vpop.f32.mrf.mxu0
        %v7234 = vpop.f32.mrf.mxu0
        %v7235 = vadd.f32 0.0, %v7234
        %v7236 = vpop.f32.mrf.mxu0
        %7237 = vmatprep.mubr.bf16.mxu0 0
        %7238 = vmatmul.mubr.bf16.gmra.mxu0 %v7083
        %v7239 = vpop.f32.mrf.mxu0
        %v7240 = vadd.f32 0.0, %v7239
        %v7241 = vpop.f32.mrf.mxu0
        %v7242 = vpop.f32.mrf.mxu0
        %v7243 = vadd.f32 0.0, %v7242
        %v7244 = vpop.f32.mrf.mxu0
        %7245 = vdwg.mxu0
        %v7246 = vadd.f32 %v6892, %v7120
        %v7247 = vadd.f32 %v6893, %v7123
        %v7248 = vadd.f32 %v6894, %v7128
        %v7249 = vadd.f32 %v6895, %v7131
        %v7250 = vadd.f32 %v6896, %v7136
        %v7251 = vadd.f32 %v6897, %v7139
        %v7252 = vadd.f32 %v6898, %v7144
        %v7253 = vadd.f32 %v6899, %v7147
        %v7254 = vadd.f32 %v6900, %v7152
        %v7255 = vadd.f32 %v6901, %v7155
        %v7256 = vadd.f32 %v6902, %v7160
        %v7257 = vadd.f32 %v6903, %v7163
        %v7258 = vadd.f32 %v6904, %v7168
        %v7259 = vadd.f32 %v6905, %v7171
        %v7260 = vadd.f32 %v6906, %v7176
        %v7261 = vadd.f32 %v6907, %v7179
        %v7262 = vadd.f32 %v6908, %v7184
        %v7263 = vadd.f32 %v6909, %v7187
        %v7264 = vadd.f32 %v6910, %v7192
        %v7265 = vadd.f32 %v6911, %v7195
        %v7266 = vadd.f32 %v6912, %v7200
        %v7267 = vadd.f32 %v6913, %v7203
        %v7268 = vadd.f32 %v6914, %v7208
        %v7269 = vadd.f32 %v6915, %v7211
        %v7270 = vadd.f32 %v6916, %v7216
        %v7271 = vadd.f32 %v6917, %v7219
        %v7272 = vadd.f32 %v6918, %v7224
        %v7273 = vadd.f32 %v6919, %v7227
        %v7274 = vadd.f32 %v6920, %v7232
        %v7275 = vadd.f32 %v6921, %v7235
        %v7276 = vadd.f32 %v6922, %v7240
        %v7277 = vadd.f32 %v6923, %v7243
        %v7278 = vld [vmem:[#allocation2 + $0x27] sm:$0xff]
        %v7279 = vld [vmem:[#allocation2 + $0x2f] sm:$0xff]
        %v7280 = vld [vmem:[#allocation2 + $0x37] sm:$0xff]
        %v7281 = vld [vmem:[#allocation2 + $0x3f] sm:$0xff]
        %v7282 = vld [vmem:[#allocation2 + $0x47] sm:$0xff]
        %v7283 = vld [vmem:[#allocation2 + $0x4f] sm:$0xff]
        %v7284 = vld [vmem:[#allocation2 + $0x57] sm:$0xff]
        %v7285 = vld [vmem:[#allocation2 + $0x5f] sm:$0xff]
        %v7286 = vld [vmem:[#allocation2 + $0x67] sm:$0xff]
        %v7287 = vld [vmem:[#allocation2 + $0x6f] sm:$0xff]
        %v7288 = vld [vmem:[#allocation2 + $0x77] sm:$0xff]
        %v7289 = vld [vmem:[#allocation2 + $0x7f] sm:$0xff]
        %v7290 = vld [vmem:[#allocation2 + $0x87] sm:$0xff]
        %v7291 = vld [vmem:[#allocation2 + $0x8f] sm:$0xff]
        %v7292 = vld [vmem:[#allocation2 + $0x97] sm:$0xff]
        %v7293 = vld [vmem:[#allocation2 + $0x9f] sm:$0xff]
        %v7294 = vld [vmem:[#allocation2 + $0xa7] sm:$0xff]
        %v7295 = vld [vmem:[#allocation2 + $0xaf] sm:$0xff]
        %v7296 = vld [vmem:[#allocation2 + $0xb7] sm:$0xff]
        %v7297 = vld [vmem:[#allocation2 + $0xbf] sm:$0xff]
        %v7298 = vld [vmem:[#allocation2 + $0xc7] sm:$0xff]
        %v7299 = vld [vmem:[#allocation2 + $0xcf] sm:$0xff]
        %v7300 = vld [vmem:[#allocation2 + $0xd7] sm:$0xff]
        %v7301 = vld [vmem:[#allocation2 + $0xdf] sm:$0xff]
        %v7302 = vld [vmem:[#allocation2 + $0xe7] sm:$0xff]
        %v7303 = vld [vmem:[#allocation2 + $0xef] sm:$0xff]
        %v7304 = vld [vmem:[#allocation2 + $0xf7] sm:$0xff]
        %v7305 = vld [vmem:[#allocation2 + $0xff] sm:$0xff]
        %v7306 = vld [vmem:[#allocation2 + $0x107] sm:$0xff]
        %v7307 = vld [vmem:[#allocation2 + $0x10f] sm:$0xff]
        %v7308 = vld [vmem:[#allocation2 + $0x117] sm:$0xff]
        %v7309 = vld [vmem:[#allocation2 + $0x11f] sm:$0xff]
        %v7310 = vsel %vm1963, %v7278, 0.0
        %v7311 = vsel %vm1964, %v7279, 0.0
        %v7312 = vsel %vm1965, %v7280, 0.0
        %v7313 = vsel %vm1966, %v7281, 0.0
        %v7314 = vsel %vm1967, %v7282, 0.0
        %v7315 = vsel %vm1968, %v7283, 0.0
        %v7316 = vsel %vm1969, %v7284, 0.0
        %v7317 = vsel %vm1970, %v7285, 0.0
        %v7318 = vsel %vm1971, %v7286, 0.0
        %v7319 = vsel %vm1972, %v7287, 0.0
        %v7320 = vsel %vm1973, %v7288, 0.0
        %v7321 = vsel %vm1974, %v7289, 0.0
        %v7322 = vsel %vm1975, %v7290, 0.0
        %v7323 = vsel %vm1976, %v7291, 0.0
        %v7324 = vsel %vm1977, %v7292, 0.0
        %v7325 = vsel %vm1978, %v7293, 0.0
        %v7326 = vsel %vm1979, %v7294, 0.0
        %v7327 = vsel %vm1980, %v7295, 0.0
        %v7328 = vsel %vm1981, %v7296, 0.0
        %v7329 = vsel %vm1982, %v7297, 0.0
        %v7330 = vsel %vm1983, %v7298, 0.0
        %v7331 = vsel %vm1984, %v7299, 0.0
        %v7332 = vsel %vm1985, %v7300, 0.0
        %v7333 = vsel %vm1986, %v7301, 0.0
        %v7334 = vsel %vm1987, %v7302, 0.0
        %v7335 = vsel %vm1988, %v7303, 0.0
        %v7336 = vsel %vm1989, %v7304, 0.0
        %v7337 = vsel %vm1990, %v7305, 0.0
        %v7338 = vsel %vm1991, %v7306, 0.0
        %v7339 = vsel %vm1992, %v7307, 0.0
        %v7340 = vsel %vm1993, %v7308, 0.0
        %v7341 = vsel %vm1994, %v7309, 0.0
        %v7342 = vpack.c.bf16 %v7311, %v7310
        %v7343 = vpack.c.bf16 %v7313, %v7312
        %v7344 = vpack.c.bf16 %v7315, %v7314
        %v7345 = vpack.c.bf16 %v7317, %v7316
        %v7346 = vpack.c.bf16 %v7319, %v7318
        %v7347 = vpack.c.bf16 %v7321, %v7320
        %v7348 = vpack.c.bf16 %v7323, %v7322
        %v7349 = vpack.c.bf16 %v7325, %v7324
        %v7350 = vpack.c.bf16 %v7327, %v7326
        %v7351 = vpack.c.bf16 %v7329, %v7328
        %v7352 = vpack.c.bf16 %v7331, %v7330
        %v7353 = vpack.c.bf16 %v7333, %v7332
        %v7354 = vpack.c.bf16 %v7335, %v7334
        %v7355 = vpack.c.bf16 %v7337, %v7336
        %v7356 = vpack.c.bf16 %v7339, %v7338
        %v7357 = vpack.c.bf16 %v7341, %v7340
        %s7358 = scalar_lea.vmem %s7, 192
        %v7359 = vld [vmem:[%s7358] sm:$0xf]
        %v7360 = vld [vmem:[%s7358 + $0x4] sm:$0xf]
        %v7361 = vld [vmem:[%s7358 + $0x8] sm:$0xf]
        %v7362 = vld [vmem:[%s7358 + $0xc] sm:$0xf]
        %v7363 = vld [vmem:[%s7358 + $0x10] sm:$0xf]
        %v7364 = vld [vmem:[%s7358 + $0x14] sm:$0xf]
        %v7365 = vld [vmem:[%s7358 + $0x18] sm:$0xf]
        %v7366 = vld [vmem:[%s7358 + $0x1c] sm:$0xf]
        %v7375 = vunpack.c.l.b16 %v7359
        %v7376 = vunpack.c.l.b16 %v7360
        %v7377 = vunpack.c.l.b16 %v7361
        %v7378 = vunpack.c.l.b16 %v7362
        %v7379 = vunpack.c.l.b16 %v7363
        %v7380 = vunpack.c.l.b16 %v7364
        %v7381 = vunpack.c.l.b16 %v7365
        %v7382 = vunpack.c.l.b16 %v7366
        %v7383 = vpack.c.b16 %v7376, %v7375
        %v7384 = vpack.c.b16 %v7378, %v7377
        %v7385 = vpack.c.b16 %v7380, %v7379
        %v7386 = vpack.c.b16 %v7382, %v7381
        %v7392 = vsel %vm1346, %v7342, 0
        %v7395 = vsel %vm1346, %v7343, 0
        %v7398 = vsel %vm1346, %v7344, 0
        %v7401 = vsel %vm1346, %v7345, 0
        %v7404 = vsel %vm1346, %v7346, 0
        %v7407 = vsel %vm1346, %v7347, 0
        %v7410 = vsel %vm1346, %v7348, 0
        %v7413 = vsel %vm1346, %v7349, 0
        %v7416 = vsel %vm1346, %v7350, 0
        %v7419 = vsel %vm1346, %v7351, 0
        %v7422 = vsel %vm1346, %v7352, 0
        %v7425 = vsel %vm1346, %v7353, 0
        %v7428 = vsel %vm1346, %v7354, 0
        %v7431 = vsel %vm1346, %v7355, 0
        %v7434 = vsel %vm1346, %v7356, 0
        %v7437 = vsel %vm1346, %v7357, 0
        %7439 = vmatprep.subr.bf16.mxu0 0
        %7440 = vmatpush1.bf16.msra.mxu0 0
        %7441 = vmatprep.subr.bf16.mxu0 0
        %7442 = vmatpush1.bf16.msra.mxu0 0
        %7443 = vmatprep.subr.bf16.mxu0 0
        %7444 = vmatpush1.bf16.msra.mxu0 0
        %7445 = vmatprep.subr.bf16.mxu0 0
        %7446 = vmatpush1.bf16.msra.mxu0 0
        %7447 = vmatprep.subr.bf16.mxu0 0
        %7448 = vmatpush1.bf16.msra.mxu0 %v7386
        %7449 = vmatprep.subr.bf16.mxu0 0
        %7450 = vmatpush1.bf16.msra.mxu0 %v7385
        %7451 = vmatprep.subr.bf16.mxu0 0
        %7452 = vmatpush1.bf16.msra.mxu0 %v7384
        %7453 = vmatprep.subr.bf16.mxu0 0
        %7454 = vmatpush1.bf16.msra.mxu0 %v7383
        %7455 = vmatprep.subr.bf16.mxu0 0
        %7456 = vmatpush2.bf16.msra.mxu0 0
        %7457 = vmatprep.subr.bf16.mxu0 0
        %7458 = vmatpush2.bf16.msra.mxu0 0
        %7459 = vmatprep.subr.bf16.mxu0 0
        %7460 = vmatpush2.bf16.msra.mxu0 0
        %7461 = vmatprep.subr.bf16.mxu0 0
        %7462 = vmatpush2.bf16.msra.mxu0 0
        %7463 = vmatprep.subr.bf16.mxu0 0
        %7464 = vmatpush2.bf16.msra.mxu0 0
        %7465 = vmatprep.subr.bf16.mxu0 0
        %7466 = vmatpush2.bf16.msra.mxu0 0
        %7467 = vmatprep.subr.bf16.mxu0 0
        %7468 = vmatpush2.bf16.msra.mxu0 0
        %7469 = vmatprep.subr.bf16.mxu0 0
        %7470 = vmatpush2.bf16.msra.mxu0 0
        %7471 = vmatprep.mubr.bf16.mxu0 0
        %7472 = vmatmul.mubr.bf16.gmra.mxu0 %v7392
        %v7473 = vpop.f32.mrf.mxu0
        %v7474 = vadd.f32 0.0, %v7473
        %v7475 = vpop.f32.mrf.mxu0
        %v7476 = vpop.f32.mrf.mxu0
        %v7477 = vadd.f32 0.0, %v7476
        %v7478 = vpop.f32.mrf.mxu0
        %7479 = vmatprep.mubr.bf16.mxu0 0
        %7480 = vmatmul.mubr.bf16.gmra.mxu0 %v7395
        %v7481 = vpop.f32.mrf.mxu0
        %v7482 = vadd.f32 0.0, %v7481
        %v7483 = vpop.f32.mrf.mxu0
        %v7484 = vpop.f32.mrf.mxu0
        %v7485 = vadd.f32 0.0, %v7484
        %v7486 = vpop.f32.mrf.mxu0
        %7487 = vmatprep.mubr.bf16.mxu0 0
        %7488 = vmatmul.mubr.bf16.gmra.mxu0 %v7398
        %v7489 = vpop.f32.mrf.mxu0
        %v7490 = vadd.f32 0.0, %v7489
        %v7491 = vpop.f32.mrf.mxu0
        %v7492 = vpop.f32.mrf.mxu0
        %v7493 = vadd.f32 0.0, %v7492
        %v7494 = vpop.f32.mrf.mxu0
        %7495 = vmatprep.mubr.bf16.mxu0 0
        %7496 = vmatmul.mubr.bf16.gmra.mxu0 %v7401
        %v7497 = vpop.f32.mrf.mxu0
        %v7498 = vadd.f32 0.0, %v7497
        %v7499 = vpop.f32.mrf.mxu0
        %v7500 = vpop.f32.mrf.mxu0
        %v7501 = vadd.f32 0.0, %v7500
        %v7502 = vpop.f32.mrf.mxu0
        %7503 = vmatprep.mubr.bf16.mxu0 0
        %7504 = vmatmul.mubr.bf16.gmra.mxu0 %v7404
        %v7505 = vpop.f32.mrf.mxu0
        %v7506 = vadd.f32 0.0, %v7505
        %v7507 = vpop.f32.mrf.mxu0
        %v7508 = vpop.f32.mrf.mxu0
        %v7509 = vadd.f32 0.0, %v7508
        %v7510 = vpop.f32.mrf.mxu0
        %7511 = vmatprep.mubr.bf16.mxu0 0
        %7512 = vmatmul.mubr.bf16.gmra.mxu0 %v7407
        %v7513 = vpop.f32.mrf.mxu0
        %v7514 = vadd.f32 0.0, %v7513
        %v7515 = vpop.f32.mrf.mxu0
        %v7516 = vpop.f32.mrf.mxu0
        %v7517 = vadd.f32 0.0, %v7516
        %v7518 = vpop.f32.mrf.mxu0
        %7519 = vmatprep.mubr.bf16.mxu0 0
        %7520 = vmatmul.mubr.bf16.gmra.mxu0 %v7410
        %v7521 = vpop.f32.mrf.mxu0
        %v7522 = vadd.f32 0.0, %v7521
        %v7523 = vpop.f32.mrf.mxu0
        %v7524 = vpop.f32.mrf.mxu0
        %v7525 = vadd.f32 0.0, %v7524
        %v7526 = vpop.f32.mrf.mxu0
        %7527 = vmatprep.mubr.bf16.mxu0 0
        %7528 = vmatmul.mubr.bf16.gmra.mxu0 %v7413
        %v7529 = vpop.f32.mrf.mxu0
        %v7530 = vadd.f32 0.0, %v7529
        %v7531 = vpop.f32.mrf.mxu0
        %v7532 = vpop.f32.mrf.mxu0
        %v7533 = vadd.f32 0.0, %v7532
        %v7534 = vpop.f32.mrf.mxu0
        %7535 = vmatprep.mubr.bf16.mxu0 0
        %7536 = vmatmul.mubr.bf16.gmra.mxu0 %v7416
        %v7537 = vpop.f32.mrf.mxu0
        %v7538 = vadd.f32 0.0, %v7537
        %v7539 = vpop.f32.mrf.mxu0
        %v7540 = vpop.f32.mrf.mxu0
        %v7541 = vadd.f32 0.0, %v7540
        %v7542 = vpop.f32.mrf.mxu0
        %7543 = vmatprep.mubr.bf16.mxu0 0
        %7544 = vmatmul.mubr.bf16.gmra.mxu0 %v7419
        %v7545 = vpop.f32.mrf.mxu0
        %v7546 = vadd.f32 0.0, %v7545
        %v7547 = vpop.f32.mrf.mxu0
        %v7548 = vpop.f32.mrf.mxu0
        %v7549 = vadd.f32 0.0, %v7548
        %v7550 = vpop.f32.mrf.mxu0
        %7551 = vmatprep.mubr.bf16.mxu0 0
        %7552 = vmatmul.mubr.bf16.gmra.mxu0 %v7422
        %v7553 = vpop.f32.mrf.mxu0
        %v7554 = vadd.f32 0.0, %v7553
        %v7555 = vpop.f32.mrf.mxu0
        %v7556 = vpop.f32.mrf.mxu0
        %v7557 = vadd.f32 0.0, %v7556
        %v7558 = vpop.f32.mrf.mxu0
        %7559 = vmatprep.mubr.bf16.mxu0 0
        %7560 = vmatmul.mubr.bf16.gmra.mxu0 %v7425
        %v7561 = vpop.f32.mrf.mxu0
        %v7562 = vadd.f32 0.0, %v7561
        %v7563 = vpop.f32.mrf.mxu0
        %v7564 = vpop.f32.mrf.mxu0
        %v7565 = vadd.f32 0.0, %v7564
        %v7566 = vpop.f32.mrf.mxu0
        %7567 = vmatprep.mubr.bf16.mxu0 0
        %7568 = vmatmul.mubr.bf16.gmra.mxu0 %v7428
        %v7569 = vpop.f32.mrf.mxu0
        %v7570 = vadd.f32 0.0, %v7569
        %v7571 = vpop.f32.mrf.mxu0
        %v7572 = vpop.f32.mrf.mxu0
        %v7573 = vadd.f32 0.0, %v7572
        %v7574 = vpop.f32.mrf.mxu0
        %7575 = vmatprep.mubr.bf16.mxu0 0
        %7576 = vmatmul.mubr.bf16.gmra.mxu0 %v7431
        %v7577 = vpop.f32.mrf.mxu0
        %v7578 = vadd.f32 0.0, %v7577
        %v7579 = vpop.f32.mrf.mxu0
        %v7580 = vpop.f32.mrf.mxu0
        %v7581 = vadd.f32 0.0, %v7580
        %v7582 = vpop.f32.mrf.mxu0
        %7583 = vmatprep.mubr.bf16.mxu0 0
        %7584 = vmatmul.mubr.bf16.gmra.mxu0 %v7434
        %v7585 = vpop.f32.mrf.mxu0
        %v7586 = vadd.f32 0.0, %v7585
        %v7587 = vpop.f32.mrf.mxu0
        %v7588 = vpop.f32.mrf.mxu0
        %v7589 = vadd.f32 0.0, %v7588
        %v7590 = vpop.f32.mrf.mxu0
        %7591 = vmatprep.mubr.bf16.mxu0 0
        %7592 = vmatmul.mubr.bf16.gmra.mxu0 %v7437
        %v7593 = vpop.f32.mrf.mxu0
        %v7594 = vadd.f32 0.0, %v7593
        %v7595 = vpop.f32.mrf.mxu0
        %v7596 = vpop.f32.mrf.mxu0
        %v7597 = vadd.f32 0.0, %v7596
        %v7598 = vpop.f32.mrf.mxu0
        %7599 = vdwg.mxu0
        %v7600 = vadd.f32 %v7246, %v7474
        %v7601 = vadd.f32 %v7247, %v7477
        %v7602 = vadd.f32 %v7248, %v7482
        %v7603 = vadd.f32 %v7249, %v7485
        %v7604 = vadd.f32 %v7250, %v7490
        %v7605 = vadd.f32 %v7251, %v7493
        %v7606 = vadd.f32 %v7252, %v7498
        %v7607 = vadd.f32 %v7253, %v7501
        %v7608 = vadd.f32 %v7254, %v7506
        %v7609 = vadd.f32 %v7255, %v7509
        %v7610 = vadd.f32 %v7256, %v7514
        %v7611 = vadd.f32 %v7257, %v7517
        %v7612 = vadd.f32 %v7258, %v7522
        %v7613 = vadd.f32 %v7259, %v7525
        %v7614 = vadd.f32 %v7260, %v7530
        %v7615 = vadd.f32 %v7261, %v7533
        %v7616 = vadd.f32 %v7262, %v7538
        %v7617 = vadd.f32 %v7263, %v7541
        %v7618 = vadd.f32 %v7264, %v7546
        %v7619 = vadd.f32 %v7265, %v7549
        %v7620 = vadd.f32 %v7266, %v7554
        %v7621 = vadd.f32 %v7267, %v7557
        %v7622 = vadd.f32 %v7268, %v7562
        %v7623 = vadd.f32 %v7269, %v7565
        %v7624 = vadd.f32 %v7270, %v7570
        %v7625 = vadd.f32 %v7271, %v7573
        %v7626 = vadd.f32 %v7272, %v7578
        %v7627 = vadd.f32 %v7273, %v7581
        %v7628 = vadd.f32 %v7274, %v7586
        %v7629 = vadd.f32 %v7275, %v7589
        %v7630 = vadd.f32 %v7276, %v7594
        %v7631 = vadd.f32 %v7277, %v7597
        %v7632 = vld [vmem:[#allocation2 + $0x28] sm:$0xff]
        %v7633 = vld [vmem:[#allocation2 + $0x30] sm:$0xff]
        %v7634 = vld [vmem:[#allocation2 + $0x38] sm:$0xff]
        %v7635 = vld [vmem:[#allocation2 + $0x40] sm:$0xff]
        %v7636 = vld [vmem:[#allocation2 + $0x48] sm:$0xff]
        %v7637 = vld [vmem:[#allocation2 + $0x50] sm:$0xff]
        %v7638 = vld [vmem:[#allocation2 + $0x58] sm:$0xff]
        %v7639 = vld [vmem:[#allocation2 + $0x60] sm:$0xff]
        %v7640 = vld [vmem:[#allocation2 + $0x68] sm:$0xff]
        %v7641 = vld [vmem:[#allocation2 + $0x70] sm:$0xff]
        %v7642 = vld [vmem:[#allocation2 + $0x78] sm:$0xff]
        %v7643 = vld [vmem:[#allocation2 + $0x80] sm:$0xff]
        %v7644 = vld [vmem:[#allocation2 + $0x88] sm:$0xff]
        %v7645 = vld [vmem:[#allocation2 + $0x90] sm:$0xff]
        %v7646 = vld [vmem:[#allocation2 + $0x98] sm:$0xff]
        %v7647 = vld [vmem:[#allocation2 + $0xa0] sm:$0xff]
        %v7648 = vld [vmem:[#allocation2 + $0xa8] sm:$0xff]
        %v7649 = vld [vmem:[#allocation2 + $0xb0] sm:$0xff]
        %v7650 = vld [vmem:[#allocation2 + $0xb8] sm:$0xff]
        %v7651 = vld [vmem:[#allocation2 + $0xc0] sm:$0xff]
        %v7652 = vld [vmem:[#allocation2 + $0xc8] sm:$0xff]
        %v7653 = vld [vmem:[#allocation2 + $0xd0] sm:$0xff]
        %v7654 = vld [vmem:[#allocation2 + $0xd8] sm:$0xff]
        %v7655 = vld [vmem:[#allocation2 + $0xe0] sm:$0xff]
        %v7656 = vld [vmem:[#allocation2 + $0xe8] sm:$0xff]
        %v7657 = vld [vmem:[#allocation2 + $0xf0] sm:$0xff]
        %v7658 = vld [vmem:[#allocation2 + $0xf8] sm:$0xff]
        %v7659 = vld [vmem:[#allocation2 + $0x100] sm:$0xff]
        %v7660 = vld [vmem:[#allocation2 + $0x108] sm:$0xff]
        %v7661 = vld [vmem:[#allocation2 + $0x110] sm:$0xff]
        %v7662 = vld [vmem:[#allocation2 + $0x118] sm:$0xff]
        %v7663 = vld [vmem:[#allocation2 + $0x120] sm:$0xff]
        %v7664 = vpack.c.bf16 %v7633, %v7632
        %v7665 = vpack.c.bf16 %v7635, %v7634
        %v7666 = vpack.c.bf16 %v7637, %v7636
        %v7667 = vpack.c.bf16 %v7639, %v7638
        %v7668 = vpack.c.bf16 %v7641, %v7640
        %v7669 = vpack.c.bf16 %v7643, %v7642
        %v7670 = vpack.c.bf16 %v7645, %v7644
        %v7671 = vpack.c.bf16 %v7647, %v7646
        %v7672 = vpack.c.bf16 %v7649, %v7648
        %v7673 = vpack.c.bf16 %v7651, %v7650
        %v7674 = vpack.c.bf16 %v7653, %v7652
        %v7675 = vpack.c.bf16 %v7655, %v7654
        %v7676 = vpack.c.bf16 %v7657, %v7656
        %v7677 = vpack.c.bf16 %v7659, %v7658
        %v7678 = vpack.c.bf16 %v7661, %v7660
        %v7679 = vpack.c.bf16 %v7663, %v7662
        %s7680 = scalar_lea.vmem %s7, 224
        %v7681 = vld [vmem:[%s7680] sm:$0xf]
        %v7682 = vld [vmem:[%s7680 + $0x4] sm:$0xf]
        %v7683 = vld [vmem:[%s7680 + $0x8] sm:$0xf]
        %v7684 = vld [vmem:[%s7680 + $0xc] sm:$0xf]
        %v7685 = vld [vmem:[%s7680 + $0x10] sm:$0xf]
        %v7686 = vld [vmem:[%s7680 + $0x14] sm:$0xf]
        %v7687 = vld [vmem:[%s7680 + $0x18] sm:$0xf]
        %v7688 = vld [vmem:[%s7680 + $0x1c] sm:$0xf]
        %v7697 = vunpack.c.l.b16 %v7681
        %v7698 = vunpack.c.l.b16 %v7682
        %v7699 = vunpack.c.l.b16 %v7683
        %v7700 = vunpack.c.l.b16 %v7684
        %v7701 = vunpack.c.l.b16 %v7685
        %v7702 = vunpack.c.l.b16 %v7686
        %v7703 = vunpack.c.l.b16 %v7687
        %v7704 = vunpack.c.l.b16 %v7688
        %v7705 = vpack.c.b16 %v7698, %v7697
        %v7706 = vpack.c.b16 %v7700, %v7699
        %v7707 = vpack.c.b16 %v7702, %v7701
        %v7708 = vpack.c.b16 %v7704, %v7703
        %v7714 = vsel %vm1346, %v7664, 0
        %v7717 = vsel %vm1346, %v7665, 0
        %v7720 = vsel %vm1346, %v7666, 0
        %v7723 = vsel %vm1346, %v7667, 0
        %v7726 = vsel %vm1346, %v7668, 0
        %v7729 = vsel %vm1346, %v7669, 0
        %v7732 = vsel %vm1346, %v7670, 0
        %v7735 = vsel %vm1346, %v7671, 0
        %v7738 = vsel %vm1346, %v7672, 0
        %v7741 = vsel %vm1346, %v7673, 0
        %v7744 = vsel %vm1346, %v7674, 0
        %v7747 = vsel %vm1346, %v7675, 0
        %v7750 = vsel %vm1346, %v7676, 0
        %v7753 = vsel %vm1346, %v7677, 0
        %v7756 = vsel %vm1346, %v7678, 0
        %v7759 = vsel %vm1346, %v7679, 0
        %7761 = vmatprep.subr.bf16.mxu0 0
        %7762 = vmatpush1.bf16.msra.mxu0 0
        %7763 = vmatprep.subr.bf16.mxu0 0
        %7764 = vmatpush1.bf16.msra.mxu0 0
        %7765 = vmatprep.subr.bf16.mxu0 0
        %7766 = vmatpush1.bf16.msra.mxu0 0
        %7767 = vmatprep.subr.bf16.mxu0 0
        %7768 = vmatpush1.bf16.msra.mxu0 0
        %7769 = vmatprep.subr.bf16.mxu0 0
        %7770 = vmatpush1.bf16.msra.mxu0 %v7708
        %7771 = vmatprep.subr.bf16.mxu0 0
        %7772 = vmatpush1.bf16.msra.mxu0 %v7707
        %7773 = vmatprep.subr.bf16.mxu0 0
        %7774 = vmatpush1.bf16.msra.mxu0 %v7706
        %7775 = vmatprep.subr.bf16.mxu0 0
        %7776 = vmatpush1.bf16.msra.mxu0 %v7705
        %7777 = vmatprep.subr.bf16.mxu0 0
        %7778 = vmatpush2.bf16.msra.mxu0 0
        %7779 = vmatprep.subr.bf16.mxu0 0
        %7780 = vmatpush2.bf16.msra.mxu0 0
        %7781 = vmatprep.subr.bf16.mxu0 0
        %7782 = vmatpush2.bf16.msra.mxu0 0
        %7783 = vmatprep.subr.bf16.mxu0 0
        %7784 = vmatpush2.bf16.msra.mxu0 0
        %7785 = vmatprep.subr.bf16.mxu0 0
        %7786 = vmatpush2.bf16.msra.mxu0 0
        %7787 = vmatprep.subr.bf16.mxu0 0
        %7788 = vmatpush2.bf16.msra.mxu0 0
        %7789 = vmatprep.subr.bf16.mxu0 0
        %7790 = vmatpush2.bf16.msra.mxu0 0
        %7791 = vmatprep.subr.bf16.mxu0 0
        %7792 = vmatpush2.bf16.msra.mxu0 0
        %7793 = vmatprep.mubr.bf16.mxu0 0
        %7794 = vmatmul.mubr.bf16.gmra.mxu0 %v7714
        %v7795 = vpop.f32.mrf.mxu0
        %v7796 = vadd.f32 0.0, %v7795
        %v7797 = vpop.f32.mrf.mxu0
        %v7798 = vpop.f32.mrf.mxu0
        %v7799 = vadd.f32 0.0, %v7798
        %v7800 = vpop.f32.mrf.mxu0
        %7801 = vmatprep.mubr.bf16.mxu0 0
        %7802 = vmatmul.mubr.bf16.gmra.mxu0 %v7717
        %v7803 = vpop.f32.mrf.mxu0
        %v7804 = vadd.f32 0.0, %v7803
        %v7805 = vpop.f32.mrf.mxu0
        %v7806 = vpop.f32.mrf.mxu0
        %v7807 = vadd.f32 0.0, %v7806
        %v7808 = vpop.f32.mrf.mxu0
        %7809 = vmatprep.mubr.bf16.mxu0 0
        %7810 = vmatmul.mubr.bf16.gmra.mxu0 %v7720
        %v7811 = vpop.f32.mrf.mxu0
        %v7812 = vadd.f32 0.0, %v7811
        %v7813 = vpop.f32.mrf.mxu0
        %v7814 = vpop.f32.mrf.mxu0
        %v7815 = vadd.f32 0.0, %v7814
        %v7816 = vpop.f32.mrf.mxu0
        %7817 = vmatprep.mubr.bf16.mxu0 0
        %7818 = vmatmul.mubr.bf16.gmra.mxu0 %v7723
        %v7819 = vpop.f32.mrf.mxu0
        %v7820 = vadd.f32 0.0, %v7819
        %v7821 = vpop.f32.mrf.mxu0
        %v7822 = vpop.f32.mrf.mxu0
        %v7823 = vadd.f32 0.0, %v7822
        %v7824 = vpop.f32.mrf.mxu0
        %7825 = vmatprep.mubr.bf16.mxu0 0
        %7826 = vmatmul.mubr.bf16.gmra.mxu0 %v7726
        %v7827 = vpop.f32.mrf.mxu0
        %v7828 = vadd.f32 0.0, %v7827
        %v7829 = vpop.f32.mrf.mxu0
        %v7830 = vpop.f32.mrf.mxu0
        %v7831 = vadd.f32 0.0, %v7830
        %v7832 = vpop.f32.mrf.mxu0
        %7833 = vmatprep.mubr.bf16.mxu0 0
        %7834 = vmatmul.mubr.bf16.gmra.mxu0 %v7729
        %v7835 = vpop.f32.mrf.mxu0
        %v7836 = vadd.f32 0.0, %v7835
        %v7837 = vpop.f32.mrf.mxu0
        %v7838 = vpop.f32.mrf.mxu0
        %v7839 = vadd.f32 0.0, %v7838
        %v7840 = vpop.f32.mrf.mxu0
        %7841 = vmatprep.mubr.bf16.mxu0 0
        %7842 = vmatmul.mubr.bf16.gmra.mxu0 %v7732
        %v7843 = vpop.f32.mrf.mxu0
        %v7844 = vadd.f32 0.0, %v7843
        %v7845 = vpop.f32.mrf.mxu0
        %v7846 = vpop.f32.mrf.mxu0
        %v7847 = vadd.f32 0.0, %v7846
        %v7848 = vpop.f32.mrf.mxu0
        %7849 = vmatprep.mubr.bf16.mxu0 0
        %7850 = vmatmul.mubr.bf16.gmra.mxu0 %v7735
        %v7851 = vpop.f32.mrf.mxu0
        %v7852 = vadd.f32 0.0, %v7851
        %v7853 = vpop.f32.mrf.mxu0
        %v7854 = vpop.f32.mrf.mxu0
        %v7855 = vadd.f32 0.0, %v7854
        %v7856 = vpop.f32.mrf.mxu0
        %7857 = vmatprep.mubr.bf16.mxu0 0
        %7858 = vmatmul.mubr.bf16.gmra.mxu0 %v7738
        %v7859 = vpop.f32.mrf.mxu0
        %v7860 = vadd.f32 0.0, %v7859
        %v7861 = vpop.f32.mrf.mxu0
        %v7862 = vpop.f32.mrf.mxu0
        %v7863 = vadd.f32 0.0, %v7862
        %v7864 = vpop.f32.mrf.mxu0
        %7865 = vmatprep.mubr.bf16.mxu0 0
        %7866 = vmatmul.mubr.bf16.gmra.mxu0 %v7741
        %v7867 = vpop.f32.mrf.mxu0
        %v7868 = vadd.f32 0.0, %v7867
        %v7869 = vpop.f32.mrf.mxu0
        %v7870 = vpop.f32.mrf.mxu0
        %v7871 = vadd.f32 0.0, %v7870
        %v7872 = vpop.f32.mrf.mxu0
        %7873 = vmatprep.mubr.bf16.mxu0 0
        %7874 = vmatmul.mubr.bf16.gmra.mxu0 %v7744
        %v7875 = vpop.f32.mrf.mxu0
        %v7876 = vadd.f32 0.0, %v7875
        %v7877 = vpop.f32.mrf.mxu0
        %v7878 = vpop.f32.mrf.mxu0
        %v7879 = vadd.f32 0.0, %v7878
        %v7880 = vpop.f32.mrf.mxu0
        %7881 = vmatprep.mubr.bf16.mxu0 0
        %7882 = vmatmul.mubr.bf16.gmra.mxu0 %v7747
        %v7883 = vpop.f32.mrf.mxu0
        %v7884 = vadd.f32 0.0, %v7883
        %v7885 = vpop.f32.mrf.mxu0
        %v7886 = vpop.f32.mrf.mxu0
        %v7887 = vadd.f32 0.0, %v7886
        %v7888 = vpop.f32.mrf.mxu0
        %7889 = vmatprep.mubr.bf16.mxu0 0
        %7890 = vmatmul.mubr.bf16.gmra.mxu0 %v7750
        %v7891 = vpop.f32.mrf.mxu0
        %v7892 = vadd.f32 0.0, %v7891
        %v7893 = vpop.f32.mrf.mxu0
        %v7894 = vpop.f32.mrf.mxu0
        %v7895 = vadd.f32 0.0, %v7894
        %v7896 = vpop.f32.mrf.mxu0
        %7897 = vmatprep.mubr.bf16.mxu0 0
        %7898 = vmatmul.mubr.bf16.gmra.mxu0 %v7753
        %v7899 = vpop.f32.mrf.mxu0
        %v7900 = vadd.f32 0.0, %v7899
        %v7901 = vpop.f32.mrf.mxu0
        %v7902 = vpop.f32.mrf.mxu0
        %v7903 = vadd.f32 0.0, %v7902
        %v7904 = vpop.f32.mrf.mxu0
        %7905 = vmatprep.mubr.bf16.mxu0 0
        %7906 = vmatmul.mubr.bf16.gmra.mxu0 %v7756
        %v7907 = vpop.f32.mrf.mxu0
        %v7908 = vadd.f32 0.0, %v7907
        %v7909 = vpop.f32.mrf.mxu0
        %v7910 = vpop.f32.mrf.mxu0
        %v7911 = vadd.f32 0.0, %v7910
        %v7912 = vpop.f32.mrf.mxu0
        %7913 = vmatprep.mubr.bf16.mxu0 0
        %7914 = vmatmul.mubr.bf16.gmra.mxu0 %v7759
        %v7915 = vpop.f32.mrf.mxu0
        %v7916 = vadd.f32 0.0, %v7915
        %v7917 = vpop.f32.mrf.mxu0
        %v7918 = vpop.f32.mrf.mxu0
        %v7919 = vadd.f32 0.0, %v7918
        %v7920 = vpop.f32.mrf.mxu0
        %7921 = vdwg.mxu0
        %v7922 = vadd.f32 %v7600, %v7796
        %v7923 = vadd.f32 %v7601, %v7799
        %v7924 = vadd.f32 %v7602, %v7804
        %v7925 = vadd.f32 %v7603, %v7807
        %v7926 = vadd.f32 %v7604, %v7812
        %v7927 = vadd.f32 %v7605, %v7815
        %v7928 = vadd.f32 %v7606, %v7820
        %v7929 = vadd.f32 %v7607, %v7823
        %v7930 = vadd.f32 %v7608, %v7828
        %v7931 = vadd.f32 %v7609, %v7831
        %v7932 = vadd.f32 %v7610, %v7836
        %v7933 = vadd.f32 %v7611, %v7839
        %v7934 = vadd.f32 %v7612, %v7844
        %v7935 = vadd.f32 %v7613, %v7847
        %v7936 = vadd.f32 %v7614, %v7852
        %v7937 = vadd.f32 %v7615, %v7855
        %v7938 = vadd.f32 %v7616, %v7860
        %v7939 = vadd.f32 %v7617, %v7863
        %v7940 = vadd.f32 %v7618, %v7868
        %v7941 = vadd.f32 %v7619, %v7871
        %v7942 = vadd.f32 %v7620, %v7876
        %v7943 = vadd.f32 %v7621, %v7879
        %v7944 = vadd.f32 %v7622, %v7884
        %v7945 = vadd.f32 %v7623, %v7887
        %v7946 = vadd.f32 %v7624, %v7892
        %v7947 = vadd.f32 %v7625, %v7895
        %v7948 = vadd.f32 %v7626, %v7900
        %v7949 = vadd.f32 %v7627, %v7903
        %v7950 = vadd.f32 %v7628, %v7908
        %v7951 = vadd.f32 %v7629, %v7911
        %v7952 = vadd.f32 %v7630, %v7916
        %v7953 = vadd.f32 %v7631, %v7919
        %v7954 = vld [vmem:[#allocation2 + $0x29] sm:$0xff]
        %v7955 = vld [vmem:[#allocation2 + $0x31] sm:$0xff]
        %v7956 = vld [vmem:[#allocation2 + $0x39] sm:$0xff]
        %v7957 = vld [vmem:[#allocation2 + $0x41] sm:$0xff]
        %v7958 = vld [vmem:[#allocation2 + $0x49] sm:$0xff]
        %v7959 = vld [vmem:[#allocation2 + $0x51] sm:$0xff]
        %v7960 = vld [vmem:[#allocation2 + $0x59] sm:$0xff]
        %v7961 = vld [vmem:[#allocation2 + $0x61] sm:$0xff]
        %v7962 = vld [vmem:[#allocation2 + $0x69] sm:$0xff]
        %v7963 = vld [vmem:[#allocation2 + $0x71] sm:$0xff]
        %v7964 = vld [vmem:[#allocation2 + $0x79] sm:$0xff]
        %v7965 = vld [vmem:[#allocation2 + $0x81] sm:$0xff]
        %v7966 = vld [vmem:[#allocation2 + $0x89] sm:$0xff]
        %v7967 = vld [vmem:[#allocation2 + $0x91] sm:$0xff]
        %v7968 = vld [vmem:[#allocation2 + $0x99] sm:$0xff]
        %v7969 = vld [vmem:[#allocation2 + $0xa1] sm:$0xff]
        %v7970 = vld [vmem:[#allocation2 + $0xa9] sm:$0xff]
        %v7971 = vld [vmem:[#allocation2 + $0xb1] sm:$0xff]
        %v7972 = vld [vmem:[#allocation2 + $0xb9] sm:$0xff]
        %v7973 = vld [vmem:[#allocation2 + $0xc1] sm:$0xff]
        %v7974 = vld [vmem:[#allocation2 + $0xc9] sm:$0xff]
        %v7975 = vld [vmem:[#allocation2 + $0xd1] sm:$0xff]
        %v7976 = vld [vmem:[#allocation2 + $0xd9] sm:$0xff]
        %v7977 = vld [vmem:[#allocation2 + $0xe1] sm:$0xff]
        %v7978 = vld [vmem:[#allocation2 + $0xe9] sm:$0xff]
        %v7979 = vld [vmem:[#allocation2 + $0xf1] sm:$0xff]
        %v7980 = vld [vmem:[#allocation2 + $0xf9] sm:$0xff]
        %v7981 = vld [vmem:[#allocation2 + $0x101] sm:$0xff]
        %v7982 = vld [vmem:[#allocation2 + $0x109] sm:$0xff]
        %v7983 = vld [vmem:[#allocation2 + $0x111] sm:$0xff]
        %v7984 = vld [vmem:[#allocation2 + $0x119] sm:$0xff]
        %v7985 = vld [vmem:[#allocation2 + $0x121] sm:$0xff]
        %v7986 = vsel %vm2638, %v7954, 0.0
        %v7987 = vsel %vm2639, %v7955, 0.0
        %v7988 = vsel %vm2640, %v7956, 0.0
        %v7989 = vsel %vm2641, %v7957, 0.0
        %v7990 = vsel %vm2642, %v7958, 0.0
        %v7991 = vsel %vm2643, %v7959, 0.0
        %v7992 = vsel %vm2644, %v7960, 0.0
        %v7993 = vsel %vm2645, %v7961, 0.0
        %v7994 = vsel %vm2646, %v7962, 0.0
        %v7995 = vsel %vm2647, %v7963, 0.0
        %v7996 = vsel %vm2648, %v7964, 0.0
        %v7997 = vsel %vm2649, %v7965, 0.0
        %v7998 = vsel %vm2650, %v7966, 0.0
        %v7999 = vsel %vm2651, %v7967, 0.0
        %v8000 = vsel %vm2652, %v7968, 0.0
        %v8001 = vsel %vm2653, %v7969, 0.0
        %v8002 = vsel %vm2654, %v7970, 0.0
        %v8003 = vsel %vm2655, %v7971, 0.0
        %v8004 = vsel %vm2656, %v7972, 0.0
        %v8005 = vsel %vm2657, %v7973, 0.0
        %v8006 = vsel %vm2658, %v7974, 0.0
        %v8007 = vsel %vm2659, %v7975, 0.0
        %v8008 = vsel %vm2660, %v7976, 0.0
        %v8009 = vsel %vm2661, %v7977, 0.0
        %v8010 = vsel %vm2662, %v7978, 0.0
        %v8011 = vsel %vm2663, %v7979, 0.0
        %v8012 = vsel %vm2664, %v7980, 0.0
        %v8013 = vsel %vm2665, %v7981, 0.0
        %v8014 = vsel %vm2666, %v7982, 0.0
        %v8015 = vsel %vm2667, %v7983, 0.0
        %v8016 = vsel %vm2668, %v7984, 0.0
        %v8017 = vsel %vm2669, %v7985, 0.0
        %v8018 = vpack.c.bf16 %v7987, %v7986
        %v8019 = vpack.c.bf16 %v7989, %v7988
        %v8020 = vpack.c.bf16 %v7991, %v7990
        %v8021 = vpack.c.bf16 %v7993, %v7992
        %v8022 = vpack.c.bf16 %v7995, %v7994
        %v8023 = vpack.c.bf16 %v7997, %v7996
        %v8024 = vpack.c.bf16 %v7999, %v7998
        %v8025 = vpack.c.bf16 %v8001, %v8000
        %v8026 = vpack.c.bf16 %v8003, %v8002
        %v8027 = vpack.c.bf16 %v8005, %v8004
        %v8028 = vpack.c.bf16 %v8007, %v8006
        %v8029 = vpack.c.bf16 %v8009, %v8008
        %v8030 = vpack.c.bf16 %v8011, %v8010
        %v8031 = vpack.c.bf16 %v8013, %v8012
        %v8032 = vpack.c.bf16 %v8015, %v8014
        %v8033 = vpack.c.bf16 %v8017, %v8016
        %s8034 = scalar_lea.vmem %s7, 256
        %v8035 = vld [vmem:[%s8034] sm:$0xf]
        %v8036 = vld [vmem:[%s8034 + $0x4] sm:$0xf]
        %v8037 = vld [vmem:[%s8034 + $0x8] sm:$0xf]
        %v8038 = vld [vmem:[%s8034 + $0xc] sm:$0xf]
        %v8039 = vld [vmem:[%s8034 + $0x10] sm:$0xf]
        %v8040 = vld [vmem:[%s8034 + $0x14] sm:$0xf]
        %v8041 = vld [vmem:[%s8034 + $0x18] sm:$0xf]
        %v8042 = vld [vmem:[%s8034 + $0x1c] sm:$0xf]
        %v8051 = vunpack.c.l.b16 %v8035
        %v8052 = vunpack.c.l.b16 %v8036
        %v8053 = vunpack.c.l.b16 %v8037
        %v8054 = vunpack.c.l.b16 %v8038
        %v8055 = vunpack.c.l.b16 %v8039
        %v8056 = vunpack.c.l.b16 %v8040
        %v8057 = vunpack.c.l.b16 %v8041
        %v8058 = vunpack.c.l.b16 %v8042
        %v8059 = vpack.c.b16 %v8052, %v8051
        %v8060 = vpack.c.b16 %v8054, %v8053
        %v8061 = vpack.c.b16 %v8056, %v8055
        %v8062 = vpack.c.b16 %v8058, %v8057
        %v8068 = vsel %vm1346, %v8018, 0
        %v8071 = vsel %vm1346, %v8019, 0
        %v8074 = vsel %vm1346, %v8020, 0
        %v8077 = vsel %vm1346, %v8021, 0
        %v8080 = vsel %vm1346, %v8022, 0
        %v8083 = vsel %vm1346, %v8023, 0
        %v8086 = vsel %vm1346, %v8024, 0
        %v8089 = vsel %vm1346, %v8025, 0
        %v8092 = vsel %vm1346, %v8026, 0
        %v8095 = vsel %vm1346, %v8027, 0
        %v8098 = vsel %vm1346, %v8028, 0
        %v8101 = vsel %vm1346, %v8029, 0
        %v8104 = vsel %vm1346, %v8030, 0
        %v8107 = vsel %vm1346, %v8031, 0
        %v8110 = vsel %vm1346, %v8032, 0
        %v8113 = vsel %vm1346, %v8033, 0
        %8115 = vmatprep.subr.bf16.mxu0 0
        %8116 = vmatpush1.bf16.msra.mxu0 0
        %8117 = vmatprep.subr.bf16.mxu0 0
        %8118 = vmatpush1.bf16.msra.mxu0 0
        %8119 = vmatprep.subr.bf16.mxu0 0
        %8120 = vmatpush1.bf16.msra.mxu0 0
        %8121 = vmatprep.subr.bf16.mxu0 0
        %8122 = vmatpush1.bf16.msra.mxu0 0
        %8123 = vmatprep.subr.bf16.mxu0 0
        %8124 = vmatpush1.bf16.msra.mxu0 %v8062
        %8125 = vmatprep.subr.bf16.mxu0 0
        %8126 = vmatpush1.bf16.msra.mxu0 %v8061
        %8127 = vmatprep.subr.bf16.mxu0 0
        %8128 = vmatpush1.bf16.msra.mxu0 %v8060
        %8129 = vmatprep.subr.bf16.mxu0 0
        %8130 = vmatpush1.bf16.msra.mxu0 %v8059
        %8131 = vmatprep.subr.bf16.mxu0 0
        %8132 = vmatpush2.bf16.msra.mxu0 0
        %8133 = vmatprep.subr.bf16.mxu0 0
        %8134 = vmatpush2.bf16.msra.mxu0 0
        %8135 = vmatprep.subr.bf16.mxu0 0
        %8136 = vmatpush2.bf16.msra.mxu0 0
        %8137 = vmatprep.subr.bf16.mxu0 0
        %8138 = vmatpush2.bf16.msra.mxu0 0
        %8139 = vmatprep.subr.bf16.mxu0 0
        %8140 = vmatpush2.bf16.msra.mxu0 0
        %8141 = vmatprep.subr.bf16.mxu0 0
        %8142 = vmatpush2.bf16.msra.mxu0 0
        %8143 = vmatprep.subr.bf16.mxu0 0
        %8144 = vmatpush2.bf16.msra.mxu0 0
        %8145 = vmatprep.subr.bf16.mxu0 0
        %8146 = vmatpush2.bf16.msra.mxu0 0
        %8147 = vmatprep.mubr.bf16.mxu0 0
        %8148 = vmatmul.mubr.bf16.gmra.mxu0 %v8068
        %v8149 = vpop.f32.mrf.mxu0
        %v8150 = vadd.f32 0.0, %v8149
        %v8151 = vpop.f32.mrf.mxu0
        %v8152 = vpop.f32.mrf.mxu0
        %v8153 = vadd.f32 0.0, %v8152
        %v8154 = vpop.f32.mrf.mxu0
        %8155 = vmatprep.mubr.bf16.mxu0 0
        %8156 = vmatmul.mubr.bf16.gmra.mxu0 %v8071
        %v8157 = vpop.f32.mrf.mxu0
        %v8158 = vadd.f32 0.0, %v8157
        %v8159 = vpop.f32.mrf.mxu0
        %v8160 = vpop.f32.mrf.mxu0
        %v8161 = vadd.f32 0.0, %v8160
        %v8162 = vpop.f32.mrf.mxu0
        %8163 = vmatprep.mubr.bf16.mxu0 0
        %8164 = vmatmul.mubr.bf16.gmra.mxu0 %v8074
        %v8165 = vpop.f32.mrf.mxu0
        %v8166 = vadd.f32 0.0, %v8165
        %v8167 = vpop.f32.mrf.mxu0
        %v8168 = vpop.f32.mrf.mxu0
        %v8169 = vadd.f32 0.0, %v8168
        %v8170 = vpop.f32.mrf.mxu0
        %8171 = vmatprep.mubr.bf16.mxu0 0
        %8172 = vmatmul.mubr.bf16.gmra.mxu0 %v8077
        %v8173 = vpop.f32.mrf.mxu0
        %v8174 = vadd.f32 0.0, %v8173
        %v8175 = vpop.f32.mrf.mxu0
        %v8176 = vpop.f32.mrf.mxu0
        %v8177 = vadd.f32 0.0, %v8176
        %v8178 = vpop.f32.mrf.mxu0
        %8179 = vmatprep.mubr.bf16.mxu0 0
        %8180 = vmatmul.mubr.bf16.gmra.mxu0 %v8080
        %v8181 = vpop.f32.mrf.mxu0
        %v8182 = vadd.f32 0.0, %v8181
        %v8183 = vpop.f32.mrf.mxu0
        %v8184 = vpop.f32.mrf.mxu0
        %v8185 = vadd.f32 0.0, %v8184
        %v8186 = vpop.f32.mrf.mxu0
        %8187 = vmatprep.mubr.bf16.mxu0 0
        %8188 = vmatmul.mubr.bf16.gmra.mxu0 %v8083
        %v8189 = vpop.f32.mrf.mxu0
        %v8190 = vadd.f32 0.0, %v8189
        %v8191 = vpop.f32.mrf.mxu0
        %v8192 = vpop.f32.mrf.mxu0
        %v8193 = vadd.f32 0.0, %v8192
        %v8194 = vpop.f32.mrf.mxu0
        %8195 = vmatprep.mubr.bf16.mxu0 0
        %8196 = vmatmul.mubr.bf16.gmra.mxu0 %v8086
        %v8197 = vpop.f32.mrf.mxu0
        %v8198 = vadd.f32 0.0, %v8197
        %v8199 = vpop.f32.mrf.mxu0
        %v8200 = vpop.f32.mrf.mxu0
        %v8201 = vadd.f32 0.0, %v8200
        %v8202 = vpop.f32.mrf.mxu0
        %8203 = vmatprep.mubr.bf16.mxu0 0
        %8204 = vmatmul.mubr.bf16.gmra.mxu0 %v8089
        %v8205 = vpop.f32.mrf.mxu0
        %v8206 = vadd.f32 0.0, %v8205
        %v8207 = vpop.f32.mrf.mxu0
        %v8208 = vpop.f32.mrf.mxu0
        %v8209 = vadd.f32 0.0, %v8208
        %v8210 = vpop.f32.mrf.mxu0
        %8211 = vmatprep.mubr.bf16.mxu0 0
        %8212 = vmatmul.mubr.bf16.gmra.mxu0 %v8092
        %v8213 = vpop.f32.mrf.mxu0
        %v8214 = vadd.f32 0.0, %v8213
        %v8215 = vpop.f32.mrf.mxu0
        %v8216 = vpop.f32.mrf.mxu0
        %v8217 = vadd.f32 0.0, %v8216
        %v8218 = vpop.f32.mrf.mxu0
        %8219 = vmatprep.mubr.bf16.mxu0 0
        %8220 = vmatmul.mubr.bf16.gmra.mxu0 %v8095
        %v8221 = vpop.f32.mrf.mxu0
        %v8222 = vadd.f32 0.0, %v8221
        %v8223 = vpop.f32.mrf.mxu0
        %v8224 = vpop.f32.mrf.mxu0
        %v8225 = vadd.f32 0.0, %v8224
        %v8226 = vpop.f32.mrf.mxu0
        %8227 = vmatprep.mubr.bf16.mxu0 0
        %8228 = vmatmul.mubr.bf16.gmra.mxu0 %v8098
        %v8229 = vpop.f32.mrf.mxu0
        %v8230 = vadd.f32 0.0, %v8229
        %v8231 = vpop.f32.mrf.mxu0
        %v8232 = vpop.f32.mrf.mxu0
        %v8233 = vadd.f32 0.0, %v8232
        %v8234 = vpop.f32.mrf.mxu0
        %8235 = vmatprep.mubr.bf16.mxu0 0
        %8236 = vmatmul.mubr.bf16.gmra.mxu0 %v8101
        %v8237 = vpop.f32.mrf.mxu0
        %v8238 = vadd.f32 0.0, %v8237
        %v8239 = vpop.f32.mrf.mxu0
        %v8240 = vpop.f32.mrf.mxu0
        %v8241 = vadd.f32 0.0, %v8240
        %v8242 = vpop.f32.mrf.mxu0
        %8243 = vmatprep.mubr.bf16.mxu0 0
        %8244 = vmatmul.mubr.bf16.gmra.mxu0 %v8104
        %v8245 = vpop.f32.mrf.mxu0
        %v8246 = vadd.f32 0.0, %v8245
        %v8247 = vpop.f32.mrf.mxu0
        %v8248 = vpop.f32.mrf.mxu0
        %v8249 = vadd.f32 0.0, %v8248
        %v8250 = vpop.f32.mrf.mxu0
        %8251 = vmatprep.mubr.bf16.mxu0 0
        %8252 = vmatmul.mubr.bf16.gmra.mxu0 %v8107
        %v8253 = vpop.f32.mrf.mxu0
        %v8254 = vadd.f32 0.0, %v8253
        %v8255 = vpop.f32.mrf.mxu0
        %v8256 = vpop.f32.mrf.mxu0
        %v8257 = vadd.f32 0.0, %v8256
        %v8258 = vpop.f32.mrf.mxu0
        %8259 = vmatprep.mubr.bf16.mxu0 0
        %8260 = vmatmul.mubr.bf16.gmra.mxu0 %v8110
        %v8261 = vpop.f32.mrf.mxu0
        %v8262 = vadd.f32 0.0, %v8261
        %v8263 = vpop.f32.mrf.mxu0
        %v8264 = vpop.f32.mrf.mxu0
        %v8265 = vadd.f32 0.0, %v8264
        %v8266 = vpop.f32.mrf.mxu0
        %8267 = vmatprep.mubr.bf16.mxu0 0
        %8268 = vmatmul.mubr.bf16.gmra.mxu0 %v8113
        %v8269 = vpop.f32.mrf.mxu0
        %v8270 = vadd.f32 0.0, %v8269
        %v8271 = vpop.f32.mrf.mxu0
        %v8272 = vpop.f32.mrf.mxu0
        %v8273 = vadd.f32 0.0, %v8272
        %v8274 = vpop.f32.mrf.mxu0
        %8275 = vdwg.mxu0
        %v8276 = vadd.f32 %v7922, %v8150
        %v8277 = vadd.f32 %v7923, %v8153
        %v8278 = vadd.f32 %v7924, %v8158
        %v8279 = vadd.f32 %v7925, %v8161
        %v8280 = vadd.f32 %v7926, %v8166
        %v8281 = vadd.f32 %v7927, %v8169
        %v8282 = vadd.f32 %v7928, %v8174
        %v8283 = vadd.f32 %v7929, %v8177
        %v8284 = vadd.f32 %v7930, %v8182
        %v8285 = vadd.f32 %v7931, %v8185
        %v8286 = vadd.f32 %v7932, %v8190
        %v8287 = vadd.f32 %v7933, %v8193
        %v8288 = vadd.f32 %v7934, %v8198
        %v8289 = vadd.f32 %v7935, %v8201
        %v8290 = vadd.f32 %v7936, %v8206
        %v8291 = vadd.f32 %v7937, %v8209
        %v8292 = vadd.f32 %v7938, %v8214
        %v8293 = vadd.f32 %v7939, %v8217
        %v8294 = vadd.f32 %v7940, %v8222
        %v8295 = vadd.f32 %v7941, %v8225
        %v8296 = vadd.f32 %v7942, %v8230
        %v8297 = vadd.f32 %v7943, %v8233
        %v8298 = vadd.f32 %v7944, %v8238
        %v8299 = vadd.f32 %v7945, %v8241
        %v8300 = vadd.f32 %v7946, %v8246
        %v8301 = vadd.f32 %v7947, %v8249
        %v8302 = vadd.f32 %v7948, %v8254
        %v8303 = vadd.f32 %v7949, %v8257
        %v8304 = vadd.f32 %v7950, %v8262
        %v8305 = vadd.f32 %v7951, %v8265
        %v8306 = vadd.f32 %v7952, %v8270
        %v8307 = vadd.f32 %v7953, %v8273
        %v8309 = vlaneseq
        %v8310 = vshrl.u32 %v8309, 7
        %v8311 = vsub.s32 0, %v8310
        %v8312 = vrot.slane %v5282, %v8311
        %v8314 = vadd.f32 %v8276, %v8312
        %v8315 = vadd.f32 %v8277, %v8312
        %v8316 = vadd.f32 %v8278, %v8312
        %v8317 = vadd.f32 %v8279, %v8312
        %v8318 = vadd.f32 %v8280, %v8312
        %v8319 = vadd.f32 %v8281, %v8312
        %v8320 = vadd.f32 %v8282, %v8312
        %v8321 = vadd.f32 %v8283, %v8312
        %v8322 = vadd.f32 %v8284, %v8312
        %v8323 = vadd.f32 %v8285, %v8312
        %v8324 = vadd.f32 %v8286, %v8312
        %v8325 = vadd.f32 %v8287, %v8312
        %v8326 = vadd.f32 %v8288, %v8312
        %v8327 = vadd.f32 %v8289, %v8312
        %v8328 = vadd.f32 %v8290, %v8312
        %v8329 = vadd.f32 %v8291, %v8312
        %v8330 = vadd.f32 %v8292, %v8312
        %v8331 = vadd.f32 %v8293, %v8312
        %v8332 = vadd.f32 %v8294, %v8312
        %v8333 = vadd.f32 %v8295, %v8312
        %v8334 = vadd.f32 %v8296, %v8312
        %v8335 = vadd.f32 %v8297, %v8312
        %v8336 = vadd.f32 %v8298, %v8312
        %v8337 = vadd.f32 %v8299, %v8312
        %v8338 = vadd.f32 %v8300, %v8312
        %v8339 = vadd.f32 %v8301, %v8312
        %v8340 = vadd.f32 %v8302, %v8312
        %v8341 = vadd.f32 %v8303, %v8312
        %v8342 = vadd.f32 %v8304, %v8312
        %v8343 = vadd.f32 %v8305, %v8312
        %v8344 = vadd.f32 %v8306, %v8312
        %v8345 = vadd.f32 %v8307, %v8312
        %v8346 = vxor.u32 %v8314, 2147483648
        %v8347 = vxor.u32 %v8315, 2147483648
        %v8348 = vxor.u32 %v8316, 2147483648
        %v8349 = vxor.u32 %v8317, 2147483648
        %v8350 = vxor.u32 %v8318, 2147483648
        %v8351 = vxor.u32 %v8319, 2147483648
        %v8352 = vxor.u32 %v8320, 2147483648
        %v8353 = vxor.u32 %v8321, 2147483648
        %v8354 = vxor.u32 %v8322, 2147483648
        %v8355 = vxor.u32 %v8323, 2147483648
        %v8356 = vxor.u32 %v8324, 2147483648
        %v8357 = vxor.u32 %v8325, 2147483648
        %v8358 = vxor.u32 %v8326, 2147483648
        %v8359 = vxor.u32 %v8327, 2147483648
        %v8360 = vxor.u32 %v8328, 2147483648
        %v8361 = vxor.u32 %v8329, 2147483648
        %v8362 = vxor.u32 %v8330, 2147483648
        %v8363 = vxor.u32 %v8331, 2147483648
        %v8364 = vxor.u32 %v8332, 2147483648
        %v8365 = vxor.u32 %v8333, 2147483648
        %v8366 = vxor.u32 %v8334, 2147483648
        %v8367 = vxor.u32 %v8335, 2147483648
        %v8368 = vxor.u32 %v8336, 2147483648
        %v8369 = vxor.u32 %v8337, 2147483648
        %v8370 = vxor.u32 %v8338, 2147483648
        %v8371 = vxor.u32 %v8339, 2147483648
        %v8372 = vxor.u32 %v8340, 2147483648
        %v8373 = vxor.u32 %v8341, 2147483648
        %v8374 = vxor.u32 %v8342, 2147483648
        %v8375 = vxor.u32 %v8343, 2147483648
        %v8376 = vxor.u32 %v8344, 2147483648
        %v8377 = vxor.u32 %v8345, 2147483648
        %v8378 = vmul.f32 %v8346, 1.442695
        %v8379 = vpow.pop %v8378
        %v8380 = vmul.f32 %v8347, 1.442695
        %v8381 = vpow.pop %v8380
        %v8382 = vmul.f32 %v8348, 1.442695
        %v8383 = vpow.pop %v8382
        %v8384 = vmul.f32 %v8349, 1.442695
        %v8385 = vpow.pop %v8384
        %v8386 = vmul.f32 %v8350, 1.442695
        %v8387 = vpow.pop %v8386
        %v8388 = vmul.f32 %v8351, 1.442695
        %v8389 = vpow.pop %v8388
        %v8390 = vmul.f32 %v8352, 1.442695
        %v8391 = vpow.pop %v8390
        %v8392 = vmul.f32 %v8353, 1.442695
        %v8393 = vpow.pop %v8392
        %v8394 = vmul.f32 %v8354, 1.442695
        %v8395 = vpow.pop %v8394
        %v8396 = vmul.f32 %v8355, 1.442695
        %v8397 = vpow.pop %v8396
        %v8398 = vmul.f32 %v8356, 1.442695
        %v8399 = vpow.pop %v8398
        %v8400 = vmul.f32 %v8357, 1.442695
        %v8401 = vpow.pop %v8400
        %v8402 = vmul.f32 %v8358, 1.442695
        %v8403 = vpow.pop %v8402
        %v8404 = vmul.f32 %v8359, 1.442695
        %v8405 = vpow.pop %v8404
        %v8406 = vmul.f32 %v8360, 1.442695
        %v8407 = vpow.pop %v8406
        %v8408 = vmul.f32 %v8361, 1.442695
        %v8409 = vpow.pop %v8408
        %v8410 = vmul.f32 %v8362, 1.442695
        %v8411 = vpow.pop %v8410
        %v8412 = vmul.f32 %v8363, 1.442695
        %v8413 = vpow.pop %v8412
        %v8414 = vmul.f32 %v8364, 1.442695
        %v8415 = vpow.pop %v8414
        %v8416 = vmul.f32 %v8365, 1.442695
        %v8417 = vpow.pop %v8416
        %v8418 = vmul.f32 %v8366, 1.442695
        %v8419 = vpow.pop %v8418
        %v8420 = vmul.f32 %v8367, 1.442695
        %v8421 = vpow.pop %v8420
        %v8422 = vmul.f32 %v8368, 1.442695
        %v8423 = vpow.pop %v8422
        %v8424 = vmul.f32 %v8369, 1.442695
        %v8425 = vpow.pop %v8424
        %v8426 = vmul.f32 %v8370, 1.442695
        %v8427 = vpow.pop %v8426
        %v8428 = vmul.f32 %v8371, 1.442695
        %v8429 = vpow.pop %v8428
        %v8430 = vmul.f32 %v8372, 1.442695
        %v8431 = vpow.pop %v8430
        %v8432 = vmul.f32 %v8373, 1.442695
        %v8433 = vpow.pop %v8432
        %v8434 = vmul.f32 %v8374, 1.442695
        %v8435 = vpow.pop %v8434
        %v8436 = vmul.f32 %v8375, 1.442695
        %v8437 = vpow.pop %v8436
        %v8438 = vmul.f32 %v8376, 1.442695
        %v8439 = vpow.pop %v8438
        %v8440 = vmul.f32 %v8377, 1.442695
        %v8441 = vpow.pop %v8440
        %v8442 = vadd.f32 %v8379, 1.0
        %v8443 = vadd.f32 %v8381, 1.0
        %v8444 = vadd.f32 %v8383, 1.0
        %v8445 = vadd.f32 %v8385, 1.0
        %v8446 = vadd.f32 %v8387, 1.0
        %v8447 = vadd.f32 %v8389, 1.0
        %v8448 = vadd.f32 %v8391, 1.0
        %v8449 = vadd.f32 %v8393, 1.0
        %v8450 = vadd.f32 %v8395, 1.0
        %v8451 = vadd.f32 %v8397, 1.0
        %v8452 = vadd.f32 %v8399, 1.0
        %v8453 = vadd.f32 %v8401, 1.0
        %v8454 = vadd.f32 %v8403, 1.0
        %v8455 = vadd.f32 %v8405, 1.0
        %v8456 = vadd.f32 %v8407, 1.0
        %v8457 = vadd.f32 %v8409, 1.0
        %v8458 = vadd.f32 %v8411, 1.0
        %v8459 = vadd.f32 %v8413, 1.0
        %v8460 = vadd.f32 %v8415, 1.0
        %v8461 = vadd.f32 %v8417, 1.0
        %v8462 = vadd.f32 %v8419, 1.0
        %v8463 = vadd.f32 %v8421, 1.0
        %v8464 = vadd.f32 %v8423, 1.0
        %v8465 = vadd.f32 %v8425, 1.0
        %v8466 = vadd.f32 %v8427, 1.0
        %v8467 = vadd.f32 %v8429, 1.0
        %v8468 = vadd.f32 %v8431, 1.0
        %v8469 = vadd.f32 %v8433, 1.0
        %v8470 = vadd.f32 %v8435, 1.0
        %v8471 = vadd.f32 %v8437, 1.0
        %v8472 = vadd.f32 %v8439, 1.0
        %v8473 = vadd.f32 %v8441, 1.0
        %v8474 = vrcp.pop %v8442
        %v8475 = vmul.f32 1.0, %v8474
        %v8476 = vrcp.pop %v8443
        %v8477 = vmul.f32 1.0, %v8476
        %v8478 = vrcp.pop %v8444
        %v8479 = vmul.f32 1.0, %v8478
        %v8480 = vrcp.pop %v8445
        %v8481 = vmul.f32 1.0, %v8480
        %v8482 = vrcp.pop %v8446
        %v8483 = vmul.f32 1.0, %v8482
        %v8484 = vrcp.pop %v8447
        %v8485 = vmul.f32 1.0, %v8484
        %v8486 = vrcp.pop %v8448
        %v8487 = vmul.f32 1.0, %v8486
        %v8488 = vrcp.pop %v8449
        %v8489 = vmul.f32 1.0, %v8488
        %v8490 = vrcp.pop %v8450
        %v8491 = vmul.f32 1.0, %v8490
        %v8492 = vrcp.pop %v8451
        %v8493 = vmul.f32 1.0, %v8492
        %v8494 = vrcp.pop %v8452
        %v8495 = vmul.f32 1.0, %v8494
        %v8496 = vrcp.pop %v8453
        %v8497 = vmul.f32 1.0, %v8496
        %v8498 = vrcp.pop %v8454
        %v8499 = vmul.f32 1.0, %v8498
        %v8500 = vrcp.pop %v8455
        %v8501 = vmul.f32 1.0, %v8500
        %v8502 = vrcp.pop %v8456
        %v8503 = vmul.f32 1.0, %v8502
        %v8504 = vrcp.pop %v8457
        %v8505 = vmul.f32 1.0, %v8504
        %v8506 = vrcp.pop %v8458
        %v8507 = vmul.f32 1.0, %v8506
        %v8508 = vrcp.pop %v8459
        %v8509 = vmul.f32 1.0, %v8508
        %v8510 = vrcp.pop %v8460
        %v8511 = vmul.f32 1.0, %v8510
        %v8512 = vrcp.pop %v8461
        %v8513 = vmul.f32 1.0, %v8512
        %v8514 = vrcp.pop %v8462
        %v8515 = vmul.f32 1.0, %v8514
        %v8516 = vrcp.pop %v8463
        %v8517 = vmul.f32 1.0, %v8516
        %v8518 = vrcp.pop %v8464
        %v8519 = vmul.f32 1.0, %v8518
        %v8520 = vrcp.pop %v8465
        %v8521 = vmul.f32 1.0, %v8520
        %v8522 = vrcp.pop %v8466
        %v8523 = vmul.f32 1.0, %v8522
        %v8524 = vrcp.pop %v8467
        %v8525 = vmul.f32 1.0, %v8524
        %v8526 = vrcp.pop %v8468
        %v8527 = vmul.f32 1.0, %v8526
        %v8528 = vrcp.pop %v8469
        %v8529 = vmul.f32 1.0, %v8528
        %v8530 = vrcp.pop %v8470
        %v8531 = vmul.f32 1.0, %v8530
        %v8532 = vrcp.pop %v8471
        %v8533 = vmul.f32 1.0, %v8532
        %v8534 = vrcp.pop %v8472
        %v8535 = vmul.f32 1.0, %v8534
        %v8536 = vrcp.pop %v8473
        %v8537 = vmul.f32 1.0, %v8536
        %v8538 = vmul.f32 %v8314, %v8475
        %v8539 = vmul.f32 %v8315, %v8477
        %v8540 = vmul.f32 %v8316, %v8479
        %v8541 = vmul.f32 %v8317, %v8481
        %v8542 = vmul.f32 %v8318, %v8483
        %v8543 = vmul.f32 %v8319, %v8485
        %v8544 = vmul.f32 %v8320, %v8487
        %v8545 = vmul.f32 %v8321, %v8489
        %v8546 = vmul.f32 %v8322, %v8491
        %v8547 = vmul.f32 %v8323, %v8493
        %v8548 = vmul.f32 %v8324, %v8495
        %v8549 = vmul.f32 %v8325, %v8497
        %v8550 = vmul.f32 %v8326, %v8499
        %v8551 = vmul.f32 %v8327, %v8501
        %v8552 = vmul.f32 %v8328, %v8503
        %v8553 = vmul.f32 %v8329, %v8505
        %v8554 = vmul.f32 %v8330, %v8507
        %v8555 = vmul.f32 %v8331, %v8509
        %v8556 = vmul.f32 %v8332, %v8511
        %v8557 = vmul.f32 %v8333, %v8513
        %v8558 = vmul.f32 %v8334, %v8515
        %v8559 = vmul.f32 %v8335, %v8517
        %v8560 = vmul.f32 %v8336, %v8519
        %v8561 = vmul.f32 %v8337, %v8521
        %v8562 = vmul.f32 %v8338, %v8523
        %v8563 = vmul.f32 %v8339, %v8525
        %v8564 = vmul.f32 %v8340, %v8527
        %v8565 = vmul.f32 %v8341, %v8529
        %v8566 = vmul.f32 %v8342, %v8531
        %v8567 = vmul.f32 %v8343, %v8533
        %v8568 = vmul.f32 %v8344, %v8535
        %v8569 = vmul.f32 %v8345, %v8537
        %v8570 = vld [vmem:[%s10] sm:$0x1]
        %v8571 = vpack.c.bf16 %v859, %v858
        %v8572 = vpack.c.bf16 %v861, %v860
        %v8573 = vpack.c.bf16 %v863, %v862
        %v8574 = vpack.c.bf16 %v865, %v864
        %v8575 = vpack.c.bf16 %v867, %v866
        %v8576 = vpack.c.bf16 %v869, %v868
        %v8577 = vpack.c.bf16 %v871, %v870
        %v8578 = vpack.c.bf16 %v873, %v872
        %v8579 = vpack.c.bf16 %v875, %v874
        %v8580 = vpack.c.bf16 %v877, %v876
        %v8581 = vpack.c.bf16 %v879, %v878
        %v8582 = vpack.c.bf16 %v881, %v880
        %v8583 = vpack.c.bf16 %v883, %v882
        %v8584 = vpack.c.bf16 %v885, %v884
        %v8585 = vpack.c.bf16 %v887, %v886
        %v8586 = vpack.c.bf16 %v889, %v888
        %v8587 = vld [vmem:[%s9] sm:$0xf]
        %v8588 = vld [vmem:[%s9 + $0x4] sm:$0xf]
        %v8589 = vld [vmem:[%s9 + $0x8] sm:$0xf]
        %v8590 = vld [vmem:[%s9 + $0xc] sm:$0xf]
        %v8591 = vld [vmem:[%s9 + $0x10] sm:$0xf]
        %v8592 = vld [vmem:[%s9 + $0x14] sm:$0xf]
        %v8593 = vld [vmem:[%s9 + $0x18] sm:$0xf]
        %v8594 = vld [vmem:[%s9 + $0x1c] sm:$0xf]
        %v8603 = vunpack.c.l.b16 %v8587
        %v8604 = vunpack.c.l.b16 %v8588
        %v8605 = vunpack.c.l.b16 %v8589
        %v8606 = vunpack.c.l.b16 %v8590
        %v8607 = vunpack.c.l.b16 %v8591
        %v8608 = vunpack.c.l.b16 %v8592
        %v8609 = vunpack.c.l.b16 %v8593
        %v8610 = vunpack.c.l.b16 %v8594
        %v8611 = vpack.c.b16 %v8604, %v8603
        %v8612 = vpack.c.b16 %v8606, %v8605
        %v8613 = vpack.c.b16 %v8608, %v8607
        %v8614 = vpack.c.b16 %v8610, %v8609
        %v8620 = vsel %vm1346, %v8571, 0
        %v8623 = vsel %vm1346, %v8572, 0
        %v8626 = vsel %vm1346, %v8573, 0
        %v8629 = vsel %vm1346, %v8574, 0
        %v8632 = vsel %vm1346, %v8575, 0
        %v8635 = vsel %vm1346, %v8576, 0
        %v8638 = vsel %vm1346, %v8577, 0
        %v8641 = vsel %vm1346, %v8578, 0
        %v8644 = vsel %vm1346, %v8579, 0
        %v8647 = vsel %vm1346, %v8580, 0
        %v8650 = vsel %vm1346, %v8581, 0
        %v8653 = vsel %vm1346, %v8582, 0
        %v8656 = vsel %vm1346, %v8583, 0
        %v8659 = vsel %vm1346, %v8584, 0
        %v8662 = vsel %vm1346, %v8585, 0
        %v8665 = vsel %vm1346, %v8586, 0
        %8667 = vmatprep.subr.bf16.mxu0 0
        %8668 = vmatpush1.bf16.msra.mxu0 0
        %8669 = vmatprep.subr.bf16.mxu0 0
        %8670 = vmatpush1.bf16.msra.mxu0 0
        %8671 = vmatprep.subr.bf16.mxu0 0
        %8672 = vmatpush1.bf16.msra.mxu0 0
        %8673 = vmatprep.subr.bf16.mxu0 0
        %8674 = vmatpush1.bf16.msra.mxu0 0
        %8675 = vmatprep.subr.bf16.mxu0 0
        %8676 = vmatpush1.bf16.msra.mxu0 %v8614
        %8677 = vmatprep.subr.bf16.mxu0 0
        %8678 = vmatpush1.bf16.msra.mxu0 %v8613
        %8679 = vmatprep.subr.bf16.mxu0 0
        %8680 = vmatpush1.bf16.msra.mxu0 %v8612
        %8681 = vmatprep.subr.bf16.mxu0 0
        %8682 = vmatpush1.bf16.msra.mxu0 %v8611
        %8683 = vmatprep.subr.bf16.mxu0 0
        %8684 = vmatpush2.bf16.msra.mxu0 0
        %8685 = vmatprep.subr.bf16.mxu0 0
        %8686 = vmatpush2.bf16.msra.mxu0 0
        %8687 = vmatprep.subr.bf16.mxu0 0
        %8688 = vmatpush2.bf16.msra.mxu0 0
        %8689 = vmatprep.subr.bf16.mxu0 0
        %8690 = vmatpush2.bf16.msra.mxu0 0
        %8691 = vmatprep.subr.bf16.mxu0 0
        %8692 = vmatpush2.bf16.msra.mxu0 0
        %8693 = vmatprep.subr.bf16.mxu0 0
        %8694 = vmatpush2.bf16.msra.mxu0 0
        %8695 = vmatprep.subr.bf16.mxu0 0
        %8696 = vmatpush2.bf16.msra.mxu0 0
        %8697 = vmatprep.subr.bf16.mxu0 0
        %8698 = vmatpush2.bf16.msra.mxu0 0
        %8699 = vmatprep.mubr.bf16.mxu0 0
        %8700 = vmatmul.mubr.bf16.gmra.mxu0 %v8620
        %v8701 = vpop.f32.mrf.mxu0
        %v8702 = vadd.f32 0.0, %v8701
        %v8703 = vpop.f32.mrf.mxu0
        %v8704 = vpop.f32.mrf.mxu0
        %v8705 = vadd.f32 0.0, %v8704
        %v8706 = vpop.f32.mrf.mxu0
        %8707 = vmatprep.mubr.bf16.mxu0 0
        %8708 = vmatmul.mubr.bf16.gmra.mxu0 %v8623
        %v8709 = vpop.f32.mrf.mxu0
        %v8710 = vadd.f32 0.0, %v8709
        %v8711 = vpop.f32.mrf.mxu0
        %v8712 = vpop.f32.mrf.mxu0
        %v8713 = vadd.f32 0.0, %v8712
        %v8714 = vpop.f32.mrf.mxu0
        %8715 = vmatprep.mubr.bf16.mxu0 0
        %8716 = vmatmul.mubr.bf16.gmra.mxu0 %v8626
        %v8717 = vpop.f32.mrf.mxu0
        %v8718 = vadd.f32 0.0, %v8717
        %v8719 = vpop.f32.mrf.mxu0
        %v8720 = vpop.f32.mrf.mxu0
        %v8721 = vadd.f32 0.0, %v8720
        %v8722 = vpop.f32.mrf.mxu0
        %8723 = vmatprep.mubr.bf16.mxu0 0
        %8724 = vmatmul.mubr.bf16.gmra.mxu0 %v8629
        %v8725 = vpop.f32.mrf.mxu0
        %v8726 = vadd.f32 0.0, %v8725
        %v8727 = vpop.f32.mrf.mxu0
        %v8728 = vpop.f32.mrf.mxu0
        %v8729 = vadd.f32 0.0, %v8728
        %v8730 = vpop.f32.mrf.mxu0
        %8731 = vmatprep.mubr.bf16.mxu0 0
        %8732 = vmatmul.mubr.bf16.gmra.mxu0 %v8632
        %v8733 = vpop.f32.mrf.mxu0
        %v8734 = vadd.f32 0.0, %v8733
        %v8735 = vpop.f32.mrf.mxu0
        %v8736 = vpop.f32.mrf.mxu0
        %v8737 = vadd.f32 0.0, %v8736
        %v8738 = vpop.f32.mrf.mxu0
        %8739 = vmatprep.mubr.bf16.mxu0 0
        %8740 = vmatmul.mubr.bf16.gmra.mxu0 %v8635
        %v8741 = vpop.f32.mrf.mxu0
        %v8742 = vadd.f32 0.0, %v8741
        %v8743 = vpop.f32.mrf.mxu0
        %v8744 = vpop.f32.mrf.mxu0
        %v8745 = vadd.f32 0.0, %v8744
        %v8746 = vpop.f32.mrf.mxu0
        %8747 = vmatprep.mubr.bf16.mxu0 0
        %8748 = vmatmul.mubr.bf16.gmra.mxu0 %v8638
        %v8749 = vpop.f32.mrf.mxu0
        %v8750 = vadd.f32 0.0, %v8749
        %v8751 = vpop.f32.mrf.mxu0
        %v8752 = vpop.f32.mrf.mxu0
        %v8753 = vadd.f32 0.0, %v8752
        %v8754 = vpop.f32.mrf.mxu0
        %8755 = vmatprep.mubr.bf16.mxu0 0
        %8756 = vmatmul.mubr.bf16.gmra.mxu0 %v8641
        %v8757 = vpop.f32.mrf.mxu0
        %v8758 = vadd.f32 0.0, %v8757
        %v8759 = vpop.f32.mrf.mxu0
        %v8760 = vpop.f32.mrf.mxu0
        %v8761 = vadd.f32 0.0, %v8760
        %v8762 = vpop.f32.mrf.mxu0
        %8763 = vmatprep.mubr.bf16.mxu0 0
        %8764 = vmatmul.mubr.bf16.gmra.mxu0 %v8644
        %v8765 = vpop.f32.mrf.mxu0
        %v8766 = vadd.f32 0.0, %v8765
        %v8767 = vpop.f32.mrf.mxu0
        %v8768 = vpop.f32.mrf.mxu0
        %v8769 = vadd.f32 0.0, %v8768
        %v8770 = vpop.f32.mrf.mxu0
        %8771 = vmatprep.mubr.bf16.mxu0 0
        %8772 = vmatmul.mubr.bf16.gmra.mxu0 %v8647
        %v8773 = vpop.f32.mrf.mxu0
        %v8774 = vadd.f32 0.0, %v8773
        %v8775 = vpop.f32.mrf.mxu0
        %v8776 = vpop.f32.mrf.mxu0
        %v8777 = vadd.f32 0.0, %v8776
        %v8778 = vpop.f32.mrf.mxu0
        %8779 = vmatprep.mubr.bf16.mxu0 0
        %8780 = vmatmul.mubr.bf16.gmra.mxu0 %v8650
        %v8781 = vpop.f32.mrf.mxu0
        %v8782 = vadd.f32 0.0, %v8781
        %v8783 = vpop.f32.mrf.mxu0
        %v8784 = vpop.f32.mrf.mxu0
        %v8785 = vadd.f32 0.0, %v8784
        %v8786 = vpop.f32.mrf.mxu0
        %8787 = vmatprep.mubr.bf16.mxu0 0
        %8788 = vmatmul.mubr.bf16.gmra.mxu0 %v8653
        %v8789 = vpop.f32.mrf.mxu0
        %v8790 = vadd.f32 0.0, %v8789
        %v8791 = vpop.f32.mrf.mxu0
        %v8792 = vpop.f32.mrf.mxu0
        %v8793 = vadd.f32 0.0, %v8792
        %v8794 = vpop.f32.mrf.mxu0
        %8795 = vmatprep.mubr.bf16.mxu0 0
        %8796 = vmatmul.mubr.bf16.gmra.mxu0 %v8656
        %v8797 = vpop.f32.mrf.mxu0
        %v8798 = vadd.f32 0.0, %v8797
        %v8799 = vpop.f32.mrf.mxu0
        %v8800 = vpop.f32.mrf.mxu0
        %v8801 = vadd.f32 0.0, %v8800
        %v8802 = vpop.f32.mrf.mxu0
        %8803 = vmatprep.mubr.bf16.mxu0 0
        %8804 = vmatmul.mubr.bf16.gmra.mxu0 %v8659
        %v8805 = vpop.f32.mrf.mxu0
        %v8806 = vadd.f32 0.0, %v8805
        %v8807 = vpop.f32.mrf.mxu0
        %v8808 = vpop.f32.mrf.mxu0
        %v8809 = vadd.f32 0.0, %v8808
        %v8810 = vpop.f32.mrf.mxu0
        %8811 = vmatprep.mubr.bf16.mxu0 0
        %8812 = vmatmul.mubr.bf16.gmra.mxu0 %v8662
        %v8813 = vpop.f32.mrf.mxu0
        %v8814 = vadd.f32 0.0, %v8813
        %v8815 = vpop.f32.mrf.mxu0
        %v8816 = vpop.f32.mrf.mxu0
        %v8817 = vadd.f32 0.0, %v8816
        %v8818 = vpop.f32.mrf.mxu0
        %8819 = vmatprep.mubr.bf16.mxu0 0
        %8820 = vmatmul.mubr.bf16.gmra.mxu0 %v8665
        %v8821 = vpop.f32.mrf.mxu0
        %v8822 = vadd.f32 0.0, %v8821
        %v8823 = vpop.f32.mrf.mxu0
        %v8824 = vpop.f32.mrf.mxu0
        %v8825 = vadd.f32 0.0, %v8824
        %v8826 = vpop.f32.mrf.mxu0
        %8827 = vdwg.mxu0
        %v8829 = vlaneseq
        %v8830 = vshrl.u32 %v8829, 7
        %v8831 = vsub.s32 0, %v8830
        %v8832 = vrot.slane %v8570, %v8831
        %v8834 = vadd.f32 %v8832, %v8702
        %v8835 = vadd.f32 %v8832, %v8705
        %v8836 = vadd.f32 %v8832, %v8710
        %v8837 = vadd.f32 %v8832, %v8713
        %v8838 = vadd.f32 %v8832, %v8718
        %v8839 = vadd.f32 %v8832, %v8721
        %v8840 = vadd.f32 %v8832, %v8726
        %v8841 = vadd.f32 %v8832, %v8729
        %v8842 = vadd.f32 %v8832, %v8734
        %v8843 = vadd.f32 %v8832, %v8737
        %v8844 = vadd.f32 %v8832, %v8742
        %v8845 = vadd.f32 %v8832, %v8745
        %v8846 = vadd.f32 %v8832, %v8750
        %v8847 = vadd.f32 %v8832, %v8753
        %v8848 = vadd.f32 %v8832, %v8758
        %v8849 = vadd.f32 %v8832, %v8761
        %v8850 = vadd.f32 %v8832, %v8766
        %v8851 = vadd.f32 %v8832, %v8769
        %v8852 = vadd.f32 %v8832, %v8774
        %v8853 = vadd.f32 %v8832, %v8777
        %v8854 = vadd.f32 %v8832, %v8782
        %v8855 = vadd.f32 %v8832, %v8785
        %v8856 = vadd.f32 %v8832, %v8790
        %v8857 = vadd.f32 %v8832, %v8793
        %v8858 = vadd.f32 %v8832, %v8798
        %v8859 = vadd.f32 %v8832, %v8801
        %v8860 = vadd.f32 %v8832, %v8806
        %v8861 = vadd.f32 %v8832, %v8809
        %v8862 = vadd.f32 %v8832, %v8814
        %v8863 = vadd.f32 %v8832, %v8817
        %v8864 = vadd.f32 %v8832, %v8822
        %v8865 = vadd.f32 %v8832, %v8825
        %s8866 = scalar_lea.vmem %s9, 32
        %v8867 = vld [vmem:[%s8866] sm:$0xf]
        %v8868 = vld [vmem:[%s8866 + $0x4] sm:$0xf]
        %v8869 = vld [vmem:[%s8866 + $0x8] sm:$0xf]
        %v8870 = vld [vmem:[%s8866 + $0xc] sm:$0xf]
        %v8871 = vld [vmem:[%s8866 + $0x10] sm:$0xf]
        %v8872 = vld [vmem:[%s8866 + $0x14] sm:$0xf]
        %v8873 = vld [vmem:[%s8866 + $0x18] sm:$0xf]
        %v8874 = vld [vmem:[%s8866 + $0x1c] sm:$0xf]
        %v8883 = vunpack.c.l.b16 %v8867
        %v8884 = vunpack.c.l.b16 %v8868
        %v8885 = vunpack.c.l.b16 %v8869
        %v8886 = vunpack.c.l.b16 %v8870
        %v8887 = vunpack.c.l.b16 %v8871
        %v8888 = vunpack.c.l.b16 %v8872
        %v8889 = vunpack.c.l.b16 %v8873
        %v8890 = vunpack.c.l.b16 %v8874
        %v8891 = vpack.c.b16 %v8884, %v8883
        %v8892 = vpack.c.b16 %v8886, %v8885
        %v8893 = vpack.c.b16 %v8888, %v8887
        %v8894 = vpack.c.b16 %v8890, %v8889
        %8899 = vmatprep.subr.bf16.mxu0 0
        %8900 = vmatpush1.bf16.msra.mxu0 0
        %8901 = vmatprep.subr.bf16.mxu0 0
        %8902 = vmatpush1.bf16.msra.mxu0 0
        %8903 = vmatprep.subr.bf16.mxu0 0
        %8904 = vmatpush1.bf16.msra.mxu0 0
        %8905 = vmatprep.subr.bf16.mxu0 0
        %8906 = vmatpush1.bf16.msra.mxu0 0
        %8907 = vmatprep.subr.bf16.mxu0 0
        %8908 = vmatpush1.bf16.msra.mxu0 %v8894
        %8909 = vmatprep.subr.bf16.mxu0 0
        %8910 = vmatpush1.bf16.msra.mxu0 %v8893
        %8911 = vmatprep.subr.bf16.mxu0 0
        %8912 = vmatpush1.bf16.msra.mxu0 %v8892
        %8913 = vmatprep.subr.bf16.mxu0 0
        %8914 = vmatpush1.bf16.msra.mxu0 %v8891
        %8915 = vmatprep.subr.bf16.mxu0 0
        %8916 = vmatpush2.bf16.msra.mxu0 0
        %8917 = vmatprep.subr.bf16.mxu0 0
        %8918 = vmatpush2.bf16.msra.mxu0 0
        %8919 = vmatprep.subr.bf16.mxu0 0
        %8920 = vmatpush2.bf16.msra.mxu0 0
        %8921 = vmatprep.subr.bf16.mxu0 0
        %8922 = vmatpush2.bf16.msra.mxu0 0
        %8923 = vmatprep.subr.bf16.mxu0 0
        %8924 = vmatpush2.bf16.msra.mxu0 0
        %8925 = vmatprep.subr.bf16.mxu0 0
        %8926 = vmatpush2.bf16.msra.mxu0 0
        %8927 = vmatprep.subr.bf16.mxu0 0
        %8928 = vmatpush2.bf16.msra.mxu0 0
        %8929 = vmatprep.subr.bf16.mxu0 0
        %8930 = vmatpush2.bf16.msra.mxu0 0
        %8931 = vmatprep.mubr.bf16.mxu0 0
        %8932 = vmatmul.mubr.bf16.gmra.mxu0 %v3396
        %v8933 = vpop.f32.mrf.mxu0
        %v8934 = vadd.f32 0.0, %v8933
        %v8935 = vpop.f32.mrf.mxu0
        %v8936 = vpop.f32.mrf.mxu0
        %v8937 = vadd.f32 0.0, %v8936
        %v8938 = vpop.f32.mrf.mxu0
        %8939 = vmatprep.mubr.bf16.mxu0 0
        %8940 = vmatmul.mubr.bf16.gmra.mxu0 %v3399
        %v8941 = vpop.f32.mrf.mxu0
        %v8942 = vadd.f32 0.0, %v8941
        %v8943 = vpop.f32.mrf.mxu0
        %v8944 = vpop.f32.mrf.mxu0
        %v8945 = vadd.f32 0.0, %v8944
        %v8946 = vpop.f32.mrf.mxu0
        %8947 = vmatprep.mubr.bf16.mxu0 0
        %8948 = vmatmul.mubr.bf16.gmra.mxu0 %v3402
        %v8949 = vpop.f32.mrf.mxu0
        %v8950 = vadd.f32 0.0, %v8949
        %v8951 = vpop.f32.mrf.mxu0
        %v8952 = vpop.f32.mrf.mxu0
        %v8953 = vadd.f32 0.0, %v8952
        %v8954 = vpop.f32.mrf.mxu0
        %8955 = vmatprep.mubr.bf16.mxu0 0
        %8956 = vmatmul.mubr.bf16.gmra.mxu0 %v3405
        %v8957 = vpop.f32.mrf.mxu0
        %v8958 = vadd.f32 0.0, %v8957
        %v8959 = vpop.f32.mrf.mxu0
        %v8960 = vpop.f32.mrf.mxu0
        %v8961 = vadd.f32 0.0, %v8960
        %v8962 = vpop.f32.mrf.mxu0
        %8963 = vmatprep.mubr.bf16.mxu0 0
        %8964 = vmatmul.mubr.bf16.gmra.mxu0 %v3408
        %v8965 = vpop.f32.mrf.mxu0
        %v8966 = vadd.f32 0.0, %v8965
        %v8967 = vpop.f32.mrf.mxu0
        %v8968 = vpop.f32.mrf.mxu0
        %v8969 = vadd.f32 0.0, %v8968
        %v8970 = vpop.f32.mrf.mxu0
        %8971 = vmatprep.mubr.bf16.mxu0 0
        %8972 = vmatmul.mubr.bf16.gmra.mxu0 %v3411
        %v8973 = vpop.f32.mrf.mxu0
        %v8974 = vadd.f32 0.0, %v8973
        %v8975 = vpop.f32.mrf.mxu0
        %v8976 = vpop.f32.mrf.mxu0
        %v8977 = vadd.f32 0.0, %v8976
        %v8978 = vpop.f32.mrf.mxu0
        %8979 = vmatprep.mubr.bf16.mxu0 0
        %8980 = vmatmul.mubr.bf16.gmra.mxu0 %v3414
        %v8981 = vpop.f32.mrf.mxu0
        %v8982 = vadd.f32 0.0, %v8981
        %v8983 = vpop.f32.mrf.mxu0
        %v8984 = vpop.f32.mrf.mxu0
        %v8985 = vadd.f32 0.0, %v8984
        %v8986 = vpop.f32.mrf.mxu0
        %8987 = vmatprep.mubr.bf16.mxu0 0
        %8988 = vmatmul.mubr.bf16.gmra.mxu0 %v3417
        %v8989 = vpop.f32.mrf.mxu0
        %v8990 = vadd.f32 0.0, %v8989
        %v8991 = vpop.f32.mrf.mxu0
        %v8992 = vpop.f32.mrf.mxu0
        %v8993 = vadd.f32 0.0, %v8992
        %v8994 = vpop.f32.mrf.mxu0
        %8995 = vmatprep.mubr.bf16.mxu0 0
        %8996 = vmatmul.mubr.bf16.gmra.mxu0 %v3420
        %v8997 = vpop.f32.mrf.mxu0
        %v8998 = vadd.f32 0.0, %v8997
        %v8999 = vpop.f32.mrf.mxu0
        %v9000 = vpop.f32.mrf.mxu0
        %v9001 = vadd.f32 0.0, %v9000
        %v9002 = vpop.f32.mrf.mxu0
        %9003 = vmatprep.mubr.bf16.mxu0 0
        %9004 = vmatmul.mubr.bf16.gmra.mxu0 %v3423
        %v9005 = vpop.f32.mrf.mxu0
        %v9006 = vadd.f32 0.0, %v9005
        %v9007 = vpop.f32.mrf.mxu0
        %v9008 = vpop.f32.mrf.mxu0
        %v9009 = vadd.f32 0.0, %v9008
        %v9010 = vpop.f32.mrf.mxu0
        %9011 = vmatprep.mubr.bf16.mxu0 0
        %9012 = vmatmul.mubr.bf16.gmra.mxu0 %v3426
        %v9013 = vpop.f32.mrf.mxu0
        %v9014 = vadd.f32 0.0, %v9013
        %v9015 = vpop.f32.mrf.mxu0
        %v9016 = vpop.f32.mrf.mxu0
        %v9017 = vadd.f32 0.0, %v9016
        %v9018 = vpop.f32.mrf.mxu0
        %9019 = vmatprep.mubr.bf16.mxu0 0
        %9020 = vmatmul.mubr.bf16.gmra.mxu0 %v3429
        %v9021 = vpop.f32.mrf.mxu0
        %v9022 = vadd.f32 0.0, %v9021
        %v9023 = vpop.f32.mrf.mxu0
        %v9024 = vpop.f32.mrf.mxu0
        %v9025 = vadd.f32 0.0, %v9024
        %v9026 = vpop.f32.mrf.mxu0
        %9027 = vmatprep.mubr.bf16.mxu0 0
        %9028 = vmatmul.mubr.bf16.gmra.mxu0 %v3432
        %v9029 = vpop.f32.mrf.mxu0
        %v9030 = vadd.f32 0.0, %v9029
        %v9031 = vpop.f32.mrf.mxu0
        %v9032 = vpop.f32.mrf.mxu0
        %v9033 = vadd.f32 0.0, %v9032
        %v9034 = vpop.f32.mrf.mxu0
        %9035 = vmatprep.mubr.bf16.mxu0 0
        %9036 = vmatmul.mubr.bf16.gmra.mxu0 %v3435
        %v9037 = vpop.f32.mrf.mxu0
        %v9038 = vadd.f32 0.0, %v9037
        %v9039 = vpop.f32.mrf.mxu0
        %v9040 = vpop.f32.mrf.mxu0
        %v9041 = vadd.f32 0.0, %v9040
        %v9042 = vpop.f32.mrf.mxu0
        %9043 = vmatprep.mubr.bf16.mxu0 0
        %9044 = vmatmul.mubr.bf16.gmra.mxu0 %v3438
        %v9045 = vpop.f32.mrf.mxu0
        %v9046 = vadd.f32 0.0, %v9045
        %v9047 = vpop.f32.mrf.mxu0
        %v9048 = vpop.f32.mrf.mxu0
        %v9049 = vadd.f32 0.0, %v9048
        %v9050 = vpop.f32.mrf.mxu0
        %9051 = vmatprep.mubr.bf16.mxu0 0
        %9052 = vmatmul.mubr.bf16.gmra.mxu0 %v3441
        %v9053 = vpop.f32.mrf.mxu0
        %v9054 = vadd.f32 0.0, %v9053
        %v9055 = vpop.f32.mrf.mxu0
        %v9056 = vpop.f32.mrf.mxu0
        %v9057 = vadd.f32 0.0, %v9056
        %v9058 = vpop.f32.mrf.mxu0
        %9059 = vdwg.mxu0
        %v9060 = vadd.f32 %v8834, %v8934
        %v9061 = vadd.f32 %v8835, %v8937
        %v9062 = vadd.f32 %v8836, %v8942
        %v9063 = vadd.f32 %v8837, %v8945
        %v9064 = vadd.f32 %v8838, %v8950
        %v9065 = vadd.f32 %v8839, %v8953
        %v9066 = vadd.f32 %v8840, %v8958
        %v9067 = vadd.f32 %v8841, %v8961
        %v9068 = vadd.f32 %v8842, %v8966
        %v9069 = vadd.f32 %v8843, %v8969
        %v9070 = vadd.f32 %v8844, %v8974
        %v9071 = vadd.f32 %v8845, %v8977
        %v9072 = vadd.f32 %v8846, %v8982
        %v9073 = vadd.f32 %v8847, %v8985
        %v9074 = vadd.f32 %v8848, %v8990
        %v9075 = vadd.f32 %v8849, %v8993
        %v9076 = vadd.f32 %v8850, %v8998
        %v9077 = vadd.f32 %v8851, %v9001
        %v9078 = vadd.f32 %v8852, %v9006
        %v9079 = vadd.f32 %v8853, %v9009
        %v9080 = vadd.f32 %v8854, %v9014
        %v9081 = vadd.f32 %v8855, %v9017
        %v9082 = vadd.f32 %v8856, %v9022
        %v9083 = vadd.f32 %v8857, %v9025
        %v9084 = vadd.f32 %v8858, %v9030
        %v9085 = vadd.f32 %v8859, %v9033
        %v9086 = vadd.f32 %v8860, %v9038
        %v9087 = vadd.f32 %v8861, %v9041
        %v9088 = vadd.f32 %v8862, %v9046
        %v9089 = vadd.f32 %v8863, %v9049
        %v9090 = vadd.f32 %v8864, %v9054
        %v9091 = vadd.f32 %v8865, %v9057
        %v9092 = vpack.c.bf16 %v8539, %v8538
        %v9093 = vpack.c.bf16 %v8541, %v8540
        %v9094 = vpack.c.bf16 %v8543, %v8542
        %v9095 = vpack.c.bf16 %v8545, %v8544
        %v9096 = vpack.c.bf16 %v8547, %v8546
        %v9097 = vpack.c.bf16 %v8549, %v8548
        %v9098 = vpack.c.bf16 %v8551, %v8550
        %v9099 = vpack.c.bf16 %v8553, %v8552
        %v9100 = vpack.c.bf16 %v8555, %v8554
        %v9101 = vpack.c.bf16 %v8557, %v8556
        %v9102 = vpack.c.bf16 %v8559, %v8558
        %v9103 = vpack.c.bf16 %v8561, %v8560
        %v9104 = vpack.c.bf16 %v8563, %v8562
        %v9105 = vpack.c.bf16 %v8565, %v8564
        %v9106 = vpack.c.bf16 %v8567, %v8566
        %v9107 = vpack.c.bf16 %v8569, %v8568
        %s9108 = scalar_lea.vmem %s9, 64
        %v9109 = vld [vmem:[%s9108] sm:$0xf]
        %v9110 = vld [vmem:[%s9108 + $0x4] sm:$0xf]
        %v9111 = vld [vmem:[%s9108 + $0x8] sm:$0xf]
        %v9112 = vld [vmem:[%s9108 + $0xc] sm:$0xf]
        %v9113 = vld [vmem:[%s9108 + $0x10] sm:$0xf]
        %v9114 = vld [vmem:[%s9108 + $0x14] sm:$0xf]
        %v9115 = vld [vmem:[%s9108 + $0x18] sm:$0xf]
        %v9116 = vld [vmem:[%s9108 + $0x1c] sm:$0xf]
        %v9125 = vunpack.c.l.b16 %v9109
        %v9126 = vunpack.c.l.b16 %v9110
        %v9127 = vunpack.c.l.b16 %v9111
        %v9128 = vunpack.c.l.b16 %v9112
        %v9129 = vunpack.c.l.b16 %v9113
        %v9130 = vunpack.c.l.b16 %v9114
        %v9131 = vunpack.c.l.b16 %v9115
        %v9132 = vunpack.c.l.b16 %v9116
        %v9133 = vpack.c.b16 %v9126, %v9125
        %v9134 = vpack.c.b16 %v9128, %v9127
        %v9135 = vpack.c.b16 %v9130, %v9129
        %v9136 = vpack.c.b16 %v9132, %v9131
        %v9142 = vsel %vm1346, %v9092, 0
        %v9145 = vsel %vm1346, %v9093, 0
        %v9148 = vsel %vm1346, %v9094, 0
        %v9151 = vsel %vm1346, %v9095, 0
        %v9154 = vsel %vm1346, %v9096, 0
        %v9157 = vsel %vm1346, %v9097, 0
        %v9160 = vsel %vm1346, %v9098, 0
        %v9163 = vsel %vm1346, %v9099, 0
        %v9166 = vsel %vm1346, %v9100, 0
        %v9169 = vsel %vm1346, %v9101, 0
        %v9172 = vsel %vm1346, %v9102, 0
        %v9175 = vsel %vm1346, %v9103, 0
        %v9178 = vsel %vm1346, %v9104, 0
        %v9181 = vsel %vm1346, %v9105, 0
        %v9184 = vsel %vm1346, %v9106, 0
        %v9187 = vsel %vm1346, %v9107, 0
        %9189 = vmatprep.subr.bf16.mxu0 0
        %9190 = vmatpush1.bf16.msra.mxu0 0
        %9191 = vmatprep.subr.bf16.mxu0 0
        %9192 = vmatpush1.bf16.msra.mxu0 0
        %9193 = vmatprep.subr.bf16.mxu0 0
        %9194 = vmatpush1.bf16.msra.mxu0 0
        %9195 = vmatprep.subr.bf16.mxu0 0
        %9196 = vmatpush1.bf16.msra.mxu0 0
        %9197 = vmatprep.subr.bf16.mxu0 0
        %9198 = vmatpush1.bf16.msra.mxu0 %v9136
        %9199 = vmatprep.subr.bf16.mxu0 0
        %9200 = vmatpush1.bf16.msra.mxu0 %v9135
        %9201 = vmatprep.subr.bf16.mxu0 0
        %9202 = vmatpush1.bf16.msra.mxu0 %v9134
        %9203 = vmatprep.subr.bf16.mxu0 0
        %9204 = vmatpush1.bf16.msra.mxu0 %v9133
        %9205 = vmatprep.subr.bf16.mxu0 0
        %9206 = vmatpush2.bf16.msra.mxu0 0
        %9207 = vmatprep.subr.bf16.mxu0 0
        %9208 = vmatpush2.bf16.msra.mxu0 0
        %9209 = vmatprep.subr.bf16.mxu0 0
        %9210 = vmatpush2.bf16.msra.mxu0 0
        %9211 = vmatprep.subr.bf16.mxu0 0
        %9212 = vmatpush2.bf16.msra.mxu0 0
        %9213 = vmatprep.subr.bf16.mxu0 0
        %9214 = vmatpush2.bf16.msra.mxu0 0
        %9215 = vmatprep.subr.bf16.mxu0 0
        %9216 = vmatpush2.bf16.msra.mxu0 0
        %9217 = vmatprep.subr.bf16.mxu0 0
        %9218 = vmatpush2.bf16.msra.mxu0 0
        %9219 = vmatprep.subr.bf16.mxu0 0
        %9220 = vmatpush2.bf16.msra.mxu0 0
        %9221 = vmatprep.mubr.bf16.mxu0 0
        %9222 = vmatmul.mubr.bf16.gmra.mxu0 %v9142
        %v9223 = vpop.f32.mrf.mxu0
        %v9224 = vadd.f32 0.0, %v9223
        %v9225 = vpop.f32.mrf.mxu0
        %v9226 = vpop.f32.mrf.mxu0
        %v9227 = vadd.f32 0.0, %v9226
        %v9228 = vpop.f32.mrf.mxu0
        %9229 = vmatprep.mubr.bf16.mxu0 0
        %9230 = vmatmul.mubr.bf16.gmra.mxu0 %v9145
        %v9231 = vpop.f32.mrf.mxu0
        %v9232 = vadd.f32 0.0, %v9231
        %v9233 = vpop.f32.mrf.mxu0
        %v9234 = vpop.f32.mrf.mxu0
        %v9235 = vadd.f32 0.0, %v9234
        %v9236 = vpop.f32.mrf.mxu0
        %9237 = vmatprep.mubr.bf16.mxu0 0
        %9238 = vmatmul.mubr.bf16.gmra.mxu0 %v9148
        %v9239 = vpop.f32.mrf.mxu0
        %v9240 = vadd.f32 0.0, %v9239
        %v9241 = vpop.f32.mrf.mxu0
        %v9242 = vpop.f32.mrf.mxu0
        %v9243 = vadd.f32 0.0, %v9242
        %v9244 = vpop.f32.mrf.mxu0
        %9245 = vmatprep.mubr.bf16.mxu0 0
        %9246 = vmatmul.mubr.bf16.gmra.mxu0 %v9151
        %v9247 = vpop.f32.mrf.mxu0
        %v9248 = vadd.f32 0.0, %v9247
        %v9249 = vpop.f32.mrf.mxu0
        %v9250 = vpop.f32.mrf.mxu0
        %v9251 = vadd.f32 0.0, %v9250
        %v9252 = vpop.f32.mrf.mxu0
        %9253 = vmatprep.mubr.bf16.mxu0 0
        %9254 = vmatmul.mubr.bf16.gmra.mxu0 %v9154
        %v9255 = vpop.f32.mrf.mxu0
        %v9256 = vadd.f32 0.0, %v9255
        %v9257 = vpop.f32.mrf.mxu0
        %v9258 = vpop.f32.mrf.mxu0
        %v9259 = vadd.f32 0.0, %v9258
        %v9260 = vpop.f32.mrf.mxu0
        %9261 = vmatprep.mubr.bf16.mxu0 0
        %9262 = vmatmul.mubr.bf16.gmra.mxu0 %v9157
        %v9263 = vpop.f32.mrf.mxu0
        %v9264 = vadd.f32 0.0, %v9263
        %v9265 = vpop.f32.mrf.mxu0
        %v9266 = vpop.f32.mrf.mxu0
        %v9267 = vadd.f32 0.0, %v9266
        %v9268 = vpop.f32.mrf.mxu0
        %9269 = vmatprep.mubr.bf16.mxu0 0
        %9270 = vmatmul.mubr.bf16.gmra.mxu0 %v9160
        %v9271 = vpop.f32.mrf.mxu0
        %v9272 = vadd.f32 0.0, %v9271
        %v9273 = vpop.f32.mrf.mxu0
        %v9274 = vpop.f32.mrf.mxu0
        %v9275 = vadd.f32 0.0, %v9274
        %v9276 = vpop.f32.mrf.mxu0
        %9277 = vmatprep.mubr.bf16.mxu0 0
        %9278 = vmatmul.mubr.bf16.gmra.mxu0 %v9163
        %v9279 = vpop.f32.mrf.mxu0
        %v9280 = vadd.f32 0.0, %v9279
        %v9281 = vpop.f32.mrf.mxu0
        %v9282 = vpop.f32.mrf.mxu0
        %v9283 = vadd.f32 0.0, %v9282
        %v9284 = vpop.f32.mrf.mxu0
        %9285 = vmatprep.mubr.bf16.mxu0 0
        %9286 = vmatmul.mubr.bf16.gmra.mxu0 %v9166
        %v9287 = vpop.f32.mrf.mxu0
        %v9288 = vadd.f32 0.0, %v9287
        %v9289 = vpop.f32.mrf.mxu0
        %v9290 = vpop.f32.mrf.mxu0
        %v9291 = vadd.f32 0.0, %v9290
        %v9292 = vpop.f32.mrf.mxu0
        %9293 = vmatprep.mubr.bf16.mxu0 0
        %9294 = vmatmul.mubr.bf16.gmra.mxu0 %v9169
        %v9295 = vpop.f32.mrf.mxu0
        %v9296 = vadd.f32 0.0, %v9295
        %v9297 = vpop.f32.mrf.mxu0
        %v9298 = vpop.f32.mrf.mxu0
        %v9299 = vadd.f32 0.0, %v9298
        %v9300 = vpop.f32.mrf.mxu0
        %9301 = vmatprep.mubr.bf16.mxu0 0
        %9302 = vmatmul.mubr.bf16.gmra.mxu0 %v9172
        %v9303 = vpop.f32.mrf.mxu0
        %v9304 = vadd.f32 0.0, %v9303
        %v9305 = vpop.f32.mrf.mxu0
        %v9306 = vpop.f32.mrf.mxu0
        %v9307 = vadd.f32 0.0, %v9306
        %v9308 = vpop.f32.mrf.mxu0
        %9309 = vmatprep.mubr.bf16.mxu0 0
        %9310 = vmatmul.mubr.bf16.gmra.mxu0 %v9175
        %v9311 = vpop.f32.mrf.mxu0
        %v9312 = vadd.f32 0.0, %v9311
        %v9313 = vpop.f32.mrf.mxu0
        %v9314 = vpop.f32.mrf.mxu0
        %v9315 = vadd.f32 0.0, %v9314
        %v9316 = vpop.f32.mrf.mxu0
        %9317 = vmatprep.mubr.bf16.mxu0 0
        %9318 = vmatmul.mubr.bf16.gmra.mxu0 %v9178
        %v9319 = vpop.f32.mrf.mxu0
        %v9320 = vadd.f32 0.0, %v9319
        %v9321 = vpop.f32.mrf.mxu0
        %v9322 = vpop.f32.mrf.mxu0
        %v9323 = vadd.f32 0.0, %v9322
        %v9324 = vpop.f32.mrf.mxu0
        %9325 = vmatprep.mubr.bf16.mxu0 0
        %9326 = vmatmul.mubr.bf16.gmra.mxu0 %v9181
        %v9327 = vpop.f32.mrf.mxu0
        %v9328 = vadd.f32 0.0, %v9327
        %v9329 = vpop.f32.mrf.mxu0
        %v9330 = vpop.f32.mrf.mxu0
        %v9331 = vadd.f32 0.0, %v9330
        %v9332 = vpop.f32.mrf.mxu0
        %9333 = vmatprep.mubr.bf16.mxu0 0
        %9334 = vmatmul.mubr.bf16.gmra.mxu0 %v9184
        %v9335 = vpop.f32.mrf.mxu0
        %v9336 = vadd.f32 0.0, %v9335
        %v9337 = vpop.f32.mrf.mxu0
        %v9338 = vpop.f32.mrf.mxu0
        %v9339 = vadd.f32 0.0, %v9338
        %v9340 = vpop.f32.mrf.mxu0
        %9341 = vmatprep.mubr.bf16.mxu0 0
        %9342 = vmatmul.mubr.bf16.gmra.mxu0 %v9187
        %v9343 = vpop.f32.mrf.mxu0
        %v9344 = vadd.f32 0.0, %v9343
        %v9345 = vpop.f32.mrf.mxu0
        %v9346 = vpop.f32.mrf.mxu0
        %v9347 = vadd.f32 0.0, %v9346
        %v9348 = vpop.f32.mrf.mxu0
        %9349 = vdwg.mxu0
        %v9350 = vadd.f32 %v9060, %v9224
        %v9351 = vadd.f32 %v9061, %v9227
        %v9352 = vadd.f32 %v9062, %v9232
        %v9353 = vadd.f32 %v9063, %v9235
        %v9354 = vadd.f32 %v9064, %v9240
        %v9355 = vadd.f32 %v9065, %v9243
        %v9356 = vadd.f32 %v9066, %v9248
        %v9357 = vadd.f32 %v9067, %v9251
        %v9358 = vadd.f32 %v9068, %v9256
        %v9359 = vadd.f32 %v9069, %v9259
        %v9360 = vadd.f32 %v9070, %v9264
        %v9361 = vadd.f32 %v9071, %v9267
        %v9362 = vadd.f32 %v9072, %v9272
        %v9363 = vadd.f32 %v9073, %v9275
        %v9364 = vadd.f32 %v9074, %v9280
        %v9365 = vadd.f32 %v9075, %v9283
        %v9366 = vadd.f32 %v9076, %v9288
        %v9367 = vadd.f32 %v9077, %v9291
        %v9368 = vadd.f32 %v9078, %v9296
        %v9369 = vadd.f32 %v9079, %v9299
        %v9370 = vadd.f32 %v9080, %v9304
        %v9371 = vadd.f32 %v9081, %v9307
        %v9372 = vadd.f32 %v9082, %v9312
        %v9373 = vadd.f32 %v9083, %v9315
        %v9374 = vadd.f32 %v9084, %v9320
        %v9375 = vadd.f32 %v9085, %v9323
        %v9376 = vadd.f32 %v9086, %v9328
        %v9377 = vadd.f32 %v9087, %v9331
        %v9378 = vadd.f32 %v9088, %v9336
        %v9379 = vadd.f32 %v9089, %v9339
        %v9380 = vadd.f32 %v9090, %v9344
        %v9381 = vadd.f32 %v9091, %v9347
        %v9382 = vxor.u32 %v9350, 2147483648
        %v9383 = vxor.u32 %v9351, 2147483648
        %v9384 = vxor.u32 %v9352, 2147483648
        %v9385 = vxor.u32 %v9353, 2147483648
        %v9386 = vxor.u32 %v9354, 2147483648
        %v9387 = vxor.u32 %v9355, 2147483648
        %v9388 = vxor.u32 %v9356, 2147483648
        %v9389 = vxor.u32 %v9357, 2147483648
        %v9390 = vxor.u32 %v9358, 2147483648
        %v9391 = vxor.u32 %v9359, 2147483648
        %v9392 = vxor.u32 %v9360, 2147483648
        %v9393 = vxor.u32 %v9361, 2147483648
        %v9394 = vxor.u32 %v9362, 2147483648
        %v9395 = vxor.u32 %v9363, 2147483648
        %v9396 = vxor.u32 %v9364, 2147483648
        %v9397 = vxor.u32 %v9365, 2147483648
        %v9398 = vxor.u32 %v9366, 2147483648
        %v9399 = vxor.u32 %v9367, 2147483648
        %v9400 = vxor.u32 %v9368, 2147483648
        %v9401 = vxor.u32 %v9369, 2147483648
        %v9402 = vxor.u32 %v9370, 2147483648
        %v9403 = vxor.u32 %v9371, 2147483648
        %v9404 = vxor.u32 %v9372, 2147483648
        %v9405 = vxor.u32 %v9373, 2147483648
        %v9406 = vxor.u32 %v9374, 2147483648
        %v9407 = vxor.u32 %v9375, 2147483648
        %v9408 = vxor.u32 %v9376, 2147483648
        %v9409 = vxor.u32 %v9377, 2147483648
        %v9410 = vxor.u32 %v9378, 2147483648
        %v9411 = vxor.u32 %v9379, 2147483648
        %v9412 = vxor.u32 %v9380, 2147483648
        %v9413 = vxor.u32 %v9381, 2147483648
        %v9414 = vmul.f32 %v9382, 1.442695
        %v9415 = vpow.pop %v9414
        %v9416 = vmul.f32 %v9383, 1.442695
        %v9417 = vpow.pop %v9416
        %v9418 = vmul.f32 %v9384, 1.442695
        %v9419 = vpow.pop %v9418
        %v9420 = vmul.f32 %v9385, 1.442695
        %v9421 = vpow.pop %v9420
        %v9422 = vmul.f32 %v9386, 1.442695
        %v9423 = vpow.pop %v9422
        %v9424 = vmul.f32 %v9387, 1.442695
        %v9425 = vpow.pop %v9424
        %v9426 = vmul.f32 %v9388, 1.442695
        %v9427 = vpow.pop %v9426
        %v9428 = vmul.f32 %v9389, 1.442695
        %v9429 = vpow.pop %v9428
        %v9430 = vmul.f32 %v9390, 1.442695
        %v9431 = vpow.pop %v9430
        %v9432 = vmul.f32 %v9391, 1.442695
        %v9433 = vpow.pop %v9432
        %v9434 = vmul.f32 %v9392, 1.442695
        %v9435 = vpow.pop %v9434
        %v9436 = vmul.f32 %v9393, 1.442695
        %v9437 = vpow.pop %v9436
        %v9438 = vmul.f32 %v9394, 1.442695
        %v9439 = vpow.pop %v9438
        %v9440 = vmul.f32 %v9395, 1.442695
        %v9441 = vpow.pop %v9440
        %v9442 = vmul.f32 %v9396, 1.442695
        %v9443 = vpow.pop %v9442
        %v9444 = vmul.f32 %v9397, 1.442695
        %v9445 = vpow.pop %v9444
        %v9446 = vmul.f32 %v9398, 1.442695
        %v9447 = vpow.pop %v9446
        %v9448 = vmul.f32 %v9399, 1.442695
        %v9449 = vpow.pop %v9448
        %v9450 = vmul.f32 %v9400, 1.442695
        %v9451 = vpow.pop %v9450
        %v9452 = vmul.f32 %v9401, 1.442695
        %v9453 = vpow.pop %v9452
        %v9454 = vmul.f32 %v9402, 1.442695
        %v9455 = vpow.pop %v9454
        %v9456 = vmul.f32 %v9403, 1.442695
        %v9457 = vpow.pop %v9456
        %v9458 = vmul.f32 %v9404, 1.442695
        %v9459 = vpow.pop %v9458
        %v9460 = vmul.f32 %v9405, 1.442695
        %v9461 = vpow.pop %v9460
        %v9462 = vmul.f32 %v9406, 1.442695
        %v9463 = vpow.pop %v9462
        %v9464 = vmul.f32 %v9407, 1.442695
        %v9465 = vpow.pop %v9464
        %v9466 = vmul.f32 %v9408, 1.442695
        %v9467 = vpow.pop %v9466
        %v9468 = vmul.f32 %v9409, 1.442695
        %v9469 = vpow.pop %v9468
        %v9470 = vmul.f32 %v9410, 1.442695
        %v9471 = vpow.pop %v9470
        %v9472 = vmul.f32 %v9411, 1.442695
        %v9473 = vpow.pop %v9472
        %v9474 = vmul.f32 %v9412, 1.442695
        %v9475 = vpow.pop %v9474
        %v9476 = vmul.f32 %v9413, 1.442695
        %v9477 = vpow.pop %v9476
        %v9478 = vadd.f32 %v9415, 1.0
        %v9479 = vadd.f32 %v9417, 1.0
        %v9480 = vadd.f32 %v9419, 1.0
        %v9481 = vadd.f32 %v9421, 1.0
        %v9482 = vadd.f32 %v9423, 1.0
        %v9483 = vadd.f32 %v9425, 1.0
        %v9484 = vadd.f32 %v9427, 1.0
        %v9485 = vadd.f32 %v9429, 1.0
        %v9486 = vadd.f32 %v9431, 1.0
        %v9487 = vadd.f32 %v9433, 1.0
        %v9488 = vadd.f32 %v9435, 1.0
        %v9489 = vadd.f32 %v9437, 1.0
        %v9490 = vadd.f32 %v9439, 1.0
        %v9491 = vadd.f32 %v9441, 1.0
        %v9492 = vadd.f32 %v9443, 1.0
        %v9493 = vadd.f32 %v9445, 1.0
        %v9494 = vadd.f32 %v9447, 1.0
        %v9495 = vadd.f32 %v9449, 1.0
        %v9496 = vadd.f32 %v9451, 1.0
        %v9497 = vadd.f32 %v9453, 1.0
        %v9498 = vadd.f32 %v9455, 1.0
        %v9499 = vadd.f32 %v9457, 1.0
        %v9500 = vadd.f32 %v9459, 1.0
        %v9501 = vadd.f32 %v9461, 1.0
        %v9502 = vadd.f32 %v9463, 1.0
        %v9503 = vadd.f32 %v9465, 1.0
        %v9504 = vadd.f32 %v9467, 1.0
        %v9505 = vadd.f32 %v9469, 1.0
        %v9506 = vadd.f32 %v9471, 1.0
        %v9507 = vadd.f32 %v9473, 1.0
        %v9508 = vadd.f32 %v9475, 1.0
        %v9509 = vadd.f32 %v9477, 1.0
        %v9510 = vrcp.pop %v9478
        %v9511 = vmul.f32 1.0, %v9510
        %v9512 = vrcp.pop %v9479
        %v9513 = vmul.f32 1.0, %v9512
        %v9514 = vrcp.pop %v9480
        %v9515 = vmul.f32 1.0, %v9514
        %v9516 = vrcp.pop %v9481
        %v9517 = vmul.f32 1.0, %v9516
        %v9518 = vrcp.pop %v9482
        %v9519 = vmul.f32 1.0, %v9518
        %v9520 = vrcp.pop %v9483
        %v9521 = vmul.f32 1.0, %v9520
        %v9522 = vrcp.pop %v9484
        %v9523 = vmul.f32 1.0, %v9522
        %v9524 = vrcp.pop %v9485
        %v9525 = vmul.f32 1.0, %v9524
        %v9526 = vrcp.pop %v9486
        %v9527 = vmul.f32 1.0, %v9526
        %v9528 = vrcp.pop %v9487
        %v9529 = vmul.f32 1.0, %v9528
        %v9530 = vrcp.pop %v9488
        %v9531 = vmul.f32 1.0, %v9530
        %v9532 = vrcp.pop %v9489
        %v9533 = vmul.f32 1.0, %v9532
        %v9534 = vrcp.pop %v9490
        %v9535 = vmul.f32 1.0, %v9534
        %v9536 = vrcp.pop %v9491
        %v9537 = vmul.f32 1.0, %v9536
        %v9538 = vrcp.pop %v9492
        %v9539 = vmul.f32 1.0, %v9538
        %v9540 = vrcp.pop %v9493
        %v9541 = vmul.f32 1.0, %v9540
        %v9542 = vrcp.pop %v9494
        %v9543 = vmul.f32 1.0, %v9542
        %v9544 = vrcp.pop %v9495
        %v9545 = vmul.f32 1.0, %v9544
        %v9546 = vrcp.pop %v9496
        %v9547 = vmul.f32 1.0, %v9546
        %v9548 = vrcp.pop %v9497
        %v9549 = vmul.f32 1.0, %v9548
        %v9550 = vrcp.pop %v9498
        %v9551 = vmul.f32 1.0, %v9550
        %v9552 = vrcp.pop %v9499
        %v9553 = vmul.f32 1.0, %v9552
        %v9554 = vrcp.pop %v9500
        %v9555 = vmul.f32 1.0, %v9554
        %v9556 = vrcp.pop %v9501
        %v9557 = vmul.f32 1.0, %v9556
        %v9558 = vrcp.pop %v9502
        %v9559 = vmul.f32 1.0, %v9558
        %v9560 = vrcp.pop %v9503
        %v9561 = vmul.f32 1.0, %v9560
        %v9562 = vrcp.pop %v9504
        %v9563 = vmul.f32 1.0, %v9562
        %v9564 = vrcp.pop %v9505
        %v9565 = vmul.f32 1.0, %v9564
        %v9566 = vrcp.pop %v9506
        %v9567 = vmul.f32 1.0, %v9566
        %v9568 = vrcp.pop %v9507
        %v9569 = vmul.f32 1.0, %v9568
        %v9570 = vrcp.pop %v9508
        %v9571 = vmul.f32 1.0, %v9570
        %v9572 = vrcp.pop %v9509
        %v9573 = vmul.f32 1.0, %v9572
        %v9574 = vmul.f32 %v9350, %v9511
        %v9575 = vmul.f32 %v9351, %v9513
        %v9576 = vmul.f32 %v9352, %v9515
        %v9577 = vmul.f32 %v9353, %v9517
        %v9578 = vmul.f32 %v9354, %v9519
        %v9579 = vmul.f32 %v9355, %v9521
        %v9580 = vmul.f32 %v9356, %v9523
        %v9581 = vmul.f32 %v9357, %v9525
        %v9582 = vmul.f32 %v9358, %v9527
        %v9583 = vmul.f32 %v9359, %v9529
        %v9584 = vmul.f32 %v9360, %v9531
        %v9585 = vmul.f32 %v9361, %v9533
        %v9586 = vmul.f32 %v9362, %v9535
        %v9587 = vmul.f32 %v9363, %v9537
        %v9588 = vmul.f32 %v9364, %v9539
        %v9589 = vmul.f32 %v9365, %v9541
        %v9590 = vmul.f32 %v9366, %v9543
        %v9591 = vmul.f32 %v9367, %v9545
        %v9592 = vmul.f32 %v9368, %v9547
        %v9593 = vmul.f32 %v9369, %v9549
        %v9594 = vmul.f32 %v9370, %v9551
        %v9595 = vmul.f32 %v9371, %v9553
        %v9596 = vmul.f32 %v9372, %v9555
        %v9597 = vmul.f32 %v9373, %v9557
        %v9598 = vmul.f32 %v9374, %v9559
        %v9599 = vmul.f32 %v9375, %v9561
        %v9600 = vmul.f32 %v9376, %v9563
        %v9601 = vmul.f32 %v9377, %v9565
        %v9602 = vmul.f32 %v9378, %v9567
        %v9603 = vmul.f32 %v9379, %v9569
        %v9604 = vmul.f32 %v9380, %v9571
        %v9605 = vmul.f32 %v9381, %v9573
        %9606 = vst [vmem:[%s379] sm:$0xff] %v9574
        %9607 = vst [vmem:[%s379 + $0x8] sm:$0xff] %v9575
        %9608 = vst [vmem:[%s379 + $0x10] sm:$0xff] %v9576
        %9609 = vst [vmem:[%s379 + $0x18] sm:$0xff] %v9577
        %9610 = vst [vmem:[%s379 + $0x20] sm:$0xff] %v9578
        %9611 = vst [vmem:[%s379 + $0x28] sm:$0xff] %v9579
        %9612 = vst [vmem:[%s379 + $0x30] sm:$0xff] %v9580
        %9613 = vst [vmem:[%s379 + $0x38] sm:$0xff] %v9581
        %9614 = vst [vmem:[%s379 + $0x40] sm:$0xff] %v9582
        %9615 = vst [vmem:[%s379 + $0x48] sm:$0xff] %v9583
        %9616 = vst [vmem:[%s379 + $0x50] sm:$0xff] %v9584
        %9617 = vst [vmem:[%s379 + $0x58] sm:$0xff] %v9585
        %9618 = vst [vmem:[%s379 + $0x60] sm:$0xff] %v9586
        %9619 = vst [vmem:[%s379 + $0x68] sm:$0xff] %v9587
        %9620 = vst [vmem:[%s379 + $0x70] sm:$0xff] %v9588
        %9621 = vst [vmem:[%s379 + $0x78] sm:$0xff] %v9589
        %9622 = vst [vmem:[%s379 + $0x80] sm:$0xff] %v9590
        %9623 = vst [vmem:[%s379 + $0x88] sm:$0xff] %v9591
        %9624 = vst [vmem:[%s379 + $0x90] sm:$0xff] %v9592
        %9625 = vst [vmem:[%s379 + $0x98] sm:$0xff] %v9593
        %9626 = vst [vmem:[%s379 + $0xa0] sm:$0xff] %v9594
        %9627 = vst [vmem:[%s379 + $0xa8] sm:$0xff] %v9595
        %9628 = vst [vmem:[%s379 + $0xb0] sm:$0xff] %v9596
        %9629 = vst [vmem:[%s379 + $0xb8] sm:$0xff] %v9597
        %9630 = vst [vmem:[%s379 + $0xc0] sm:$0xff] %v9598
        %9631 = vst [vmem:[%s379 + $0xc8] sm:$0xff] %v9599
        %9632 = vst [vmem:[%s379 + $0xd0] sm:$0xff] %v9600
        %9633 = vst [vmem:[%s379 + $0xd8] sm:$0xff] %v9601
        %9634 = vst [vmem:[%s379 + $0xe0] sm:$0xff] %v9602
        %9635 = vst [vmem:[%s379 + $0xe8] sm:$0xff] %v9603
        %9636 = vst [vmem:[%s379 + $0xf0] sm:$0xff] %v9604
        %9637 = vst [vmem:[%s379 + $0xf8] sm:$0xff] %v9605
        %s9638 = sand.u32 %s269, 1
        %s9639 = scalar_lea.sflag [#allocation4], %s9638
        %s9640 = sand.u32 %s269, 1
        %s9641 = smul.addr %s9640, 256
        %s9642 = scalar_lea.vmem [#allocation3], %s9641
        // Predicated region
        $region65: #{c2f_att_forward.1} parent=63 // pred_check
          %p9643 = pneg %p279
        $region66: #{c2f_att_forward.1} parent=63 // pred_check_branch
          %9645 = sbr.rel (%p9643) target = $region68
        $region67: #{c2f_att_forward.1} parent=63 // pred_region
          %s9647 = ssub.s32 4096, 4096
          %9648 = vsyncadd %s9639, %s9647
          %s9649 = smul.addr %s25, 32
          %s9650 = smul.addr %s9649, 128
          %s9651 = scalar_lea.hbm %s11, %s9650
          %s9652 = sshll.u32 %s9642, 4
          %s9653 = int_to_ptr.vmem [resolvable:$true] %s9652
          %9658 = dma.vmem_to_hbm [thread:$0]  %s9653, 4096, %s9651, %s9639, 128, 128, 8
        $region68: #{c2f_att_forward.1} parent=63 // pred_fallthru
          _
      $region64: #{c2f_att_forward.1} parent=5 // pred_fallthru
        _
      %p9659 = scmp.le.s32.totalorder 2, %s20
      // Predicated region
      $region69: #{c2f_att_forward.1} parent=5 // pred_check
        %p9660 = pneg %p9659
      $region70: #{c2f_att_forward.1} parent=5 // pred_check_branch
        %9662 = sbr.rel (%p9660) target = $region72
      $region71: #{c2f_att_forward.1} parent=5 // pred_region
        %s9663 = ssub.s32 %s20, 2
        // Predicated region
        $region73: #{c2f_att_forward.1} parent=71 // pred_check
          %p9664 = pneg %p285
        $region74: #{c2f_att_forward.1} parent=71 // pred_check_branch
          %9666 = sbr.rel (%p9664) target = $region76
        $region75: #{c2f_att_forward.1} parent=71 // pred_region
          %s9667 = sand.u32 %s270, 1
          %s9668 = scalar_lea.sflag [#allocation4], %s9667
          %s9669 = sand.u32 %s270, 1
          %s9670 = smul.addr %s9669, 256
          %s9671 = scalar_lea.vmem [#allocation3], %s9670
          %9672 = dma.done %s9668, 4096
        $region76: #{c2f_att_forward.1} parent=71 // pred_fallthru
          _
      $region72: #{c2f_att_forward.1} parent=5 // pred_fallthru
        _
    $region6: #{c2f_att_forward.1} parent=1 // loop_footer
      %s24 = sadd.s32 1, %s20
    $region7: #{c2f_att_forward.1} parent=1 // loop_footer_branch
      %19 = sbr.rel target = $region3
    $region8: #{c2f_att_forward.1} parent=1 // loop_exit
      _
    %9673 = vsyncpa [#allocation4], 1
    %s9674 = scalar_lea.sflag [#allocation4], 1
    %9675 = vsyncpa %s9674, 1

</llo_original>
